<compile_context>
chip_gen: v7x
topology: tpu7x:2x2x1
jax: 0.10.0
libtpu: 0.0.40
codegen_flags: <defaults>
</compile_context>

<pallas_src>
import functools

import jax
import jax.numpy as jnp
from jax.experimental import pallas as pl
from jax.experimental.pallas import tpu as pltpu

CONV_ARCH = [64, 64, 'M', 128, 128, 'M', 256, 256, 256, 'M',
             512, 512, 512, 'M', 512, 512, 512, 'M']
BN_EPS = 1e-5


def _vmem_limit_bytes():
    """Generation-aware scoped-VMEM budget (96 MiB on v5e/v6e, 48 MiB on v7x)."""
    try:
        cap = int(pltpu.get_tpu_info().vmem_capacity_bytes)
        return max(min(cap - cap // 4, 96 * 1024 * 1024), 32 * 1024 * 1024)
    except Exception:
        return 48 * 1024 * 1024


VMEM_LIMIT = _vmem_limit_bytes()


def _pow2_tile(n, cap):
    """Largest power-of-two divisor of n that is <= cap (at least 1)."""
    t = 1
    while t * 2 <= min(n, cap) and n % (t * 2) == 0:
        t *= 2
    return t


def _row_chunk(h, w):
    """Largest divisor of h such that the chunk has <= ~512 output rows (th*w)."""
    target = max(1, 512 // max(w, 1))
    th = 1
    for cand in range(1, h + 1):
        if h % cand == 0 and cand <= target:
            th = cand
    return th


# --------------------------- conv3x3 + BN stats ------------------------------

def _conv3x3_kernel(x_ref, w_ref, b_ref, y_ref, s1_ref, s2_ref, *, th):
    """One (image, Cout-tile) step of a 3x3/pad-1 conv.

    x_ref: (1, H+2, W+2, C) bf16 padded image.
    w_ref: (3, 3C, TCout) bf16 (per dy, K ordered dx-major then channel).
    b_ref: (1, TCout) f32.
    y_ref: (1, H, W, TCout) bf16.
    s1_ref/s2_ref: (1, 1, TCout) f32 partial BN sums / sums of squares.
    """
    _, _, _, c = x_ref.shape
    _, H, W, tco = y_ref.shape
    bias = b_ref[...]                                    # (1, TCout) f32
    s1 = jnp.zeros((1, tco), jnp.float32)
    s2 = jnp.zeros((1, tco), jnp.float32)
    for ci in range(H // th):                            # M-tiled accumulator
        h0 = ci * th
        acc = jnp.zeros((th * W, tco), jnp.float32)
        for dy in range(3):
            rows = x_ref[0, h0 + dy:h0 + dy + th, :, :]  # (th, W+2, C) bf16
            # fuse the 3 dx taps into one K=3C contraction
            lhs = jnp.concatenate(
                [rows[:, 0:W, :], rows[:, 1:W + 1, :], rows[:, 2:W + 2, :]],
                axis=-1).reshape(th * W, 3 * c)
            acc += jnp.dot(lhs, w_ref[dy],
                           preferred_element_type=jnp.float32)
        acc += bias
        y_ref[0, h0:h0 + th, :, :] = acc.reshape(th, W, tco).astype(y_ref.dtype)
        s1 = s1 + jnp.sum(acc, axis=0, keepdims=True)
        s2 = s2 + jnp.sum(acc * acc, axis=0, keepdims=True)
    s1_ref[...] = s1.reshape(1, 1, tco)
    s2_ref[...] = s2.reshape(1, 1, tco)


def conv3x3_bn_stats(x_nhwc, w3, bias, cout_tile=256):
    """x_nhwc: (N,H,W,C) bf16; w3: (3, 3C, Cout) bf16; bias: (Cout,) f32.

    Returns conv output y (N,H,W,Cout) bf16 plus per-image partial sums /
    sums-of-squares (N,1,Cout) f32 for training-mode BatchNorm statistics.
    """
    N, H, W, C = x_nhwc.shape
    Cout = w3.shape[-1]
    # NOTE: on v5e a 128-wide Cout tile would match the 128x128 MXU better.
    tco = cout_tile if Cout % cout_tile == 0 else Cout
    tco = min(tco, Cout)
    th = _row_chunk(H, W)
    xp = jnp.pad(x_nhwc, ((0, 0), (1, 1), (1, 1), (0, 0)))   # zero pad, 1 copy
    kernel = functools.partial(_conv3x3_kernel, th=th)
    return pl.pallas_call(
        kernel,
        out_shape=(jax.ShapeDtypeStruct((N, H, W, Cout), jnp.bfloat16),
                   jax.ShapeDtypeStruct((N, 1, Cout), jnp.float32),
                   jax.ShapeDtypeStruct((N, 1, Cout), jnp.float32)),
        grid_spec=pltpu.PrefetchScalarGridSpec(
            num_scalar_prefetch=0,
            grid=(N, Cout // tco),
            in_specs=[
                pl.BlockSpec((1, H + 2, W + 2, C), lambda n, co: (n, 0, 0, 0)),
                pl.BlockSpec((3, 3 * C, tco), lambda n, co: (0, 0, co)),
                pl.BlockSpec((1, tco), lambda n, co: (0, co)),
            ],
            out_specs=(pl.BlockSpec((1, H, W, tco), lambda n, co: (n, 0, 0, co)),
                       pl.BlockSpec((1, 1, tco), lambda n, co: (n, 0, co)),
                       pl.BlockSpec((1, 1, tco), lambda n, co: (n, 0, co)))),
        compiler_params=pltpu.CompilerParams(
            dimension_semantics=("parallel", "parallel"),
            vmem_limit_bytes=VMEM_LIMIT),
    )(xp, w3, bias.reshape(1, Cout).astype(jnp.float32))


# --------------------------- BatchNorm + ReLU --------------------------------

def _bn_relu_kernel(y_ref, sc_ref, sh_ref, o_ref):
    v = y_ref[...].astype(jnp.float32)
    o_ref[...] = jnp.maximum(v * sc_ref[...] + sh_ref[...], 0.0).astype(o_ref.dtype)


def bn_relu(y, scale, shift):
    """y: (N,H,W,C) bf16 conv output; scale/shift: (C,) f32. Returns bf16 NHWC."""
    N, H, W, C = y.shape
    M = N * H * W
    scale = scale.astype(jnp.float32)
    shift = shift.astype(jnp.float32)
    # Lane-dense trick for C < 128 (e.g. C=64): present (M/rep, 128) slabs.
    if C < 128 and 128 % C == 0 and M % (128 // C) == 0:
        rep = 128 // C
        y2 = y.reshape(M // rep, C * rep)
        sc = jnp.tile(scale, rep).reshape(1, C * rep)
        sh = jnp.tile(shift, rep).reshape(1, C * rep)
    else:
        y2 = y.reshape(M, C)
        sc = scale.reshape(1, C)
        sh = shift.reshape(1, C)
    Mr, Cr = y2.shape
    tm = _pow2_tile(Mr, 1024)
    if tm < 8:                       # avoid a pathological per-row grid
        tm = Mr
    out = pl.pallas_call(
        _bn_relu_kernel,
        out_shape=jax.ShapeDtypeStruct((Mr, Cr), jnp.bfloat16),
        grid_spec=pltpu.PrefetchScalarGridSpec(
            num_scalar_prefetch=0, grid=(Mr // tm,),
            in_specs=[pl.BlockSpec((tm, Cr), lambda i: (i, 0)),
                      pl.BlockSpec((1, Cr), lambda i: (0, 0)),
                      pl.BlockSpec((1, Cr), lambda i: (0, 0))],
            out_specs=pl.BlockSpec((tm, Cr), lambda i: (i, 0))),
        compiler_params=pltpu.CompilerParams(
            dimension_semantics=("parallel",),
            vmem_limit_bytes=VMEM_LIMIT),
    )(y2, sc, sh)
    return out.reshape(N, H, W, C)


# ---------------------- fused BatchNorm + ReLU + MaxPool 2x2 ------------------

def _bn_relu_pool_kernel(y_ref, sc_ref, sh_ref, o_ref):
    v = y_ref[...].astype(jnp.float32)                 # (N, 2, W, C)
    v = jnp.maximum(v * sc_ref[...] + sh_ref[...], 0.0)
    r = jnp.maximum(v[:, 0], v[:, 1])                  # (N, W, C)  vertical max
    r = jnp.maximum(r[:, 0::2, :], r[:, 1::2, :])      # (N, W/2, C) horizontal
    o_ref[...] = r.reshape(o_ref.shape).astype(o_ref.dtype)


def bn_relu_pool(y, scale, shift):
    """BN + ReLU + MaxPool(2,2) fused.  y: (N,H,W,C) bf16 -> (N,H/2,W/2,C) bf16."""
    N, H, W, C = y.shape
    Ho, Wo = H // 2, W // 2
    return pl.pallas_call(
        _bn_relu_pool_kernel,
        out_shape=jax.ShapeDtypeStruct((N, Ho, Wo, C), jnp.bfloat16),
        grid_spec=pltpu.PrefetchScalarGridSpec(
            num_scalar_prefetch=0, grid=(Ho,),
            in_specs=[pl.BlockSpec((N, 2, W, C), lambda i: (0, i, 0, 0)),
                      pl.BlockSpec((1, C), lambda i: (0, 0)),
                      pl.BlockSpec((1, C), lambda i: (0, 0))],
            out_specs=pl.BlockSpec((N, 1, Wo, C), lambda i: (0, i, 0, 0))),
        compiler_params=pltpu.CompilerParams(
            dimension_semantics=("parallel",),
            vmem_limit_bytes=VMEM_LIMIT),
    )(y, scale.reshape(1, C).astype(jnp.float32),
      shift.reshape(1, C).astype(jnp.float32))


# ----------------------------- Linear (+ReLU+Dropout) -------------------------

def _fc_kernel(x_ref, w_ref, b_ref, *rest, relu, dropout):
    if dropout:
        m_ref, o_ref, acc_ref = rest
    else:
        o_ref, acc_ref = rest
    k = pl.program_id(1)

    @pl.when(k == 0)
    def _():
        acc_ref[...] = jnp.zeros_like(acc_ref)

    acc_ref[...] += jnp.dot(x_ref[...], w_ref[...],
                            preferred_element_type=jnp.float32)

    @pl.when(k == pl.num_programs(1) - 1)
    def _():
        r = acc_ref[...] + b_ref[...]
        if relu:
            r = jnp.maximum(r, 0.0)
        if dropout:
            r = r * m_ref[...]
        o_ref[...] = r.astype(o_ref.dtype)


def linear(x, w, b, *, relu=False, drop_mask=None, out_dtype=jnp.float32,
           tn_target=512, tk_target=512):
    """x: (B,K); w: (K,Nout); Nout tiled on a parallel axis, K tiled 'arbitrary'."""
    B, K = x.shape
    Nout = w.shape[1]
    tk = tk_target if K % tk_target == 0 else K
    tn = tn_target if (Nout % tn_target == 0 and tn_target % 128 == 0) else Nout
    nj, nk = Nout // tn, K // tk
    dropout = drop_mask is not None

    x = x.astype(jnp.bfloat16)
    w = w.astype(jnp.bfloat16)
    b2 = b.reshape(1, Nout).astype(jnp.float32)

    in_specs = [pl.BlockSpec((B, tk), lambda j, k: (0, k)),
                pl.BlockSpec((tk, tn), lambda j, k: (k, j)),
                pl.BlockSpec((1, tn), lambda j, k: (0, j))]
    args = [x, w, b2]
    if dropout:
        in_specs.append(pl.BlockSpec((B, tn), lambda j, k: (0, j)))
        args.append(drop_mask.astype(jnp.float32))

    return pl.pallas_call(
        functools.partial(_fc_kernel, relu=relu, dropout=dropout),
        out_shape=jax.ShapeDtypeStruct((B, Nout), out_dtype),
        grid_spec=pltpu.PrefetchScalarGridSpec(
            num_scalar_prefetch=0, grid=(nj, nk),
            in_specs=in_specs,
            out_specs=pl.BlockSpec((B, tn), lambda j, k: (0, j)),
            scratch_shapes=[pltpu.VMEM((B, tn), jnp.float32)]),
        compiler_params=pltpu.CompilerParams(
            dimension_semantics=("parallel", "arbitrary"),
            vmem_limit_bytes=VMEM_LIMIT),
    )(*args)


# ------------------------------ params & forward ------------------------------

def init_vgg_params(key, in_channels=3, num_classes=1000, final_hw=1):
    params = {'convs': [], 'fcs': []}
    c_in = in_channels
    for a in CONV_ARCH:
        if a == 'M':
            continue
        key, k1 = jax.random.split(key)
        w = jax.random.normal(k1, (3, 3, c_in, a), jnp.float32) * jnp.sqrt(2.0 / (9 * c_in))
        b = jnp.zeros((a,), jnp.float32)
        gamma = jnp.ones((a,), jnp.float32)   # torch BatchNorm2d default init
        beta = jnp.zeros((a,), jnp.float32)
        params['convs'].append((w, b, gamma, beta))
        c_in = a
    feat = 512 * final_hw * final_hw
    for d_in, d_out in [(feat, 4096), (4096, 4096), (4096, num_classes)]:
        key, k1 = jax.random.split(key)
        w = jax.random.normal(k1, (d_in, d_out), jnp.float32) * jnp.sqrt(2.0 / d_in)
        b = jnp.zeros((d_out,), jnp.float32)
        params['fcs'].append((w, b))
    return params


def vgg_forward(params, x_nchw, dropout_seed=0):
    x = jnp.transpose(x_nchw, (0, 2, 3, 1)).astype(jnp.bfloat16)  # NCHW -> NHWC
    # Pad the 3 input channels to 8 for a friendlier lane layout in conv #1.
    if x.shape[-1] % 8 != 0:
        x = jnp.pad(x, ((0, 0), (0, 0), (0, 0), (0, 8 - x.shape[-1] % 8)))

    ci = 0
    i = 0
    n_items = len(CONV_ARCH)
    while i < n_items:
        a = CONV_ARCH[i]            # always an int here ('M' consumed below)
        w, b, gamma, beta = params['convs'][ci]
        ci += 1
        N, H, W, C = x.shape
        if w.shape[2] != C:         # first conv: zero-pad weight input channels
            w = jnp.pad(w, ((0, 0), (0, 0), (0, C - w.shape[2]), (0, 0)))
        w3 = w.reshape(3, 3 * C, a).astype(jnp.bfloat16)   # (dy, dx-major*C, Cout)
        y, s1, s2 = conv3x3_bn_stats(x, w3, b)
        # training-mode BatchNorm: biased batch variance from f32 partial sums.
        # (E[x^2]-E[x]^2 in f32; tolerance vs torch reflects bf16 conv operands.)
        cnt = jnp.float32(N * H * W)
        mean = jnp.sum(s1, axis=(0, 1)) / cnt
        var = jnp.maximum(jnp.sum(s2, axis=(0, 1)) / cnt - mean * mean, 0.0)
        scale = gamma / jnp.sqrt(var + BN_EPS)
        shift = beta - mean * scale
        if i + 1 < n_items and CONV_ARCH[i + 1] == 'M':
            x = bn_relu_pool(y, scale, shift)
            i += 2
        else:
            x = bn_relu(y, scale, shift)
            i += 1

    # flatten exactly like torch `out.reshape(N, -1)` on an NCHW tensor
    N = x.shape[0]
    feat = jnp.transpose(x, (0, 3, 1, 2)).reshape(N, -1)

    (w1, b1), (w2, b2), (w3_, b3) = params['fcs']
    # TODO(synk): training-mode dropout; masks come from jax.random (applied in
    # the FC epilogue), so the random stream cannot bit-match torch's RNG.
    key = jax.random.PRNGKey(dropout_seed)
    k1, k2 = jax.random.split(key)
    m1 = jax.random.bernoulli(k1, 0.5, (N, w1.shape[1])).astype(jnp.float32) * 2.0
    m2 = jax.random.bernoulli(k2, 0.5, (N, w2.shape[1])).astype(jnp.float32) * 2.0

    h = linear(feat, w1, b1, relu=True, drop_mask=m1, out_dtype=jnp.bfloat16)
    h = linear(h, w2, b2, relu=True, drop_mask=m2, out_dtype=jnp.bfloat16)
    return linear(h, w3_, b3, relu=False, out_dtype=jnp.float32)


# --------------------------------- main ---------------------------------------

if __name__ == "__main__":
    key = jax.random.PRNGKey(0)
    kp, kx = jax.random.split(key)

    # Small-shape stand-in for torch.randn((32, 3, 224, 224)): batch=2, 3
    # channels, 32x32 spatial.  After the five 2x2 maxpools one pixel remains,
    # so the classifier in_features is 512*(H/32)^2 (= 512*7*7 for 224 input,
    # exactly as in the reference module).
    N, H = 2, 32
    x = jax.random.normal(kx, (N, 3, H, H), jnp.float32)

    params = init_vgg_params(kp, in_channels=3, num_classes=1000,
                             final_hw=H // 32)

    out = vgg_forward(params, x)
    out = jax.block_until_ready(out)

    assert out.shape == (N, 1000), out.shape
    assert bool(jnp.all(jnp.isfinite(out)))
    print("KERNEL_OK")
</pallas_src>

<mosaic_0001>
module attributes {stable_mosaic.version = 11 : i64} {
  func.func @_conv3x3_kernel(%arg0: i32, %arg1: i32, %arg2: memref<1x34x34x8xbf16, #tpu.memory_space<vmem>>, %arg3: memref<3x24x64xbf16, #tpu.memory_space<vmem>>, %arg4: memref<1x64xf32, #tpu.memory_space<vmem>>, %arg5: memref<1x32x32x64xbf16, #tpu.memory_space<vmem>>, %arg6: memref<1x1x64xf32, #tpu.memory_space<vmem>>, %arg7: memref<1x1x64xf32, #tpu.memory_space<vmem>>) attributes {dimension_semantics = [#tpu.dimension_semantics<parallel>, #tpu.dimension_semantics<parallel>], iteration_bounds = array<i64: 2, 1>, scalar_prefetch = 0 : i64, scratch_operands = 0 : i64, tpu.core_type = #tpu.core_type<tc>, window_params = [{transform_indices = @transform_0, window_bounds = array<i64: 1, 34, 34, 8>}, {transform_indices = @transform_1, window_bounds = array<i64: 3, 24, 64>}, {transform_indices = @transform_2, window_bounds = array<i64: 1, 64>}, {transform_indices = @transform_3, window_bounds = array<i64: 1, 32, 32, 64>}, {transform_indices = @transform_4, window_bounds = array<i64: 1, 1, 64>}, {transform_indices = @transform_5, window_bounds = array<i64: 1, 1, 64>}]} {
    %c0 = arith.constant 0 : index
    %c0_0 = arith.constant 0 : index
    %0 = vector.load %arg4[%c0, %c0_0] : memref<1x64xf32, #tpu.memory_space<vmem>>, vector<1x64xf32>
    %cst = arith.constant 0.000000e+00 : f32
    %1 = vector.broadcast %cst : f32 to vector<1x64xf32>
    %cst_1 = arith.constant 0.000000e+00 : f32
    %2 = vector.broadcast %cst_1 : f32 to vector<1x64xf32>
    %cst_2 = arith.constant 0.000000e+00 : f32
    %3 = vector.broadcast %cst_2 : f32 to vector<512x64xf32>
    %c0_3 = arith.constant 0 : index
    %c0_4 = arith.constant 0 : index
    %c0_5 = arith.constant 0 : index
    %c0_6 = arith.constant 0 : index
    %4 = vector.load %arg2[%c0_3, %c0_4, %c0_5, %c0_6] : memref<1x34x34x8xbf16, #tpu.memory_space<vmem>>, vector<1x16x34x8xbf16>
    %5 = vector.shape_cast %4 : vector<1x16x34x8xbf16> to vector<16x34x8xbf16>
    %6 = vector.extract_strided_slice %5 {offsets = [0, 0, 0], sizes = [16, 32, 8], strides = [1, 1, 1]} : vector<16x34x8xbf16> to vector<16x32x8xbf16>
    %7 = vector.extract_strided_slice %5 {offsets = [0, 1, 0], sizes = [16, 32, 8], strides = [1, 1, 1]} : vector<16x34x8xbf16> to vector<16x32x8xbf16>
    %8 = vector.extract_strided_slice %5 {offsets = [0, 2, 0], sizes = [16, 32, 8], strides = [1, 1, 1]} : vector<16x34x8xbf16> to vector<16x32x8xbf16>
    %9 = tpu.concatenate %6, %7, %8 in 2 : vector<16x32x8xbf16>, vector<16x32x8xbf16>, vector<16x32x8xbf16> -> vector<16x32x24xbf16>
    %10 = vector.shape_cast %9 : vector<16x32x24xbf16> to vector<512x24xbf16>
    %c0_7 = arith.constant 0 : index
    %c0_8 = arith.constant 0 : index
    %c0_9 = arith.constant 0 : index
    %11 = vector.load %arg3[%c0_7, %c0_8, %c0_9] : memref<3x24x64xbf16, #tpu.memory_space<vmem>>, vector<1x24x64xbf16>
    %12 = vector.shape_cast %11 : vector<1x24x64xbf16> to vector<24x64xbf16>
    %cst_10 = arith.constant dense<0.000000e+00> : vector<512x64xf32>
    %13 = tpu.matmul %10, %12, %cst_10 {dimension_numbers = #tpu.dot_dimension_numbers<[1], [0], [0], [1], [0, 0, 1, 1], [], []>} : vector<512x24xbf16>, vector<24x64xbf16>, vector<512x64xf32> -> vector<512x64xf32>
    %14 = arith.addf %3, %13 : vector<512x64xf32>
    %c0_11 = arith.constant 0 : index
    %c1 = arith.constant 1 : index
    %c0_12 = arith.constant 0 : index
    %c0_13 = arith.constant 0 : index
    %15 = vector.load %arg2[%c0_11, %c1, %c0_12, %c0_13] : memref<1x34x34x8xbf16, #tpu.memory_space<vmem>>, vector<1x16x34x8xbf16>
    %16 = vector.shape_cast %15 : vector<1x16x34x8xbf16> to vector<16x34x8xbf16>
    %17 = vector.extract_strided_slice %16 {offsets = [0, 0, 0], sizes = [16, 32, 8], strides = [1, 1, 1]} : vector<16x34x8xbf16> to vector<16x32x8xbf16>
    %18 = vector.extract_strided_slice %16 {offsets = [0, 1, 0], sizes = [16, 32, 8], strides = [1, 1, 1]} : vector<16x34x8xbf16> to vector<16x32x8xbf16>
    %19 = vector.extract_strided_slice %16 {offsets = [0, 2, 0], sizes = [16, 32, 8], strides = [1, 1, 1]} : vector<16x34x8xbf16> to vector<16x32x8xbf16>
    %20 = tpu.concatenate %17, %18, %19 in 2 : vector<16x32x8xbf16>, vector<16x32x8xbf16>, vector<16x32x8xbf16> -> vector<16x32x24xbf16>
    %21 = vector.shape_cast %20 : vector<16x32x24xbf16> to vector<512x24xbf16>
    %c1_14 = arith.constant 1 : index
    %c0_15 = arith.constant 0 : index
    %c0_16 = arith.constant 0 : index
    %22 = vector.load %arg3[%c1_14, %c0_15, %c0_16] : memref<3x24x64xbf16, #tpu.memory_space<vmem>>, vector<1x24x64xbf16>
    %23 = vector.shape_cast %22 : vector<1x24x64xbf16> to vector<24x64xbf16>
    %cst_17 = arith.constant dense<0.000000e+00> : vector<512x64xf32>
    %24 = tpu.matmul %21, %23, %cst_17 {dimension_numbers = #tpu.dot_dimension_numbers<[1], [0], [0], [1], [0, 0, 1, 1], [], []>} : vector<512x24xbf16>, vector<24x64xbf16>, vector<512x64xf32> -> vector<512x64xf32>
    %25 = arith.addf %14, %24 : vector<512x64xf32>
    %c0_18 = arith.constant 0 : index
    %c2 = arith.constant 2 : index
    %c0_19 = arith.constant 0 : index
    %c0_20 = arith.constant 0 : index
    %26 = vector.load %arg2[%c0_18, %c2, %c0_19, %c0_20] : memref<1x34x34x8xbf16, #tpu.memory_space<vmem>>, vector<1x16x34x8xbf16>
    %27 = vector.shape_cast %26 : vector<1x16x34x8xbf16> to vector<16x34x8xbf16>
    %28 = vector.extract_strided_slice %27 {offsets = [0, 0, 0], sizes = [16, 32, 8], strides = [1, 1, 1]} : vector<16x34x8xbf16> to vector<16x32x8xbf16>
    %29 = vector.extract_strided_slice %27 {offsets = [0, 1, 0], sizes = [16, 32, 8], strides = [1, 1, 1]} : vector<16x34x8xbf16> to vector<16x32x8xbf16>
    %30 = vector.extract_strided_slice %27 {offsets = [0, 2, 0], sizes = [16, 32, 8], strides = [1, 1, 1]} : vector<16x34x8xbf16> to vector<16x32x8xbf16>
    %31 = tpu.concatenate %28, %29, %30 in 2 : vector<16x32x8xbf16>, vector<16x32x8xbf16>, vector<16x32x8xbf16> -> vector<16x32x24xbf16>
    %32 = vector.shape_cast %31 : vector<16x32x24xbf16> to vector<512x24xbf16>
    %c2_21 = arith.constant 2 : index
    %c0_22 = arith.constant 0 : index
    %c0_23 = arith.constant 0 : index
    %33 = vector.load %arg3[%c2_21, %c0_22, %c0_23] : memref<3x24x64xbf16, #tpu.memory_space<vmem>>, vector<1x24x64xbf16>
    %34 = vector.shape_cast %33 : vector<1x24x64xbf16> to vector<24x64xbf16>
    %cst_24 = arith.constant dense<0.000000e+00> : vector<512x64xf32>
    %35 = tpu.matmul %32, %34, %cst_24 {dimension_numbers = #tpu.dot_dimension_numbers<[1], [0], [0], [1], [0, 0, 1, 1], [], []>} : vector<512x24xbf16>, vector<24x64xbf16>, vector<512x64xf32> -> vector<512x64xf32>
    %36 = arith.addf %25, %35 : vector<512x64xf32>
    %37 = vector.broadcast %0 : vector<1x64xf32> to vector<512x64xf32>
    %38 = arith.addf %36, %37 : vector<512x64xf32>
    %39 = vector.shape_cast %38 : vector<512x64xf32> to vector<16x32x64xf32>
    %40 = arith.truncf %39 : vector<16x32x64xf32> to vector<16x32x64xbf16>
    %c0_25 = arith.constant 0 : index
    %c0_26 = arith.constant 0 : index
    %c0_27 = arith.constant 0 : index
    %c0_28 = arith.constant 0 : index
    %41 = vector.load %arg5[%c0_25, %c0_26, %c0_27, %c0_28] : memref<1x32x32x64xbf16, #tpu.memory_space<vmem>>, vector<1x16x32x64xbf16>
    %42 = vector.shape_cast %41 : vector<1x16x32x64xbf16> to vector<16x32x64xbf16>
    %43 = vector.shape_cast %40 : vector<16x32x64xbf16> to vector<1x16x32x64xbf16>
    tpu.vector_store %arg5[%c0_25, %c0_26, %c0_27, %c0_28], %43 {strides = array<i32>} : memref<1x32x32x64xbf16, #tpu.memory_space<vmem>>, vector<1x16x32x64xbf16>,
    %cst_29 = arith.constant dense<0.000000e+00> : vector<64xf32>
    %44 = vector.multi_reduction <add>, %38, %cst_29 [0] : vector<512x64xf32> to vector<64xf32>
    %45 = vector.shape_cast %44 : vector<64xf32> to vector<1x64xf32>
    %46 = arith.addf %1, %45 : vector<1x64xf32>
    %47 = arith.mulf %38, %38 : vector<512x64xf32>
    %cst_30 = arith.constant dense<0.000000e+00> : vector<64xf32>
    %48 = vector.multi_reduction <add>, %47, %cst_30 [0] : vector<512x64xf32> to vector<64xf32>
    %49 = vector.shape_cast %48 : vector<64xf32> to vector<1x64xf32>
    %50 = arith.addf %2, %49 : vector<1x64xf32>
    %cst_31 = arith.constant 0.000000e+00 : f32
    %51 = vector.broadcast %cst_31 : f32 to vector<512x64xf32>
    %c0_32 = arith.constant 0 : index
    %c16 = arith.constant 16 : index
    %c0_33 = arith.constant 0 : index
    %c0_34 = arith.constant 0 : index
    %52 = vector.load %arg2[%c0_32, %c16, %c0_33, %c0_34] : memref<1x34x34x8xbf16, #tpu.memory_space<vmem>>, vector<1x16x34x8xbf16>
    %53 = vector.shape_cast %52 : vector<1x16x34x8xbf16> to vector<16x34x8xbf16>
    %54 = vector.extract_strided_slice %53 {offsets = [0, 0, 0], sizes = [16, 32, 8], strides = [1, 1, 1]} : vector<16x34x8xbf16> to vector<16x32x8xbf16>
    %55 = vector.extract_strided_slice %53 {offsets = [0, 1, 0], sizes = [16, 32, 8], strides = [1, 1, 1]} : vector<16x34x8xbf16> to vector<16x32x8xbf16>
    %56 = vector.extract_strided_slice %53 {offsets = [0, 2, 0], sizes = [16, 32, 8], strides = [1, 1, 1]} : vector<16x34x8xbf16> to vector<16x32x8xbf16>
    %57 = tpu.concatenate %54, %55, %56 in 2 : vector<16x32x8xbf16>, vector<16x32x8xbf16>, vector<16x32x8xbf16> -> vector<16x32x24xbf16>
    %58 = vector.shape_cast %57 : vector<16x32x24xbf16> to vector<512x24xbf16>
    %c0_35 = arith.constant 0 : index
    %c0_36 = arith.constant 0 : index
    %c0_37 = arith.constant 0 : index
    %59 = vector.load %arg3[%c0_35, %c0_36, %c0_37] : memref<3x24x64xbf16, #tpu.memory_space<vmem>>, vector<1x24x64xbf16>
    %60 = vector.shape_cast %59 : vector<1x24x64xbf16> to vector<24x64xbf16>
    %cst_38 = arith.constant dense<0.000000e+00> : vector<512x64xf32>
    %61 = tpu.matmul %58, %60, %cst_38 {dimension_numbers = #tpu.dot_dimension_numbers<[1], [0], [0], [1], [0, 0, 1, 1], [], []>} : vector<512x24xbf16>, vector<24x64xbf16>, vector<512x64xf32> -> vector<512x64xf32>
    %62 = arith.addf %51, %61 : vector<512x64xf32>
    %c0_39 = arith.constant 0 : index
    %c17 = arith.constant 17 : index
    %c0_40 = arith.constant 0 : index
    %c0_41 = arith.constant 0 : index
    %63 = vector.load %arg2[%c0_39, %c17, %c0_40, %c0_41] : memref<1x34x34x8xbf16, #tpu.memory_space<vmem>>, vector<1x16x34x8xbf16>
    %64 = vector.shape_cast %63 : vector<1x16x34x8xbf16> to vector<16x34x8xbf16>
    %65 = vector.extract_strided_slice %64 {offsets = [0, 0, 0], sizes = [16, 32, 8], strides = [1, 1, 1]} : vector<16x34x8xbf16> to vector<16x32x8xbf16>
    %66 = vector.extract_strided_slice %64 {offsets = [0, 1, 0], sizes = [16, 32, 8], strides = [1, 1, 1]} : vector<16x34x8xbf16> to vector<16x32x8xbf16>
    %67 = vector.extract_strided_slice %64 {offsets = [0, 2, 0], sizes = [16, 32, 8], strides = [1, 1, 1]} : vector<16x34x8xbf16> to vector<16x32x8xbf16>
    %68 = tpu.concatenate %65, %66, %67 in 2 : vector<16x32x8xbf16>, vector<16x32x8xbf16>, vector<16x32x8xbf16> -> vector<16x32x24xbf16>
    %69 = vector.shape_cast %68 : vector<16x32x24xbf16> to vector<512x24xbf16>
    %c1_42 = arith.constant 1 : index
    %c0_43 = arith.constant 0 : index
    %c0_44 = arith.constant 0 : index
    %70 = vector.load %arg3[%c1_42, %c0_43, %c0_44] : memref<3x24x64xbf16, #tpu.memory_space<vmem>>, vector<1x24x64xbf16>
    %71 = vector.shape_cast %70 : vector<1x24x64xbf16> to vector<24x64xbf16>
    %cst_45 = arith.constant dense<0.000000e+00> : vector<512x64xf32>
    %72 = tpu.matmul %69, %71, %cst_45 {dimension_numbers = #tpu.dot_dimension_numbers<[1], [0], [0], [1], [0, 0, 1, 1], [], []>} : vector<512x24xbf16>, vector<24x64xbf16>, vector<512x64xf32> -> vector<512x64xf32>
    %73 = arith.addf %62, %72 : vector<512x64xf32>
    %c0_46 = arith.constant 0 : index
    %c18 = arith.constant 18 : index
    %c0_47 = arith.constant 0 : index
    %c0_48 = arith.constant 0 : index
    %74 = vector.load %arg2[%c0_46, %c18, %c0_47, %c0_48] : memref<1x34x34x8xbf16, #tpu.memory_space<vmem>>, vector<1x16x34x8xbf16>
    %75 = vector.shape_cast %74 : vector<1x16x34x8xbf16> to vector<16x34x8xbf16>
    %76 = vector.extract_strided_slice %75 {offsets = [0, 0, 0], sizes = [16, 32, 8], strides = [1, 1, 1]} : vector<16x34x8xbf16> to vector<16x32x8xbf16>
    %77 = vector.extract_strided_slice %75 {offsets = [0, 1, 0], sizes = [16, 32, 8], strides = [1, 1, 1]} : vector<16x34x8xbf16> to vector<16x32x8xbf16>
    %78 = vector.extract_strided_slice %75 {offsets = [0, 2, 0], sizes = [16, 32, 8], strides = [1, 1, 1]} : vector<16x34x8xbf16> to vector<16x32x8xbf16>
    %79 = tpu.concatenate %76, %77, %78 in 2 : vector<16x32x8xbf16>, vector<16x32x8xbf16>, vector<16x32x8xbf16> -> vector<16x32x24xbf16>
    %80 = vector.shape_cast %79 : vector<16x32x24xbf16> to vector<512x24xbf16>
    %c2_49 = arith.constant 2 : index
    %c0_50 = arith.constant 0 : index
    %c0_51 = arith.constant 0 : index
    %81 = vector.load %arg3[%c2_49, %c0_50, %c0_51] : memref<3x24x64xbf16, #tpu.memory_space<vmem>>, vector<1x24x64xbf16>
    %82 = vector.shape_cast %81 : vector<1x24x64xbf16> to vector<24x64xbf16>
    %cst_52 = arith.constant dense<0.000000e+00> : vector<512x64xf32>
    %83 = tpu.matmul %80, %82, %cst_52 {dimension_numbers = #tpu.dot_dimension_numbers<[1], [0], [0], [1], [0, 0, 1, 1], [], []>} : vector<512x24xbf16>, vector<24x64xbf16>, vector<512x64xf32> -> vector<512x64xf32>
    %84 = arith.addf %73, %83 : vector<512x64xf32>
    %85 = vector.broadcast %0 : vector<1x64xf32> to vector<512x64xf32>
    %86 = arith.addf %84, %85 : vector<512x64xf32>
    %87 = vector.shape_cast %86 : vector<512x64xf32> to vector<16x32x64xf32>
    %88 = arith.truncf %87 : vector<16x32x64xf32> to vector<16x32x64xbf16>
    %c0_53 = arith.constant 0 : index
    %c16_54 = arith.constant 16 : index
    %c0_55 = arith.constant 0 : index
    %c0_56 = arith.constant 0 : index
    %89 = vector.load %arg5[%c0_53, %c16_54, %c0_55, %c0_56] : memref<1x32x32x64xbf16, #tpu.memory_space<vmem>>, vector<1x16x32x64xbf16>
    %90 = vector.shape_cast %89 : vector<1x16x32x64xbf16> to vector<16x32x64xbf16>
    %91 = vector.shape_cast %88 : vector<16x32x64xbf16> to vector<1x16x32x64xbf16>
    tpu.vector_store %arg5[%c0_53, %c16_54, %c0_55, %c0_56], %91 {strides = array<i32>} : memref<1x32x32x64xbf16, #tpu.memory_space<vmem>>, vector<1x16x32x64xbf16>,
    %cst_57 = arith.constant dense<0.000000e+00> : vector<64xf32>
    %92 = vector.multi_reduction <add>, %86, %cst_57 [0] : vector<512x64xf32> to vector<64xf32>
    %93 = vector.shape_cast %92 : vector<64xf32> to vector<1x64xf32>
    %94 = arith.addf %46, %93 : vector<1x64xf32>
    %95 = arith.mulf %86, %86 : vector<512x64xf32>
    %cst_58 = arith.constant dense<0.000000e+00> : vector<64xf32>
    %96 = vector.multi_reduction <add>, %95, %cst_58 [0] : vector<512x64xf32> to vector<64xf32>
    %97 = vector.shape_cast %96 : vector<64xf32> to vector<1x64xf32>
    %98 = arith.addf %50, %97 : vector<1x64xf32>
    %99 = vector.shape_cast %94 : vector<1x64xf32> to vector<1x1x64xf32>
    %c0_59 = arith.constant 0 : index
    %c0_60 = arith.constant 0 : index
    %c0_61 = arith.constant 0 : index
    %100 = vector.load %arg6[%c0_59, %c0_60, %c0_61] : memref<1x1x64xf32, #tpu.memory_space<vmem>>, vector<1x1x64xf32>
    tpu.vector_store %arg6[%c0_59, %c0_60, %c0_61], %99 {strides = array<i32>} : memref<1x1x64xf32, #tpu.memory_space<vmem>>, vector<1x1x64xf32>,
    %101 = vector.shape_cast %98 : vector<1x64xf32> to vector<1x1x64xf32>
    %c0_62 = arith.constant 0 : index
    %c0_63 = arith.constant 0 : index
    %c0_64 = arith.constant 0 : index
    %102 = vector.load %arg7[%c0_62, %c0_63, %c0_64] : memref<1x1x64xf32, #tpu.memory_space<vmem>>, vector<1x1x64xf32>
    tpu.vector_store %arg7[%c0_62, %c0_63, %c0_64], %101 {strides = array<i32>} : memref<1x1x64xf32, #tpu.memory_space<vmem>>, vector<1x1x64xf32>,
    return
  }
  func.func @transform_0(%arg0: i32, %arg1: i32) -> (i32, i32, i32, i32) {
    %c0_i32 = arith.constant 0 : i32
    %c0_i32_0 = arith.constant 0 : i32
    %c0_i32_1 = arith.constant 0 : i32
    %c0_i32_2 = arith.constant 0 : i32
    return %arg0, %c0_i32, %c0_i32_0, %c0_i32_1 : i32, i32, i32, i32
  }
  func.func @transform_1(%arg0: i32, %arg1: i32) -> (i32, i32, i32) {
    %c0_i32 = arith.constant 0 : i32
    %c0_i32_0 = arith.constant 0 : i32
    %c0_i32_1 = arith.constant 0 : i32
    return %c0_i32, %c0_i32_0, %arg1 : i32, i32, i32
  }
  func.func @transform_2(%arg0: i32, %arg1: i32) -> (i32, i32) {
    %c0_i32 = arith.constant 0 : i32
    %c0_i32_0 = arith.constant 0 : i32
    return %c0_i32, %arg1 : i32, i32
  }
  func.func @transform_3(%arg0: i32, %arg1: i32) -> (i32, i32, i32, i32) {
    %c0_i32 = arith.constant 0 : i32
    %c0_i32_0 = arith.constant 0 : i32
    %c0_i32_1 = arith.constant 0 : i32
    return %arg0, %c0_i32, %c0_i32_0, %arg1 : i32, i32, i32, i32
  }
  func.func @transform_4(%arg0: i32, %arg1: i32) -> (i32, i32, i32) {
    %c0_i32 = arith.constant 0 : i32
    %c0_i32_0 = arith.constant 0 : i32
    return %arg0, %c0_i32, %arg1 : i32, i32, i32
  }
  func.func @transform_5(%arg0: i32, %arg1: i32) -> (i32, i32, i32) {
    %c0_i32 = arith.constant 0 : i32
    %c0_i32_0 = arith.constant 0 : i32
    return %arg0, %c0_i32, %arg1 : i32, i32, i32
  }
}

</mosaic_0001>

<llo_original>
// kernel: tpu_custom_call.1
$region0: #{tpu_custom_call.1}
  #allocation0 [shape = 'u32[]', space=smem, size = 0x4, offset = 0x4, fixed_abs, tag = 'smem constant byte address 0x4 - core index']
  #allocation1 [shape = 'u32[144,128]{1,0:T(1,128)}', space=vmem, size = 0x12000, scoped, tag = 'internal scratch']
  %s0 = inlined_call_operand.vmem [shape: bf16[2,34,34,8], index: 0, kind: input, shape index: {}]
  %s1 = inlined_call_operand.vmem [shape: bf16[3,24,64], index: 1, kind: input, shape index: {}]
  %s2 = inlined_call_operand.vmem [shape: f32[1,64], index: 2, kind: input, shape index: {}]
  %s3 = inlined_call_operand.hbm [shape: bf16[2,32,32,64], index: 3, kind: output, shape index: {0}]
  %s4 = inlined_call_operand.hbm [shape: f32[2,1,64], index: 4, kind: output, shape index: {1}]
  %s5 = inlined_call_operand.hbm [shape: f32[2,1,64], index: 5, kind: output, shape index: {2}]
  %6 = xla_tuple %s3, %s4, %s5
  %s7 = sld [smem:[#allocation0]]
  $region61: #{tpu_custom_call.1} parent=0
    _
  %s9 = ssub.s32 1, %s7
  %s10 = scalar_select 0, %s9, %s7
  $region1: #{tpu_custom_call.1} parent=0
    #allocation2 [shape = 'u8[524288]{0}', space=vmem, size = 0x80000, scoped, tag = 'output window, operand 0']
    #allocation3 [shape = 's32[2]{0}', space=sflag, size = 0x8, scoped, tag = 'scoped memory for tpu_custom_call.1']
    #allocation4 [shape = 'u8[1024]{0}', space=vmem, size = 0x400, scoped, tag = 'output window, operand 1']
    #allocation5 [shape = 's32[2]{0}', space=sflag, size = 0x8, scoped, tag = 'scoped memory for tpu_custom_call.1']
    #allocation6 [shape = 'u8[1024]{0}', space=vmem, size = 0x400, scoped, tag = 'output window, operand 2']
    %11 = vsyncpa [#allocation3], 0
    %s12 = scalar_lea.sflag [#allocation3], 1
    %13 = vsyncpa %s12, 0
    %14 = vsyncpa [#allocation5], 0
    %s15 = scalar_lea.sflag [#allocation5], 1
    %16 = vsyncpa %s15, 0
    loop: start=0, step=1, limit=4
    $region2: #{tpu_custom_call.1} parent=1 // loop_pre_header
      _
    $region3: #{tpu_custom_call.1} parent=1 // loop_header
      %s18 = sphi 0, %s22
      %p19 = scmp.ge.s32.totalorder %s18, 4
      %s25 = sphi 0, %s37
      %s26 = sphi 0, %s33
      %s27 = sphi 0, %s25
      %s28 = sphi 0, %s26
      %s29 = sphi 0, %s27
      %s30 = sphi 0, %s28
      %s40 = sphi 0, %s42
      %s43 = sphi 0, %s40
      %s44 = sphi 0, %s43
      %s60 = sphi 0, %s44
      %s66 = sphi 0, %s68
      %s69 = sphi 0, %s66
      %s70 = sphi 0, %s69
      %s86 = sphi 0, %s70
      %s92 = sphi 0, %s94
      %s95 = sphi 0, %s92
      %s96 = sphi 0, %s95
      %s112 = sphi 0, %s96
      %s120 = sphi 0, %s122
      %s123 = sphi 0, %s120
      %s124 = sphi 0, %s123
      %s140 = sphi 0, %s124
      %s148 = sphi 0, %s150
      %s151 = sphi 0, %s148
      %s152 = sphi 0, %s151
      %s168 = sphi 0, %s152
      %s176 = sphi 0, %s178
      %s179 = sphi 0, %s176
      %s180 = sphi 0, %s179
      %s196 = sphi 0, %s180
    $region4: #{tpu_custom_call.1} parent=1 // loop_header_branch
      %21 = sbr.rel (%p19) target = $region8
    $region5: #{tpu_custom_call.1} parent=1 // loop_body
      %s23 = ssub.s32 %s18, 1
      %s24 = ssub.s32 %s18, 2
      %s31 = sadd.s32 1, %s26
      %p32 = scmp.ge.s32.totalorder %s31, 1
      %s33 = scalar_select %p32, 0, %s31
      %s34 = sadd.s32 1, %s25
      %s35 = scalar_select %p32, %s34, %s25
      %p36 = scmp.ge.s32.totalorder %s35, 2
      %s37 = scalar_select %p36, 0, %s35
      %s38 = ssub.s32 %s25, %s37
      %p39 = scmp.eq.s32.totalorder %s38, 0
      %s41 = sadd.s32 %s40, 1
      %s42 = scalar_select %p39, %s40, %s41
      %p45 = pneg %p39
      %p46 = scmp.eq.s32.totalorder %s18, 1
      %p47 = por %p45, %p46
      %p48 = scmp.ne.s32.totalorder %s40, %s43
      %p49 = scmp.eq.s32.totalorder %s18, 0
      %p50 = por %p48, %p49
      %p51 = scmp.ne.s32.totalorder %s40, %s43
      %p52 = scmp.eq.s32.totalorder %s23, 1
      %p53 = por %p51, %p52
      %p54 = scmp.ne.s32.totalorder %s43, %s44
      %p55 = scmp.eq.s32.totalorder %s23, 0
      %p56 = por %p54, %p55
      %p57 = scmp.ne.s32.totalorder %s43, %s44
      %p58 = scmp.eq.s32.totalorder %s24, 1
      %p59 = por %p57, %p58
      %p61 = scmp.ne.s32.totalorder %s44, %s60
      %p62 = scmp.eq.s32.totalorder %s24, 0
      %p63 = por %p61, %p62
      %s64 = ssub.s32 %s26, %s33
      %p65 = scmp.eq.s32.totalorder %s64, 0
      %s67 = sadd.s32 %s66, 1
      %s68 = scalar_select %p65, %s66, %s67
      %p71 = pneg %p65
      %p72 = scmp.eq.s32.totalorder %s18, 1
      %p73 = por %p71, %p72
      %p74 = scmp.ne.s32.totalorder %s66, %s69
      %p75 = scmp.eq.s32.totalorder %s18, 0
      %p76 = por %p74, %p75
      %p77 = scmp.ne.s32.totalorder %s66, %s69
      %p78 = scmp.eq.s32.totalorder %s23, 1
      %p79 = por %p77, %p78
      %p80 = scmp.ne.s32.totalorder %s69, %s70
      %p81 = scmp.eq.s32.totalorder %s23, 0
      %p82 = por %p80, %p81
      %p83 = scmp.ne.s32.totalorder %s69, %s70
      %p84 = scmp.eq.s32.totalorder %s24, 1
      %p85 = por %p83, %p84
      %p87 = scmp.ne.s32.totalorder %s70, %s86
      %p88 = scmp.eq.s32.totalorder %s24, 0
      %p89 = por %p87, %p88
      %s90 = ssub.s32 %s26, %s33
      %p91 = scmp.eq.s32.totalorder %s90, 0
      %s93 = sadd.s32 %s92, 1
      %s94 = scalar_select %p91, %s92, %s93
      %p97 = pneg %p91
      %p98 = scmp.eq.s32.totalorder %s18, 1
      %p99 = por %p97, %p98
      %p100 = scmp.ne.s32.totalorder %s92, %s95
      %p101 = scmp.eq.s32.totalorder %s18, 0
      %p102 = por %p100, %p101
      %p103 = scmp.ne.s32.totalorder %s92, %s95
      %p104 = scmp.eq.s32.totalorder %s23, 1
      %p105 = por %p103, %p104
      %p106 = scmp.ne.s32.totalorder %s95, %s96
      %p107 = scmp.eq.s32.totalorder %s23, 0
      %p108 = por %p106, %p107
      %p109 = scmp.ne.s32.totalorder %s95, %s96
      %p110 = scmp.eq.s32.totalorder %s24, 1
      %p111 = por %p109, %p110
      %p113 = scmp.ne.s32.totalorder %s96, %s112
      %p114 = scmp.eq.s32.totalorder %s24, 0
      %p115 = por %p113, %p114
      %s116 = ssub.s32 %s25, %s37
      %s117 = ssub.s32 %s26, %s33
      %s118 = sor.u32 %s116, %s117
      %p119 = scmp.eq.s32.totalorder %s118, 0
      %s121 = sadd.s32 %s120, 1
      %s122 = scalar_select %p119, %s120, %s121
      %p125 = pneg %p119
      %p126 = scmp.eq.s32.totalorder %s18, 1
      %p127 = por %p125, %p126
      %p128 = scmp.ne.s32.totalorder %s120, %s123
      %p129 = scmp.eq.s32.totalorder %s18, 0
      %p130 = por %p128, %p129
      %p131 = scmp.ne.s32.totalorder %s120, %s123
      %p132 = scmp.eq.s32.totalorder %s23, 1
      %p133 = por %p131, %p132
      %p134 = scmp.ne.s32.totalorder %s123, %s124
      %p135 = scmp.eq.s32.totalorder %s23, 0
      %p136 = por %p134, %p135
      %p137 = scmp.ne.s32.totalorder %s123, %s124
      %p138 = scmp.eq.s32.totalorder %s24, 1
      %p139 = por %p137, %p138
      %p141 = scmp.ne.s32.totalorder %s124, %s140
      %p142 = scmp.eq.s32.totalorder %s24, 0
      %p143 = por %p141, %p142
      %s144 = ssub.s32 %s25, %s37
      %s145 = ssub.s32 %s26, %s33
      %s146 = sor.u32 %s144, %s145
      %p147 = scmp.eq.s32.totalorder %s146, 0
      %s149 = sadd.s32 %s148, 1
      %s150 = scalar_select %p147, %s148, %s149
      %p153 = pneg %p147
      %p154 = scmp.eq.s32.totalorder %s18, 1
      %p155 = por %p153, %p154
      %p156 = scmp.ne.s32.totalorder %s148, %s151
      %p157 = scmp.eq.s32.totalorder %s18, 0
      %p158 = por %p156, %p157
      %p159 = scmp.ne.s32.totalorder %s148, %s151
      %p160 = scmp.eq.s32.totalorder %s23, 1
      %p161 = por %p159, %p160
      %p162 = scmp.ne.s32.totalorder %s151, %s152
      %p163 = scmp.eq.s32.totalorder %s23, 0
      %p164 = por %p162, %p163
      %p165 = scmp.ne.s32.totalorder %s151, %s152
      %p166 = scmp.eq.s32.totalorder %s24, 1
      %p167 = por %p165, %p166
      %p169 = scmp.ne.s32.totalorder %s152, %s168
      %p170 = scmp.eq.s32.totalorder %s24, 0
      %p171 = por %p169, %p170
      %s172 = ssub.s32 %s25, %s37
      %s173 = ssub.s32 %s26, %s33
      %s174 = sor.u32 %s172, %s173
      %p175 = scmp.eq.s32.totalorder %s174, 0
      %s177 = sadd.s32 %s176, 1
      %s178 = scalar_select %p175, %s176, %s177
      %p181 = pneg %p175
      %p182 = scmp.eq.s32.totalorder %s18, 1
      %p183 = por %p181, %p182
      %p184 = scmp.ne.s32.totalorder %s176, %s179
      %p185 = scmp.eq.s32.totalorder %s18, 0
      %p186 = por %p184, %p185
      %p187 = scmp.ne.s32.totalorder %s176, %s179
      %p188 = scmp.eq.s32.totalorder %s23, 1
      %p189 = por %p187, %p188
      %p190 = scmp.ne.s32.totalorder %s179, %s180
      %p191 = scmp.eq.s32.totalorder %s23, 0
      %p192 = por %p190, %p191
      %p193 = scmp.ne.s32.totalorder %s179, %s180
      %p194 = scmp.eq.s32.totalorder %s24, 1
      %p195 = por %p193, %p194
      %p197 = scmp.ne.s32.totalorder %s180, %s196
      %p198 = scmp.eq.s32.totalorder %s24, 0
      %p199 = por %p197, %p198
      %p200 = scmp.le.s32.totalorder 1, %s18
      %p201 = scmp.lt.s32.totalorder %s18, 3
      %p202 = pnand %p200, %p201
      %p203 = pneg %p202
      // Predicated region
      $region9: #{tpu_custom_call.1} parent=5 // pred_check
        _
      $region10: #{tpu_custom_call.1} parent=5 // pred_check_branch
        %205 = sbr.rel (%p202) target = $region12
      $region11: #{tpu_custom_call.1} parent=5 // pred_region
        %s206 = ssub.s32 %s18, 1
        // Predicated region
        $region13: #{tpu_custom_call.1} parent=11 // pred_check
          %p207 = pneg %p82
        $region14: #{tpu_custom_call.1} parent=11 // pred_check_branch
          %209 = sbr.rel (%p207) target = $region16
        $region15: #{tpu_custom_call.1} parent=11 // pred_region
          %p210 = scmp.lt.s32.totalorder %s28, 0
          %s211 = scalar_select %p210, %s28, 0
          %s212 = smul.addr %s211, 4
          %s213 = scalar_lea.vmem %s1, %s212
        $region16: #{tpu_custom_call.1} parent=11 // pred_fallthru
          _
        // Predicated region
        $region17: #{tpu_custom_call.1} parent=11 // pred_check
          %p214 = pneg %p108
        $region18: #{tpu_custom_call.1} parent=11 // pred_check_branch
          %216 = sbr.rel (%p214) target = $region20
        $region19: #{tpu_custom_call.1} parent=11 // pred_region
          %p217 = scmp.lt.s32.totalorder %s28, 0
          %s218 = scalar_select %p217, %s28, 0
          %s219 = scalar_lea.vmem %s2, %s218
        $region20: #{tpu_custom_call.1} parent=11 // pred_fallthru
          _
      $region12: #{tpu_custom_call.1} parent=5 // pred_fallthru
        _
      %p220 = scmp.lt.s32.totalorder %s18, 2
      // Predicated region
      $region21: #{tpu_custom_call.1} parent=5 // pred_check
        %p221 = pneg %p220
      $region22: #{tpu_custom_call.1} parent=5 // pred_check_branch
        %223 = sbr.rel (%p221) target = $region24
      $region23: #{tpu_custom_call.1} parent=5 // pred_region
        // Predicated region
        $region25: #{tpu_custom_call.1} parent=23 // pred_check
          %p224 = pneg %p50
        $region26: #{tpu_custom_call.1} parent=23 // pred_check_branch
          %226 = sbr.rel (%p224) target = $region28
        $region27: #{tpu_custom_call.1} parent=23 // pred_region
          %p227 = scmp.lt.s32.totalorder %s25, 1
          %s228 = scalar_select %p227, %s25, 1
          %s229 = smul.addr %s228, 170
          %s230 = smul.addr %s229, 4
          %s231 = scalar_lea.vmem %s0, %s230
        $region28: #{tpu_custom_call.1} parent=23 // pred_fallthru
          _
      $region24: #{tpu_custom_call.1} parent=5 // pred_fallthru
        _
      %p232 = scmp.le.s32.totalorder 1, %s18
      %p233 = scmp.lt.s32.totalorder %s18, 3
      %p234 = pnand %p232, %p233
      %p235 = pneg %p234
      // Predicated region
      $region29: #{tpu_custom_call.1} parent=5 // pred_check
        _
      $region30: #{tpu_custom_call.1} parent=5 // pred_check_branch
        %237 = sbr.rel (%p234) target = $region32
      $region31: #{tpu_custom_call.1} parent=5 // pred_region
        %s238 = ssub.s32 %s18, 1
        %p239 = scmp.lt.s32.totalorder %s27, 1
        %s240 = scalar_select %p239, %s27, 1
        %s241 = smul.addr %s240, 170
        %s242 = smul.addr %s241, 4
        %s243 = scalar_lea.vmem %s0, %s242
        %p244 = pneg %p56
        %p245 = pneg %p53
        %p246 = scmp.lt.s32.totalorder %s28, 0
        %s247 = scalar_select %p246, %s28, 0
        %s248 = smul.addr %s247, 4
        %s249 = scalar_lea.vmem %s1, %s248
        %p250 = pneg %p82
        %p251 = pneg %p79
        %p252 = scmp.lt.s32.totalorder %s28, 0
        %s253 = scalar_select %p252, %s28, 0
        %s254 = scalar_lea.vmem %s2, %s253
        %p255 = pneg %p108
        %p256 = pneg %p105
        %p257 = pneg %p136
        %p258 = pneg %p133
        %s259 = sand.u32 %s123, 1
        %s260 = scalar_lea.sflag [#allocation3], %s259
        %s261 = sand.u32 %s123, 1
        %s262 = smul.addr %s261, 512
        %s263 = scalar_lea.vmem [#allocation2], %s262
        %p264 = pneg %p164
        %p265 = pneg %p161
        %s266 = sand.u32 %s23, 1
        %s267 = scalar_lea.sflag [#allocation5], %s266
        %s268 = sand.u32 %s151, 1
        %s269 = scalar_lea.vmem [#allocation4], %s268
        %p270 = pneg %p192
        %p271 = pneg %p189
        %s272 = sand.u32 %s23, 1
        %s273 = scalar_lea.sflag [#allocation5], %s272
        %s274 = sand.u32 %s179, 1
        %s275 = scalar_lea.vmem [#allocation6], %s274
        %p276 = scmp.lt.s32.totalorder %s27, 1
        %s277 = scalar_select %p276, %s27, 1
        %s278 = smul.addr %s277, 170
        %s279 = smul.addr %s278, 4
        %s280 = scalar_lea.vmem %s0, %s279
        %p281 = scmp.lt.s32.totalorder %s28, 0
        %s282 = scalar_select %p281, %s28, 0
        %s283 = smul.addr %s282, 4
        %s284 = scalar_lea.vmem %s1, %s283
        %p285 = scmp.lt.s32.totalorder %s28, 0
        %s286 = scalar_select %p285, %s28, 0
        %s287 = scalar_lea.vmem %s2, %s286
        %v289 = vld [vmem:[%s287] sm:$0x1]
        %v290 = vld [vmem:[%s280] sm:$0xf]
        %v291 = vld [vmem:[%s280 + $0x4] sm:$0xf]
        %v292 = vld [vmem:[%s280 + $0x8] sm:$0xf]
        %v293 = vld [vmem:[%s280 + $0xc] sm:$0xf]
        %v294 = vld [vmem:[%s280 + $0x10] sm:$0x1]
        %v295 = vld [vmem:[%s280 + $0x14] sm:$0xf]
        %v296 = vld [vmem:[%s280 + $0x18] sm:$0xf]
        %v297 = vld [vmem:[%s280 + $0x1c] sm:$0xf]
        %v298 = vld [vmem:[%s280 + $0x20] sm:$0xf]
        %v299 = vld [vmem:[%s280 + $0x24] sm:$0x1]
        %v300 = vld [vmem:[%s280 + $0x28] sm:$0xf]
        %v301 = vld [vmem:[%s280 + $0x2c] sm:$0xf]
        %v302 = vld [vmem:[%s280 + $0x30] sm:$0xf]
        %v303 = vld [vmem:[%s280 + $0x34] sm:$0xf]
        %v304 = vld [vmem:[%s280 + $0x38] sm:$0x1]
        %v305 = vld [vmem:[%s280 + $0x3c] sm:$0xf]
        %v306 = vld [vmem:[%s280 + $0x40] sm:$0xf]
        %v307 = vld [vmem:[%s280 + $0x44] sm:$0xf]
        %v308 = vld [vmem:[%s280 + $0x48] sm:$0xf]
        %v309 = vld [vmem:[%s280 + $0x4c] sm:$0x1]
        %v310 = vld [vmem:[%s280 + $0x50] sm:$0xf]
        %v311 = vld [vmem:[%s280 + $0x54] sm:$0xf]
        %v312 = vld [vmem:[%s280 + $0x58] sm:$0xf]
        %v313 = vld [vmem:[%s280 + $0x5c] sm:$0xf]
        %v314 = vld [vmem:[%s280 + $0x60] sm:$0x1]
        %v315 = vld [vmem:[%s280 + $0x64] sm:$0xf]
        %v316 = vld [vmem:[%s280 + $0x68] sm:$0xf]
        %v317 = vld [vmem:[%s280 + $0x6c] sm:$0xf]
        %v318 = vld [vmem:[%s280 + $0x70] sm:$0xf]
        %v319 = vld [vmem:[%s280 + $0x74] sm:$0x1]
        %v320 = vld [vmem:[%s280 + $0x78] sm:$0xf]
        %v321 = vld [vmem:[%s280 + $0x7c] sm:$0xf]
        %v322 = vld [vmem:[%s280 + $0x80] sm:$0xf]
        %v323 = vld [vmem:[%s280 + $0x84] sm:$0xf]
        %v324 = vld [vmem:[%s280 + $0x88] sm:$0x1]
        %v325 = vld [vmem:[%s280 + $0x8c] sm:$0xf]
        %v326 = vld [vmem:[%s280 + $0x90] sm:$0xf]
        %v327 = vld [vmem:[%s280 + $0x94] sm:$0xf]
        %v328 = vld [vmem:[%s280 + $0x98] sm:$0xf]
        %v329 = vld [vmem:[%s280 + $0x9c] sm:$0x1]
        %v330 = vld [vmem:[%s280 + $0xa0] sm:$0xf]
        %v331 = vld [vmem:[%s280 + $0xa4] sm:$0xf]
        %v332 = vld [vmem:[%s280 + $0xa8] sm:$0xf]
        %v333 = vld [vmem:[%s280 + $0xac] sm:$0xf]
        %v334 = vld [vmem:[%s280 + $0xb0] sm:$0x1]
        %v335 = vld [vmem:[%s280 + $0xb4] sm:$0xf]
        %v336 = vld [vmem:[%s280 + $0xb8] sm:$0xf]
        %v337 = vld [vmem:[%s280 + $0xbc] sm:$0xf]
        %v338 = vld [vmem:[%s280 + $0xc0] sm:$0xf]
        %v339 = vld [vmem:[%s280 + $0xc4] sm:$0x1]
        %v340 = vld [vmem:[%s280 + $0xc8] sm:$0xf]
        %v341 = vld [vmem:[%s280 + $0xcc] sm:$0xf]
        %v342 = vld [vmem:[%s280 + $0xd0] sm:$0xf]
        %v343 = vld [vmem:[%s280 + $0xd4] sm:$0xf]
        %v344 = vld [vmem:[%s280 + $0xd8] sm:$0x1]
        %v345 = vld [vmem:[%s280 + $0xdc] sm:$0xf]
        %v346 = vld [vmem:[%s280 + $0xe0] sm:$0xf]
        %v347 = vld [vmem:[%s280 + $0xe4] sm:$0xf]
        %v348 = vld [vmem:[%s280 + $0xe8] sm:$0xf]
        %v349 = vld [vmem:[%s280 + $0xec] sm:$0x1]
        %v350 = vld [vmem:[%s280 + $0xf0] sm:$0xf]
        %v351 = vld [vmem:[%s280 + $0xf4] sm:$0xf]
        %v352 = vld [vmem:[%s280 + $0xf8] sm:$0xf]
        %v353 = vld [vmem:[%s280 + $0xfc] sm:$0xf]
        %v354 = vld [vmem:[%s280 + $0x100] sm:$0x1]
        %v355 = vld [vmem:[%s280 + $0x104] sm:$0xf]
        %v356 = vld [vmem:[%s280 + $0x108] sm:$0xf]
        %v357 = vld [vmem:[%s280 + $0x10c] sm:$0xf]
        %v358 = vld [vmem:[%s280 + $0x110] sm:$0xf]
        %v359 = vld [vmem:[%s280 + $0x114] sm:$0x1]
        %v360 = vld [vmem:[%s280 + $0x118] sm:$0xf]
        %v361 = vld [vmem:[%s280 + $0x11c] sm:$0xf]
        %v362 = vld [vmem:[%s280 + $0x120] sm:$0xf]
        %v363 = vld [vmem:[%s280 + $0x124] sm:$0xf]
        %v364 = vld [vmem:[%s280 + $0x128] sm:$0x1]
        %v365 = vld [vmem:[%s280 + $0x12c] sm:$0xf]
        %v366 = vld [vmem:[%s280 + $0x130] sm:$0xf]
        %v367 = vld [vmem:[%s280 + $0x134] sm:$0xf]
        %v368 = vld [vmem:[%s280 + $0x138] sm:$0xf]
        %v369 = vld [vmem:[%s280 + $0x13c] sm:$0x1]
        %v434 = vunpack.c.l.b16 %v290
        %v435 = vunpack.c.l.b16 %v291
        %v436 = vunpack.c.l.b16 %v292
        %v437 = vunpack.c.l.b16 %v293
        %v438 = vunpack.c.l.b16 %v295
        %v439 = vunpack.c.l.b16 %v296
        %v440 = vunpack.c.l.b16 %v297
        %v441 = vunpack.c.l.b16 %v298
        %v442 = vunpack.c.l.b16 %v300
        %v443 = vunpack.c.l.b16 %v301
        %v444 = vunpack.c.l.b16 %v302
        %v445 = vunpack.c.l.b16 %v303
        %v446 = vunpack.c.l.b16 %v305
        %v447 = vunpack.c.l.b16 %v306
        %v448 = vunpack.c.l.b16 %v307
        %v449 = vunpack.c.l.b16 %v308
        %v450 = vunpack.c.l.b16 %v310
        %v451 = vunpack.c.l.b16 %v311
        %v452 = vunpack.c.l.b16 %v312
        %v453 = vunpack.c.l.b16 %v313
        %v454 = vunpack.c.l.b16 %v315
        %v455 = vunpack.c.l.b16 %v316
        %v456 = vunpack.c.l.b16 %v317
        %v457 = vunpack.c.l.b16 %v318
        %v458 = vunpack.c.l.b16 %v320
        %v459 = vunpack.c.l.b16 %v321
        %v460 = vunpack.c.l.b16 %v322
        %v461 = vunpack.c.l.b16 %v323
        %v462 = vunpack.c.l.b16 %v325
        %v463 = vunpack.c.l.b16 %v326
        %v464 = vunpack.c.l.b16 %v327
        %v465 = vunpack.c.l.b16 %v328
        %v466 = vunpack.c.l.b16 %v330
        %v467 = vunpack.c.l.b16 %v331
        %v468 = vunpack.c.l.b16 %v332
        %v469 = vunpack.c.l.b16 %v333
        %v470 = vunpack.c.l.b16 %v335
        %v471 = vunpack.c.l.b16 %v336
        %v472 = vunpack.c.l.b16 %v337
        %v473 = vunpack.c.l.b16 %v338
        %v474 = vunpack.c.l.b16 %v340
        %v475 = vunpack.c.l.b16 %v341
        %v476 = vunpack.c.l.b16 %v342
        %v477 = vunpack.c.l.b16 %v343
        %v478 = vunpack.c.l.b16 %v345
        %v479 = vunpack.c.l.b16 %v346
        %v480 = vunpack.c.l.b16 %v347
        %v481 = vunpack.c.l.b16 %v348
        %v482 = vunpack.c.l.b16 %v350
        %v483 = vunpack.c.l.b16 %v351
        %v484 = vunpack.c.l.b16 %v352
        %v485 = vunpack.c.l.b16 %v353
        %v486 = vunpack.c.l.b16 %v355
        %v487 = vunpack.c.l.b16 %v356
        %v488 = vunpack.c.l.b16 %v357
        %v489 = vunpack.c.l.b16 %v358
        %v490 = vunpack.c.l.b16 %v360
        %v491 = vunpack.c.l.b16 %v361
        %v492 = vunpack.c.l.b16 %v362
        %v493 = vunpack.c.l.b16 %v363
        %v494 = vunpack.c.l.b16 %v365
        %v495 = vunpack.c.l.b16 %v366
        %v496 = vunpack.c.l.b16 %v367
        %v497 = vunpack.c.l.b16 %v368
        %v498 = vpack.c.b16 %v435, %v434
        %v499 = vpack.c.b16 %v437, %v436
        %v500 = vpack.c.b16 %v439, %v438
        %v501 = vpack.c.b16 %v441, %v440
        %v502 = vpack.c.b16 %v443, %v442
        %v503 = vpack.c.b16 %v445, %v444
        %v504 = vpack.c.b16 %v447, %v446
        %v505 = vpack.c.b16 %v449, %v448
        %v506 = vpack.c.b16 %v451, %v450
        %v507 = vpack.c.b16 %v453, %v452
        %v508 = vpack.c.b16 %v455, %v454
        %v509 = vpack.c.b16 %v457, %v456
        %v510 = vpack.c.b16 %v459, %v458
        %v511 = vpack.c.b16 %v461, %v460
        %v512 = vpack.c.b16 %v463, %v462
        %v513 = vpack.c.b16 %v465, %v464
        %v514 = vpack.c.b16 %v467, %v466
        %v515 = vpack.c.b16 %v469, %v468
        %v516 = vpack.c.b16 %v471, %v470
        %v517 = vpack.c.b16 %v473, %v472
        %v518 = vpack.c.b16 %v475, %v474
        %v519 = vpack.c.b16 %v477, %v476
        %v520 = vpack.c.b16 %v479, %v478
        %v521 = vpack.c.b16 %v481, %v480
        %v522 = vpack.c.b16 %v483, %v482
        %v523 = vpack.c.b16 %v485, %v484
        %v524 = vpack.c.b16 %v487, %v486
        %v525 = vpack.c.b16 %v489, %v488
        %v526 = vpack.c.b16 %v491, %v490
        %v527 = vpack.c.b16 %v493, %v492
        %v528 = vpack.c.b16 %v495, %v494
        %v529 = vpack.c.b16 %v497, %v496
        %v546 = vunpack.c.l.b16 %v294
        %v547 = vunpack.c.l.b16 %v299
        %v548 = vunpack.c.l.b16 %v304
        %v549 = vunpack.c.l.b16 %v309
        %v550 = vunpack.c.l.b16 %v314
        %v551 = vunpack.c.l.b16 %v319
        %v552 = vunpack.c.l.b16 %v324
        %v553 = vunpack.c.l.b16 %v329
        %v554 = vunpack.c.l.b16 %v334
        %v555 = vunpack.c.l.b16 %v339
        %v556 = vunpack.c.l.b16 %v344
        %v557 = vunpack.c.l.b16 %v349
        %v558 = vunpack.c.l.b16 %v354
        %v559 = vunpack.c.l.b16 %v359
        %v560 = vunpack.c.l.b16 %v364
        %v561 = vunpack.c.l.b16 %v369
        %v562 = vpack.c.b16 %v546, %v546
        %v563 = vpack.c.b16 %v547, %v547
        %v564 = vpack.c.b16 %v548, %v548
        %v565 = vpack.c.b16 %v549, %v549
        %v566 = vpack.c.b16 %v550, %v550
        %v567 = vpack.c.b16 %v551, %v551
        %v568 = vpack.c.b16 %v552, %v552
        %v569 = vpack.c.b16 %v553, %v553
        %v570 = vpack.c.b16 %v554, %v554
        %v571 = vpack.c.b16 %v555, %v555
        %v572 = vpack.c.b16 %v556, %v556
        %v573 = vpack.c.b16 %v557, %v557
        %v574 = vpack.c.b16 %v558, %v558
        %v575 = vpack.c.b16 %v559, %v559
        %v576 = vpack.c.b16 %v560, %v560
        %v577 = vpack.c.b16 %v561, %v561
        %vm578 = vsmask.f32 7424
        %v580 = vshrl.u32 %v498, 16
        %v582 = vshll.u32 %v498, 16
        %v584 = vrot.slane %v582, 1
        %v585 = vor.u32 %v580, %v584
        %v587 = vshll.u32 %v499, 16
        %v589 = vrot.slane %v587, 1
        %v590 = vsel %vm578, %v585, %v589
        %v591 = vshrl.u32 %v499, 16
        %v593 = vor.u32 %v591, %v589
        %v595 = vshll.u32 %v562, 16
        %v597 = vrot.slane %v595, 1
        %v598 = vsel %vm578, %v593, %v597
        %v600 = vshrl.u32 %v500, 16
        %v602 = vshll.u32 %v500, 16
        %v604 = vrot.slane %v602, 1
        %v605 = vor.u32 %v600, %v604
        %v607 = vshll.u32 %v501, 16
        %v609 = vrot.slane %v607, 1
        %v610 = vsel %vm578, %v605, %v609
        %v611 = vshrl.u32 %v501, 16
        %v613 = vor.u32 %v611, %v609
        %v615 = vshll.u32 %v563, 16
        %v617 = vrot.slane %v615, 1
        %v618 = vsel %vm578, %v613, %v617
        %v620 = vshrl.u32 %v502, 16
        %v622 = vshll.u32 %v502, 16
        %v624 = vrot.slane %v622, 1
        %v625 = vor.u32 %v620, %v624
        %v627 = vshll.u32 %v503, 16
        %v629 = vrot.slane %v627, 1
        %v630 = vsel %vm578, %v625, %v629
        %v631 = vshrl.u32 %v503, 16
        %v633 = vor.u32 %v631, %v629
        %v635 = vshll.u32 %v564, 16
        %v637 = vrot.slane %v635, 1
        %v638 = vsel %vm578, %v633, %v637
        %v640 = vshrl.u32 %v504, 16
        %v642 = vshll.u32 %v504, 16
        %v644 = vrot.slane %v642, 1
        %v645 = vor.u32 %v640, %v644
        %v647 = vshll.u32 %v505, 16
        %v649 = vrot.slane %v647, 1
        %v650 = vsel %vm578, %v645, %v649
        %v651 = vshrl.u32 %v505, 16
        %v653 = vor.u32 %v651, %v649
        %v655 = vshll.u32 %v565, 16
        %v657 = vrot.slane %v655, 1
        %v658 = vsel %vm578, %v653, %v657
        %v660 = vshrl.u32 %v506, 16
        %v662 = vshll.u32 %v506, 16
        %v664 = vrot.slane %v662, 1
        %v665 = vor.u32 %v660, %v664
        %v667 = vshll.u32 %v507, 16
        %v669 = vrot.slane %v667, 1
        %v670 = vsel %vm578, %v665, %v669
        %v671 = vshrl.u32 %v507, 16
        %v673 = vor.u32 %v671, %v669
        %v675 = vshll.u32 %v566, 16
        %v677 = vrot.slane %v675, 1
        %v678 = vsel %vm578, %v673, %v677
        %v680 = vshrl.u32 %v508, 16
        %v682 = vshll.u32 %v508, 16
        %v684 = vrot.slane %v682, 1
        %v685 = vor.u32 %v680, %v684
        %v687 = vshll.u32 %v509, 16
        %v689 = vrot.slane %v687, 1
        %v690 = vsel %vm578, %v685, %v689
        %v691 = vshrl.u32 %v509, 16
        %v693 = vor.u32 %v691, %v689
        %v695 = vshll.u32 %v567, 16
        %v697 = vrot.slane %v695, 1
        %v698 = vsel %vm578, %v693, %v697
        %v700 = vshrl.u32 %v510, 16
        %v702 = vshll.u32 %v510, 16
        %v704 = vrot.slane %v702, 1
        %v705 = vor.u32 %v700, %v704
        %v707 = vshll.u32 %v511, 16
        %v709 = vrot.slane %v707, 1
        %v710 = vsel %vm578, %v705, %v709
        %v711 = vshrl.u32 %v511, 16
        %v713 = vor.u32 %v711, %v709
        %v715 = vshll.u32 %v568, 16
        %v717 = vrot.slane %v715, 1
        %v718 = vsel %vm578, %v713, %v717
        %v720 = vshrl.u32 %v512, 16
        %v722 = vshll.u32 %v512, 16
        %v724 = vrot.slane %v722, 1
        %v725 = vor.u32 %v720, %v724
        %v727 = vshll.u32 %v513, 16
        %v729 = vrot.slane %v727, 1
        %v730 = vsel %vm578, %v725, %v729
        %v731 = vshrl.u32 %v513, 16
        %v733 = vor.u32 %v731, %v729
        %v735 = vshll.u32 %v569, 16
        %v737 = vrot.slane %v735, 1
        %v738 = vsel %vm578, %v733, %v737
        %v740 = vshrl.u32 %v514, 16
        %v742 = vshll.u32 %v514, 16
        %v744 = vrot.slane %v742, 1
        %v745 = vor.u32 %v740, %v744
        %v747 = vshll.u32 %v515, 16
        %v749 = vrot.slane %v747, 1
        %v750 = vsel %vm578, %v745, %v749
        %v751 = vshrl.u32 %v515, 16
        %v753 = vor.u32 %v751, %v749
        %v755 = vshll.u32 %v570, 16
        %v757 = vrot.slane %v755, 1
        %v758 = vsel %vm578, %v753, %v757
        %v760 = vshrl.u32 %v516, 16
        %v762 = vshll.u32 %v516, 16
        %v764 = vrot.slane %v762, 1
        %v765 = vor.u32 %v760, %v764
        %v767 = vshll.u32 %v517, 16
        %v769 = vrot.slane %v767, 1
        %v770 = vsel %vm578, %v765, %v769
        %v771 = vshrl.u32 %v517, 16
        %v773 = vor.u32 %v771, %v769
        %v775 = vshll.u32 %v571, 16
        %v777 = vrot.slane %v775, 1
        %v778 = vsel %vm578, %v773, %v777
        %v780 = vshrl.u32 %v518, 16
        %v782 = vshll.u32 %v518, 16
        %v784 = vrot.slane %v782, 1
        %v785 = vor.u32 %v780, %v784
        %v787 = vshll.u32 %v519, 16
        %v789 = vrot.slane %v787, 1
        %v790 = vsel %vm578, %v785, %v789
        %v791 = vshrl.u32 %v519, 16
        %v793 = vor.u32 %v791, %v789
        %v795 = vshll.u32 %v572, 16
        %v797 = vrot.slane %v795, 1
        %v798 = vsel %vm578, %v793, %v797
        %v800 = vshrl.u32 %v520, 16
        %v802 = vshll.u32 %v520, 16
        %v804 = vrot.slane %v802, 1
        %v805 = vor.u32 %v800, %v804
        %v807 = vshll.u32 %v521, 16
        %v809 = vrot.slane %v807, 1
        %v810 = vsel %vm578, %v805, %v809
        %v811 = vshrl.u32 %v521, 16
        %v813 = vor.u32 %v811, %v809
        %v815 = vshll.u32 %v573, 16
        %v817 = vrot.slane %v815, 1
        %v818 = vsel %vm578, %v813, %v817
        %v820 = vshrl.u32 %v522, 16
        %v822 = vshll.u32 %v522, 16
        %v824 = vrot.slane %v822, 1
        %v825 = vor.u32 %v820, %v824
        %v827 = vshll.u32 %v523, 16
        %v829 = vrot.slane %v827, 1
        %v830 = vsel %vm578, %v825, %v829
        %v831 = vshrl.u32 %v523, 16
        %v833 = vor.u32 %v831, %v829
        %v835 = vshll.u32 %v574, 16
        %v837 = vrot.slane %v835, 1
        %v838 = vsel %vm578, %v833, %v837
        %v840 = vshrl.u32 %v524, 16
        %v842 = vshll.u32 %v524, 16
        %v844 = vrot.slane %v842, 1
        %v845 = vor.u32 %v840, %v844
        %v847 = vshll.u32 %v525, 16
        %v849 = vrot.slane %v847, 1
        %v850 = vsel %vm578, %v845, %v849
        %v851 = vshrl.u32 %v525, 16
        %v853 = vor.u32 %v851, %v849
        %v855 = vshll.u32 %v575, 16
        %v857 = vrot.slane %v855, 1
        %v858 = vsel %vm578, %v853, %v857
        %v860 = vshrl.u32 %v526, 16
        %v862 = vshll.u32 %v526, 16
        %v864 = vrot.slane %v862, 1
        %v865 = vor.u32 %v860, %v864
        %v867 = vshll.u32 %v527, 16
        %v869 = vrot.slane %v867, 1
        %v870 = vsel %vm578, %v865, %v869
        %v871 = vshrl.u32 %v527, 16
        %v873 = vor.u32 %v871, %v869
        %v875 = vshll.u32 %v576, 16
        %v877 = vrot.slane %v875, 1
        %v878 = vsel %vm578, %v873, %v877
        %v880 = vshrl.u32 %v528, 16
        %v882 = vshll.u32 %v528, 16
        %v884 = vrot.slane %v882, 1
        %v885 = vor.u32 %v880, %v884
        %v887 = vshll.u32 %v529, 16
        %v889 = vrot.slane %v887, 1
        %v890 = vsel %vm578, %v885, %v889
        %v891 = vshrl.u32 %v529, 16
        %v893 = vor.u32 %v891, %v889
        %v895 = vshll.u32 %v577, 16
        %v897 = vrot.slane %v895, 1
        %v898 = vsel %vm578, %v893, %v897
        %899 = vrot.lane.b32.xlu0 %v590, 8
        %v900 = vpop.permute.xlu0 %899
        %901 = vrot.lane.b32.xlu0 %v598, 8
        %v902 = vpop.permute.xlu0 %901
        %903 = vrot.lane.b32.xlu0 %v610, 8
        %v904 = vpop.permute.xlu0 %903
        %905 = vrot.lane.b32.xlu0 %v618, 8
        %v906 = vpop.permute.xlu0 %905
        %907 = vrot.lane.b32.xlu0 %v630, 8
        %v908 = vpop.permute.xlu0 %907
        %909 = vrot.lane.b32.xlu0 %v638, 8
        %v910 = vpop.permute.xlu0 %909
        %911 = vrot.lane.b32.xlu0 %v650, 8
        %v912 = vpop.permute.xlu0 %911
        %913 = vrot.lane.b32.xlu0 %v658, 8
        %v914 = vpop.permute.xlu0 %913
        %915 = vrot.lane.b32.xlu0 %v670, 8
        %v916 = vpop.permute.xlu0 %915
        %917 = vrot.lane.b32.xlu0 %v678, 8
        %v918 = vpop.permute.xlu0 %917
        %919 = vrot.lane.b32.xlu0 %v690, 8
        %v920 = vpop.permute.xlu0 %919
        %921 = vrot.lane.b32.xlu0 %v698, 8
        %v922 = vpop.permute.xlu0 %921
        %923 = vrot.lane.b32.xlu0 %v710, 8
        %v924 = vpop.permute.xlu0 %923
        %925 = vrot.lane.b32.xlu0 %v718, 8
        %v926 = vpop.permute.xlu0 %925
        %927 = vrot.lane.b32.xlu0 %v730, 8
        %v928 = vpop.permute.xlu0 %927
        %929 = vrot.lane.b32.xlu0 %v738, 8
        %v930 = vpop.permute.xlu0 %929
        %931 = vrot.lane.b32.xlu0 %v750, 8
        %v932 = vpop.permute.xlu0 %931
        %933 = vrot.lane.b32.xlu0 %v758, 8
        %v934 = vpop.permute.xlu0 %933
        %935 = vrot.lane.b32.xlu0 %v770, 8
        %v936 = vpop.permute.xlu0 %935
        %937 = vrot.lane.b32.xlu0 %v778, 8
        %v938 = vpop.permute.xlu0 %937
        %939 = vrot.lane.b32.xlu0 %v790, 8
        %v940 = vpop.permute.xlu0 %939
        %941 = vrot.lane.b32.xlu0 %v798, 8
        %v942 = vpop.permute.xlu0 %941
        %943 = vrot.lane.b32.xlu0 %v810, 8
        %v944 = vpop.permute.xlu0 %943
        %945 = vrot.lane.b32.xlu0 %v818, 8
        %v946 = vpop.permute.xlu0 %945
        %947 = vrot.lane.b32.xlu0 %v830, 8
        %v948 = vpop.permute.xlu0 %947
        %949 = vrot.lane.b32.xlu0 %v838, 8
        %v950 = vpop.permute.xlu0 %949
        %951 = vrot.lane.b32.xlu0 %v850, 8
        %v952 = vpop.permute.xlu0 %951
        %953 = vrot.lane.b32.xlu0 %v858, 8
        %v954 = vpop.permute.xlu0 %953
        %955 = vrot.lane.b32.xlu0 %v870, 8
        %v956 = vpop.permute.xlu0 %955
        %957 = vrot.lane.b32.xlu0 %v878, 8
        %v958 = vpop.permute.xlu0 %957
        %959 = vrot.lane.b32.xlu0 %v890, 8
        %v960 = vpop.permute.xlu0 %959
        %961 = vrot.lane.b32.xlu0 %v898, 8
        %v962 = vpop.permute.xlu0 %961
        %vm963 = vcmask 1046528
        %v964 = vrot.slane %v498, 1
        %v965 = vrot.slane %v499, 1
        %v966 = vsel %vm963, %v964, %v965
        %v967 = vrot.slane %v562, 1
        %v968 = vsel %vm963, %v965, %v967
        %v969 = vrot.slane %v500, 1
        %v970 = vrot.slane %v501, 1
        %v971 = vsel %vm963, %v969, %v970
        %v972 = vrot.slane %v563, 1
        %v973 = vsel %vm963, %v970, %v972
        %v974 = vrot.slane %v502, 1
        %v975 = vrot.slane %v503, 1
        %v976 = vsel %vm963, %v974, %v975
        %v977 = vrot.slane %v564, 1
        %v978 = vsel %vm963, %v975, %v977
        %v979 = vrot.slane %v504, 1
        %v980 = vrot.slane %v505, 1
        %v981 = vsel %vm963, %v979, %v980
        %v982 = vrot.slane %v565, 1
        %v983 = vsel %vm963, %v980, %v982
        %v984 = vrot.slane %v506, 1
        %v985 = vrot.slane %v507, 1
        %v986 = vsel %vm963, %v984, %v985
        %v987 = vrot.slane %v566, 1
        %v988 = vsel %vm963, %v985, %v987
        %v989 = vrot.slane %v508, 1
        %v990 = vrot.slane %v509, 1
        %v991 = vsel %vm963, %v989, %v990
        %v992 = vrot.slane %v567, 1
        %v993 = vsel %vm963, %v990, %v992
        %v994 = vrot.slane %v510, 1
        %v995 = vrot.slane %v511, 1
        %v996 = vsel %vm963, %v994, %v995
        %v997 = vrot.slane %v568, 1
        %v998 = vsel %vm963, %v995, %v997
        %v999 = vrot.slane %v512, 1
        %v1000 = vrot.slane %v513, 1
        %v1001 = vsel %vm963, %v999, %v1000
        %v1002 = vrot.slane %v569, 1
        %v1003 = vsel %vm963, %v1000, %v1002
        %v1004 = vrot.slane %v514, 1
        %v1005 = vrot.slane %v515, 1
        %v1006 = vsel %vm963, %v1004, %v1005
        %v1007 = vrot.slane %v570, 1
        %v1008 = vsel %vm963, %v1005, %v1007
        %v1009 = vrot.slane %v516, 1
        %v1010 = vrot.slane %v517, 1
        %v1011 = vsel %vm963, %v1009, %v1010
        %v1012 = vrot.slane %v571, 1
        %v1013 = vsel %vm963, %v1010, %v1012
        %v1014 = vrot.slane %v518, 1
        %v1015 = vrot.slane %v519, 1
        %v1016 = vsel %vm963, %v1014, %v1015
        %v1017 = vrot.slane %v572, 1
        %v1018 = vsel %vm963, %v1015, %v1017
        %v1019 = vrot.slane %v520, 1
        %v1020 = vrot.slane %v521, 1
        %v1021 = vsel %vm963, %v1019, %v1020
        %v1022 = vrot.slane %v573, 1
        %v1023 = vsel %vm963, %v1020, %v1022
        %v1024 = vrot.slane %v522, 1
        %v1025 = vrot.slane %v523, 1
        %v1026 = vsel %vm963, %v1024, %v1025
        %v1027 = vrot.slane %v574, 1
        %v1028 = vsel %vm963, %v1025, %v1027
        %v1029 = vrot.slane %v524, 1
        %v1030 = vrot.slane %v525, 1
        %v1031 = vsel %vm963, %v1029, %v1030
        %v1032 = vrot.slane %v575, 1
        %v1033 = vsel %vm963, %v1030, %v1032
        %v1034 = vrot.slane %v526, 1
        %v1035 = vrot.slane %v527, 1
        %v1036 = vsel %vm963, %v1034, %v1035
        %v1037 = vrot.slane %v576, 1
        %v1038 = vsel %vm963, %v1035, %v1037
        %v1039 = vrot.slane %v528, 1
        %v1040 = vrot.slane %v529, 1
        %v1041 = vsel %vm963, %v1039, %v1040
        %v1042 = vrot.slane %v577, 1
        %v1043 = vsel %vm963, %v1040, %v1042
        %1044 = vrot.lane.b32.xlu0 %v966, 16
        %v1045 = vpop.permute.xlu0 %1044
        %1046 = vrot.lane.b32.xlu0 %v968, 16
        %v1047 = vpop.permute.xlu0 %1046
        %1048 = vrot.lane.b32.xlu0 %v971, 16
        %v1049 = vpop.permute.xlu0 %1048
        %1050 = vrot.lane.b32.xlu0 %v973, 16
        %v1051 = vpop.permute.xlu0 %1050
        %1052 = vrot.lane.b32.xlu0 %v976, 16
        %v1053 = vpop.permute.xlu0 %1052
        %1054 = vrot.lane.b32.xlu0 %v978, 16
        %v1055 = vpop.permute.xlu0 %1054
        %1056 = vrot.lane.b32.xlu0 %v981, 16
        %v1057 = vpop.permute.xlu0 %1056
        %1058 = vrot.lane.b32.xlu0 %v983, 16
        %v1059 = vpop.permute.xlu0 %1058
        %1060 = vrot.lane.b32.xlu0 %v986, 16
        %v1061 = vpop.permute.xlu0 %1060
        %1062 = vrot.lane.b32.xlu0 %v988, 16
        %v1063 = vpop.permute.xlu0 %1062
        %1064 = vrot.lane.b32.xlu0 %v991, 16
        %v1065 = vpop.permute.xlu0 %1064
        %1066 = vrot.lane.b32.xlu0 %v993, 16
        %v1067 = vpop.permute.xlu0 %1066
        %1068 = vrot.lane.b32.xlu0 %v996, 16
        %v1069 = vpop.permute.xlu0 %1068
        %1070 = vrot.lane.b32.xlu0 %v998, 16
        %v1071 = vpop.permute.xlu0 %1070
        %1072 = vrot.lane.b32.xlu0 %v1001, 16
        %v1073 = vpop.permute.xlu0 %1072
        %1074 = vrot.lane.b32.xlu0 %v1003, 16
        %v1075 = vpop.permute.xlu0 %1074
        %1076 = vrot.lane.b32.xlu0 %v1006, 16
        %v1077 = vpop.permute.xlu0 %1076
        %1078 = vrot.lane.b32.xlu0 %v1008, 16
        %v1079 = vpop.permute.xlu0 %1078
        %1080 = vrot.lane.b32.xlu0 %v1011, 16
        %v1081 = vpop.permute.xlu0 %1080
        %1082 = vrot.lane.b32.xlu0 %v1013, 16
        %v1083 = vpop.permute.xlu0 %1082
        %1084 = vrot.lane.b32.xlu0 %v1016, 16
        %v1085 = vpop.permute.xlu0 %1084
        %1086 = vrot.lane.b32.xlu0 %v1018, 16
        %v1087 = vpop.permute.xlu0 %1086
        %1088 = vrot.lane.b32.xlu0 %v1021, 16
        %v1089 = vpop.permute.xlu0 %1088
        %1090 = vrot.lane.b32.xlu0 %v1023, 16
        %v1091 = vpop.permute.xlu0 %1090
        %1092 = vrot.lane.b32.xlu0 %v1026, 16
        %v1093 = vpop.permute.xlu0 %1092
        %1094 = vrot.lane.b32.xlu0 %v1028, 16
        %v1095 = vpop.permute.xlu0 %1094
        %1096 = vrot.lane.b32.xlu0 %v1031, 16
        %v1097 = vpop.permute.xlu0 %1096
        %1098 = vrot.lane.b32.xlu0 %v1033, 16
        %v1099 = vpop.permute.xlu0 %1098
        %1100 = vrot.lane.b32.xlu0 %v1036, 16
        %v1101 = vpop.permute.xlu0 %1100
        %1102 = vrot.lane.b32.xlu0 %v1038, 16
        %v1103 = vpop.permute.xlu0 %1102
        %1104 = vrot.lane.b32.xlu0 %v1041, 16
        %v1105 = vpop.permute.xlu0 %1104
        %1106 = vrot.lane.b32.xlu0 %v1043, 16
        %v1107 = vpop.permute.xlu0 %1106
        %vm1108 = vcmask 64512
        %v1110 = vsel %vm1108, %v498, %v900
        %v1112 = vsel %vm1108, %v499, %v902
        %v1114 = vsel %vm1108, %v500, %v904
        %v1116 = vsel %vm1108, %v501, %v906
        %v1118 = vsel %vm1108, %v502, %v908
        %v1120 = vsel %vm1108, %v503, %v910
        %v1122 = vsel %vm1108, %v504, %v912
        %v1124 = vsel %vm1108, %v505, %v914
        %v1126 = vsel %vm1108, %v506, %v916
        %v1128 = vsel %vm1108, %v507, %v918
        %v1130 = vsel %vm1108, %v508, %v920
        %v1132 = vsel %vm1108, %v509, %v922
        %v1134 = vsel %vm1108, %v510, %v924
        %v1136 = vsel %vm1108, %v511, %v926
        %v1138 = vsel %vm1108, %v512, %v928
        %v1140 = vsel %vm1108, %v513, %v930
        %v1142 = vsel %vm1108, %v514, %v932
        %v1144 = vsel %vm1108, %v515, %v934
        %v1146 = vsel %vm1108, %v516, %v936
        %v1148 = vsel %vm1108, %v517, %v938
        %v1150 = vsel %vm1108, %v518, %v940
        %v1152 = vsel %vm1108, %v519, %v942
        %v1154 = vsel %vm1108, %v520, %v944
        %v1156 = vsel %vm1108, %v521, %v946
        %v1158 = vsel %vm1108, %v522, %v948
        %v1160 = vsel %vm1108, %v523, %v950
        %v1162 = vsel %vm1108, %v524, %v952
        %v1164 = vsel %vm1108, %v525, %v954
        %v1166 = vsel %vm1108, %v526, %v956
        %v1168 = vsel %vm1108, %v527, %v958
        %v1170 = vsel %vm1108, %v528, %v960
        %v1172 = vsel %vm1108, %v529, %v962
        %vm1173 = vcmask 130048
        %v1175 = vsel %vm1173, %v1110, %v1045
        %v1177 = vsel %vm1173, %v1112, %v1047
        %v1179 = vsel %vm1173, %v1114, %v1049
        %v1181 = vsel %vm1173, %v1116, %v1051
        %v1183 = vsel %vm1173, %v1118, %v1053
        %v1185 = vsel %vm1173, %v1120, %v1055
        %v1187 = vsel %vm1173, %v1122, %v1057
        %v1189 = vsel %vm1173, %v1124, %v1059
        %v1191 = vsel %vm1173, %v1126, %v1061
        %v1193 = vsel %vm1173, %v1128, %v1063
        %v1195 = vsel %vm1173, %v1130, %v1065
        %v1197 = vsel %vm1173, %v1132, %v1067
        %v1199 = vsel %vm1173, %v1134, %v1069
        %v1201 = vsel %vm1173, %v1136, %v1071
        %v1203 = vsel %vm1173, %v1138, %v1073
        %v1205 = vsel %vm1173, %v1140, %v1075
        %v1207 = vsel %vm1173, %v1142, %v1077
        %v1209 = vsel %vm1173, %v1144, %v1079
        %v1211 = vsel %vm1173, %v1146, %v1081
        %v1213 = vsel %vm1173, %v1148, %v1083
        %v1215 = vsel %vm1173, %v1150, %v1085
        %v1217 = vsel %vm1173, %v1152, %v1087
        %v1219 = vsel %vm1173, %v1154, %v1089
        %v1221 = vsel %vm1173, %v1156, %v1091
        %v1223 = vsel %vm1173, %v1158, %v1093
        %v1225 = vsel %vm1173, %v1160, %v1095
        %v1227 = vsel %vm1173, %v1162, %v1097
        %v1229 = vsel %vm1173, %v1164, %v1099
        %v1231 = vsel %vm1173, %v1166, %v1101
        %v1233 = vsel %vm1173, %v1168, %v1103
        %v1235 = vsel %vm1173, %v1170, %v1105
        %v1237 = vsel %vm1173, %v1172, %v1107
        %v1238 = vld [vmem:[%s284] sm:$0xf]
        %v1239 = vld [vmem:[%s284 + $0x4] sm:$0xf]
        %v1240 = vld [vmem:[%s284 + $0x8] sm:$0xf]
        %s1241 = scalar_lea.vmem %s280, 20
        %v1242 = vld [vmem:[%s1241] sm:$0xf]
        %v1243 = vld [vmem:[%s1241 + $0x4] sm:$0xf]
        %v1244 = vld [vmem:[%s1241 + $0x8] sm:$0xf]
        %v1245 = vld [vmem:[%s1241 + $0xc] sm:$0xf]
        %v1246 = vld [vmem:[%s1241 + $0x10] sm:$0x1]
        %v1247 = vld [vmem:[%s1241 + $0x14] sm:$0xf]
        %v1248 = vld [vmem:[%s1241 + $0x18] sm:$0xf]
        %v1249 = vld [vmem:[%s1241 + $0x1c] sm:$0xf]
        %v1250 = vld [vmem:[%s1241 + $0x20] sm:$0xf]
        %v1251 = vld [vmem:[%s1241 + $0x24] sm:$0x1]
        %v1252 = vld [vmem:[%s1241 + $0x28] sm:$0xf]
        %v1253 = vld [vmem:[%s1241 + $0x2c] sm:$0xf]
        %v1254 = vld [vmem:[%s1241 + $0x30] sm:$0xf]
        %v1255 = vld [vmem:[%s1241 + $0x34] sm:$0xf]
        %v1256 = vld [vmem:[%s1241 + $0x38] sm:$0x1]
        %v1257 = vld [vmem:[%s1241 + $0x3c] sm:$0xf]
        %v1258 = vld [vmem:[%s1241 + $0x40] sm:$0xf]
        %v1259 = vld [vmem:[%s1241 + $0x44] sm:$0xf]
        %v1260 = vld [vmem:[%s1241 + $0x48] sm:$0xf]
        %v1261 = vld [vmem:[%s1241 + $0x4c] sm:$0x1]
        %v1262 = vld [vmem:[%s1241 + $0x50] sm:$0xf]
        %v1263 = vld [vmem:[%s1241 + $0x54] sm:$0xf]
        %v1264 = vld [vmem:[%s1241 + $0x58] sm:$0xf]
        %v1265 = vld [vmem:[%s1241 + $0x5c] sm:$0xf]
        %v1266 = vld [vmem:[%s1241 + $0x60] sm:$0x1]
        %v1267 = vld [vmem:[%s1241 + $0x64] sm:$0xf]
        %v1268 = vld [vmem:[%s1241 + $0x68] sm:$0xf]
        %v1269 = vld [vmem:[%s1241 + $0x6c] sm:$0xf]
        %v1270 = vld [vmem:[%s1241 + $0x70] sm:$0xf]
        %v1271 = vld [vmem:[%s1241 + $0x74] sm:$0x1]
        %v1272 = vld [vmem:[%s1241 + $0x78] sm:$0xf]
        %v1273 = vld [vmem:[%s1241 + $0x7c] sm:$0xf]
        %v1274 = vld [vmem:[%s1241 + $0x80] sm:$0xf]
        %v1275 = vld [vmem:[%s1241 + $0x84] sm:$0xf]
        %v1276 = vld [vmem:[%s1241 + $0x88] sm:$0x1]
        %v1277 = vld [vmem:[%s1241 + $0x8c] sm:$0xf]
        %v1278 = vld [vmem:[%s1241 + $0x90] sm:$0xf]
        %v1279 = vld [vmem:[%s1241 + $0x94] sm:$0xf]
        %v1280 = vld [vmem:[%s1241 + $0x98] sm:$0xf]
        %v1281 = vld [vmem:[%s1241 + $0x9c] sm:$0x1]
        %v1282 = vld [vmem:[%s1241 + $0xa0] sm:$0xf]
        %v1283 = vld [vmem:[%s1241 + $0xa4] sm:$0xf]
        %v1284 = vld [vmem:[%s1241 + $0xa8] sm:$0xf]
        %v1285 = vld [vmem:[%s1241 + $0xac] sm:$0xf]
        %v1286 = vld [vmem:[%s1241 + $0xb0] sm:$0x1]
        %v1287 = vld [vmem:[%s1241 + $0xb4] sm:$0xf]
        %v1288 = vld [vmem:[%s1241 + $0xb8] sm:$0xf]
        %v1289 = vld [vmem:[%s1241 + $0xbc] sm:$0xf]
        %v1290 = vld [vmem:[%s1241 + $0xc0] sm:$0xf]
        %v1291 = vld [vmem:[%s1241 + $0xc4] sm:$0x1]
        %v1292 = vld [vmem:[%s1241 + $0xc8] sm:$0xf]
        %v1293 = vld [vmem:[%s1241 + $0xcc] sm:$0xf]
        %v1294 = vld [vmem:[%s1241 + $0xd0] sm:$0xf]
        %v1295 = vld [vmem:[%s1241 + $0xd4] sm:$0xf]
        %v1296 = vld [vmem:[%s1241 + $0xd8] sm:$0x1]
        %v1297 = vld [vmem:[%s1241 + $0xdc] sm:$0xf]
        %v1298 = vld [vmem:[%s1241 + $0xe0] sm:$0xf]
        %v1299 = vld [vmem:[%s1241 + $0xe4] sm:$0xf]
        %v1300 = vld [vmem:[%s1241 + $0xe8] sm:$0xf]
        %v1301 = vld [vmem:[%s1241 + $0xec] sm:$0x1]
        %v1302 = vld [vmem:[%s1241 + $0xf0] sm:$0xf]
        %v1303 = vld [vmem:[%s1241 + $0xf4] sm:$0xf]
        %v1304 = vld [vmem:[%s1241 + $0xf8] sm:$0xf]
        %v1305 = vld [vmem:[%s1241 + $0xfc] sm:$0xf]
        %v1306 = vld [vmem:[%s1241 + $0x100] sm:$0x1]
        %v1307 = vld [vmem:[%s1241 + $0x104] sm:$0xf]
        %v1308 = vld [vmem:[%s1241 + $0x108] sm:$0xf]
        %v1309 = vld [vmem:[%s1241 + $0x10c] sm:$0xf]
        %v1310 = vld [vmem:[%s1241 + $0x110] sm:$0xf]
        %v1311 = vld [vmem:[%s1241 + $0x114] sm:$0x1]
        %v1312 = vld [vmem:[%s1241 + $0x118] sm:$0xf]
        %v1313 = vld [vmem:[%s1241 + $0x11c] sm:$0xf]
        %v1314 = vld [vmem:[%s1241 + $0x120] sm:$0xf]
        %v1315 = vld [vmem:[%s1241 + $0x124] sm:$0xf]
        %v1316 = vld [vmem:[%s1241 + $0x128] sm:$0x1]
        %v1317 = vld [vmem:[%s1241 + $0x12c] sm:$0xf]
        %v1318 = vld [vmem:[%s1241 + $0x130] sm:$0xf]
        %v1319 = vld [vmem:[%s1241 + $0x134] sm:$0xf]
        %v1320 = vld [vmem:[%s1241 + $0x138] sm:$0xf]
        %v1321 = vld [vmem:[%s1241 + $0x13c] sm:$0x1]
        %v1386 = vunpack.c.l.b16 %v1242
        %v1387 = vunpack.c.l.b16 %v1243
        %v1388 = vunpack.c.l.b16 %v1244
        %v1389 = vunpack.c.l.b16 %v1245
        %v1390 = vunpack.c.l.b16 %v1247
        %v1391 = vunpack.c.l.b16 %v1248
        %v1392 = vunpack.c.l.b16 %v1249
        %v1393 = vunpack.c.l.b16 %v1250
        %v1394 = vunpack.c.l.b16 %v1252
        %v1395 = vunpack.c.l.b16 %v1253
        %v1396 = vunpack.c.l.b16 %v1254
        %v1397 = vunpack.c.l.b16 %v1255
        %v1398 = vunpack.c.l.b16 %v1257
        %v1399 = vunpack.c.l.b16 %v1258
        %v1400 = vunpack.c.l.b16 %v1259
        %v1401 = vunpack.c.l.b16 %v1260
        %v1402 = vunpack.c.l.b16 %v1262
        %v1403 = vunpack.c.l.b16 %v1263
        %v1404 = vunpack.c.l.b16 %v1264
        %v1405 = vunpack.c.l.b16 %v1265
        %v1406 = vunpack.c.l.b16 %v1267
        %v1407 = vunpack.c.l.b16 %v1268
        %v1408 = vunpack.c.l.b16 %v1269
        %v1409 = vunpack.c.l.b16 %v1270
        %v1410 = vunpack.c.l.b16 %v1272
        %v1411 = vunpack.c.l.b16 %v1273
        %v1412 = vunpack.c.l.b16 %v1274
        %v1413 = vunpack.c.l.b16 %v1275
        %v1414 = vunpack.c.l.b16 %v1277
        %v1415 = vunpack.c.l.b16 %v1278
        %v1416 = vunpack.c.l.b16 %v1279
        %v1417 = vunpack.c.l.b16 %v1280
        %v1418 = vunpack.c.l.b16 %v1282
        %v1419 = vunpack.c.l.b16 %v1283
        %v1420 = vunpack.c.l.b16 %v1284
        %v1421 = vunpack.c.l.b16 %v1285
        %v1422 = vunpack.c.l.b16 %v1287
        %v1423 = vunpack.c.l.b16 %v1288
        %v1424 = vunpack.c.l.b16 %v1289
        %v1425 = vunpack.c.l.b16 %v1290
        %v1426 = vunpack.c.l.b16 %v1292
        %v1427 = vunpack.c.l.b16 %v1293
        %v1428 = vunpack.c.l.b16 %v1294
        %v1429 = vunpack.c.l.b16 %v1295
        %v1430 = vunpack.c.l.b16 %v1297
        %v1431 = vunpack.c.l.b16 %v1298
        %v1432 = vunpack.c.l.b16 %v1299
        %v1433 = vunpack.c.l.b16 %v1300
        %v1434 = vunpack.c.l.b16 %v1302
        %v1435 = vunpack.c.l.b16 %v1303
        %v1436 = vunpack.c.l.b16 %v1304
        %v1437 = vunpack.c.l.b16 %v1305
        %v1438 = vunpack.c.l.b16 %v1307
        %v1439 = vunpack.c.l.b16 %v1308
        %v1440 = vunpack.c.l.b16 %v1309
        %v1441 = vunpack.c.l.b16 %v1310
        %v1442 = vunpack.c.l.b16 %v1312
        %v1443 = vunpack.c.l.b16 %v1313
        %v1444 = vunpack.c.l.b16 %v1314
        %v1445 = vunpack.c.l.b16 %v1315
        %v1446 = vunpack.c.l.b16 %v1317
        %v1447 = vunpack.c.l.b16 %v1318
        %v1448 = vunpack.c.l.b16 %v1319
        %v1449 = vunpack.c.l.b16 %v1320
        %v1450 = vpack.c.b16 %v1387, %v1386
        %v1451 = vpack.c.b16 %v1389, %v1388
        %v1452 = vpack.c.b16 %v1391, %v1390
        %v1453 = vpack.c.b16 %v1393, %v1392
        %v1454 = vpack.c.b16 %v1395, %v1394
        %v1455 = vpack.c.b16 %v1397, %v1396
        %v1456 = vpack.c.b16 %v1399, %v1398
        %v1457 = vpack.c.b16 %v1401, %v1400
        %v1458 = vpack.c.b16 %v1403, %v1402
        %v1459 = vpack.c.b16 %v1405, %v1404
        %v1460 = vpack.c.b16 %v1407, %v1406
        %v1461 = vpack.c.b16 %v1409, %v1408
        %v1462 = vpack.c.b16 %v1411, %v1410
        %v1463 = vpack.c.b16 %v1413, %v1412
        %v1464 = vpack.c.b16 %v1415, %v1414
        %v1465 = vpack.c.b16 %v1417, %v1416
        %v1466 = vpack.c.b16 %v1419, %v1418
        %v1467 = vpack.c.b16 %v1421, %v1420
        %v1468 = vpack.c.b16 %v1423, %v1422
        %v1469 = vpack.c.b16 %v1425, %v1424
        %v1470 = vpack.c.b16 %v1427, %v1426
        %v1471 = vpack.c.b16 %v1429, %v1428
        %v1472 = vpack.c.b16 %v1431, %v1430
        %v1473 = vpack.c.b16 %v1433, %v1432
        %v1474 = vpack.c.b16 %v1435, %v1434
        %v1475 = vpack.c.b16 %v1437, %v1436
        %v1476 = vpack.c.b16 %v1439, %v1438
        %v1477 = vpack.c.b16 %v1441, %v1440
        %v1478 = vpack.c.b16 %v1443, %v1442
        %v1479 = vpack.c.b16 %v1445, %v1444
        %v1480 = vpack.c.b16 %v1447, %v1446
        %v1481 = vpack.c.b16 %v1449, %v1448
        %v1498 = vunpack.c.l.b16 %v1246
        %v1499 = vunpack.c.l.b16 %v1251
        %v1500 = vunpack.c.l.b16 %v1256
        %v1501 = vunpack.c.l.b16 %v1261
        %v1502 = vunpack.c.l.b16 %v1266
        %v1503 = vunpack.c.l.b16 %v1271
        %v1504 = vunpack.c.l.b16 %v1276
        %v1505 = vunpack.c.l.b16 %v1281
        %v1506 = vunpack.c.l.b16 %v1286
        %v1507 = vunpack.c.l.b16 %v1291
        %v1508 = vunpack.c.l.b16 %v1296
        %v1509 = vunpack.c.l.b16 %v1301
        %v1510 = vunpack.c.l.b16 %v1306
        %v1511 = vunpack.c.l.b16 %v1311
        %v1512 = vunpack.c.l.b16 %v1316
        %v1513 = vunpack.c.l.b16 %v1321
        %v1514 = vpack.c.b16 %v1498, %v1498
        %v1515 = vpack.c.b16 %v1499, %v1499
        %v1516 = vpack.c.b16 %v1500, %v1500
        %v1517 = vpack.c.b16 %v1501, %v1501
        %v1518 = vpack.c.b16 %v1502, %v1502
        %v1519 = vpack.c.b16 %v1503, %v1503
        %v1520 = vpack.c.b16 %v1504, %v1504
        %v1521 = vpack.c.b16 %v1505, %v1505
        %v1522 = vpack.c.b16 %v1506, %v1506
        %v1523 = vpack.c.b16 %v1507, %v1507
        %v1524 = vpack.c.b16 %v1508, %v1508
        %v1525 = vpack.c.b16 %v1509, %v1509
        %v1526 = vpack.c.b16 %v1510, %v1510
        %v1527 = vpack.c.b16 %v1511, %v1511
        %v1528 = vpack.c.b16 %v1512, %v1512
        %v1529 = vpack.c.b16 %v1513, %v1513
        %v1531 = vshrl.u32 %v1450, 16
        %v1533 = vshll.u32 %v1450, 16
        %v1535 = vrot.slane %v1533, 1
        %v1536 = vor.u32 %v1531, %v1535
        %v1538 = vshll.u32 %v1451, 16
        %v1540 = vrot.slane %v1538, 1
        %v1541 = vsel %vm578, %v1536, %v1540
        %v1542 = vshrl.u32 %v1451, 16
        %v1544 = vor.u32 %v1542, %v1540
        %v1546 = vshll.u32 %v1514, 16
        %v1548 = vrot.slane %v1546, 1
        %v1549 = vsel %vm578, %v1544, %v1548
        %v1551 = vshrl.u32 %v1452, 16
        %v1553 = vshll.u32 %v1452, 16
        %v1555 = vrot.slane %v1553, 1
        %v1556 = vor.u32 %v1551, %v1555
        %v1558 = vshll.u32 %v1453, 16
        %v1560 = vrot.slane %v1558, 1
        %v1561 = vsel %vm578, %v1556, %v1560
        %v1562 = vshrl.u32 %v1453, 16
        %v1564 = vor.u32 %v1562, %v1560
        %v1566 = vshll.u32 %v1515, 16
        %v1568 = vrot.slane %v1566, 1
        %v1569 = vsel %vm578, %v1564, %v1568
        %v1571 = vshrl.u32 %v1454, 16
        %v1573 = vshll.u32 %v1454, 16
        %v1575 = vrot.slane %v1573, 1
        %v1576 = vor.u32 %v1571, %v1575
        %v1578 = vshll.u32 %v1455, 16
        %v1580 = vrot.slane %v1578, 1
        %v1581 = vsel %vm578, %v1576, %v1580
        %v1582 = vshrl.u32 %v1455, 16
        %v1584 = vor.u32 %v1582, %v1580
        %v1586 = vshll.u32 %v1516, 16
        %v1588 = vrot.slane %v1586, 1
        %v1589 = vsel %vm578, %v1584, %v1588
        %v1591 = vshrl.u32 %v1456, 16
        %v1593 = vshll.u32 %v1456, 16
        %v1595 = vrot.slane %v1593, 1
        %v1596 = vor.u32 %v1591, %v1595
        %v1598 = vshll.u32 %v1457, 16
        %v1600 = vrot.slane %v1598, 1
        %v1601 = vsel %vm578, %v1596, %v1600
        %v1602 = vshrl.u32 %v1457, 16
        %v1604 = vor.u32 %v1602, %v1600
        %v1606 = vshll.u32 %v1517, 16
        %v1608 = vrot.slane %v1606, 1
        %v1609 = vsel %vm578, %v1604, %v1608
        %v1611 = vshrl.u32 %v1458, 16
        %v1613 = vshll.u32 %v1458, 16
        %v1615 = vrot.slane %v1613, 1
        %v1616 = vor.u32 %v1611, %v1615
        %v1618 = vshll.u32 %v1459, 16
        %v1620 = vrot.slane %v1618, 1
        %v1621 = vsel %vm578, %v1616, %v1620
        %v1622 = vshrl.u32 %v1459, 16
        %v1624 = vor.u32 %v1622, %v1620
        %v1626 = vshll.u32 %v1518, 16
        %v1628 = vrot.slane %v1626, 1
        %v1629 = vsel %vm578, %v1624, %v1628
        %v1631 = vshrl.u32 %v1460, 16
        %v1633 = vshll.u32 %v1460, 16
        %v1635 = vrot.slane %v1633, 1
        %v1636 = vor.u32 %v1631, %v1635
        %v1638 = vshll.u32 %v1461, 16
        %v1640 = vrot.slane %v1638, 1
        %v1641 = vsel %vm578, %v1636, %v1640
        %v1642 = vshrl.u32 %v1461, 16
        %v1644 = vor.u32 %v1642, %v1640
        %v1646 = vshll.u32 %v1519, 16
        %v1648 = vrot.slane %v1646, 1
        %v1649 = vsel %vm578, %v1644, %v1648
        %v1651 = vshrl.u32 %v1462, 16
        %v1653 = vshll.u32 %v1462, 16
        %v1655 = vrot.slane %v1653, 1
        %v1656 = vor.u32 %v1651, %v1655
        %v1658 = vshll.u32 %v1463, 16
        %v1660 = vrot.slane %v1658, 1
        %v1661 = vsel %vm578, %v1656, %v1660
        %v1662 = vshrl.u32 %v1463, 16
        %v1664 = vor.u32 %v1662, %v1660
        %v1666 = vshll.u32 %v1520, 16
        %v1668 = vrot.slane %v1666, 1
        %v1669 = vsel %vm578, %v1664, %v1668
        %v1671 = vshrl.u32 %v1464, 16
        %v1673 = vshll.u32 %v1464, 16
        %v1675 = vrot.slane %v1673, 1
        %v1676 = vor.u32 %v1671, %v1675
        %v1678 = vshll.u32 %v1465, 16
        %v1680 = vrot.slane %v1678, 1
        %v1681 = vsel %vm578, %v1676, %v1680
        %v1682 = vshrl.u32 %v1465, 16
        %v1684 = vor.u32 %v1682, %v1680
        %v1686 = vshll.u32 %v1521, 16
        %v1688 = vrot.slane %v1686, 1
        %v1689 = vsel %vm578, %v1684, %v1688
        %v1691 = vshrl.u32 %v1466, 16
        %v1693 = vshll.u32 %v1466, 16
        %v1695 = vrot.slane %v1693, 1
        %v1696 = vor.u32 %v1691, %v1695
        %v1698 = vshll.u32 %v1467, 16
        %v1700 = vrot.slane %v1698, 1
        %v1701 = vsel %vm578, %v1696, %v1700
        %v1702 = vshrl.u32 %v1467, 16
        %v1704 = vor.u32 %v1702, %v1700
        %v1706 = vshll.u32 %v1522, 16
        %v1708 = vrot.slane %v1706, 1
        %v1709 = vsel %vm578, %v1704, %v1708
        %v1711 = vshrl.u32 %v1468, 16
        %v1713 = vshll.u32 %v1468, 16
        %v1715 = vrot.slane %v1713, 1
        %v1716 = vor.u32 %v1711, %v1715
        %v1718 = vshll.u32 %v1469, 16
        %v1720 = vrot.slane %v1718, 1
        %v1721 = vsel %vm578, %v1716, %v1720
        %v1722 = vshrl.u32 %v1469, 16
        %v1724 = vor.u32 %v1722, %v1720
        %v1726 = vshll.u32 %v1523, 16
        %v1728 = vrot.slane %v1726, 1
        %v1729 = vsel %vm578, %v1724, %v1728
        %v1731 = vshrl.u32 %v1470, 16
        %v1733 = vshll.u32 %v1470, 16
        %v1735 = vrot.slane %v1733, 1
        %v1736 = vor.u32 %v1731, %v1735
        %v1738 = vshll.u32 %v1471, 16
        %v1740 = vrot.slane %v1738, 1
        %v1741 = vsel %vm578, %v1736, %v1740
        %v1742 = vshrl.u32 %v1471, 16
        %v1744 = vor.u32 %v1742, %v1740
        %v1746 = vshll.u32 %v1524, 16
        %v1748 = vrot.slane %v1746, 1
        %v1749 = vsel %vm578, %v1744, %v1748
        %v1751 = vshrl.u32 %v1472, 16
        %v1753 = vshll.u32 %v1472, 16
        %v1755 = vrot.slane %v1753, 1
        %v1756 = vor.u32 %v1751, %v1755
        %v1758 = vshll.u32 %v1473, 16
        %v1760 = vrot.slane %v1758, 1
        %v1761 = vsel %vm578, %v1756, %v1760
        %v1762 = vshrl.u32 %v1473, 16
        %v1764 = vor.u32 %v1762, %v1760
        %v1766 = vshll.u32 %v1525, 16
        %v1768 = vrot.slane %v1766, 1
        %v1769 = vsel %vm578, %v1764, %v1768
        %v1771 = vshrl.u32 %v1474, 16
        %v1773 = vshll.u32 %v1474, 16
        %v1775 = vrot.slane %v1773, 1
        %v1776 = vor.u32 %v1771, %v1775
        %v1778 = vshll.u32 %v1475, 16
        %v1780 = vrot.slane %v1778, 1
        %v1781 = vsel %vm578, %v1776, %v1780
        %v1782 = vshrl.u32 %v1475, 16
        %v1784 = vor.u32 %v1782, %v1780
        %v1786 = vshll.u32 %v1526, 16
        %v1788 = vrot.slane %v1786, 1
        %v1789 = vsel %vm578, %v1784, %v1788
        %v1791 = vshrl.u32 %v1476, 16
        %v1793 = vshll.u32 %v1476, 16
        %v1795 = vrot.slane %v1793, 1
        %v1796 = vor.u32 %v1791, %v1795
        %v1798 = vshll.u32 %v1477, 16
        %v1800 = vrot.slane %v1798, 1
        %v1801 = vsel %vm578, %v1796, %v1800
        %v1802 = vshrl.u32 %v1477, 16
        %v1804 = vor.u32 %v1802, %v1800
        %v1806 = vshll.u32 %v1527, 16
        %v1808 = vrot.slane %v1806, 1
        %v1809 = vsel %vm578, %v1804, %v1808
        %v1811 = vshrl.u32 %v1478, 16
        %v1813 = vshll.u32 %v1478, 16
        %v1815 = vrot.slane %v1813, 1
        %v1816 = vor.u32 %v1811, %v1815
        %v1818 = vshll.u32 %v1479, 16
        %v1820 = vrot.slane %v1818, 1
        %v1821 = vsel %vm578, %v1816, %v1820
        %v1822 = vshrl.u32 %v1479, 16
        %v1824 = vor.u32 %v1822, %v1820
        %v1826 = vshll.u32 %v1528, 16
        %v1828 = vrot.slane %v1826, 1
        %v1829 = vsel %vm578, %v1824, %v1828
        %v1831 = vshrl.u32 %v1480, 16
        %v1833 = vshll.u32 %v1480, 16
        %v1835 = vrot.slane %v1833, 1
        %v1836 = vor.u32 %v1831, %v1835
        %v1838 = vshll.u32 %v1481, 16
        %v1840 = vrot.slane %v1838, 1
        %v1841 = vsel %vm578, %v1836, %v1840
        %v1842 = vshrl.u32 %v1481, 16
        %v1844 = vor.u32 %v1842, %v1840
        %v1846 = vshll.u32 %v1529, 16
        %v1848 = vrot.slane %v1846, 1
        %v1849 = vsel %vm578, %v1844, %v1848
        %1850 = vrot.lane.b32.xlu0 %v1541, 8
        %v1851 = vpop.permute.xlu0 %1850
        %1852 = vrot.lane.b32.xlu0 %v1549, 8
        %v1853 = vpop.permute.xlu0 %1852
        %1854 = vrot.lane.b32.xlu0 %v1561, 8
        %v1855 = vpop.permute.xlu0 %1854
        %1856 = vrot.lane.b32.xlu0 %v1569, 8
        %v1857 = vpop.permute.xlu0 %1856
        %1858 = vrot.lane.b32.xlu0 %v1581, 8
        %v1859 = vpop.permute.xlu0 %1858
        %1860 = vrot.lane.b32.xlu0 %v1589, 8
        %v1861 = vpop.permute.xlu0 %1860
        %1862 = vrot.lane.b32.xlu0 %v1601, 8
        %v1863 = vpop.permute.xlu0 %1862
        %1864 = vrot.lane.b32.xlu0 %v1609, 8
        %v1865 = vpop.permute.xlu0 %1864
        %1866 = vrot.lane.b32.xlu0 %v1621, 8
        %v1867 = vpop.permute.xlu0 %1866
        %1868 = vrot.lane.b32.xlu0 %v1629, 8
        %v1869 = vpop.permute.xlu0 %1868
        %1870 = vrot.lane.b32.xlu0 %v1641, 8
        %v1871 = vpop.permute.xlu0 %1870
        %1872 = vrot.lane.b32.xlu0 %v1649, 8
        %v1873 = vpop.permute.xlu0 %1872
        %1874 = vrot.lane.b32.xlu0 %v1661, 8
        %v1875 = vpop.permute.xlu0 %1874
        %1876 = vrot.lane.b32.xlu0 %v1669, 8
        %v1877 = vpop.permute.xlu0 %1876
        %1878 = vrot.lane.b32.xlu0 %v1681, 8
        %v1879 = vpop.permute.xlu0 %1878
        %1880 = vrot.lane.b32.xlu0 %v1689, 8
        %v1881 = vpop.permute.xlu0 %1880
        %1882 = vrot.lane.b32.xlu0 %v1701, 8
        %v1883 = vpop.permute.xlu0 %1882
        %1884 = vrot.lane.b32.xlu0 %v1709, 8
        %v1885 = vpop.permute.xlu0 %1884
        %1886 = vrot.lane.b32.xlu0 %v1721, 8
        %v1887 = vpop.permute.xlu0 %1886
        %1888 = vrot.lane.b32.xlu0 %v1729, 8
        %v1889 = vpop.permute.xlu0 %1888
        %1890 = vrot.lane.b32.xlu0 %v1741, 8
        %v1891 = vpop.permute.xlu0 %1890
        %1892 = vrot.lane.b32.xlu0 %v1749, 8
        %v1893 = vpop.permute.xlu0 %1892
        %1894 = vrot.lane.b32.xlu0 %v1761, 8
        %v1895 = vpop.permute.xlu0 %1894
        %1896 = vrot.lane.b32.xlu0 %v1769, 8
        %v1897 = vpop.permute.xlu0 %1896
        %1898 = vrot.lane.b32.xlu0 %v1781, 8
        %v1899 = vpop.permute.xlu0 %1898
        %1900 = vrot.lane.b32.xlu0 %v1789, 8
        %v1901 = vpop.permute.xlu0 %1900
        %1902 = vrot.lane.b32.xlu0 %v1801, 8
        %v1903 = vpop.permute.xlu0 %1902
        %1904 = vrot.lane.b32.xlu0 %v1809, 8
        %v1905 = vpop.permute.xlu0 %1904
        %1906 = vrot.lane.b32.xlu0 %v1821, 8
        %v1907 = vpop.permute.xlu0 %1906
        %1908 = vrot.lane.b32.xlu0 %v1829, 8
        %v1909 = vpop.permute.xlu0 %1908
        %1910 = vrot.lane.b32.xlu0 %v1841, 8
        %v1911 = vpop.permute.xlu0 %1910
        %1912 = vrot.lane.b32.xlu0 %v1849, 8
        %v1913 = vpop.permute.xlu0 %1912
        %v1914 = vrot.slane %v1450, 1
        %v1915 = vrot.slane %v1451, 1
        %v1916 = vsel %vm963, %v1914, %v1915
        %v1917 = vrot.slane %v1514, 1
        %v1918 = vsel %vm963, %v1915, %v1917
        %v1919 = vrot.slane %v1452, 1
        %v1920 = vrot.slane %v1453, 1
        %v1921 = vsel %vm963, %v1919, %v1920
        %v1922 = vrot.slane %v1515, 1
        %v1923 = vsel %vm963, %v1920, %v1922
        %v1924 = vrot.slane %v1454, 1
        %v1925 = vrot.slane %v1455, 1
        %v1926 = vsel %vm963, %v1924, %v1925
        %v1927 = vrot.slane %v1516, 1
        %v1928 = vsel %vm963, %v1925, %v1927
        %v1929 = vrot.slane %v1456, 1
        %v1930 = vrot.slane %v1457, 1
        %v1931 = vsel %vm963, %v1929, %v1930
        %v1932 = vrot.slane %v1517, 1
        %v1933 = vsel %vm963, %v1930, %v1932
        %v1934 = vrot.slane %v1458, 1
        %v1935 = vrot.slane %v1459, 1
        %v1936 = vsel %vm963, %v1934, %v1935
        %v1937 = vrot.slane %v1518, 1
        %v1938 = vsel %vm963, %v1935, %v1937
        %v1939 = vrot.slane %v1460, 1
        %v1940 = vrot.slane %v1461, 1
        %v1941 = vsel %vm963, %v1939, %v1940
        %v1942 = vrot.slane %v1519, 1
        %v1943 = vsel %vm963, %v1940, %v1942
        %v1944 = vrot.slane %v1462, 1
        %v1945 = vrot.slane %v1463, 1
        %v1946 = vsel %vm963, %v1944, %v1945
        %v1947 = vrot.slane %v1520, 1
        %v1948 = vsel %vm963, %v1945, %v1947
        %v1949 = vrot.slane %v1464, 1
        %v1950 = vrot.slane %v1465, 1
        %v1951 = vsel %vm963, %v1949, %v1950
        %v1952 = vrot.slane %v1521, 1
        %v1953 = vsel %vm963, %v1950, %v1952
        %v1954 = vrot.slane %v1466, 1
        %v1955 = vrot.slane %v1467, 1
        %v1956 = vsel %vm963, %v1954, %v1955
        %v1957 = vrot.slane %v1522, 1
        %v1958 = vsel %vm963, %v1955, %v1957
        %v1959 = vrot.slane %v1468, 1
        %v1960 = vrot.slane %v1469, 1
        %v1961 = vsel %vm963, %v1959, %v1960
        %v1962 = vrot.slane %v1523, 1
        %v1963 = vsel %vm963, %v1960, %v1962
        %v1964 = vrot.slane %v1470, 1
        %v1965 = vrot.slane %v1471, 1
        %v1966 = vsel %vm963, %v1964, %v1965
        %v1967 = vrot.slane %v1524, 1
        %v1968 = vsel %vm963, %v1965, %v1967
        %v1969 = vrot.slane %v1472, 1
        %v1970 = vrot.slane %v1473, 1
        %v1971 = vsel %vm963, %v1969, %v1970
        %v1972 = vrot.slane %v1525, 1
        %v1973 = vsel %vm963, %v1970, %v1972
        %v1974 = vrot.slane %v1474, 1
        %v1975 = vrot.slane %v1475, 1
        %v1976 = vsel %vm963, %v1974, %v1975
        %v1977 = vrot.slane %v1526, 1
        %v1978 = vsel %vm963, %v1975, %v1977
        %v1979 = vrot.slane %v1476, 1
        %v1980 = vrot.slane %v1477, 1
        %v1981 = vsel %vm963, %v1979, %v1980
        %v1982 = vrot.slane %v1527, 1
        %v1983 = vsel %vm963, %v1980, %v1982
        %v1984 = vrot.slane %v1478, 1
        %v1985 = vrot.slane %v1479, 1
        %v1986 = vsel %vm963, %v1984, %v1985
        %v1987 = vrot.slane %v1528, 1
        %v1988 = vsel %vm963, %v1985, %v1987
        %v1989 = vrot.slane %v1480, 1
        %v1990 = vrot.slane %v1481, 1
        %v1991 = vsel %vm963, %v1989, %v1990
        %v1992 = vrot.slane %v1529, 1
        %v1993 = vsel %vm963, %v1990, %v1992
        %1994 = vrot.lane.b32.xlu0 %v1916, 16
        %v1995 = vpop.permute.xlu0 %1994
        %1996 = vrot.lane.b32.xlu0 %v1918, 16
        %v1997 = vpop.permute.xlu0 %1996
        %1998 = vrot.lane.b32.xlu0 %v1921, 16
        %v1999 = vpop.permute.xlu0 %1998
        %2000 = vrot.lane.b32.xlu0 %v1923, 16
        %v2001 = vpop.permute.xlu0 %2000
        %2002 = vrot.lane.b32.xlu0 %v1926, 16
        %v2003 = vpop.permute.xlu0 %2002
        %2004 = vrot.lane.b32.xlu0 %v1928, 16
        %v2005 = vpop.permute.xlu0 %2004
        %2006 = vrot.lane.b32.xlu0 %v1931, 16
        %v2007 = vpop.permute.xlu0 %2006
        %2008 = vrot.lane.b32.xlu0 %v1933, 16
        %v2009 = vpop.permute.xlu0 %2008
        %2010 = vrot.lane.b32.xlu0 %v1936, 16
        %v2011 = vpop.permute.xlu0 %2010
        %2012 = vrot.lane.b32.xlu0 %v1938, 16
        %v2013 = vpop.permute.xlu0 %2012
        %2014 = vrot.lane.b32.xlu0 %v1941, 16
        %v2015 = vpop.permute.xlu0 %2014
        %2016 = vrot.lane.b32.xlu0 %v1943, 16
        %v2017 = vpop.permute.xlu0 %2016
        %2018 = vrot.lane.b32.xlu0 %v1946, 16
        %v2019 = vpop.permute.xlu0 %2018
        %2020 = vrot.lane.b32.xlu0 %v1948, 16
        %v2021 = vpop.permute.xlu0 %2020
        %2022 = vrot.lane.b32.xlu0 %v1951, 16
        %v2023 = vpop.permute.xlu0 %2022
        %2024 = vrot.lane.b32.xlu0 %v1953, 16
        %v2025 = vpop.permute.xlu0 %2024
        %2026 = vrot.lane.b32.xlu0 %v1956, 16
        %v2027 = vpop.permute.xlu0 %2026
        %2028 = vrot.lane.b32.xlu0 %v1958, 16
        %v2029 = vpop.permute.xlu0 %2028
        %2030 = vrot.lane.b32.xlu0 %v1961, 16
        %v2031 = vpop.permute.xlu0 %2030
        %2032 = vrot.lane.b32.xlu0 %v1963, 16
        %v2033 = vpop.permute.xlu0 %2032
        %2034 = vrot.lane.b32.xlu0 %v1966, 16
        %v2035 = vpop.permute.xlu0 %2034
        %2036 = vrot.lane.b32.xlu0 %v1968, 16
        %v2037 = vpop.permute.xlu0 %2036
        %2038 = vrot.lane.b32.xlu0 %v1971, 16
        %v2039 = vpop.permute.xlu0 %2038
        %2040 = vrot.lane.b32.xlu0 %v1973, 16
        %v2041 = vpop.permute.xlu0 %2040
        %2042 = vrot.lane.b32.xlu0 %v1976, 16
        %v2043 = vpop.permute.xlu0 %2042
        %2044 = vrot.lane.b32.xlu0 %v1978, 16
        %v2045 = vpop.permute.xlu0 %2044
        %2046 = vrot.lane.b32.xlu0 %v1981, 16
        %v2047 = vpop.permute.xlu0 %2046
        %2048 = vrot.lane.b32.xlu0 %v1983, 16
        %v2049 = vpop.permute.xlu0 %2048
        %2050 = vrot.lane.b32.xlu0 %v1986, 16
        %v2051 = vpop.permute.xlu0 %2050
        %2052 = vrot.lane.b32.xlu0 %v1988, 16
        %v2053 = vpop.permute.xlu0 %2052
        %2054 = vrot.lane.b32.xlu0 %v1991, 16
        %v2055 = vpop.permute.xlu0 %2054
        %2056 = vrot.lane.b32.xlu0 %v1993, 16
        %v2057 = vpop.permute.xlu0 %2056
        %v2059 = vsel %vm1108, %v1450, %v1851
        %v2061 = vsel %vm1108, %v1451, %v1853
        %v2063 = vsel %vm1108, %v1452, %v1855
        %v2065 = vsel %vm1108, %v1453, %v1857
        %v2067 = vsel %vm1108, %v1454, %v1859
        %v2069 = vsel %vm1108, %v1455, %v1861
        %v2071 = vsel %vm1108, %v1456, %v1863
        %v2073 = vsel %vm1108, %v1457, %v1865
        %v2075 = vsel %vm1108, %v1458, %v1867
        %v2077 = vsel %vm1108, %v1459, %v1869
        %v2079 = vsel %vm1108, %v1460, %v1871
        %v2081 = vsel %vm1108, %v1461, %v1873
        %v2083 = vsel %vm1108, %v1462, %v1875
        %v2085 = vsel %vm1108, %v1463, %v1877
        %v2087 = vsel %vm1108, %v1464, %v1879
        %v2089 = vsel %vm1108, %v1465, %v1881
        %v2091 = vsel %vm1108, %v1466, %v1883
        %v2093 = vsel %vm1108, %v1467, %v1885
        %v2095 = vsel %vm1108, %v1468, %v1887
        %v2097 = vsel %vm1108, %v1469, %v1889
        %v2099 = vsel %vm1108, %v1470, %v1891
        %v2101 = vsel %vm1108, %v1471, %v1893
        %v2103 = vsel %vm1108, %v1472, %v1895
        %v2105 = vsel %vm1108, %v1473, %v1897
        %v2107 = vsel %vm1108, %v1474, %v1899
        %v2109 = vsel %vm1108, %v1475, %v1901
        %v2111 = vsel %vm1108, %v1476, %v1903
        %v2113 = vsel %vm1108, %v1477, %v1905
        %v2115 = vsel %vm1108, %v1478, %v1907
        %v2117 = vsel %vm1108, %v1479, %v1909
        %v2119 = vsel %vm1108, %v1480, %v1911
        %v2121 = vsel %vm1108, %v1481, %v1913
        %v2123 = vsel %vm1173, %v2059, %v1995
        %v2125 = vsel %vm1173, %v2061, %v1997
        %v2127 = vsel %vm1173, %v2063, %v1999
        %v2129 = vsel %vm1173, %v2065, %v2001
        %v2131 = vsel %vm1173, %v2067, %v2003
        %v2133 = vsel %vm1173, %v2069, %v2005
        %v2135 = vsel %vm1173, %v2071, %v2007
        %v2137 = vsel %vm1173, %v2073, %v2009
        %v2139 = vsel %vm1173, %v2075, %v2011
        %v2141 = vsel %vm1173, %v2077, %v2013
        %v2143 = vsel %vm1173, %v2079, %v2015
        %v2145 = vsel %vm1173, %v2081, %v2017
        %v2147 = vsel %vm1173, %v2083, %v2019
        %v2149 = vsel %vm1173, %v2085, %v2021
        %v2151 = vsel %vm1173, %v2087, %v2023
        %v2153 = vsel %vm1173, %v2089, %v2025
        %v2155 = vsel %vm1173, %v2091, %v2027
        %v2157 = vsel %vm1173, %v2093, %v2029
        %v2159 = vsel %vm1173, %v2095, %v2031
        %v2161 = vsel %vm1173, %v2097, %v2033
        %v2163 = vsel %vm1173, %v2099, %v2035
        %v2165 = vsel %vm1173, %v2101, %v2037
        %v2167 = vsel %vm1173, %v2103, %v2039
        %v2169 = vsel %vm1173, %v2105, %v2041
        %v2171 = vsel %vm1173, %v2107, %v2043
        %v2173 = vsel %vm1173, %v2109, %v2045
        %v2175 = vsel %vm1173, %v2111, %v2047
        %v2177 = vsel %vm1173, %v2113, %v2049
        %v2179 = vsel %vm1173, %v2115, %v2051
        %v2181 = vsel %vm1173, %v2117, %v2053
        %v2183 = vsel %vm1173, %v2119, %v2055
        %v2185 = vsel %vm1173, %v2121, %v2057
        %s2186 = scalar_lea.vmem %s284, 12
        %v2187 = vld [vmem:[%s2186] sm:$0xf]
        %v2188 = vld [vmem:[%s2186 + $0x4] sm:$0xf]
        %v2189 = vld [vmem:[%s2186 + $0x8] sm:$0xf]
        %v2193 = vunpack.c.l.b16 %v2187
        %v2194 = vunpack.c.l.b16 %v2188
        %v2195 = vunpack.c.l.b16 %v2189
        %v2196 = vpack.c.b16 %v2194, %v2193
        %v2197 = vpack.c.b16 %v2195, %v2195
        %vm2199 = vcmask 195584
        %v2200 = vsel %vm2199, %v2123, 0
        %v2202 = vsel %vm2199, %v2125, 0
        %v2204 = vsel %vm2199, %v2127, 0
        %v2206 = vsel %vm2199, %v2129, 0
        %v2208 = vsel %vm2199, %v2131, 0
        %v2210 = vsel %vm2199, %v2133, 0
        %v2212 = vsel %vm2199, %v2135, 0
        %v2214 = vsel %vm2199, %v2137, 0
        %v2216 = vsel %vm2199, %v2139, 0
        %v2218 = vsel %vm2199, %v2141, 0
        %v2220 = vsel %vm2199, %v2143, 0
        %v2222 = vsel %vm2199, %v2145, 0
        %v2224 = vsel %vm2199, %v2147, 0
        %v2226 = vsel %vm2199, %v2149, 0
        %v2228 = vsel %vm2199, %v2151, 0
        %v2230 = vsel %vm2199, %v2153, 0
        %v2232 = vsel %vm2199, %v2155, 0
        %v2234 = vsel %vm2199, %v2157, 0
        %v2236 = vsel %vm2199, %v2159, 0
        %v2238 = vsel %vm2199, %v2161, 0
        %v2240 = vsel %vm2199, %v2163, 0
        %v2242 = vsel %vm2199, %v2165, 0
        %v2244 = vsel %vm2199, %v2167, 0
        %v2246 = vsel %vm2199, %v2169, 0
        %v2248 = vsel %vm2199, %v2171, 0
        %v2250 = vsel %vm2199, %v2173, 0
        %v2252 = vsel %vm2199, %v2175, 0
        %v2254 = vsel %vm2199, %v2177, 0
        %v2256 = vsel %vm2199, %v2179, 0
        %v2258 = vsel %vm2199, %v2181, 0
        %v2260 = vsel %vm2199, %v2183, 0
        %v2262 = vsel %vm2199, %v2185, 0
        %vm2264 = vcmask 1043456
        %v2266 = vsel %vm2264, %v2197, 0
        %2268 = vmatprep.subr.bf16.mxu0 0
        %2269 = vmatpush1.bf16.msra.mxu0 %v2196
        %2270 = vmatprep.subr.bf16.mxu0 0
        %2271 = vmatpush1.bf16.msra.mxu0 %v2266
        %2272 = vmatprep.subr.bf16.mxu0 0
        %2273 = vmatpush1.bf16.msra.mxu0 0
        %2274 = vmatprep.subr.bf16.mxu0 0
        %2275 = vmatpush1.bf16.msra.mxu0 0
        %2276 = vmatprep.subr.bf16.mxu0 0
        %2277 = vmatpush1.bf16.msra.mxu0 0
        %2278 = vmatprep.subr.bf16.mxu0 0
        %2279 = vmatpush1.bf16.msra.mxu0 0
        %2280 = vmatprep.subr.bf16.mxu0 0
        %2281 = vmatpush1.bf16.msra.mxu0 0
        %2282 = vmatprep.subr.bf16.mxu0 0
        %2283 = vmatpush1.bf16.msra.mxu0 0
        %2284 = vmatprep.subr.bf16.mxu0 0
        %2285 = vmatpush1.bf16.msra.mxu0 0
        %2286 = vmatprep.subr.bf16.mxu0 0
        %2287 = vmatpush1.bf16.msra.mxu0 0
        %2288 = vmatprep.subr.bf16.mxu0 0
        %2289 = vmatpush1.bf16.msra.mxu0 0
        %2290 = vmatprep.subr.bf16.mxu0 0
        %2291 = vmatpush1.bf16.msra.mxu0 0
        %2292 = vmatprep.subr.bf16.mxu0 0
        %2293 = vmatpush1.bf16.msra.mxu0 0
        %2294 = vmatprep.subr.bf16.mxu0 0
        %2295 = vmatpush1.bf16.msra.mxu0 0
        %2296 = vmatprep.subr.bf16.mxu0 0
        %2297 = vmatpush1.bf16.msra.mxu0 0
        %2298 = vmatprep.subr.bf16.mxu0 0
        %2299 = vmatpush1.bf16.msra.mxu0 0
        %2300 = vmatprep.mubr.bf16.mxu0 0
        %2301 = vmatmul.mubr.bf16.gmra.mrb[0].mxu0 %v2200
        %v2302 = vpop.f32.mrb[0].mxu0
        %v2303 = vadd.f32 0.0, %v2302
        %v2304 = vpop.f32.mrb[0].mxu0
        %v2305 = vpop.f32.mrb[0].mxu0
        %v2306 = vadd.f32 0.0, %v2305
        %v2307 = vpop.f32.mrb[0].mxu0
        %2308 = vmatprep.mubr.bf16.mxu0 0
        %2309 = vmatmul.mubr.bf16.gmra.mrb[0].mxu0 %v2202
        %v2310 = vpop.f32.mrb[0].mxu0
        %v2311 = vadd.f32 0.0, %v2310
        %v2312 = vpop.f32.mrb[0].mxu0
        %v2313 = vpop.f32.mrb[0].mxu0
        %v2314 = vadd.f32 0.0, %v2313
        %v2315 = vpop.f32.mrb[0].mxu0
        %2316 = vmatprep.mubr.bf16.mxu0 0
        %2317 = vmatmul.mubr.bf16.gmra.mrb[0].mxu0 %v2204
        %v2318 = vpop.f32.mrb[0].mxu0
        %v2319 = vadd.f32 0.0, %v2318
        %v2320 = vpop.f32.mrb[0].mxu0
        %v2321 = vpop.f32.mrb[0].mxu0
        %v2322 = vadd.f32 0.0, %v2321
        %v2323 = vpop.f32.mrb[0].mxu0
        %2324 = vmatprep.mubr.bf16.mxu0 0
        %2325 = vmatmul.mubr.bf16.gmra.mrb[0].mxu0 %v2206
        %v2326 = vpop.f32.mrb[0].mxu0
        %v2327 = vadd.f32 0.0, %v2326
        %v2328 = vpop.f32.mrb[0].mxu0
        %v2329 = vpop.f32.mrb[0].mxu0
        %v2330 = vadd.f32 0.0, %v2329
        %v2331 = vpop.f32.mrb[0].mxu0
        %2332 = vmatprep.mubr.bf16.mxu0 0
        %2333 = vmatmul.mubr.bf16.gmra.mrb[0].mxu0 %v2208
        %v2334 = vpop.f32.mrb[0].mxu0
        %v2335 = vadd.f32 0.0, %v2334
        %v2336 = vpop.f32.mrb[0].mxu0
        %v2337 = vpop.f32.mrb[0].mxu0
        %v2338 = vadd.f32 0.0, %v2337
        %v2339 = vpop.f32.mrb[0].mxu0
        %2340 = vmatprep.mubr.bf16.mxu0 0
        %2341 = vmatmul.mubr.bf16.gmra.mrb[0].mxu0 %v2210
        %v2342 = vpop.f32.mrb[0].mxu0
        %v2343 = vadd.f32 0.0, %v2342
        %v2344 = vpop.f32.mrb[0].mxu0
        %v2345 = vpop.f32.mrb[0].mxu0
        %v2346 = vadd.f32 0.0, %v2345
        %v2347 = vpop.f32.mrb[0].mxu0
        %2348 = vmatprep.mubr.bf16.mxu0 0
        %2349 = vmatmul.mubr.bf16.gmra.mrb[0].mxu0 %v2212
        %v2350 = vpop.f32.mrb[0].mxu0
        %v2351 = vadd.f32 0.0, %v2350
        %v2352 = vpop.f32.mrb[0].mxu0
        %v2353 = vpop.f32.mrb[0].mxu0
        %v2354 = vadd.f32 0.0, %v2353
        %v2355 = vpop.f32.mrb[0].mxu0
        %2356 = vmatprep.mubr.bf16.mxu0 0
        %2357 = vmatmul.mubr.bf16.gmra.mrb[0].mxu0 %v2214
        %v2358 = vpop.f32.mrb[0].mxu0
        %v2359 = vadd.f32 0.0, %v2358
        %v2360 = vpop.f32.mrb[0].mxu0
        %v2361 = vpop.f32.mrb[0].mxu0
        %v2362 = vadd.f32 0.0, %v2361
        %v2363 = vpop.f32.mrb[0].mxu0
        %2364 = vmatprep.mubr.bf16.mxu0 0
        %2365 = vmatmul.mubr.bf16.gmra.mrb[0].mxu0 %v2216
        %v2366 = vpop.f32.mrb[0].mxu0
        %v2367 = vadd.f32 0.0, %v2366
        %v2368 = vpop.f32.mrb[0].mxu0
        %v2369 = vpop.f32.mrb[0].mxu0
        %v2370 = vadd.f32 0.0, %v2369
        %v2371 = vpop.f32.mrb[0].mxu0
        %2372 = vmatprep.mubr.bf16.mxu0 0
        %2373 = vmatmul.mubr.bf16.gmra.mrb[0].mxu0 %v2218
        %v2374 = vpop.f32.mrb[0].mxu0
        %v2375 = vadd.f32 0.0, %v2374
        %v2376 = vpop.f32.mrb[0].mxu0
        %v2377 = vpop.f32.mrb[0].mxu0
        %v2378 = vadd.f32 0.0, %v2377
        %v2379 = vpop.f32.mrb[0].mxu0
        %2380 = vmatprep.mubr.bf16.mxu0 0
        %2381 = vmatmul.mubr.bf16.gmra.mrb[0].mxu0 %v2220
        %v2382 = vpop.f32.mrb[0].mxu0
        %v2383 = vadd.f32 0.0, %v2382
        %v2384 = vpop.f32.mrb[0].mxu0
        %v2385 = vpop.f32.mrb[0].mxu0
        %v2386 = vadd.f32 0.0, %v2385
        %v2387 = vpop.f32.mrb[0].mxu0
        %2388 = vmatprep.mubr.bf16.mxu0 0
        %2389 = vmatmul.mubr.bf16.gmra.mrb[0].mxu0 %v2222
        %v2390 = vpop.f32.mrb[0].mxu0
        %v2391 = vadd.f32 0.0, %v2390
        %v2392 = vpop.f32.mrb[0].mxu0
        %v2393 = vpop.f32.mrb[0].mxu0
        %v2394 = vadd.f32 0.0, %v2393
        %v2395 = vpop.f32.mrb[0].mxu0
        %2396 = vmatprep.mubr.bf16.mxu0 0
        %2397 = vmatmul.mubr.bf16.gmra.mrb[0].mxu0 %v2224
        %v2398 = vpop.f32.mrb[0].mxu0
        %v2399 = vadd.f32 0.0, %v2398
        %v2400 = vpop.f32.mrb[0].mxu0
        %v2401 = vpop.f32.mrb[0].mxu0
        %v2402 = vadd.f32 0.0, %v2401
        %v2403 = vpop.f32.mrb[0].mxu0
        %2404 = vmatprep.mubr.bf16.mxu0 0
        %2405 = vmatmul.mubr.bf16.gmra.mrb[0].mxu0 %v2226
        %v2406 = vpop.f32.mrb[0].mxu0
        %v2407 = vadd.f32 0.0, %v2406
        %v2408 = vpop.f32.mrb[0].mxu0
        %v2409 = vpop.f32.mrb[0].mxu0
        %v2410 = vadd.f32 0.0, %v2409
        %v2411 = vpop.f32.mrb[0].mxu0
        %2412 = vmatprep.mubr.bf16.mxu0 0
        %2413 = vmatmul.mubr.bf16.gmra.mrb[0].mxu0 %v2228
        %v2414 = vpop.f32.mrb[0].mxu0
        %v2415 = vadd.f32 0.0, %v2414
        %v2416 = vpop.f32.mrb[0].mxu0
        %v2417 = vpop.f32.mrb[0].mxu0
        %v2418 = vadd.f32 0.0, %v2417
        %v2419 = vpop.f32.mrb[0].mxu0
        %2420 = vmatprep.mubr.bf16.mxu0 0
        %2421 = vmatmul.mubr.bf16.gmra.mrb[0].mxu0 %v2230
        %v2422 = vpop.f32.mrb[0].mxu0
        %v2423 = vadd.f32 0.0, %v2422
        %v2424 = vpop.f32.mrb[0].mxu0
        %v2425 = vpop.f32.mrb[0].mxu0
        %v2426 = vadd.f32 0.0, %v2425
        %v2427 = vpop.f32.mrb[0].mxu0
        %2428 = vmatprep.mubr.bf16.mxu0 0
        %2429 = vmatmul.mubr.bf16.gmra.mrb[0].mxu0 %v2232
        %v2430 = vpop.f32.mrb[0].mxu0
        %v2431 = vadd.f32 0.0, %v2430
        %v2432 = vpop.f32.mrb[0].mxu0
        %v2433 = vpop.f32.mrb[0].mxu0
        %v2434 = vadd.f32 0.0, %v2433
        %v2435 = vpop.f32.mrb[0].mxu0
        %2436 = vmatprep.mubr.bf16.mxu0 0
        %2437 = vmatmul.mubr.bf16.gmra.mrb[0].mxu0 %v2234
        %v2438 = vpop.f32.mrb[0].mxu0
        %v2439 = vadd.f32 0.0, %v2438
        %v2440 = vpop.f32.mrb[0].mxu0
        %v2441 = vpop.f32.mrb[0].mxu0
        %v2442 = vadd.f32 0.0, %v2441
        %v2443 = vpop.f32.mrb[0].mxu0
        %2444 = vmatprep.mubr.bf16.mxu0 0
        %2445 = vmatmul.mubr.bf16.gmra.mrb[0].mxu0 %v2236
        %v2446 = vpop.f32.mrb[0].mxu0
        %v2447 = vadd.f32 0.0, %v2446
        %v2448 = vpop.f32.mrb[0].mxu0
        %v2449 = vpop.f32.mrb[0].mxu0
        %v2450 = vadd.f32 0.0, %v2449
        %v2451 = vpop.f32.mrb[0].mxu0
        %2452 = vmatprep.mubr.bf16.mxu0 0
        %2453 = vmatmul.mubr.bf16.gmra.mrb[0].mxu0 %v2238
        %v2454 = vpop.f32.mrb[0].mxu0
        %v2455 = vadd.f32 0.0, %v2454
        %v2456 = vpop.f32.mrb[0].mxu0
        %v2457 = vpop.f32.mrb[0].mxu0
        %v2458 = vadd.f32 0.0, %v2457
        %v2459 = vpop.f32.mrb[0].mxu0
        %2460 = vmatprep.mubr.bf16.mxu0 0
        %2461 = vmatmul.mubr.bf16.gmra.mrb[0].mxu0 %v2240
        %v2462 = vpop.f32.mrb[0].mxu0
        %v2463 = vadd.f32 0.0, %v2462
        %v2464 = vpop.f32.mrb[0].mxu0
        %v2465 = vpop.f32.mrb[0].mxu0
        %v2466 = vadd.f32 0.0, %v2465
        %v2467 = vpop.f32.mrb[0].mxu0
        %2468 = vmatprep.mubr.bf16.mxu0 0
        %2469 = vmatmul.mubr.bf16.gmra.mrb[0].mxu0 %v2242
        %v2470 = vpop.f32.mrb[0].mxu0
        %v2471 = vadd.f32 0.0, %v2470
        %v2472 = vpop.f32.mrb[0].mxu0
        %v2473 = vpop.f32.mrb[0].mxu0
        %v2474 = vadd.f32 0.0, %v2473
        %v2475 = vpop.f32.mrb[0].mxu0
        %2476 = vmatprep.mubr.bf16.mxu0 0
        %2477 = vmatmul.mubr.bf16.gmra.mrb[0].mxu0 %v2244
        %v2478 = vpop.f32.mrb[0].mxu0
        %v2479 = vadd.f32 0.0, %v2478
        %v2480 = vpop.f32.mrb[0].mxu0
        %v2481 = vpop.f32.mrb[0].mxu0
        %v2482 = vadd.f32 0.0, %v2481
        %v2483 = vpop.f32.mrb[0].mxu0
        %2484 = vmatprep.mubr.bf16.mxu0 0
        %2485 = vmatmul.mubr.bf16.gmra.mrb[0].mxu0 %v2246
        %v2486 = vpop.f32.mrb[0].mxu0
        %v2487 = vadd.f32 0.0, %v2486
        %v2488 = vpop.f32.mrb[0].mxu0
        %v2489 = vpop.f32.mrb[0].mxu0
        %v2490 = vadd.f32 0.0, %v2489
        %v2491 = vpop.f32.mrb[0].mxu0
        %2492 = vmatprep.mubr.bf16.mxu0 0
        %2493 = vmatmul.mubr.bf16.gmra.mrb[0].mxu0 %v2248
        %v2494 = vpop.f32.mrb[0].mxu0
        %v2495 = vadd.f32 0.0, %v2494
        %v2496 = vpop.f32.mrb[0].mxu0
        %v2497 = vpop.f32.mrb[0].mxu0
        %v2498 = vadd.f32 0.0, %v2497
        %v2499 = vpop.f32.mrb[0].mxu0
        %2500 = vmatprep.mubr.bf16.mxu0 0
        %2501 = vmatmul.mubr.bf16.gmra.mrb[0].mxu0 %v2250
        %v2502 = vpop.f32.mrb[0].mxu0
        %v2503 = vadd.f32 0.0, %v2502
        %v2504 = vpop.f32.mrb[0].mxu0
        %v2505 = vpop.f32.mrb[0].mxu0
        %v2506 = vadd.f32 0.0, %v2505
        %v2507 = vpop.f32.mrb[0].mxu0
        %2508 = vmatprep.mubr.bf16.mxu0 0
        %2509 = vmatmul.mubr.bf16.gmra.mrb[0].mxu0 %v2252
        %v2510 = vpop.f32.mrb[0].mxu0
        %v2511 = vadd.f32 0.0, %v2510
        %v2512 = vpop.f32.mrb[0].mxu0
        %v2513 = vpop.f32.mrb[0].mxu0
        %v2514 = vadd.f32 0.0, %v2513
        %v2515 = vpop.f32.mrb[0].mxu0
        %2516 = vmatprep.mubr.bf16.mxu0 0
        %2517 = vmatmul.mubr.bf16.gmra.mrb[0].mxu0 %v2254
        %v2518 = vpop.f32.mrb[0].mxu0
        %v2519 = vadd.f32 0.0, %v2518
        %v2520 = vpop.f32.mrb[0].mxu0
        %v2521 = vpop.f32.mrb[0].mxu0
        %v2522 = vadd.f32 0.0, %v2521
        %v2523 = vpop.f32.mrb[0].mxu0
        %2524 = vmatprep.mubr.bf16.mxu0 0
        %2525 = vmatmul.mubr.bf16.gmra.mrb[0].mxu0 %v2256
        %v2526 = vpop.f32.mrb[0].mxu0
        %v2527 = vadd.f32 0.0, %v2526
        %v2528 = vpop.f32.mrb[0].mxu0
        %v2529 = vpop.f32.mrb[0].mxu0
        %v2530 = vadd.f32 0.0, %v2529
        %v2531 = vpop.f32.mrb[0].mxu0
        %2532 = vmatprep.mubr.bf16.mxu0 0
        %2533 = vmatmul.mubr.bf16.gmra.mrb[0].mxu0 %v2258
        %v2534 = vpop.f32.mrb[0].mxu0
        %v2535 = vadd.f32 0.0, %v2534
        %v2536 = vpop.f32.mrb[0].mxu0
        %v2537 = vpop.f32.mrb[0].mxu0
        %v2538 = vadd.f32 0.0, %v2537
        %v2539 = vpop.f32.mrb[0].mxu0
        %2540 = vmatprep.mubr.bf16.mxu0 0
        %2541 = vmatmul.mubr.bf16.gmra.mrb[0].mxu0 %v2260
        %v2542 = vpop.f32.mrb[0].mxu0
        %v2543 = vadd.f32 0.0, %v2542
        %v2544 = vpop.f32.mrb[0].mxu0
        %v2545 = vpop.f32.mrb[0].mxu0
        %v2546 = vadd.f32 0.0, %v2545
        %v2547 = vpop.f32.mrb[0].mxu0
        %2548 = vmatprep.mubr.bf16.mxu0 0
        %2549 = vmatmul.mubr.bf16.gmra.mrb[0].mxu0 %v2262
        %v2550 = vpop.f32.mrb[0].mxu0
        %v2551 = vadd.f32 0.0, %v2550
        %v2552 = vpop.f32.mrb[0].mxu0
        %v2553 = vpop.f32.mrb[0].mxu0
        %v2554 = vadd.f32 0.0, %v2553
        %v2555 = vpop.f32.mrb[0].mxu0
        %2556 = vdwg.mxu0
        %v2560 = vunpack.c.l.b16 %v1238
        %v2561 = vunpack.c.l.b16 %v1239
        %v2562 = vunpack.c.l.b16 %v1240
        %v2563 = vpack.c.b16 %v2561, %v2560
        %v2564 = vpack.c.b16 %v2562, %v2562
        %v2566 = vsel %vm2199, %v1175, 0
        %v2568 = vsel %vm2199, %v1177, 0
        %v2570 = vsel %vm2199, %v1179, 0
        %v2572 = vsel %vm2199, %v1181, 0
        %v2574 = vsel %vm2199, %v1183, 0
        %v2576 = vsel %vm2199, %v1185, 0
        %v2578 = vsel %vm2199, %v1187, 0
        %v2580 = vsel %vm2199, %v1189, 0
        %v2582 = vsel %vm2199, %v1191, 0
        %v2584 = vsel %vm2199, %v1193, 0
        %v2586 = vsel %vm2199, %v1195, 0
        %v2588 = vsel %vm2199, %v1197, 0
        %v2590 = vsel %vm2199, %v1199, 0
        %v2592 = vsel %vm2199, %v1201, 0
        %v2594 = vsel %vm2199, %v1203, 0
        %v2596 = vsel %vm2199, %v1205, 0
        %v2598 = vsel %vm2199, %v1207, 0
        %v2600 = vsel %vm2199, %v1209, 0
        %v2602 = vsel %vm2199, %v1211, 0
        %v2604 = vsel %vm2199, %v1213, 0
        %v2606 = vsel %vm2199, %v1215, 0
        %v2608 = vsel %vm2199, %v1217, 0
        %v2610 = vsel %vm2199, %v1219, 0
        %v2612 = vsel %vm2199, %v1221, 0
        %v2614 = vsel %vm2199, %v1223, 0
        %v2616 = vsel %vm2199, %v1225, 0
        %v2618 = vsel %vm2199, %v1227, 0
        %v2620 = vsel %vm2199, %v1229, 0
        %v2622 = vsel %vm2199, %v1231, 0
        %v2624 = vsel %vm2199, %v1233, 0
        %v2626 = vsel %vm2199, %v1235, 0
        %v2628 = vsel %vm2199, %v1237, 0
        %v2631 = vsel %vm2264, %v2564, 0
        %2633 = vmatprep.subr.bf16.mxu0 0
        %2634 = vmatpush1.bf16.msra.mxu0 %v2563
        %2635 = vmatprep.subr.bf16.mxu0 0
        %2636 = vmatpush1.bf16.msra.mxu0 %v2631
        %2637 = vmatprep.subr.bf16.mxu0 0
        %2638 = vmatpush1.bf16.msra.mxu0 0
        %2639 = vmatprep.subr.bf16.mxu0 0
        %2640 = vmatpush1.bf16.msra.mxu0 0
        %2641 = vmatprep.subr.bf16.mxu0 0
        %2642 = vmatpush1.bf16.msra.mxu0 0
        %2643 = vmatprep.subr.bf16.mxu0 0
        %2644 = vmatpush1.bf16.msra.mxu0 0
        %2645 = vmatprep.subr.bf16.mxu0 0
        %2646 = vmatpush1.bf16.msra.mxu0 0
        %2647 = vmatprep.subr.bf16.mxu0 0
        %2648 = vmatpush1.bf16.msra.mxu0 0
        %2649 = vmatprep.subr.bf16.mxu0 0
        %2650 = vmatpush1.bf16.msra.mxu0 0
        %2651 = vmatprep.subr.bf16.mxu0 0
        %2652 = vmatpush1.bf16.msra.mxu0 0
        %2653 = vmatprep.subr.bf16.mxu0 0
        %2654 = vmatpush1.bf16.msra.mxu0 0
        %2655 = vmatprep.subr.bf16.mxu0 0
        %2656 = vmatpush1.bf16.msra.mxu0 0
        %2657 = vmatprep.subr.bf16.mxu0 0
        %2658 = vmatpush1.bf16.msra.mxu0 0
        %2659 = vmatprep.subr.bf16.mxu0 0
        %2660 = vmatpush1.bf16.msra.mxu0 0
        %2661 = vmatprep.subr.bf16.mxu0 0
        %2662 = vmatpush1.bf16.msra.mxu0 0
        %2663 = vmatprep.subr.bf16.mxu0 0
        %2664 = vmatpush1.bf16.msra.mxu0 0
        %2665 = vmatprep.mubr.bf16.mxu0 0
        %2666 = vmatmul.mubr.bf16.gmra.mrb[0].mxu0 %v2566
        %v2667 = vpop.f32.mrb[0].mxu0
        %v2668 = vadd.f32 %v2303, %v2667
        %v2669 = vpop.f32.mrb[0].mxu0
        %v2670 = vpop.f32.mrb[0].mxu0
        %v2671 = vadd.f32 %v2306, %v2670
        %v2672 = vpop.f32.mrb[0].mxu0
        %2673 = vmatprep.mubr.bf16.mxu0 0
        %2674 = vmatmul.mubr.bf16.gmra.mrb[0].mxu0 %v2568
        %v2675 = vpop.f32.mrb[0].mxu0
        %v2676 = vadd.f32 %v2311, %v2675
        %v2677 = vpop.f32.mrb[0].mxu0
        %v2678 = vpop.f32.mrb[0].mxu0
        %v2679 = vadd.f32 %v2314, %v2678
        %v2680 = vpop.f32.mrb[0].mxu0
        %2681 = vmatprep.mubr.bf16.mxu0 0
        %2682 = vmatmul.mubr.bf16.gmra.mrb[0].mxu0 %v2570
        %v2683 = vpop.f32.mrb[0].mxu0
        %v2684 = vadd.f32 %v2319, %v2683
        %v2685 = vpop.f32.mrb[0].mxu0
        %v2686 = vpop.f32.mrb[0].mxu0
        %v2687 = vadd.f32 %v2322, %v2686
        %v2688 = vpop.f32.mrb[0].mxu0
        %2689 = vmatprep.mubr.bf16.mxu0 0
        %2690 = vmatmul.mubr.bf16.gmra.mrb[0].mxu0 %v2572
        %v2691 = vpop.f32.mrb[0].mxu0
        %v2692 = vadd.f32 %v2327, %v2691
        %v2693 = vpop.f32.mrb[0].mxu0
        %v2694 = vpop.f32.mrb[0].mxu0
        %v2695 = vadd.f32 %v2330, %v2694
        %v2696 = vpop.f32.mrb[0].mxu0
        %2697 = vmatprep.mubr.bf16.mxu0 0
        %2698 = vmatmul.mubr.bf16.gmra.mrb[0].mxu0 %v2574
        %v2699 = vpop.f32.mrb[0].mxu0
        %v2700 = vadd.f32 %v2335, %v2699
        %v2701 = vpop.f32.mrb[0].mxu0
        %v2702 = vpop.f32.mrb[0].mxu0
        %v2703 = vadd.f32 %v2338, %v2702
        %v2704 = vpop.f32.mrb[0].mxu0
        %2705 = vmatprep.mubr.bf16.mxu0 0
        %2706 = vmatmul.mubr.bf16.gmra.mrb[0].mxu0 %v2576
        %v2707 = vpop.f32.mrb[0].mxu0
        %v2708 = vadd.f32 %v2343, %v2707
        %v2709 = vpop.f32.mrb[0].mxu0
        %v2710 = vpop.f32.mrb[0].mxu0
        %v2711 = vadd.f32 %v2346, %v2710
        %v2712 = vpop.f32.mrb[0].mxu0
        %2713 = vmatprep.mubr.bf16.mxu0 0
        %2714 = vmatmul.mubr.bf16.gmra.mrb[0].mxu0 %v2578
        %v2715 = vpop.f32.mrb[0].mxu0
        %v2716 = vadd.f32 %v2351, %v2715
        %v2717 = vpop.f32.mrb[0].mxu0
        %v2718 = vpop.f32.mrb[0].mxu0
        %v2719 = vadd.f32 %v2354, %v2718
        %v2720 = vpop.f32.mrb[0].mxu0
        %2721 = vmatprep.mubr.bf16.mxu0 0
        %2722 = vmatmul.mubr.bf16.gmra.mrb[0].mxu0 %v2580
        %v2723 = vpop.f32.mrb[0].mxu0
        %v2724 = vadd.f32 %v2359, %v2723
        %v2725 = vpop.f32.mrb[0].mxu0
        %v2726 = vpop.f32.mrb[0].mxu0
        %v2727 = vadd.f32 %v2362, %v2726
        %v2728 = vpop.f32.mrb[0].mxu0
        %2729 = vmatprep.mubr.bf16.mxu0 0
        %2730 = vmatmul.mubr.bf16.gmra.mrb[0].mxu0 %v2582
        %v2731 = vpop.f32.mrb[0].mxu0
        %v2732 = vadd.f32 %v2367, %v2731
        %v2733 = vpop.f32.mrb[0].mxu0
        %v2734 = vpop.f32.mrb[0].mxu0
        %v2735 = vadd.f32 %v2370, %v2734
        %v2736 = vpop.f32.mrb[0].mxu0
        %2737 = vmatprep.mubr.bf16.mxu0 0
        %2738 = vmatmul.mubr.bf16.gmra.mrb[0].mxu0 %v2584
        %v2739 = vpop.f32.mrb[0].mxu0
        %v2740 = vadd.f32 %v2375, %v2739
        %v2741 = vpop.f32.mrb[0].mxu0
        %v2742 = vpop.f32.mrb[0].mxu0
        %v2743 = vadd.f32 %v2378, %v2742
        %v2744 = vpop.f32.mrb[0].mxu0
        %2745 = vmatprep.mubr.bf16.mxu0 0
        %2746 = vmatmul.mubr.bf16.gmra.mrb[0].mxu0 %v2586
        %v2747 = vpop.f32.mrb[0].mxu0
        %v2748 = vadd.f32 %v2383, %v2747
        %v2749 = vpop.f32.mrb[0].mxu0
        %v2750 = vpop.f32.mrb[0].mxu0
        %v2751 = vadd.f32 %v2386, %v2750
        %v2752 = vpop.f32.mrb[0].mxu0
        %2753 = vmatprep.mubr.bf16.mxu0 0
        %2754 = vmatmul.mubr.bf16.gmra.mrb[0].mxu0 %v2588
        %v2755 = vpop.f32.mrb[0].mxu0
        %v2756 = vadd.f32 %v2391, %v2755
        %v2757 = vpop.f32.mrb[0].mxu0
        %v2758 = vpop.f32.mrb[0].mxu0
        %v2759 = vadd.f32 %v2394, %v2758
        %v2760 = vpop.f32.mrb[0].mxu0
        %2761 = vmatprep.mubr.bf16.mxu0 0
        %2762 = vmatmul.mubr.bf16.gmra.mrb[0].mxu0 %v2590
        %v2763 = vpop.f32.mrb[0].mxu0
        %v2764 = vadd.f32 %v2399, %v2763
        %v2765 = vpop.f32.mrb[0].mxu0
        %v2766 = vpop.f32.mrb[0].mxu0
        %v2767 = vadd.f32 %v2402, %v2766
        %v2768 = vpop.f32.mrb[0].mxu0
        %2769 = vmatprep.mubr.bf16.mxu0 0
        %2770 = vmatmul.mubr.bf16.gmra.mrb[0].mxu0 %v2592
        %v2771 = vpop.f32.mrb[0].mxu0
        %v2772 = vadd.f32 %v2407, %v2771
        %v2773 = vpop.f32.mrb[0].mxu0
        %v2774 = vpop.f32.mrb[0].mxu0
        %v2775 = vadd.f32 %v2410, %v2774
        %v2776 = vpop.f32.mrb[0].mxu0
        %2777 = vmatprep.mubr.bf16.mxu0 0
        %2778 = vmatmul.mubr.bf16.gmra.mrb[0].mxu0 %v2594
        %v2779 = vpop.f32.mrb[0].mxu0
        %v2780 = vadd.f32 %v2415, %v2779
        %v2781 = vpop.f32.mrb[0].mxu0
        %v2782 = vpop.f32.mrb[0].mxu0
        %v2783 = vadd.f32 %v2418, %v2782
        %v2784 = vpop.f32.mrb[0].mxu0
        %2785 = vmatprep.mubr.bf16.mxu0 0
        %2786 = vmatmul.mubr.bf16.gmra.mrb[0].mxu0 %v2596
        %v2787 = vpop.f32.mrb[0].mxu0
        %v2788 = vadd.f32 %v2423, %v2787
        %v2789 = vpop.f32.mrb[0].mxu0
        %v2790 = vpop.f32.mrb[0].mxu0
        %v2791 = vadd.f32 %v2426, %v2790
        %v2792 = vpop.f32.mrb[0].mxu0
        %2793 = vmatprep.mubr.bf16.mxu0 0
        %2794 = vmatmul.mubr.bf16.gmra.mrb[0].mxu0 %v2598
        %v2795 = vpop.f32.mrb[0].mxu0
        %v2796 = vadd.f32 %v2431, %v2795
        %v2797 = vpop.f32.mrb[0].mxu0
        %v2798 = vpop.f32.mrb[0].mxu0
        %v2799 = vadd.f32 %v2434, %v2798
        %v2800 = vpop.f32.mrb[0].mxu0
        %2801 = vmatprep.mubr.bf16.mxu0 0
        %2802 = vmatmul.mubr.bf16.gmra.mrb[0].mxu0 %v2600
        %v2803 = vpop.f32.mrb[0].mxu0
        %v2804 = vadd.f32 %v2439, %v2803
        %v2805 = vpop.f32.mrb[0].mxu0
        %v2806 = vpop.f32.mrb[0].mxu0
        %v2807 = vadd.f32 %v2442, %v2806
        %v2808 = vpop.f32.mrb[0].mxu0
        %2809 = vmatprep.mubr.bf16.mxu0 0
        %2810 = vmatmul.mubr.bf16.gmra.mrb[0].mxu0 %v2602
        %v2811 = vpop.f32.mrb[0].mxu0
        %v2812 = vadd.f32 %v2447, %v2811
        %v2813 = vpop.f32.mrb[0].mxu0
        %v2814 = vpop.f32.mrb[0].mxu0
        %v2815 = vadd.f32 %v2450, %v2814
        %v2816 = vpop.f32.mrb[0].mxu0
        %2817 = vmatprep.mubr.bf16.mxu0 0
        %2818 = vmatmul.mubr.bf16.gmra.mrb[0].mxu0 %v2604
        %v2819 = vpop.f32.mrb[0].mxu0
        %v2820 = vadd.f32 %v2455, %v2819
        %v2821 = vpop.f32.mrb[0].mxu0
        %v2822 = vpop.f32.mrb[0].mxu0
        %v2823 = vadd.f32 %v2458, %v2822
        %v2824 = vpop.f32.mrb[0].mxu0
        %2825 = vmatprep.mubr.bf16.mxu0 0
        %2826 = vmatmul.mubr.bf16.gmra.mrb[0].mxu0 %v2606
        %v2827 = vpop.f32.mrb[0].mxu0
        %v2828 = vadd.f32 %v2463, %v2827
        %v2829 = vpop.f32.mrb[0].mxu0
        %v2830 = vpop.f32.mrb[0].mxu0
        %v2831 = vadd.f32 %v2466, %v2830
        %v2832 = vpop.f32.mrb[0].mxu0
        %2833 = vmatprep.mubr.bf16.mxu0 0
        %2834 = vmatmul.mubr.bf16.gmra.mrb[0].mxu0 %v2608
        %v2835 = vpop.f32.mrb[0].mxu0
        %v2836 = vadd.f32 %v2471, %v2835
        %v2837 = vpop.f32.mrb[0].mxu0
        %v2838 = vpop.f32.mrb[0].mxu0
        %v2839 = vadd.f32 %v2474, %v2838
        %v2840 = vpop.f32.mrb[0].mxu0
        %2841 = vmatprep.mubr.bf16.mxu0 0
        %2842 = vmatmul.mubr.bf16.gmra.mrb[0].mxu0 %v2610
        %v2843 = vpop.f32.mrb[0].mxu0
        %v2844 = vadd.f32 %v2479, %v2843
        %v2845 = vpop.f32.mrb[0].mxu0
        %v2846 = vpop.f32.mrb[0].mxu0
        %v2847 = vadd.f32 %v2482, %v2846
        %v2848 = vpop.f32.mrb[0].mxu0
        %2849 = vmatprep.mubr.bf16.mxu0 0
        %2850 = vmatmul.mubr.bf16.gmra.mrb[0].mxu0 %v2612
        %v2851 = vpop.f32.mrb[0].mxu0
        %v2852 = vadd.f32 %v2487, %v2851
        %v2853 = vpop.f32.mrb[0].mxu0
        %v2854 = vpop.f32.mrb[0].mxu0
        %v2855 = vadd.f32 %v2490, %v2854
        %v2856 = vpop.f32.mrb[0].mxu0
        %2857 = vmatprep.mubr.bf16.mxu0 0
        %2858 = vmatmul.mubr.bf16.gmra.mrb[0].mxu0 %v2614
        %v2859 = vpop.f32.mrb[0].mxu0
        %v2860 = vadd.f32 %v2495, %v2859
        %v2861 = vpop.f32.mrb[0].mxu0
        %v2862 = vpop.f32.mrb[0].mxu0
        %v2863 = vadd.f32 %v2498, %v2862
        %v2864 = vpop.f32.mrb[0].mxu0
        %2865 = vmatprep.mubr.bf16.mxu0 0
        %2866 = vmatmul.mubr.bf16.gmra.mrb[0].mxu0 %v2616
        %v2867 = vpop.f32.mrb[0].mxu0
        %v2868 = vadd.f32 %v2503, %v2867
        %v2869 = vpop.f32.mrb[0].mxu0
        %v2870 = vpop.f32.mrb[0].mxu0
        %v2871 = vadd.f32 %v2506, %v2870
        %v2872 = vpop.f32.mrb[0].mxu0
        %2873 = vmatprep.mubr.bf16.mxu0 0
        %2874 = vmatmul.mubr.bf16.gmra.mrb[0].mxu0 %v2618
        %v2875 = vpop.f32.mrb[0].mxu0
        %v2876 = vadd.f32 %v2511, %v2875
        %v2877 = vpop.f32.mrb[0].mxu0
        %v2878 = vpop.f32.mrb[0].mxu0
        %v2879 = vadd.f32 %v2514, %v2878
        %v2880 = vpop.f32.mrb[0].mxu0
        %2881 = vmatprep.mubr.bf16.mxu0 0
        %2882 = vmatmul.mubr.bf16.gmra.mrb[0].mxu0 %v2620
        %v2883 = vpop.f32.mrb[0].mxu0
        %v2884 = vadd.f32 %v2519, %v2883
        %v2885 = vpop.f32.mrb[0].mxu0
        %v2886 = vpop.f32.mrb[0].mxu0
        %v2887 = vadd.f32 %v2522, %v2886
        %v2888 = vpop.f32.mrb[0].mxu0
        %2889 = vmatprep.mubr.bf16.mxu0 0
        %2890 = vmatmul.mubr.bf16.gmra.mrb[0].mxu0 %v2622
        %v2891 = vpop.f32.mrb[0].mxu0
        %v2892 = vadd.f32 %v2527, %v2891
        %v2893 = vpop.f32.mrb[0].mxu0
        %v2894 = vpop.f32.mrb[0].mxu0
        %v2895 = vadd.f32 %v2530, %v2894
        %v2896 = vpop.f32.mrb[0].mxu0
        %2897 = vmatprep.mubr.bf16.mxu0 0
        %2898 = vmatmul.mubr.bf16.gmra.mrb[0].mxu0 %v2624
        %v2899 = vpop.f32.mrb[0].mxu0
        %v2900 = vadd.f32 %v2535, %v2899
        %v2901 = vpop.f32.mrb[0].mxu0
        %v2902 = vpop.f32.mrb[0].mxu0
        %v2903 = vadd.f32 %v2538, %v2902
        %v2904 = vpop.f32.mrb[0].mxu0
        %2905 = vmatprep.mubr.bf16.mxu0 0
        %2906 = vmatmul.mubr.bf16.gmra.mrb[0].mxu0 %v2626
        %v2907 = vpop.f32.mrb[0].mxu0
        %v2908 = vadd.f32 %v2543, %v2907
        %v2909 = vpop.f32.mrb[0].mxu0
        %v2910 = vpop.f32.mrb[0].mxu0
        %v2911 = vadd.f32 %v2546, %v2910
        %v2912 = vpop.f32.mrb[0].mxu0
        %2913 = vmatprep.mubr.bf16.mxu0 0
        %2914 = vmatmul.mubr.bf16.gmra.mrb[0].mxu0 %v2628
        %v2915 = vpop.f32.mrb[0].mxu0
        %v2916 = vadd.f32 %v2551, %v2915
        %v2917 = vpop.f32.mrb[0].mxu0
        %v2918 = vpop.f32.mrb[0].mxu0
        %v2919 = vadd.f32 %v2554, %v2918
        %v2920 = vpop.f32.mrb[0].mxu0
        %2921 = vdwg.mxu0
        %s2922 = scalar_lea.vmem %s280, 40
        %v2923 = vld [vmem:[%s2922] sm:$0xf]
        %v2924 = vld [vmem:[%s2922 + $0x4] sm:$0xf]
        %v2925 = vld [vmem:[%s2922 + $0x8] sm:$0xf]
        %v2926 = vld [vmem:[%s2922 + $0xc] sm:$0xf]
        %v2927 = vld [vmem:[%s2922 + $0x10] sm:$0x1]
        %v2928 = vld [vmem:[%s2922 + $0x14] sm:$0xf]
        %v2929 = vld [vmem:[%s2922 + $0x18] sm:$0xf]
        %v2930 = vld [vmem:[%s2922 + $0x1c] sm:$0xf]
        %v2931 = vld [vmem:[%s2922 + $0x20] sm:$0xf]
        %v2932 = vld [vmem:[%s2922 + $0x24] sm:$0x1]
        %v2933 = vld [vmem:[%s2922 + $0x28] sm:$0xf]
        %v2934 = vld [vmem:[%s2922 + $0x2c] sm:$0xf]
        %v2935 = vld [vmem:[%s2922 + $0x30] sm:$0xf]
        %v2936 = vld [vmem:[%s2922 + $0x34] sm:$0xf]
        %v2937 = vld [vmem:[%s2922 + $0x38] sm:$0x1]
        %v2938 = vld [vmem:[%s2922 + $0x3c] sm:$0xf]
        %v2939 = vld [vmem:[%s2922 + $0x40] sm:$0xf]
        %v2940 = vld [vmem:[%s2922 + $0x44] sm:$0xf]
        %v2941 = vld [vmem:[%s2922 + $0x48] sm:$0xf]
        %v2942 = vld [vmem:[%s2922 + $0x4c] sm:$0x1]
        %v2943 = vld [vmem:[%s2922 + $0x50] sm:$0xf]
        %v2944 = vld [vmem:[%s2922 + $0x54] sm:$0xf]
        %v2945 = vld [vmem:[%s2922 + $0x58] sm:$0xf]
        %v2946 = vld [vmem:[%s2922 + $0x5c] sm:$0xf]
        %v2947 = vld [vmem:[%s2922 + $0x60] sm:$0x1]
        %v2948 = vld [vmem:[%s2922 + $0x64] sm:$0xf]
        %v2949 = vld [vmem:[%s2922 + $0x68] sm:$0xf]
        %v2950 = vld [vmem:[%s2922 + $0x6c] sm:$0xf]
        %v2951 = vld [vmem:[%s2922 + $0x70] sm:$0xf]
        %v2952 = vld [vmem:[%s2922 + $0x74] sm:$0x1]
        %v2953 = vld [vmem:[%s2922 + $0x78] sm:$0xf]
        %v2954 = vld [vmem:[%s2922 + $0x7c] sm:$0xf]
        %v2955 = vld [vmem:[%s2922 + $0x80] sm:$0xf]
        %v2956 = vld [vmem:[%s2922 + $0x84] sm:$0xf]
        %v2957 = vld [vmem:[%s2922 + $0x88] sm:$0x1]
        %v2958 = vld [vmem:[%s2922 + $0x8c] sm:$0xf]
        %v2959 = vld [vmem:[%s2922 + $0x90] sm:$0xf]
        %v2960 = vld [vmem:[%s2922 + $0x94] sm:$0xf]
        %v2961 = vld [vmem:[%s2922 + $0x98] sm:$0xf]
        %v2962 = vld [vmem:[%s2922 + $0x9c] sm:$0x1]
        %v2963 = vld [vmem:[%s2922 + $0xa0] sm:$0xf]
        %v2964 = vld [vmem:[%s2922 + $0xa4] sm:$0xf]
        %v2965 = vld [vmem:[%s2922 + $0xa8] sm:$0xf]
        %v2966 = vld [vmem:[%s2922 + $0xac] sm:$0xf]
        %v2967 = vld [vmem:[%s2922 + $0xb0] sm:$0x1]
        %v2968 = vld [vmem:[%s2922 + $0xb4] sm:$0xf]
        %v2969 = vld [vmem:[%s2922 + $0xb8] sm:$0xf]
        %v2970 = vld [vmem:[%s2922 + $0xbc] sm:$0xf]
        %v2971 = vld [vmem:[%s2922 + $0xc0] sm:$0xf]
        %v2972 = vld [vmem:[%s2922 + $0xc4] sm:$0x1]
        %v2973 = vld [vmem:[%s2922 + $0xc8] sm:$0xf]
        %v2974 = vld [vmem:[%s2922 + $0xcc] sm:$0xf]
        %v2975 = vld [vmem:[%s2922 + $0xd0] sm:$0xf]
        %v2976 = vld [vmem:[%s2922 + $0xd4] sm:$0xf]
        %v2977 = vld [vmem:[%s2922 + $0xd8] sm:$0x1]
        %v2978 = vld [vmem:[%s2922 + $0xdc] sm:$0xf]
        %v2979 = vld [vmem:[%s2922 + $0xe0] sm:$0xf]
        %v2980 = vld [vmem:[%s2922 + $0xe4] sm:$0xf]
        %v2981 = vld [vmem:[%s2922 + $0xe8] sm:$0xf]
        %v2982 = vld [vmem:[%s2922 + $0xec] sm:$0x1]
        %v2983 = vld [vmem:[%s2922 + $0xf0] sm:$0xf]
        %v2984 = vld [vmem:[%s2922 + $0xf4] sm:$0xf]
        %v2985 = vld [vmem:[%s2922 + $0xf8] sm:$0xf]
        %v2986 = vld [vmem:[%s2922 + $0xfc] sm:$0xf]
        %v2987 = vld [vmem:[%s2922 + $0x100] sm:$0x1]
        %v2988 = vld [vmem:[%s2922 + $0x104] sm:$0xf]
        %v2989 = vld [vmem:[%s2922 + $0x108] sm:$0xf]
        %v2990 = vld [vmem:[%s2922 + $0x10c] sm:$0xf]
        %v2991 = vld [vmem:[%s2922 + $0x110] sm:$0xf]
        %v2992 = vld [vmem:[%s2922 + $0x114] sm:$0x1]
        %v2993 = vld [vmem:[%s2922 + $0x118] sm:$0xf]
        %v2994 = vld [vmem:[%s2922 + $0x11c] sm:$0xf]
        %v2995 = vld [vmem:[%s2922 + $0x120] sm:$0xf]
        %v2996 = vld [vmem:[%s2922 + $0x124] sm:$0xf]
        %v2997 = vld [vmem:[%s2922 + $0x128] sm:$0x1]
        %v2998 = vld [vmem:[%s2922 + $0x12c] sm:$0xf]
        %v2999 = vld [vmem:[%s2922 + $0x130] sm:$0xf]
        %v3000 = vld [vmem:[%s2922 + $0x134] sm:$0xf]
        %v3001 = vld [vmem:[%s2922 + $0x138] sm:$0xf]
        %v3002 = vld [vmem:[%s2922 + $0x13c] sm:$0x1]
        %v3067 = vunpack.c.l.b16 %v2923
        %v3068 = vunpack.c.l.b16 %v2924
        %v3069 = vunpack.c.l.b16 %v2925
        %v3070 = vunpack.c.l.b16 %v2926
        %v3071 = vunpack.c.l.b16 %v2928
        %v3072 = vunpack.c.l.b16 %v2929
        %v3073 = vunpack.c.l.b16 %v2930
        %v3074 = vunpack.c.l.b16 %v2931
        %v3075 = vunpack.c.l.b16 %v2933
        %v3076 = vunpack.c.l.b16 %v2934
        %v3077 = vunpack.c.l.b16 %v2935
        %v3078 = vunpack.c.l.b16 %v2936
        %v3079 = vunpack.c.l.b16 %v2938
        %v3080 = vunpack.c.l.b16 %v2939
        %v3081 = vunpack.c.l.b16 %v2940
        %v3082 = vunpack.c.l.b16 %v2941
        %v3083 = vunpack.c.l.b16 %v2943
        %v3084 = vunpack.c.l.b16 %v2944
        %v3085 = vunpack.c.l.b16 %v2945
        %v3086 = vunpack.c.l.b16 %v2946
        %v3087 = vunpack.c.l.b16 %v2948
        %v3088 = vunpack.c.l.b16 %v2949
        %v3089 = vunpack.c.l.b16 %v2950
        %v3090 = vunpack.c.l.b16 %v2951
        %v3091 = vunpack.c.l.b16 %v2953
        %v3092 = vunpack.c.l.b16 %v2954
        %v3093 = vunpack.c.l.b16 %v2955
        %v3094 = vunpack.c.l.b16 %v2956
        %v3095 = vunpack.c.l.b16 %v2958
        %v3096 = vunpack.c.l.b16 %v2959
        %v3097 = vunpack.c.l.b16 %v2960
        %v3098 = vunpack.c.l.b16 %v2961
        %v3099 = vunpack.c.l.b16 %v2963
        %v3100 = vunpack.c.l.b16 %v2964
        %v3101 = vunpack.c.l.b16 %v2965
        %v3102 = vunpack.c.l.b16 %v2966
        %v3103 = vunpack.c.l.b16 %v2968
        %v3104 = vunpack.c.l.b16 %v2969
        %v3105 = vunpack.c.l.b16 %v2970
        %v3106 = vunpack.c.l.b16 %v2971
        %v3107 = vunpack.c.l.b16 %v2973
        %v3108 = vunpack.c.l.b16 %v2974
        %v3109 = vunpack.c.l.b16 %v2975
        %v3110 = vunpack.c.l.b16 %v2976
        %v3111 = vunpack.c.l.b16 %v2978
        %v3112 = vunpack.c.l.b16 %v2979
        %v3113 = vunpack.c.l.b16 %v2980
        %v3114 = vunpack.c.l.b16 %v2981
        %v3115 = vunpack.c.l.b16 %v2983
        %v3116 = vunpack.c.l.b16 %v2984
        %v3117 = vunpack.c.l.b16 %v2985
        %v3118 = vunpack.c.l.b16 %v2986
        %v3119 = vunpack.c.l.b16 %v2988
        %v3120 = vunpack.c.l.b16 %v2989
        %v3121 = vunpack.c.l.b16 %v2990
        %v3122 = vunpack.c.l.b16 %v2991
        %v3123 = vunpack.c.l.b16 %v2993
        %v3124 = vunpack.c.l.b16 %v2994
        %v3125 = vunpack.c.l.b16 %v2995
        %v3126 = vunpack.c.l.b16 %v2996
        %v3127 = vunpack.c.l.b16 %v2998
        %v3128 = vunpack.c.l.b16 %v2999
        %v3129 = vunpack.c.l.b16 %v3000
        %v3130 = vunpack.c.l.b16 %v3001
        %v3131 = vpack.c.b16 %v3068, %v3067
        %v3132 = vpack.c.b16 %v3070, %v3069
        %v3133 = vpack.c.b16 %v3072, %v3071
        %v3134 = vpack.c.b16 %v3074, %v3073
        %v3135 = vpack.c.b16 %v3076, %v3075
        %v3136 = vpack.c.b16 %v3078, %v3077
        %v3137 = vpack.c.b16 %v3080, %v3079
        %v3138 = vpack.c.b16 %v3082, %v3081
        %v3139 = vpack.c.b16 %v3084, %v3083
        %v3140 = vpack.c.b16 %v3086, %v3085
        %v3141 = vpack.c.b16 %v3088, %v3087
        %v3142 = vpack.c.b16 %v3090, %v3089
        %v3143 = vpack.c.b16 %v3092, %v3091
        %v3144 = vpack.c.b16 %v3094, %v3093
        %v3145 = vpack.c.b16 %v3096, %v3095
        %v3146 = vpack.c.b16 %v3098, %v3097
        %v3147 = vpack.c.b16 %v3100, %v3099
        %v3148 = vpack.c.b16 %v3102, %v3101
        %v3149 = vpack.c.b16 %v3104, %v3103
        %v3150 = vpack.c.b16 %v3106, %v3105
        %v3151 = vpack.c.b16 %v3108, %v3107
        %v3152 = vpack.c.b16 %v3110, %v3109
        %v3153 = vpack.c.b16 %v3112, %v3111
        %v3154 = vpack.c.b16 %v3114, %v3113
        %v3155 = vpack.c.b16 %v3116, %v3115
        %v3156 = vpack.c.b16 %v3118, %v3117
        %v3157 = vpack.c.b16 %v3120, %v3119
        %v3158 = vpack.c.b16 %v3122, %v3121
        %v3159 = vpack.c.b16 %v3124, %v3123
        %v3160 = vpack.c.b16 %v3126, %v3125
        %v3161 = vpack.c.b16 %v3128, %v3127
        %v3162 = vpack.c.b16 %v3130, %v3129
        %v3179 = vunpack.c.l.b16 %v2927
        %v3180 = vunpack.c.l.b16 %v2932
        %v3181 = vunpack.c.l.b16 %v2937
        %v3182 = vunpack.c.l.b16 %v2942
        %v3183 = vunpack.c.l.b16 %v2947
        %v3184 = vunpack.c.l.b16 %v2952
        %v3185 = vunpack.c.l.b16 %v2957
        %v3186 = vunpack.c.l.b16 %v2962
        %v3187 = vunpack.c.l.b16 %v2967
        %v3188 = vunpack.c.l.b16 %v2972
        %v3189 = vunpack.c.l.b16 %v2977
        %v3190 = vunpack.c.l.b16 %v2982
        %v3191 = vunpack.c.l.b16 %v2987
        %v3192 = vunpack.c.l.b16 %v2992
        %v3193 = vunpack.c.l.b16 %v2997
        %v3194 = vunpack.c.l.b16 %v3002
        %v3195 = vpack.c.b16 %v3179, %v3179
        %v3196 = vpack.c.b16 %v3180, %v3180
        %v3197 = vpack.c.b16 %v3181, %v3181
        %v3198 = vpack.c.b16 %v3182, %v3182
        %v3199 = vpack.c.b16 %v3183, %v3183
        %v3200 = vpack.c.b16 %v3184, %v3184
        %v3201 = vpack.c.b16 %v3185, %v3185
        %v3202 = vpack.c.b16 %v3186, %v3186
        %v3203 = vpack.c.b16 %v3187, %v3187
        %v3204 = vpack.c.b16 %v3188, %v3188
        %v3205 = vpack.c.b16 %v3189, %v3189
        %v3206 = vpack.c.b16 %v3190, %v3190
        %v3207 = vpack.c.b16 %v3191, %v3191
        %v3208 = vpack.c.b16 %v3192, %v3192
        %v3209 = vpack.c.b16 %v3193, %v3193
        %v3210 = vpack.c.b16 %v3194, %v3194
        %v3212 = vshrl.u32 %v3131, 16
        %v3214 = vshll.u32 %v3131, 16
        %v3216 = vrot.slane %v3214, 1
        %v3217 = vor.u32 %v3212, %v3216
        %v3219 = vshll.u32 %v3132, 16
        %v3221 = vrot.slane %v3219, 1
        %v3222 = vsel %vm578, %v3217, %v3221
        %v3223 = vshrl.u32 %v3132, 16
        %v3225 = vor.u32 %v3223, %v3221
        %v3227 = vshll.u32 %v3195, 16
        %v3229 = vrot.slane %v3227, 1
        %v3230 = vsel %vm578, %v3225, %v3229
        %v3232 = vshrl.u32 %v3133, 16
        %v3234 = vshll.u32 %v3133, 16
        %v3236 = vrot.slane %v3234, 1
        %v3237 = vor.u32 %v3232, %v3236
        %v3239 = vshll.u32 %v3134, 16
        %v3241 = vrot.slane %v3239, 1
        %v3242 = vsel %vm578, %v3237, %v3241
        %v3243 = vshrl.u32 %v3134, 16
        %v3245 = vor.u32 %v3243, %v3241
        %v3247 = vshll.u32 %v3196, 16
        %v3249 = vrot.slane %v3247, 1
        %v3250 = vsel %vm578, %v3245, %v3249
        %v3252 = vshrl.u32 %v3135, 16
        %v3254 = vshll.u32 %v3135, 16
        %v3256 = vrot.slane %v3254, 1
        %v3257 = vor.u32 %v3252, %v3256
        %v3259 = vshll.u32 %v3136, 16
        %v3261 = vrot.slane %v3259, 1
        %v3262 = vsel %vm578, %v3257, %v3261
        %v3263 = vshrl.u32 %v3136, 16
        %v3265 = vor.u32 %v3263, %v3261
        %v3267 = vshll.u32 %v3197, 16
        %v3269 = vrot.slane %v3267, 1
        %v3270 = vsel %vm578, %v3265, %v3269
        %v3272 = vshrl.u32 %v3137, 16
        %v3274 = vshll.u32 %v3137, 16
        %v3276 = vrot.slane %v3274, 1
        %v3277 = vor.u32 %v3272, %v3276
        %v3279 = vshll.u32 %v3138, 16
        %v3281 = vrot.slane %v3279, 1
        %v3282 = vsel %vm578, %v3277, %v3281
        %v3283 = vshrl.u32 %v3138, 16
        %v3285 = vor.u32 %v3283, %v3281
        %v3287 = vshll.u32 %v3198, 16
        %v3289 = vrot.slane %v3287, 1
        %v3290 = vsel %vm578, %v3285, %v3289
        %v3292 = vshrl.u32 %v3139, 16
        %v3294 = vshll.u32 %v3139, 16
        %v3296 = vrot.slane %v3294, 1
        %v3297 = vor.u32 %v3292, %v3296
        %v3299 = vshll.u32 %v3140, 16
        %v3301 = vrot.slane %v3299, 1
        %v3302 = vsel %vm578, %v3297, %v3301
        %v3303 = vshrl.u32 %v3140, 16
        %v3305 = vor.u32 %v3303, %v3301
        %v3307 = vshll.u32 %v3199, 16
        %v3309 = vrot.slane %v3307, 1
        %v3310 = vsel %vm578, %v3305, %v3309
        %v3312 = vshrl.u32 %v3141, 16
        %v3314 = vshll.u32 %v3141, 16
        %v3316 = vrot.slane %v3314, 1
        %v3317 = vor.u32 %v3312, %v3316
        %v3319 = vshll.u32 %v3142, 16
        %v3321 = vrot.slane %v3319, 1
        %v3322 = vsel %vm578, %v3317, %v3321
        %v3323 = vshrl.u32 %v3142, 16
        %v3325 = vor.u32 %v3323, %v3321
        %v3327 = vshll.u32 %v3200, 16
        %v3329 = vrot.slane %v3327, 1
        %v3330 = vsel %vm578, %v3325, %v3329
        %v3332 = vshrl.u32 %v3143, 16
        %v3334 = vshll.u32 %v3143, 16
        %v3336 = vrot.slane %v3334, 1
        %v3337 = vor.u32 %v3332, %v3336
        %v3339 = vshll.u32 %v3144, 16
        %v3341 = vrot.slane %v3339, 1
        %v3342 = vsel %vm578, %v3337, %v3341
        %v3343 = vshrl.u32 %v3144, 16
        %v3345 = vor.u32 %v3343, %v3341
        %v3347 = vshll.u32 %v3201, 16
        %v3349 = vrot.slane %v3347, 1
        %v3350 = vsel %vm578, %v3345, %v3349
        %v3352 = vshrl.u32 %v3145, 16
        %v3354 = vshll.u32 %v3145, 16
        %v3356 = vrot.slane %v3354, 1
        %v3357 = vor.u32 %v3352, %v3356
        %v3359 = vshll.u32 %v3146, 16
        %v3361 = vrot.slane %v3359, 1
        %v3362 = vsel %vm578, %v3357, %v3361
        %v3363 = vshrl.u32 %v3146, 16
        %v3365 = vor.u32 %v3363, %v3361
        %v3367 = vshll.u32 %v3202, 16
        %v3369 = vrot.slane %v3367, 1
        %v3370 = vsel %vm578, %v3365, %v3369
        %v3372 = vshrl.u32 %v3147, 16
        %v3374 = vshll.u32 %v3147, 16
        %v3376 = vrot.slane %v3374, 1
        %v3377 = vor.u32 %v3372, %v3376
        %v3379 = vshll.u32 %v3148, 16
        %v3381 = vrot.slane %v3379, 1
        %v3382 = vsel %vm578, %v3377, %v3381
        %v3383 = vshrl.u32 %v3148, 16
        %v3385 = vor.u32 %v3383, %v3381
        %v3387 = vshll.u32 %v3203, 16
        %v3389 = vrot.slane %v3387, 1
        %v3390 = vsel %vm578, %v3385, %v3389
        %v3392 = vshrl.u32 %v3149, 16
        %v3394 = vshll.u32 %v3149, 16
        %v3396 = vrot.slane %v3394, 1
        %v3397 = vor.u32 %v3392, %v3396
        %v3399 = vshll.u32 %v3150, 16
        %v3401 = vrot.slane %v3399, 1
        %v3402 = vsel %vm578, %v3397, %v3401
        %v3403 = vshrl.u32 %v3150, 16
        %v3405 = vor.u32 %v3403, %v3401
        %v3407 = vshll.u32 %v3204, 16
        %v3409 = vrot.slane %v3407, 1
        %v3410 = vsel %vm578, %v3405, %v3409
        %v3412 = vshrl.u32 %v3151, 16
        %v3414 = vshll.u32 %v3151, 16
        %v3416 = vrot.slane %v3414, 1
        %v3417 = vor.u32 %v3412, %v3416
        %v3419 = vshll.u32 %v3152, 16
        %v3421 = vrot.slane %v3419, 1
        %v3422 = vsel %vm578, %v3417, %v3421
        %v3423 = vshrl.u32 %v3152, 16
        %v3425 = vor.u32 %v3423, %v3421
        %v3427 = vshll.u32 %v3205, 16
        %v3429 = vrot.slane %v3427, 1
        %v3430 = vsel %vm578, %v3425, %v3429
        %v3432 = vshrl.u32 %v3153, 16
        %v3434 = vshll.u32 %v3153, 16
        %v3436 = vrot.slane %v3434, 1
        %v3437 = vor.u32 %v3432, %v3436
        %v3439 = vshll.u32 %v3154, 16
        %v3441 = vrot.slane %v3439, 1
        %v3442 = vsel %vm578, %v3437, %v3441
        %v3443 = vshrl.u32 %v3154, 16
        %v3445 = vor.u32 %v3443, %v3441
        %v3447 = vshll.u32 %v3206, 16
        %v3449 = vrot.slane %v3447, 1
        %v3450 = vsel %vm578, %v3445, %v3449
        %v3452 = vshrl.u32 %v3155, 16
        %v3454 = vshll.u32 %v3155, 16
        %v3456 = vrot.slane %v3454, 1
        %v3457 = vor.u32 %v3452, %v3456
        %v3459 = vshll.u32 %v3156, 16
        %v3461 = vrot.slane %v3459, 1
        %v3462 = vsel %vm578, %v3457, %v3461
        %v3463 = vshrl.u32 %v3156, 16
        %v3465 = vor.u32 %v3463, %v3461
        %v3467 = vshll.u32 %v3207, 16
        %v3469 = vrot.slane %v3467, 1
        %v3470 = vsel %vm578, %v3465, %v3469
        %v3472 = vshrl.u32 %v3157, 16
        %v3474 = vshll.u32 %v3157, 16
        %v3476 = vrot.slane %v3474, 1
        %v3477 = vor.u32 %v3472, %v3476
        %v3479 = vshll.u32 %v3158, 16
        %v3481 = vrot.slane %v3479, 1
        %v3482 = vsel %vm578, %v3477, %v3481
        %v3483 = vshrl.u32 %v3158, 16
        %v3485 = vor.u32 %v3483, %v3481
        %v3487 = vshll.u32 %v3208, 16
        %v3489 = vrot.slane %v3487, 1
        %v3490 = vsel %vm578, %v3485, %v3489
        %v3492 = vshrl.u32 %v3159, 16
        %v3494 = vshll.u32 %v3159, 16
        %v3496 = vrot.slane %v3494, 1
        %v3497 = vor.u32 %v3492, %v3496
        %v3499 = vshll.u32 %v3160, 16
        %v3501 = vrot.slane %v3499, 1
        %v3502 = vsel %vm578, %v3497, %v3501
        %v3503 = vshrl.u32 %v3160, 16
        %v3505 = vor.u32 %v3503, %v3501
        %v3507 = vshll.u32 %v3209, 16
        %v3509 = vrot.slane %v3507, 1
        %v3510 = vsel %vm578, %v3505, %v3509
        %v3512 = vshrl.u32 %v3161, 16
        %v3514 = vshll.u32 %v3161, 16
        %v3516 = vrot.slane %v3514, 1
        %v3517 = vor.u32 %v3512, %v3516
        %v3519 = vshll.u32 %v3162, 16
        %v3521 = vrot.slane %v3519, 1
        %v3522 = vsel %vm578, %v3517, %v3521
        %v3523 = vshrl.u32 %v3162, 16
        %v3525 = vor.u32 %v3523, %v3521
        %v3527 = vshll.u32 %v3210, 16
        %v3529 = vrot.slane %v3527, 1
        %v3530 = vsel %vm578, %v3525, %v3529
        %3531 = vrot.lane.b32.xlu0 %v3222, 8
        %v3532 = vpop.permute.xlu0 %3531
        %3533 = vrot.lane.b32.xlu0 %v3230, 8
        %v3534 = vpop.permute.xlu0 %3533
        %3535 = vrot.lane.b32.xlu0 %v3242, 8
        %v3536 = vpop.permute.xlu0 %3535
        %3537 = vrot.lane.b32.xlu0 %v3250, 8
        %v3538 = vpop.permute.xlu0 %3537
        %3539 = vrot.lane.b32.xlu0 %v3262, 8
        %v3540 = vpop.permute.xlu0 %3539
        %3541 = vrot.lane.b32.xlu0 %v3270, 8
        %v3542 = vpop.permute.xlu0 %3541
        %3543 = vrot.lane.b32.xlu0 %v3282, 8
        %v3544 = vpop.permute.xlu0 %3543
        %3545 = vrot.lane.b32.xlu0 %v3290, 8
        %v3546 = vpop.permute.xlu0 %3545
        %3547 = vrot.lane.b32.xlu0 %v3302, 8
        %v3548 = vpop.permute.xlu0 %3547
        %3549 = vrot.lane.b32.xlu0 %v3310, 8
        %v3550 = vpop.permute.xlu0 %3549
        %3551 = vrot.lane.b32.xlu0 %v3322, 8
        %v3552 = vpop.permute.xlu0 %3551
        %3553 = vrot.lane.b32.xlu0 %v3330, 8
        %v3554 = vpop.permute.xlu0 %3553
        %3555 = vrot.lane.b32.xlu0 %v3342, 8
        %v3556 = vpop.permute.xlu0 %3555
        %3557 = vrot.lane.b32.xlu0 %v3350, 8
        %v3558 = vpop.permute.xlu0 %3557
        %3559 = vrot.lane.b32.xlu0 %v3362, 8
        %v3560 = vpop.permute.xlu0 %3559
        %3561 = vrot.lane.b32.xlu0 %v3370, 8
        %v3562 = vpop.permute.xlu0 %3561
        %3563 = vrot.lane.b32.xlu0 %v3382, 8
        %v3564 = vpop.permute.xlu0 %3563
        %3565 = vrot.lane.b32.xlu0 %v3390, 8
        %v3566 = vpop.permute.xlu0 %3565
        %3567 = vrot.lane.b32.xlu0 %v3402, 8
        %v3568 = vpop.permute.xlu0 %3567
        %3569 = vrot.lane.b32.xlu0 %v3410, 8
        %v3570 = vpop.permute.xlu0 %3569
        %3571 = vrot.lane.b32.xlu0 %v3422, 8
        %v3572 = vpop.permute.xlu0 %3571
        %3573 = vrot.lane.b32.xlu0 %v3430, 8
        %v3574 = vpop.permute.xlu0 %3573
        %3575 = vrot.lane.b32.xlu0 %v3442, 8
        %v3576 = vpop.permute.xlu0 %3575
        %3577 = vrot.lane.b32.xlu0 %v3450, 8
        %v3578 = vpop.permute.xlu0 %3577
        %3579 = vrot.lane.b32.xlu0 %v3462, 8
        %v3580 = vpop.permute.xlu0 %3579
        %3581 = vrot.lane.b32.xlu0 %v3470, 8
        %v3582 = vpop.permute.xlu0 %3581
        %3583 = vrot.lane.b32.xlu0 %v3482, 8
        %v3584 = vpop.permute.xlu0 %3583
        %3585 = vrot.lane.b32.xlu0 %v3490, 8
        %v3586 = vpop.permute.xlu0 %3585
        %3587 = vrot.lane.b32.xlu0 %v3502, 8
        %v3588 = vpop.permute.xlu0 %3587
        %3589 = vrot.lane.b32.xlu0 %v3510, 8
        %v3590 = vpop.permute.xlu0 %3589
        %3591 = vrot.lane.b32.xlu0 %v3522, 8
        %v3592 = vpop.permute.xlu0 %3591
        %3593 = vrot.lane.b32.xlu0 %v3530, 8
        %v3594 = vpop.permute.xlu0 %3593
        %v3595 = vrot.slane %v3131, 1
        %v3596 = vrot.slane %v3132, 1
        %v3597 = vsel %vm963, %v3595, %v3596
        %v3598 = vrot.slane %v3195, 1
        %v3599 = vsel %vm963, %v3596, %v3598
        %v3600 = vrot.slane %v3133, 1
        %v3601 = vrot.slane %v3134, 1
        %v3602 = vsel %vm963, %v3600, %v3601
        %v3603 = vrot.slane %v3196, 1
        %v3604 = vsel %vm963, %v3601, %v3603
        %v3605 = vrot.slane %v3135, 1
        %v3606 = vrot.slane %v3136, 1
        %v3607 = vsel %vm963, %v3605, %v3606
        %v3608 = vrot.slane %v3197, 1
        %v3609 = vsel %vm963, %v3606, %v3608
        %v3610 = vrot.slane %v3137, 1
        %v3611 = vrot.slane %v3138, 1
        %v3612 = vsel %vm963, %v3610, %v3611
        %v3613 = vrot.slane %v3198, 1
        %v3614 = vsel %vm963, %v3611, %v3613
        %v3615 = vrot.slane %v3139, 1
        %v3616 = vrot.slane %v3140, 1
        %v3617 = vsel %vm963, %v3615, %v3616
        %v3618 = vrot.slane %v3199, 1
        %v3619 = vsel %vm963, %v3616, %v3618
        %v3620 = vrot.slane %v3141, 1
        %v3621 = vrot.slane %v3142, 1
        %v3622 = vsel %vm963, %v3620, %v3621
        %v3623 = vrot.slane %v3200, 1
        %v3624 = vsel %vm963, %v3621, %v3623
        %v3625 = vrot.slane %v3143, 1
        %v3626 = vrot.slane %v3144, 1
        %v3627 = vsel %vm963, %v3625, %v3626
        %v3628 = vrot.slane %v3201, 1
        %v3629 = vsel %vm963, %v3626, %v3628
        %v3630 = vrot.slane %v3145, 1
        %v3631 = vrot.slane %v3146, 1
        %v3632 = vsel %vm963, %v3630, %v3631
        %v3633 = vrot.slane %v3202, 1
        %v3634 = vsel %vm963, %v3631, %v3633
        %v3635 = vrot.slane %v3147, 1
        %v3636 = vrot.slane %v3148, 1
        %v3637 = vsel %vm963, %v3635, %v3636
        %v3638 = vrot.slane %v3203, 1
        %v3639 = vsel %vm963, %v3636, %v3638
        %v3640 = vrot.slane %v3149, 1
        %v3641 = vrot.slane %v3150, 1
        %v3642 = vsel %vm963, %v3640, %v3641
        %v3643 = vrot.slane %v3204, 1
        %v3644 = vsel %vm963, %v3641, %v3643
        %v3645 = vrot.slane %v3151, 1
        %v3646 = vrot.slane %v3152, 1
        %v3647 = vsel %vm963, %v3645, %v3646
        %v3648 = vrot.slane %v3205, 1
        %v3649 = vsel %vm963, %v3646, %v3648
        %v3650 = vrot.slane %v3153, 1
        %v3651 = vrot.slane %v3154, 1
        %v3652 = vsel %vm963, %v3650, %v3651
        %v3653 = vrot.slane %v3206, 1
        %v3654 = vsel %vm963, %v3651, %v3653
        %v3655 = vrot.slane %v3155, 1
        %v3656 = vrot.slane %v3156, 1
        %v3657 = vsel %vm963, %v3655, %v3656
        %v3658 = vrot.slane %v3207, 1
        %v3659 = vsel %vm963, %v3656, %v3658
        %v3660 = vrot.slane %v3157, 1
        %v3661 = vrot.slane %v3158, 1
        %v3662 = vsel %vm963, %v3660, %v3661
        %v3663 = vrot.slane %v3208, 1
        %v3664 = vsel %vm963, %v3661, %v3663
        %v3665 = vrot.slane %v3159, 1
        %v3666 = vrot.slane %v3160, 1
        %v3667 = vsel %vm963, %v3665, %v3666
        %v3668 = vrot.slane %v3209, 1
        %v3669 = vsel %vm963, %v3666, %v3668
        %v3670 = vrot.slane %v3161, 1
        %v3671 = vrot.slane %v3162, 1
        %v3672 = vsel %vm963, %v3670, %v3671
        %v3673 = vrot.slane %v3210, 1
        %v3674 = vsel %vm963, %v3671, %v3673
        %3675 = vrot.lane.b32.xlu0 %v3597, 16
        %v3676 = vpop.permute.xlu0 %3675
        %3677 = vrot.lane.b32.xlu0 %v3599, 16
        %v3678 = vpop.permute.xlu0 %3677
        %3679 = vrot.lane.b32.xlu0 %v3602, 16
        %v3680 = vpop.permute.xlu0 %3679
        %3681 = vrot.lane.b32.xlu0 %v3604, 16
        %v3682 = vpop.permute.xlu0 %3681
        %3683 = vrot.lane.b32.xlu0 %v3607, 16
        %v3684 = vpop.permute.xlu0 %3683
        %3685 = vrot.lane.b32.xlu0 %v3609, 16
        %v3686 = vpop.permute.xlu0 %3685
        %3687 = vrot.lane.b32.xlu0 %v3612, 16
        %v3688 = vpop.permute.xlu0 %3687
        %3689 = vrot.lane.b32.xlu0 %v3614, 16
        %v3690 = vpop.permute.xlu0 %3689
        %3691 = vrot.lane.b32.xlu0 %v3617, 16
        %v3692 = vpop.permute.xlu0 %3691
        %3693 = vrot.lane.b32.xlu0 %v3619, 16
        %v3694 = vpop.permute.xlu0 %3693
        %3695 = vrot.lane.b32.xlu0 %v3622, 16
        %v3696 = vpop.permute.xlu0 %3695
        %3697 = vrot.lane.b32.xlu0 %v3624, 16
        %v3698 = vpop.permute.xlu0 %3697
        %3699 = vrot.lane.b32.xlu0 %v3627, 16
        %v3700 = vpop.permute.xlu0 %3699
        %3701 = vrot.lane.b32.xlu0 %v3629, 16
        %v3702 = vpop.permute.xlu0 %3701
        %3703 = vrot.lane.b32.xlu0 %v3632, 16
        %v3704 = vpop.permute.xlu0 %3703
        %3705 = vrot.lane.b32.xlu0 %v3634, 16
        %v3706 = vpop.permute.xlu0 %3705
        %3707 = vrot.lane.b32.xlu0 %v3637, 16
        %v3708 = vpop.permute.xlu0 %3707
        %3709 = vrot.lane.b32.xlu0 %v3639, 16
        %v3710 = vpop.permute.xlu0 %3709
        %3711 = vrot.lane.b32.xlu0 %v3642, 16
        %v3712 = vpop.permute.xlu0 %3711
        %3713 = vrot.lane.b32.xlu0 %v3644, 16
        %v3714 = vpop.permute.xlu0 %3713
        %3715 = vrot.lane.b32.xlu0 %v3647, 16
        %v3716 = vpop.permute.xlu0 %3715
        %3717 = vrot.lane.b32.xlu0 %v3649, 16
        %v3718 = vpop.permute.xlu0 %3717
        %3719 = vrot.lane.b32.xlu0 %v3652, 16
        %v3720 = vpop.permute.xlu0 %3719
        %3721 = vrot.lane.b32.xlu0 %v3654, 16
        %v3722 = vpop.permute.xlu0 %3721
        %3723 = vrot.lane.b32.xlu0 %v3657, 16
        %v3724 = vpop.permute.xlu0 %3723
        %3725 = vrot.lane.b32.xlu0 %v3659, 16
        %v3726 = vpop.permute.xlu0 %3725
        %3727 = vrot.lane.b32.xlu0 %v3662, 16
        %v3728 = vpop.permute.xlu0 %3727
        %3729 = vrot.lane.b32.xlu0 %v3664, 16
        %v3730 = vpop.permute.xlu0 %3729
        %3731 = vrot.lane.b32.xlu0 %v3667, 16
        %v3732 = vpop.permute.xlu0 %3731
        %3733 = vrot.lane.b32.xlu0 %v3669, 16
        %v3734 = vpop.permute.xlu0 %3733
        %3735 = vrot.lane.b32.xlu0 %v3672, 16
        %v3736 = vpop.permute.xlu0 %3735
        %3737 = vrot.lane.b32.xlu0 %v3674, 16
        %v3738 = vpop.permute.xlu0 %3737
        %v3740 = vsel %vm1108, %v3131, %v3532
        %v3742 = vsel %vm1108, %v3132, %v3534
        %v3744 = vsel %vm1108, %v3133, %v3536
        %v3746 = vsel %vm1108, %v3134, %v3538
        %v3748 = vsel %vm1108, %v3135, %v3540
        %v3750 = vsel %vm1108, %v3136, %v3542
        %v3752 = vsel %vm1108, %v3137, %v3544
        %v3754 = vsel %vm1108, %v3138, %v3546
        %v3756 = vsel %vm1108, %v3139, %v3548
        %v3758 = vsel %vm1108, %v3140, %v3550
        %v3760 = vsel %vm1108, %v3141, %v3552
        %v3762 = vsel %vm1108, %v3142, %v3554
        %v3764 = vsel %vm1108, %v3143, %v3556
        %v3766 = vsel %vm1108, %v3144, %v3558
        %v3768 = vsel %vm1108, %v3145, %v3560
        %v3770 = vsel %vm1108, %v3146, %v3562
        %v3772 = vsel %vm1108, %v3147, %v3564
        %v3774 = vsel %vm1108, %v3148, %v3566
        %v3776 = vsel %vm1108, %v3149, %v3568
        %v3778 = vsel %vm1108, %v3150, %v3570
        %v3780 = vsel %vm1108, %v3151, %v3572
        %v3782 = vsel %vm1108, %v3152, %v3574
        %v3784 = vsel %vm1108, %v3153, %v3576
        %v3786 = vsel %vm1108, %v3154, %v3578
        %v3788 = vsel %vm1108, %v3155, %v3580
        %v3790 = vsel %vm1108, %v3156, %v3582
        %v3792 = vsel %vm1108, %v3157, %v3584
        %v3794 = vsel %vm1108, %v3158, %v3586
        %v3796 = vsel %vm1108, %v3159, %v3588
        %v3798 = vsel %vm1108, %v3160, %v3590
        %v3800 = vsel %vm1108, %v3161, %v3592
        %v3802 = vsel %vm1108, %v3162, %v3594
        %v3804 = vsel %vm1173, %v3740, %v3676
        %v3806 = vsel %vm1173, %v3742, %v3678
        %v3808 = vsel %vm1173, %v3744, %v3680
        %v3810 = vsel %vm1173, %v3746, %v3682
        %v3812 = vsel %vm1173, %v3748, %v3684
        %v3814 = vsel %vm1173, %v3750, %v3686
        %v3816 = vsel %vm1173, %v3752, %v3688
        %v3818 = vsel %vm1173, %v3754, %v3690
        %v3820 = vsel %vm1173, %v3756, %v3692
        %v3822 = vsel %vm1173, %v3758, %v3694
        %v3824 = vsel %vm1173, %v3760, %v3696
        %v3826 = vsel %vm1173, %v3762, %v3698
        %v3828 = vsel %vm1173, %v3764, %v3700
        %v3830 = vsel %vm1173, %v3766, %v3702
        %v3832 = vsel %vm1173, %v3768, %v3704
        %v3834 = vsel %vm1173, %v3770, %v3706
        %v3836 = vsel %vm1173, %v3772, %v3708
        %v3838 = vsel %vm1173, %v3774, %v3710
        %v3840 = vsel %vm1173, %v3776, %v3712
        %v3842 = vsel %vm1173, %v3778, %v3714
        %v3844 = vsel %vm1173, %v3780, %v3716
        %v3846 = vsel %vm1173, %v3782, %v3718
        %v3848 = vsel %vm1173, %v3784, %v3720
        %v3850 = vsel %vm1173, %v3786, %v3722
        %v3852 = vsel %vm1173, %v3788, %v3724
        %v3854 = vsel %vm1173, %v3790, %v3726
        %v3856 = vsel %vm1173, %v3792, %v3728
        %v3858 = vsel %vm1173, %v3794, %v3730
        %v3860 = vsel %vm1173, %v3796, %v3732
        %v3862 = vsel %vm1173, %v3798, %v3734
        %v3864 = vsel %vm1173, %v3800, %v3736
        %v3866 = vsel %vm1173, %v3802, %v3738
        %s3867 = scalar_lea.vmem %s284, 24
        %v3868 = vld [vmem:[%s3867] sm:$0xf]
        %v3869 = vld [vmem:[%s3867 + $0x4] sm:$0xf]
        %v3870 = vld [vmem:[%s3867 + $0x8] sm:$0xf]
        %v3874 = vunpack.c.l.b16 %v3868
        %v3875 = vunpack.c.l.b16 %v3869
        %v3876 = vunpack.c.l.b16 %v3870
        %v3877 = vpack.c.b16 %v3875, %v3874
        %v3878 = vpack.c.b16 %v3876, %v3876
        %v3880 = vsel %vm2199, %v3804, 0
        %v3882 = vsel %vm2199, %v3806, 0
        %v3884 = vsel %vm2199, %v3808, 0
        %v3886 = vsel %vm2199, %v3810, 0
        %v3888 = vsel %vm2199, %v3812, 0
        %v3890 = vsel %vm2199, %v3814, 0
        %v3892 = vsel %vm2199, %v3816, 0
        %v3894 = vsel %vm2199, %v3818, 0
        %v3896 = vsel %vm2199, %v3820, 0
        %v3898 = vsel %vm2199, %v3822, 0
        %v3900 = vsel %vm2199, %v3824, 0
        %v3902 = vsel %vm2199, %v3826, 0
        %v3904 = vsel %vm2199, %v3828, 0
        %v3906 = vsel %vm2199, %v3830, 0
        %v3908 = vsel %vm2199, %v3832, 0
        %v3910 = vsel %vm2199, %v3834, 0
        %v3912 = vsel %vm2199, %v3836, 0
        %v3914 = vsel %vm2199, %v3838, 0
        %v3916 = vsel %vm2199, %v3840, 0
        %v3918 = vsel %vm2199, %v3842, 0
        %v3920 = vsel %vm2199, %v3844, 0
        %v3922 = vsel %vm2199, %v3846, 0
        %v3924 = vsel %vm2199, %v3848, 0
        %v3926 = vsel %vm2199, %v3850, 0
        %v3928 = vsel %vm2199, %v3852, 0
        %v3930 = vsel %vm2199, %v3854, 0
        %v3932 = vsel %vm2199, %v3856, 0
        %v3934 = vsel %vm2199, %v3858, 0
        %v3936 = vsel %vm2199, %v3860, 0
        %v3938 = vsel %vm2199, %v3862, 0
        %v3940 = vsel %vm2199, %v3864, 0
        %v3942 = vsel %vm2199, %v3866, 0
        %v3945 = vsel %vm2264, %v3878, 0
        %3947 = vmatprep.subr.bf16.mxu0 0
        %3948 = vmatpush1.bf16.msra.mxu0 %v3877
        %3949 = vmatprep.subr.bf16.mxu0 0
        %3950 = vmatpush1.bf16.msra.mxu0 %v3945
        %3951 = vmatprep.subr.bf16.mxu0 0
        %3952 = vmatpush1.bf16.msra.mxu0 0
        %3953 = vmatprep.subr.bf16.mxu0 0
        %3954 = vmatpush1.bf16.msra.mxu0 0
        %3955 = vmatprep.subr.bf16.mxu0 0
        %3956 = vmatpush1.bf16.msra.mxu0 0
        %3957 = vmatprep.subr.bf16.mxu0 0
        %3958 = vmatpush1.bf16.msra.mxu0 0
        %3959 = vmatprep.subr.bf16.mxu0 0
        %3960 = vmatpush1.bf16.msra.mxu0 0
        %3961 = vmatprep.subr.bf16.mxu0 0
        %3962 = vmatpush1.bf16.msra.mxu0 0
        %3963 = vmatprep.subr.bf16.mxu0 0
        %3964 = vmatpush1.bf16.msra.mxu0 0
        %3965 = vmatprep.subr.bf16.mxu0 0
        %3966 = vmatpush1.bf16.msra.mxu0 0
        %3967 = vmatprep.subr.bf16.mxu0 0
        %3968 = vmatpush1.bf16.msra.mxu0 0
        %3969 = vmatprep.subr.bf16.mxu0 0
        %3970 = vmatpush1.bf16.msra.mxu0 0
        %3971 = vmatprep.subr.bf16.mxu0 0
        %3972 = vmatpush1.bf16.msra.mxu0 0
        %3973 = vmatprep.subr.bf16.mxu0 0
        %3974 = vmatpush1.bf16.msra.mxu0 0
        %3975 = vmatprep.subr.bf16.mxu0 0
        %3976 = vmatpush1.bf16.msra.mxu0 0
        %3977 = vmatprep.subr.bf16.mxu0 0
        %3978 = vmatpush1.bf16.msra.mxu0 0
        %3979 = vmatprep.mubr.bf16.mxu0 0
        %3980 = vmatmul.mubr.bf16.gmra.mrb[0].mxu0 %v3880
        %v3981 = vpop.f32.mrb[0].mxu0
        %v3982 = vadd.f32 0.0, %v3981
        %v3983 = vpop.f32.mrb[0].mxu0
        %v3984 = vpop.f32.mrb[0].mxu0
        %v3985 = vadd.f32 0.0, %v3984
        %v3986 = vpop.f32.mrb[0].mxu0
        %3987 = vmatprep.mubr.bf16.mxu0 0
        %3988 = vmatmul.mubr.bf16.gmra.mrb[0].mxu0 %v3882
        %v3989 = vpop.f32.mrb[0].mxu0
        %v3990 = vadd.f32 0.0, %v3989
        %v3991 = vpop.f32.mrb[0].mxu0
        %v3992 = vpop.f32.mrb[0].mxu0
        %v3993 = vadd.f32 0.0, %v3992
        %v3994 = vpop.f32.mrb[0].mxu0
        %3995 = vmatprep.mubr.bf16.mxu0 0
        %3996 = vmatmul.mubr.bf16.gmra.mrb[0].mxu0 %v3884
        %v3997 = vpop.f32.mrb[0].mxu0
        %v3998 = vadd.f32 0.0, %v3997
        %v3999 = vpop.f32.mrb[0].mxu0
        %v4000 = vpop.f32.mrb[0].mxu0
        %v4001 = vadd.f32 0.0, %v4000
        %v4002 = vpop.f32.mrb[0].mxu0
        %4003 = vmatprep.mubr.bf16.mxu0 0
        %4004 = vmatmul.mubr.bf16.gmra.mrb[0].mxu0 %v3886
        %v4005 = vpop.f32.mrb[0].mxu0
        %v4006 = vadd.f32 0.0, %v4005
        %v4007 = vpop.f32.mrb[0].mxu0
        %v4008 = vpop.f32.mrb[0].mxu0
        %v4009 = vadd.f32 0.0, %v4008
        %v4010 = vpop.f32.mrb[0].mxu0
        %4011 = vmatprep.mubr.bf16.mxu0 0
        %4012 = vmatmul.mubr.bf16.gmra.mrb[0].mxu0 %v3888
        %v4013 = vpop.f32.mrb[0].mxu0
        %v4014 = vadd.f32 0.0, %v4013
        %v4015 = vpop.f32.mrb[0].mxu0
        %v4016 = vpop.f32.mrb[0].mxu0
        %v4017 = vadd.f32 0.0, %v4016
        %v4018 = vpop.f32.mrb[0].mxu0
        %4019 = vmatprep.mubr.bf16.mxu0 0
        %4020 = vmatmul.mubr.bf16.gmra.mrb[0].mxu0 %v3890
        %v4021 = vpop.f32.mrb[0].mxu0
        %v4022 = vadd.f32 0.0, %v4021
        %v4023 = vpop.f32.mrb[0].mxu0
        %v4024 = vpop.f32.mrb[0].mxu0
        %v4025 = vadd.f32 0.0, %v4024
        %v4026 = vpop.f32.mrb[0].mxu0
        %4027 = vmatprep.mubr.bf16.mxu0 0
        %4028 = vmatmul.mubr.bf16.gmra.mrb[0].mxu0 %v3892
        %v4029 = vpop.f32.mrb[0].mxu0
        %v4030 = vadd.f32 0.0, %v4029
        %v4031 = vpop.f32.mrb[0].mxu0
        %v4032 = vpop.f32.mrb[0].mxu0
        %v4033 = vadd.f32 0.0, %v4032
        %v4034 = vpop.f32.mrb[0].mxu0
        %4035 = vmatprep.mubr.bf16.mxu0 0
        %4036 = vmatmul.mubr.bf16.gmra.mrb[0].mxu0 %v3894
        %v4037 = vpop.f32.mrb[0].mxu0
        %v4038 = vadd.f32 0.0, %v4037
        %v4039 = vpop.f32.mrb[0].mxu0
        %v4040 = vpop.f32.mrb[0].mxu0
        %v4041 = vadd.f32 0.0, %v4040
        %v4042 = vpop.f32.mrb[0].mxu0
        %4043 = vmatprep.mubr.bf16.mxu0 0
        %4044 = vmatmul.mubr.bf16.gmra.mrb[0].mxu0 %v3896
        %v4045 = vpop.f32.mrb[0].mxu0
        %v4046 = vadd.f32 0.0, %v4045
        %v4047 = vpop.f32.mrb[0].mxu0
        %v4048 = vpop.f32.mrb[0].mxu0
        %v4049 = vadd.f32 0.0, %v4048
        %v4050 = vpop.f32.mrb[0].mxu0
        %4051 = vmatprep.mubr.bf16.mxu0 0
        %4052 = vmatmul.mubr.bf16.gmra.mrb[0].mxu0 %v3898
        %v4053 = vpop.f32.mrb[0].mxu0
        %v4054 = vadd.f32 0.0, %v4053
        %v4055 = vpop.f32.mrb[0].mxu0
        %v4056 = vpop.f32.mrb[0].mxu0
        %v4057 = vadd.f32 0.0, %v4056
        %v4058 = vpop.f32.mrb[0].mxu0
        %4059 = vmatprep.mubr.bf16.mxu0 0
        %4060 = vmatmul.mubr.bf16.gmra.mrb[0].mxu0 %v3900
        %v4061 = vpop.f32.mrb[0].mxu0
        %v4062 = vadd.f32 0.0, %v4061
        %v4063 = vpop.f32.mrb[0].mxu0
        %v4064 = vpop.f32.mrb[0].mxu0
        %v4065 = vadd.f32 0.0, %v4064
        %v4066 = vpop.f32.mrb[0].mxu0
        %4067 = vmatprep.mubr.bf16.mxu0 0
        %4068 = vmatmul.mubr.bf16.gmra.mrb[0].mxu0 %v3902
        %v4069 = vpop.f32.mrb[0].mxu0
        %v4070 = vadd.f32 0.0, %v4069
        %v4071 = vpop.f32.mrb[0].mxu0
        %v4072 = vpop.f32.mrb[0].mxu0
        %v4073 = vadd.f32 0.0, %v4072
        %v4074 = vpop.f32.mrb[0].mxu0
        %4075 = vmatprep.mubr.bf16.mxu0 0
        %4076 = vmatmul.mubr.bf16.gmra.mrb[0].mxu0 %v3904
        %v4077 = vpop.f32.mrb[0].mxu0
        %v4078 = vadd.f32 0.0, %v4077
        %v4079 = vpop.f32.mrb[0].mxu0
        %v4080 = vpop.f32.mrb[0].mxu0
        %v4081 = vadd.f32 0.0, %v4080
        %v4082 = vpop.f32.mrb[0].mxu0
        %4083 = vmatprep.mubr.bf16.mxu0 0
        %4084 = vmatmul.mubr.bf16.gmra.mrb[0].mxu0 %v3906
        %v4085 = vpop.f32.mrb[0].mxu0
        %v4086 = vadd.f32 0.0, %v4085
        %v4087 = vpop.f32.mrb[0].mxu0
        %v4088 = vpop.f32.mrb[0].mxu0
        %v4089 = vadd.f32 0.0, %v4088
        %v4090 = vpop.f32.mrb[0].mxu0
        %4091 = vmatprep.mubr.bf16.mxu0 0
        %4092 = vmatmul.mubr.bf16.gmra.mrb[0].mxu0 %v3908
        %v4093 = vpop.f32.mrb[0].mxu0
        %v4094 = vadd.f32 0.0, %v4093
        %v4095 = vpop.f32.mrb[0].mxu0
        %v4096 = vpop.f32.mrb[0].mxu0
        %v4097 = vadd.f32 0.0, %v4096
        %v4098 = vpop.f32.mrb[0].mxu0
        %4099 = vmatprep.mubr.bf16.mxu0 0
        %4100 = vmatmul.mubr.bf16.gmra.mrb[0].mxu0 %v3910
        %v4101 = vpop.f32.mrb[0].mxu0
        %v4102 = vadd.f32 0.0, %v4101
        %v4103 = vpop.f32.mrb[0].mxu0
        %v4104 = vpop.f32.mrb[0].mxu0
        %v4105 = vadd.f32 0.0, %v4104
        %v4106 = vpop.f32.mrb[0].mxu0
        %4107 = vmatprep.mubr.bf16.mxu0 0
        %4108 = vmatmul.mubr.bf16.gmra.mrb[0].mxu0 %v3912
        %v4109 = vpop.f32.mrb[0].mxu0
        %v4110 = vadd.f32 0.0, %v4109
        %v4111 = vpop.f32.mrb[0].mxu0
        %v4112 = vpop.f32.mrb[0].mxu0
        %v4113 = vadd.f32 0.0, %v4112
        %v4114 = vpop.f32.mrb[0].mxu0
        %4115 = vmatprep.mubr.bf16.mxu0 0
        %4116 = vmatmul.mubr.bf16.gmra.mrb[0].mxu0 %v3914
        %v4117 = vpop.f32.mrb[0].mxu0
        %v4118 = vadd.f32 0.0, %v4117
        %v4119 = vpop.f32.mrb[0].mxu0
        %v4120 = vpop.f32.mrb[0].mxu0
        %v4121 = vadd.f32 0.0, %v4120
        %v4122 = vpop.f32.mrb[0].mxu0
        %4123 = vmatprep.mubr.bf16.mxu0 0
        %4124 = vmatmul.mubr.bf16.gmra.mrb[0].mxu0 %v3916
        %v4125 = vpop.f32.mrb[0].mxu0
        %v4126 = vadd.f32 0.0, %v4125
        %v4127 = vpop.f32.mrb[0].mxu0
        %v4128 = vpop.f32.mrb[0].mxu0
        %v4129 = vadd.f32 0.0, %v4128
        %v4130 = vpop.f32.mrb[0].mxu0
        %4131 = vmatprep.mubr.bf16.mxu0 0
        %4132 = vmatmul.mubr.bf16.gmra.mrb[0].mxu0 %v3918
        %v4133 = vpop.f32.mrb[0].mxu0
        %v4134 = vadd.f32 0.0, %v4133
        %v4135 = vpop.f32.mrb[0].mxu0
        %v4136 = vpop.f32.mrb[0].mxu0
        %v4137 = vadd.f32 0.0, %v4136
        %v4138 = vpop.f32.mrb[0].mxu0
        %4139 = vmatprep.mubr.bf16.mxu0 0
        %4140 = vmatmul.mubr.bf16.gmra.mrb[0].mxu0 %v3920
        %v4141 = vpop.f32.mrb[0].mxu0
        %v4142 = vadd.f32 0.0, %v4141
        %v4143 = vpop.f32.mrb[0].mxu0
        %v4144 = vpop.f32.mrb[0].mxu0
        %v4145 = vadd.f32 0.0, %v4144
        %v4146 = vpop.f32.mrb[0].mxu0
        %4147 = vmatprep.mubr.bf16.mxu0 0
        %4148 = vmatmul.mubr.bf16.gmra.mrb[0].mxu0 %v3922
        %v4149 = vpop.f32.mrb[0].mxu0
        %v4150 = vadd.f32 0.0, %v4149
        %v4151 = vpop.f32.mrb[0].mxu0
        %v4152 = vpop.f32.mrb[0].mxu0
        %v4153 = vadd.f32 0.0, %v4152
        %v4154 = vpop.f32.mrb[0].mxu0
        %4155 = vmatprep.mubr.bf16.mxu0 0
        %4156 = vmatmul.mubr.bf16.gmra.mrb[0].mxu0 %v3924
        %v4157 = vpop.f32.mrb[0].mxu0
        %v4158 = vadd.f32 0.0, %v4157
        %v4159 = vpop.f32.mrb[0].mxu0
        %v4160 = vpop.f32.mrb[0].mxu0
        %v4161 = vadd.f32 0.0, %v4160
        %v4162 = vpop.f32.mrb[0].mxu0
        %4163 = vmatprep.mubr.bf16.mxu0 0
        %4164 = vmatmul.mubr.bf16.gmra.mrb[0].mxu0 %v3926
        %v4165 = vpop.f32.mrb[0].mxu0
        %v4166 = vadd.f32 0.0, %v4165
        %v4167 = vpop.f32.mrb[0].mxu0
        %v4168 = vpop.f32.mrb[0].mxu0
        %v4169 = vadd.f32 0.0, %v4168
        %v4170 = vpop.f32.mrb[0].mxu0
        %4171 = vmatprep.mubr.bf16.mxu0 0
        %4172 = vmatmul.mubr.bf16.gmra.mrb[0].mxu0 %v3928
        %v4173 = vpop.f32.mrb[0].mxu0
        %v4174 = vadd.f32 0.0, %v4173
        %v4175 = vpop.f32.mrb[0].mxu0
        %v4176 = vpop.f32.mrb[0].mxu0
        %v4177 = vadd.f32 0.0, %v4176
        %v4178 = vpop.f32.mrb[0].mxu0
        %4179 = vmatprep.mubr.bf16.mxu0 0
        %4180 = vmatmul.mubr.bf16.gmra.mrb[0].mxu0 %v3930
        %v4181 = vpop.f32.mrb[0].mxu0
        %v4182 = vadd.f32 0.0, %v4181
        %v4183 = vpop.f32.mrb[0].mxu0
        %v4184 = vpop.f32.mrb[0].mxu0
        %v4185 = vadd.f32 0.0, %v4184
        %v4186 = vpop.f32.mrb[0].mxu0
        %4187 = vmatprep.mubr.bf16.mxu0 0
        %4188 = vmatmul.mubr.bf16.gmra.mrb[0].mxu0 %v3932
        %v4189 = vpop.f32.mrb[0].mxu0
        %v4190 = vadd.f32 0.0, %v4189
        %v4191 = vpop.f32.mrb[0].mxu0
        %v4192 = vpop.f32.mrb[0].mxu0
        %v4193 = vadd.f32 0.0, %v4192
        %v4194 = vpop.f32.mrb[0].mxu0
        %4195 = vmatprep.mubr.bf16.mxu0 0
        %4196 = vmatmul.mubr.bf16.gmra.mrb[0].mxu0 %v3934
        %v4197 = vpop.f32.mrb[0].mxu0
        %v4198 = vadd.f32 0.0, %v4197
        %v4199 = vpop.f32.mrb[0].mxu0
        %v4200 = vpop.f32.mrb[0].mxu0
        %v4201 = vadd.f32 0.0, %v4200
        %v4202 = vpop.f32.mrb[0].mxu0
        %4203 = vmatprep.mubr.bf16.mxu0 0
        %4204 = vmatmul.mubr.bf16.gmra.mrb[0].mxu0 %v3936
        %v4205 = vpop.f32.mrb[0].mxu0
        %v4206 = vadd.f32 0.0, %v4205
        %v4207 = vpop.f32.mrb[0].mxu0
        %v4208 = vpop.f32.mrb[0].mxu0
        %v4209 = vadd.f32 0.0, %v4208
        %v4210 = vpop.f32.mrb[0].mxu0
        %4211 = vmatprep.mubr.bf16.mxu0 0
        %4212 = vmatmul.mubr.bf16.gmra.mrb[0].mxu0 %v3938
        %v4213 = vpop.f32.mrb[0].mxu0
        %v4214 = vadd.f32 0.0, %v4213
        %v4215 = vpop.f32.mrb[0].mxu0
        %v4216 = vpop.f32.mrb[0].mxu0
        %v4217 = vadd.f32 0.0, %v4216
        %v4218 = vpop.f32.mrb[0].mxu0
        %4219 = vmatprep.mubr.bf16.mxu0 0
        %4220 = vmatmul.mubr.bf16.gmra.mrb[0].mxu0 %v3940
        %v4221 = vpop.f32.mrb[0].mxu0
        %v4222 = vadd.f32 0.0, %v4221
        %v4223 = vpop.f32.mrb[0].mxu0
        %v4224 = vpop.f32.mrb[0].mxu0
        %v4225 = vadd.f32 0.0, %v4224
        %v4226 = vpop.f32.mrb[0].mxu0
        %4227 = vmatprep.mubr.bf16.mxu0 0
        %4228 = vmatmul.mubr.bf16.gmra.mrb[0].mxu0 %v3942
        %v4229 = vpop.f32.mrb[0].mxu0
        %v4230 = vadd.f32 0.0, %v4229
        %v4231 = vpop.f32.mrb[0].mxu0
        %v4232 = vpop.f32.mrb[0].mxu0
        %v4233 = vadd.f32 0.0, %v4232
        %v4234 = vpop.f32.mrb[0].mxu0
        %4235 = vdwg.mxu0
        %v4236 = vadd.f32 %v2668, %v3982
        %v4237 = vadd.f32 %v2671, %v3985
        %v4238 = vadd.f32 %v2676, %v3990
        %v4239 = vadd.f32 %v2679, %v3993
        %v4240 = vadd.f32 %v2684, %v3998
        %v4241 = vadd.f32 %v2687, %v4001
        %v4242 = vadd.f32 %v2692, %v4006
        %v4243 = vadd.f32 %v2695, %v4009
        %v4244 = vadd.f32 %v2700, %v4014
        %v4245 = vadd.f32 %v2703, %v4017
        %v4246 = vadd.f32 %v2708, %v4022
        %v4247 = vadd.f32 %v2711, %v4025
        %v4248 = vadd.f32 %v2716, %v4030
        %v4249 = vadd.f32 %v2719, %v4033
        %v4250 = vadd.f32 %v2724, %v4038
        %v4251 = vadd.f32 %v2727, %v4041
        %v4252 = vadd.f32 %v2732, %v4046
        %v4253 = vadd.f32 %v2735, %v4049
        %v4254 = vadd.f32 %v2740, %v4054
        %v4255 = vadd.f32 %v2743, %v4057
        %v4256 = vadd.f32 %v2748, %v4062
        %v4257 = vadd.f32 %v2751, %v4065
        %v4258 = vadd.f32 %v2756, %v4070
        %v4259 = vadd.f32 %v2759, %v4073
        %v4260 = vadd.f32 %v2764, %v4078
        %v4261 = vadd.f32 %v2767, %v4081
        %v4262 = vadd.f32 %v2772, %v4086
        %v4263 = vadd.f32 %v2775, %v4089
        %v4264 = vadd.f32 %v2780, %v4094
        %v4265 = vadd.f32 %v2783, %v4097
        %v4266 = vadd.f32 %v2788, %v4102
        %v4267 = vadd.f32 %v2791, %v4105
        %v4268 = vadd.f32 %v2796, %v4110
        %v4269 = vadd.f32 %v2799, %v4113
        %v4270 = vadd.f32 %v2804, %v4118
        %v4271 = vadd.f32 %v2807, %v4121
        %v4272 = vadd.f32 %v2812, %v4126
        %v4273 = vadd.f32 %v2815, %v4129
        %v4274 = vadd.f32 %v2820, %v4134
        %v4275 = vadd.f32 %v2823, %v4137
        %v4276 = vadd.f32 %v2828, %v4142
        %v4277 = vadd.f32 %v2831, %v4145
        %v4278 = vadd.f32 %v2836, %v4150
        %v4279 = vadd.f32 %v2839, %v4153
        %v4280 = vadd.f32 %v2844, %v4158
        %v4281 = vadd.f32 %v2847, %v4161
        %v4282 = vadd.f32 %v2852, %v4166
        %v4283 = vadd.f32 %v2855, %v4169
        %v4284 = vadd.f32 %v2860, %v4174
        %v4285 = vadd.f32 %v2863, %v4177
        %v4286 = vadd.f32 %v2868, %v4182
        %v4287 = vadd.f32 %v2871, %v4185
        %v4288 = vadd.f32 %v2876, %v4190
        %v4289 = vadd.f32 %v2879, %v4193
        %v4290 = vadd.f32 %v2884, %v4198
        %v4291 = vadd.f32 %v2887, %v4201
        %v4292 = vadd.f32 %v2892, %v4206
        %v4293 = vadd.f32 %v2895, %v4209
        %v4294 = vadd.f32 %v2900, %v4214
        %v4295 = vadd.f32 %v2903, %v4217
        %v4296 = vadd.f32 %v2908, %v4222
        %v4297 = vadd.f32 %v2911, %v4225
        %v4298 = vadd.f32 %v2916, %v4230
        %v4299 = vadd.f32 %v2919, %v4233
        %v4301 = vlaneseq
        %v4302 = vshrl.u32 %v4301, 7
        %v4303 = vsub.s32 0, %v4302
        %v4304 = vrot.slane %v289, %v4303
        %v4306 = vadd.f32 %v4236, %v4304
        %v4307 = vadd.f32 %v4237, %v4304
        %v4308 = vadd.f32 %v4238, %v4304
        %v4309 = vadd.f32 %v4239, %v4304
        %v4310 = vadd.f32 %v4240, %v4304
        %v4311 = vadd.f32 %v4241, %v4304
        %v4312 = vadd.f32 %v4242, %v4304
        %v4313 = vadd.f32 %v4243, %v4304
        %v4314 = vadd.f32 %v4244, %v4304
        %v4315 = vadd.f32 %v4245, %v4304
        %v4316 = vadd.f32 %v4246, %v4304
        %v4317 = vadd.f32 %v4247, %v4304
        %v4318 = vadd.f32 %v4248, %v4304
        %v4319 = vadd.f32 %v4249, %v4304
        %v4320 = vadd.f32 %v4250, %v4304
        %v4321 = vadd.f32 %v4251, %v4304
        %v4322 = vadd.f32 %v4252, %v4304
        %v4323 = vadd.f32 %v4253, %v4304
        %v4324 = vadd.f32 %v4254, %v4304
        %v4325 = vadd.f32 %v4255, %v4304
        %v4326 = vadd.f32 %v4256, %v4304
        %v4327 = vadd.f32 %v4257, %v4304
        %v4328 = vadd.f32 %v4258, %v4304
        %v4329 = vadd.f32 %v4259, %v4304
        %v4330 = vadd.f32 %v4260, %v4304
        %v4331 = vadd.f32 %v4261, %v4304
        %v4332 = vadd.f32 %v4262, %v4304
        %v4333 = vadd.f32 %v4263, %v4304
        %v4334 = vadd.f32 %v4264, %v4304
        %v4335 = vadd.f32 %v4265, %v4304
        %v4336 = vadd.f32 %v4266, %v4304
        %v4337 = vadd.f32 %v4267, %v4304
        %v4338 = vadd.f32 %v4268, %v4304
        %v4339 = vadd.f32 %v4269, %v4304
        %v4340 = vadd.f32 %v4270, %v4304
        %v4341 = vadd.f32 %v4271, %v4304
        %v4342 = vadd.f32 %v4272, %v4304
        %v4343 = vadd.f32 %v4273, %v4304
        %v4344 = vadd.f32 %v4274, %v4304
        %v4345 = vadd.f32 %v4275, %v4304
        %v4346 = vadd.f32 %v4276, %v4304
        %v4347 = vadd.f32 %v4277, %v4304
        %v4348 = vadd.f32 %v4278, %v4304
        %v4349 = vadd.f32 %v4279, %v4304
        %v4350 = vadd.f32 %v4280, %v4304
        %v4351 = vadd.f32 %v4281, %v4304
        %v4352 = vadd.f32 %v4282, %v4304
        %v4353 = vadd.f32 %v4283, %v4304
        %v4354 = vadd.f32 %v4284, %v4304
        %v4355 = vadd.f32 %v4285, %v4304
        %v4356 = vadd.f32 %v4286, %v4304
        %v4357 = vadd.f32 %v4287, %v4304
        %v4358 = vadd.f32 %v4288, %v4304
        %v4359 = vadd.f32 %v4289, %v4304
        %v4360 = vadd.f32 %v4290, %v4304
        %v4361 = vadd.f32 %v4291, %v4304
        %v4362 = vadd.f32 %v4292, %v4304
        %v4363 = vadd.f32 %v4293, %v4304
        %v4364 = vadd.f32 %v4294, %v4304
        %v4365 = vadd.f32 %v4295, %v4304
        %v4366 = vadd.f32 %v4296, %v4304
        %v4367 = vadd.f32 %v4297, %v4304
        %v4368 = vadd.f32 %v4298, %v4304
        %v4369 = vadd.f32 %v4299, %v4304
        %v4370 = vpack.c.bf16 %v4307, %v4306
        %v4371 = vpack.c.bf16 %v4309, %v4308
        %v4372 = vpack.c.bf16 %v4311, %v4310
        %v4373 = vpack.c.bf16 %v4313, %v4312
        %v4374 = vpack.c.bf16 %v4315, %v4314
        %v4375 = vpack.c.bf16 %v4317, %v4316
        %v4376 = vpack.c.bf16 %v4319, %v4318
        %v4377 = vpack.c.bf16 %v4321, %v4320
        %v4378 = vpack.c.bf16 %v4323, %v4322
        %v4379 = vpack.c.bf16 %v4325, %v4324
        %v4380 = vpack.c.bf16 %v4327, %v4326
        %v4381 = vpack.c.bf16 %v4329, %v4328
        %v4382 = vpack.c.bf16 %v4331, %v4330
        %v4383 = vpack.c.bf16 %v4333, %v4332
        %v4384 = vpack.c.bf16 %v4335, %v4334
        %v4385 = vpack.c.bf16 %v4337, %v4336
        %v4386 = vpack.c.bf16 %v4339, %v4338
        %v4387 = vpack.c.bf16 %v4341, %v4340
        %v4388 = vpack.c.bf16 %v4343, %v4342
        %v4389 = vpack.c.bf16 %v4345, %v4344
        %v4390 = vpack.c.bf16 %v4347, %v4346
        %v4391 = vpack.c.bf16 %v4349, %v4348
        %v4392 = vpack.c.bf16 %v4351, %v4350
        %v4393 = vpack.c.bf16 %v4353, %v4352
        %v4394 = vpack.c.bf16 %v4355, %v4354
        %v4395 = vpack.c.bf16 %v4357, %v4356
        %v4396 = vpack.c.bf16 %v4359, %v4358
        %v4397 = vpack.c.bf16 %v4361, %v4360
        %v4398 = vpack.c.bf16 %v4363, %v4362
        %v4399 = vpack.c.bf16 %v4365, %v4364
        %v4400 = vpack.c.bf16 %v4367, %v4366
        %v4401 = vpack.c.bf16 %v4369, %v4368
        %v4434 = vunpack.c.l.b16 %v4370
        %v4435 = vunpack.c.h.b16 %v4370
        %v4436 = vunpack.c.l.b16 %v4371
        %v4437 = vunpack.c.h.b16 %v4371
        %v4438 = vunpack.c.l.b16 %v4372
        %v4439 = vunpack.c.h.b16 %v4372
        %v4440 = vunpack.c.l.b16 %v4373
        %v4441 = vunpack.c.h.b16 %v4373
        %v4442 = vunpack.c.l.b16 %v4374
        %v4443 = vunpack.c.h.b16 %v4374
        %v4444 = vunpack.c.l.b16 %v4375
        %v4445 = vunpack.c.h.b16 %v4375
        %v4446 = vunpack.c.l.b16 %v4376
        %v4447 = vunpack.c.h.b16 %v4376
        %v4448 = vunpack.c.l.b16 %v4377
        %v4449 = vunpack.c.h.b16 %v4377
        %v4450 = vunpack.c.l.b16 %v4378
        %v4451 = vunpack.c.h.b16 %v4378
        %v4452 = vunpack.c.l.b16 %v4379
        %v4453 = vunpack.c.h.b16 %v4379
        %v4454 = vunpack.c.l.b16 %v4380
        %v4455 = vunpack.c.h.b16 %v4380
        %v4456 = vunpack.c.l.b16 %v4381
        %v4457 = vunpack.c.h.b16 %v4381
        %v4458 = vunpack.c.l.b16 %v4382
        %v4459 = vunpack.c.h.b16 %v4382
        %v4460 = vunpack.c.l.b16 %v4383
        %v4461 = vunpack.c.h.b16 %v4383
        %v4462 = vunpack.c.l.b16 %v4384
        %v4463 = vunpack.c.h.b16 %v4384
        %v4464 = vunpack.c.l.b16 %v4385
        %v4465 = vunpack.c.h.b16 %v4385
        %v4466 = vunpack.c.l.b16 %v4386
        %v4467 = vunpack.c.h.b16 %v4386
        %v4468 = vunpack.c.l.b16 %v4387
        %v4469 = vunpack.c.h.b16 %v4387
        %v4470 = vunpack.c.l.b16 %v4388
        %v4471 = vunpack.c.h.b16 %v4388
        %v4472 = vunpack.c.l.b16 %v4389
        %v4473 = vunpack.c.h.b16 %v4389
        %v4474 = vunpack.c.l.b16 %v4390
        %v4475 = vunpack.c.h.b16 %v4390
        %v4476 = vunpack.c.l.b16 %v4391
        %v4477 = vunpack.c.h.b16 %v4391
        %v4478 = vunpack.c.l.b16 %v4392
        %v4479 = vunpack.c.h.b16 %v4392
        %v4480 = vunpack.c.l.b16 %v4393
        %v4481 = vunpack.c.h.b16 %v4393
        %v4482 = vunpack.c.l.b16 %v4394
        %v4483 = vunpack.c.h.b16 %v4394
        %v4484 = vunpack.c.l.b16 %v4395
        %v4485 = vunpack.c.h.b16 %v4395
        %v4486 = vunpack.c.l.b16 %v4396
        %v4487 = vunpack.c.h.b16 %v4396
        %v4488 = vunpack.c.l.b16 %v4397
        %v4489 = vunpack.c.h.b16 %v4397
        %v4490 = vunpack.c.l.b16 %v4398
        %v4491 = vunpack.c.h.b16 %v4398
        %v4492 = vunpack.c.l.b16 %v4399
        %v4493 = vunpack.c.h.b16 %v4399
        %v4494 = vunpack.c.l.b16 %v4400
        %v4495 = vunpack.c.h.b16 %v4400
        %v4496 = vunpack.c.l.b16 %v4401
        %v4497 = vunpack.c.h.b16 %v4401
        %v4498 = vpack.c.b16 %v4434, %v4434
        %v4499 = vpack.c.b16 %v4435, %v4435
        %v4500 = vpack.c.b16 %v4436, %v4436
        %v4501 = vpack.c.b16 %v4437, %v4437
        %v4502 = vpack.c.b16 %v4438, %v4438
        %v4503 = vpack.c.b16 %v4439, %v4439
        %v4504 = vpack.c.b16 %v4440, %v4440
        %v4505 = vpack.c.b16 %v4441, %v4441
        %v4506 = vpack.c.b16 %v4442, %v4442
        %v4507 = vpack.c.b16 %v4443, %v4443
        %v4508 = vpack.c.b16 %v4444, %v4444
        %v4509 = vpack.c.b16 %v4445, %v4445
        %v4510 = vpack.c.b16 %v4446, %v4446
        %v4511 = vpack.c.b16 %v4447, %v4447
        %v4512 = vpack.c.b16 %v4448, %v4448
        %v4513 = vpack.c.b16 %v4449, %v4449
        %v4514 = vpack.c.b16 %v4450, %v4450
        %v4515 = vpack.c.b16 %v4451, %v4451
        %v4516 = vpack.c.b16 %v4452, %v4452
        %v4517 = vpack.c.b16 %v4453, %v4453
        %v4518 = vpack.c.b16 %v4454, %v4454
        %v4519 = vpack.c.b16 %v4455, %v4455
        %v4520 = vpack.c.b16 %v4456, %v4456
        %v4521 = vpack.c.b16 %v4457, %v4457
        %v4522 = vpack.c.b16 %v4458, %v4458
        %v4523 = vpack.c.b16 %v4459, %v4459
        %v4524 = vpack.c.b16 %v4460, %v4460
        %v4525 = vpack.c.b16 %v4461, %v4461
        %v4526 = vpack.c.b16 %v4462, %v4462
        %v4527 = vpack.c.b16 %v4463, %v4463
        %v4528 = vpack.c.b16 %v4464, %v4464
        %v4529 = vpack.c.b16 %v4465, %v4465
        %v4530 = vpack.c.b16 %v4466, %v4466
        %v4531 = vpack.c.b16 %v4467, %v4467
        %v4532 = vpack.c.b16 %v4468, %v4468
        %v4533 = vpack.c.b16 %v4469, %v4469
        %v4534 = vpack.c.b16 %v4470, %v4470
        %v4535 = vpack.c.b16 %v4471, %v4471
        %v4536 = vpack.c.b16 %v4472, %v4472
        %v4537 = vpack.c.b16 %v4473, %v4473
        %v4538 = vpack.c.b16 %v4474, %v4474
        %v4539 = vpack.c.b16 %v4475, %v4475
        %v4540 = vpack.c.b16 %v4476, %v4476
        %v4541 = vpack.c.b16 %v4477, %v4477
        %v4542 = vpack.c.b16 %v4478, %v4478
        %v4543 = vpack.c.b16 %v4479, %v4479
        %v4544 = vpack.c.b16 %v4480, %v4480
        %v4545 = vpack.c.b16 %v4481, %v4481
        %v4546 = vpack.c.b16 %v4482, %v4482
        %v4547 = vpack.c.b16 %v4483, %v4483
        %v4548 = vpack.c.b16 %v4484, %v4484
        %v4549 = vpack.c.b16 %v4485, %v4485
        %v4550 = vpack.c.b16 %v4486, %v4486
        %v4551 = vpack.c.b16 %v4487, %v4487
        %v4552 = vpack.c.b16 %v4488, %v4488
        %v4553 = vpack.c.b16 %v4489, %v4489
        %v4554 = vpack.c.b16 %v4490, %v4490
        %v4555 = vpack.c.b16 %v4491, %v4491
        %v4556 = vpack.c.b16 %v4492, %v4492
        %v4557 = vpack.c.b16 %v4493, %v4493
        %v4558 = vpack.c.b16 %v4494, %v4494
        %v4559 = vpack.c.b16 %v4495, %v4495
        %v4560 = vpack.c.b16 %v4496, %v4496
        %v4561 = vpack.c.b16 %v4497, %v4497
        %vm4626 = vcmask 519168
        %4627 = vst.msk [vmem:[%s263] sm:$0xf] %vm4626, %v4498
        %4628 = vst.msk [vmem:[%s263 + $0x4] sm:$0xf] %vm4626, %v4499
        %4629 = vst.msk [vmem:[%s263 + $0x8] sm:$0xf] %vm4626, %v4500
        %4630 = vst.msk [vmem:[%s263 + $0xc] sm:$0xf] %vm4626, %v4501
        %4631 = vst.msk [vmem:[%s263 + $0x10] sm:$0xf] %vm4626, %v4502
        %4632 = vst.msk [vmem:[%s263 + $0x14] sm:$0xf] %vm4626, %v4503
        %4633 = vst.msk [vmem:[%s263 + $0x18] sm:$0xf] %vm4626, %v4504
        %4634 = vst.msk [vmem:[%s263 + $0x1c] sm:$0xf] %vm4626, %v4505
        %4635 = vst.msk [vmem:[%s263 + $0x20] sm:$0xf] %vm4626, %v4506
        %4636 = vst.msk [vmem:[%s263 + $0x24] sm:$0xf] %vm4626, %v4507
        %4637 = vst.msk [vmem:[%s263 + $0x28] sm:$0xf] %vm4626, %v4508
        %4638 = vst.msk [vmem:[%s263 + $0x2c] sm:$0xf] %vm4626, %v4509
        %4639 = vst.msk [vmem:[%s263 + $0x30] sm:$0xf] %vm4626, %v4510
        %4640 = vst.msk [vmem:[%s263 + $0x34] sm:$0xf] %vm4626, %v4511
        %4641 = vst.msk [vmem:[%s263 + $0x38] sm:$0xf] %vm4626, %v4512
        %4642 = vst.msk [vmem:[%s263 + $0x3c] sm:$0xf] %vm4626, %v4513
        %4643 = vst.msk [vmem:[%s263 + $0x40] sm:$0xf] %vm4626, %v4514
        %4644 = vst.msk [vmem:[%s263 + $0x44] sm:$0xf] %vm4626, %v4515
        %4645 = vst.msk [vmem:[%s263 + $0x48] sm:$0xf] %vm4626, %v4516
        %4646 = vst.msk [vmem:[%s263 + $0x4c] sm:$0xf] %vm4626, %v4517
        %4647 = vst.msk [vmem:[%s263 + $0x50] sm:$0xf] %vm4626, %v4518
        %4648 = vst.msk [vmem:[%s263 + $0x54] sm:$0xf] %vm4626, %v4519
        %4649 = vst.msk [vmem:[%s263 + $0x58] sm:$0xf] %vm4626, %v4520
        %4650 = vst.msk [vmem:[%s263 + $0x5c] sm:$0xf] %vm4626, %v4521
        %4651 = vst.msk [vmem:[%s263 + $0x60] sm:$0xf] %vm4626, %v4522
        %4652 = vst.msk [vmem:[%s263 + $0x64] sm:$0xf] %vm4626, %v4523
        %4653 = vst.msk [vmem:[%s263 + $0x68] sm:$0xf] %vm4626, %v4524
        %4654 = vst.msk [vmem:[%s263 + $0x6c] sm:$0xf] %vm4626, %v4525
        %4655 = vst.msk [vmem:[%s263 + $0x70] sm:$0xf] %vm4626, %v4526
        %4656 = vst.msk [vmem:[%s263 + $0x74] sm:$0xf] %vm4626, %v4527
        %4657 = vst.msk [vmem:[%s263 + $0x78] sm:$0xf] %vm4626, %v4528
        %4658 = vst.msk [vmem:[%s263 + $0x7c] sm:$0xf] %vm4626, %v4529
        %4659 = vst.msk [vmem:[%s263 + $0x80] sm:$0xf] %vm4626, %v4530
        %4660 = vst.msk [vmem:[%s263 + $0x84] sm:$0xf] %vm4626, %v4531
        %4661 = vst.msk [vmem:[%s263 + $0x88] sm:$0xf] %vm4626, %v4532
        %4662 = vst.msk [vmem:[%s263 + $0x8c] sm:$0xf] %vm4626, %v4533
        %4663 = vst.msk [vmem:[%s263 + $0x90] sm:$0xf] %vm4626, %v4534
        %4664 = vst.msk [vmem:[%s263 + $0x94] sm:$0xf] %vm4626, %v4535
        %4665 = vst.msk [vmem:[%s263 + $0x98] sm:$0xf] %vm4626, %v4536
        %4666 = vst.msk [vmem:[%s263 + $0x9c] sm:$0xf] %vm4626, %v4537
        %4667 = vst.msk [vmem:[%s263 + $0xa0] sm:$0xf] %vm4626, %v4538
        %4668 = vst.msk [vmem:[%s263 + $0xa4] sm:$0xf] %vm4626, %v4539
        %4669 = vst.msk [vmem:[%s263 + $0xa8] sm:$0xf] %vm4626, %v4540
        %4670 = vst.msk [vmem:[%s263 + $0xac] sm:$0xf] %vm4626, %v4541
        %4671 = vst.msk [vmem:[%s263 + $0xb0] sm:$0xf] %vm4626, %v4542
        %4672 = vst.msk [vmem:[%s263 + $0xb4] sm:$0xf] %vm4626, %v4543
        %4673 = vst.msk [vmem:[%s263 + $0xb8] sm:$0xf] %vm4626, %v4544
        %4674 = vst.msk [vmem:[%s263 + $0xbc] sm:$0xf] %vm4626, %v4545
        %4675 = vst.msk [vmem:[%s263 + $0xc0] sm:$0xf] %vm4626, %v4546
        %4676 = vst.msk [vmem:[%s263 + $0xc4] sm:$0xf] %vm4626, %v4547
        %4677 = vst.msk [vmem:[%s263 + $0xc8] sm:$0xf] %vm4626, %v4548
        %4678 = vst.msk [vmem:[%s263 + $0xcc] sm:$0xf] %vm4626, %v4549
        %4679 = vst.msk [vmem:[%s263 + $0xd0] sm:$0xf] %vm4626, %v4550
        %4680 = vst.msk [vmem:[%s263 + $0xd4] sm:$0xf] %vm4626, %v4551
        %4681 = vst.msk [vmem:[%s263 + $0xd8] sm:$0xf] %vm4626, %v4552
        %4682 = vst.msk [vmem:[%s263 + $0xdc] sm:$0xf] %vm4626, %v4553
        %4683 = vst.msk [vmem:[%s263 + $0xe0] sm:$0xf] %vm4626, %v4554
        %4684 = vst.msk [vmem:[%s263 + $0xe4] sm:$0xf] %vm4626, %v4555
        %4685 = vst.msk [vmem:[%s263 + $0xe8] sm:$0xf] %vm4626, %v4556
        %4686 = vst.msk [vmem:[%s263 + $0xec] sm:$0xf] %vm4626, %v4557
        %4687 = vst.msk [vmem:[%s263 + $0xf0] sm:$0xf] %vm4626, %v4558
        %4688 = vst.msk [vmem:[%s263 + $0xf4] sm:$0xf] %vm4626, %v4559
        %4689 = vst.msk [vmem:[%s263 + $0xf8] sm:$0xf] %vm4626, %v4560
        %4690 = vst.msk [vmem:[%s263 + $0xfc] sm:$0xf] %vm4626, %v4561
        %vm4691 = vcmask 523264
        %v4692 = vsel %vm4691, %v4306, 0.0
        %v4693 = vsel %vm4691, %v4307, 0.0
        %v4694 = vadd.f32 %v4692, %v4693
        %v4695 = vsel %vm4691, %v4308, 0.0
        %v4696 = vadd.f32 %v4694, %v4695
        %v4697 = vsel %vm4691, %v4309, 0.0
        %v4698 = vadd.f32 %v4696, %v4697
        %v4699 = vsel %vm4691, %v4310, 0.0
        %v4700 = vadd.f32 %v4698, %v4699
        %v4701 = vsel %vm4691, %v4311, 0.0
        %v4702 = vadd.f32 %v4700, %v4701
        %v4703 = vsel %vm4691, %v4312, 0.0
        %v4704 = vadd.f32 %v4702, %v4703
        %v4705 = vsel %vm4691, %v4313, 0.0
        %v4706 = vadd.f32 %v4704, %v4705
        %v4707 = vsel %vm4691, %v4314, 0.0
        %v4708 = vadd.f32 %v4706, %v4707
        %v4709 = vsel %vm4691, %v4315, 0.0
        %v4710 = vadd.f32 %v4708, %v4709
        %v4711 = vsel %vm4691, %v4316, 0.0
        %v4712 = vadd.f32 %v4710, %v4711
        %v4713 = vsel %vm4691, %v4317, 0.0
        %v4714 = vadd.f32 %v4712, %v4713
        %v4715 = vsel %vm4691, %v4318, 0.0
        %v4716 = vadd.f32 %v4714, %v4715
        %v4717 = vsel %vm4691, %v4319, 0.0
        %v4718 = vadd.f32 %v4716, %v4717
        %v4719 = vsel %vm4691, %v4320, 0.0
        %v4720 = vadd.f32 %v4718, %v4719
        %v4721 = vsel %vm4691, %v4321, 0.0
        %v4722 = vadd.f32 %v4720, %v4721
        %v4723 = vsel %vm4691, %v4322, 0.0
        %v4724 = vadd.f32 %v4722, %v4723
        %v4725 = vsel %vm4691, %v4323, 0.0
        %v4726 = vadd.f32 %v4724, %v4725
        %v4727 = vsel %vm4691, %v4324, 0.0
        %v4728 = vadd.f32 %v4726, %v4727
        %v4729 = vsel %vm4691, %v4325, 0.0
        %v4730 = vadd.f32 %v4728, %v4729
        %v4731 = vsel %vm4691, %v4326, 0.0
        %v4732 = vadd.f32 %v4730, %v4731
        %v4733 = vsel %vm4691, %v4327, 0.0
        %v4734 = vadd.f32 %v4732, %v4733
        %v4735 = vsel %vm4691, %v4328, 0.0
        %v4736 = vadd.f32 %v4734, %v4735
        %v4737 = vsel %vm4691, %v4329, 0.0
        %v4738 = vadd.f32 %v4736, %v4737
        %v4739 = vsel %vm4691, %v4330, 0.0
        %v4740 = vadd.f32 %v4738, %v4739
        %v4741 = vsel %vm4691, %v4331, 0.0
        %v4742 = vadd.f32 %v4740, %v4741
        %v4743 = vsel %vm4691, %v4332, 0.0
        %v4744 = vadd.f32 %v4742, %v4743
        %v4745 = vsel %vm4691, %v4333, 0.0
        %v4746 = vadd.f32 %v4744, %v4745
        %v4747 = vsel %vm4691, %v4334, 0.0
        %v4748 = vadd.f32 %v4746, %v4747
        %v4749 = vsel %vm4691, %v4335, 0.0
        %v4750 = vadd.f32 %v4748, %v4749
        %v4751 = vsel %vm4691, %v4336, 0.0
        %v4752 = vadd.f32 %v4750, %v4751
        %v4753 = vsel %vm4691, %v4337, 0.0
        %v4754 = vadd.f32 %v4752, %v4753
        %v4755 = vsel %vm4691, %v4338, 0.0
        %v4756 = vadd.f32 %v4754, %v4755
        %v4757 = vsel %vm4691, %v4339, 0.0
        %v4758 = vadd.f32 %v4756, %v4757
        %v4759 = vsel %vm4691, %v4340, 0.0
        %v4760 = vadd.f32 %v4758, %v4759
        %v4761 = vsel %vm4691, %v4341, 0.0
        %v4762 = vadd.f32 %v4760, %v4761
        %v4763 = vsel %vm4691, %v4342, 0.0
        %v4764 = vadd.f32 %v4762, %v4763
        %v4765 = vsel %vm4691, %v4343, 0.0
        %v4766 = vadd.f32 %v4764, %v4765
        %v4767 = vsel %vm4691, %v4344, 0.0
        %v4768 = vadd.f32 %v4766, %v4767
        %v4769 = vsel %vm4691, %v4345, 0.0
        %v4770 = vadd.f32 %v4768, %v4769
        %v4771 = vsel %vm4691, %v4346, 0.0
        %v4772 = vadd.f32 %v4770, %v4771
        %v4773 = vsel %vm4691, %v4347, 0.0
        %v4774 = vadd.f32 %v4772, %v4773
        %v4775 = vsel %vm4691, %v4348, 0.0
        %v4776 = vadd.f32 %v4774, %v4775
        %v4777 = vsel %vm4691, %v4349, 0.0
        %v4778 = vadd.f32 %v4776, %v4777
        %v4779 = vsel %vm4691, %v4350, 0.0
        %v4780 = vadd.f32 %v4778, %v4779
        %v4781 = vsel %vm4691, %v4351, 0.0
        %v4782 = vadd.f32 %v4780, %v4781
        %v4783 = vsel %vm4691, %v4352, 0.0
        %v4784 = vadd.f32 %v4782, %v4783
        %v4785 = vsel %vm4691, %v4353, 0.0
        %v4786 = vadd.f32 %v4784, %v4785
        %v4787 = vsel %vm4691, %v4354, 0.0
        %v4788 = vadd.f32 %v4786, %v4787
        %v4789 = vsel %vm4691, %v4355, 0.0
        %v4790 = vadd.f32 %v4788, %v4789
        %v4791 = vsel %vm4691, %v4356, 0.0
        %v4792 = vadd.f32 %v4790, %v4791
        %v4793 = vsel %vm4691, %v4357, 0.0
        %v4794 = vadd.f32 %v4792, %v4793
        %v4795 = vsel %vm4691, %v4358, 0.0
        %v4796 = vadd.f32 %v4794, %v4795
        %v4797 = vsel %vm4691, %v4359, 0.0
        %v4798 = vadd.f32 %v4796, %v4797
        %v4799 = vsel %vm4691, %v4360, 0.0
        %v4800 = vadd.f32 %v4798, %v4799
        %v4801 = vsel %vm4691, %v4361, 0.0
        %v4802 = vadd.f32 %v4800, %v4801
        %v4803 = vsel %vm4691, %v4362, 0.0
        %v4804 = vadd.f32 %v4802, %v4803
        %v4805 = vsel %vm4691, %v4363, 0.0
        %v4806 = vadd.f32 %v4804, %v4805
        %v4807 = vsel %vm4691, %v4364, 0.0
        %v4808 = vadd.f32 %v4806, %v4807
        %v4809 = vsel %vm4691, %v4365, 0.0
        %v4810 = vadd.f32 %v4808, %v4809
        %v4811 = vsel %vm4691, %v4366, 0.0
        %v4812 = vadd.f32 %v4810, %v4811
        %v4813 = vsel %vm4691, %v4367, 0.0
        %v4814 = vadd.f32 %v4812, %v4813
        %v4815 = vsel %vm4691, %v4368, 0.0
        %v4816 = vadd.f32 %v4814, %v4815
        %v4817 = vsel %vm4691, %v4369, 0.0
        %v4818 = vadd.f32 %v4816, %v4817
        %v4819 = vrot.slane %v4818, 4
        %v4820 = vadd.f32 %v4818, %v4819
        %v4821 = vrot.slane %v4820, 2
        %v4822 = vadd.f32 %v4820, %v4821
        %v4823 = vrot.slane %v4822, 1
        %v4824 = vadd.f32 %v4822, %v4823
        %v4825 = vadd.f32 %v4824, 0.0
        %v4826 = vmul.f32 %v4306, %v4306
        %v4827 = vmul.f32 %v4307, %v4307
        %v4828 = vmul.f32 %v4308, %v4308
        %v4829 = vmul.f32 %v4309, %v4309
        %v4830 = vmul.f32 %v4310, %v4310
        %v4831 = vmul.f32 %v4311, %v4311
        %v4832 = vmul.f32 %v4312, %v4312
        %v4833 = vmul.f32 %v4313, %v4313
        %v4834 = vmul.f32 %v4314, %v4314
        %v4835 = vmul.f32 %v4315, %v4315
        %v4836 = vmul.f32 %v4316, %v4316
        %v4837 = vmul.f32 %v4317, %v4317
        %v4838 = vmul.f32 %v4318, %v4318
        %v4839 = vmul.f32 %v4319, %v4319
        %v4840 = vmul.f32 %v4320, %v4320
        %v4841 = vmul.f32 %v4321, %v4321
        %v4842 = vmul.f32 %v4322, %v4322
        %v4843 = vmul.f32 %v4323, %v4323
        %v4844 = vmul.f32 %v4324, %v4324
        %v4845 = vmul.f32 %v4325, %v4325
        %v4846 = vmul.f32 %v4326, %v4326
        %v4847 = vmul.f32 %v4327, %v4327
        %v4848 = vmul.f32 %v4328, %v4328
        %v4849 = vmul.f32 %v4329, %v4329
        %v4850 = vmul.f32 %v4330, %v4330
        %v4851 = vmul.f32 %v4331, %v4331
        %v4852 = vmul.f32 %v4332, %v4332
        %v4853 = vmul.f32 %v4333, %v4333
        %v4854 = vmul.f32 %v4334, %v4334
        %v4855 = vmul.f32 %v4335, %v4335
        %v4856 = vmul.f32 %v4336, %v4336
        %v4857 = vmul.f32 %v4337, %v4337
        %v4858 = vmul.f32 %v4338, %v4338
        %v4859 = vmul.f32 %v4339, %v4339
        %v4860 = vmul.f32 %v4340, %v4340
        %v4861 = vmul.f32 %v4341, %v4341
        %v4862 = vmul.f32 %v4342, %v4342
        %v4863 = vmul.f32 %v4343, %v4343
        %v4864 = vmul.f32 %v4344, %v4344
        %v4865 = vmul.f32 %v4345, %v4345
        %v4866 = vmul.f32 %v4346, %v4346
        %v4867 = vmul.f32 %v4347, %v4347
        %v4868 = vmul.f32 %v4348, %v4348
        %v4869 = vmul.f32 %v4349, %v4349
        %v4870 = vmul.f32 %v4350, %v4350
        %v4871 = vmul.f32 %v4351, %v4351
        %v4872 = vmul.f32 %v4352, %v4352
        %v4873 = vmul.f32 %v4353, %v4353
        %v4874 = vmul.f32 %v4354, %v4354
        %v4875 = vmul.f32 %v4355, %v4355
        %v4876 = vmul.f32 %v4356, %v4356
        %v4877 = vmul.f32 %v4357, %v4357
        %v4878 = vmul.f32 %v4358, %v4358
        %v4879 = vmul.f32 %v4359, %v4359
        %v4880 = vmul.f32 %v4360, %v4360
        %v4881 = vmul.f32 %v4361, %v4361
        %v4882 = vmul.f32 %v4362, %v4362
        %v4883 = vmul.f32 %v4363, %v4363
        %v4884 = vmul.f32 %v4364, %v4364
        %v4885 = vmul.f32 %v4365, %v4365
        %v4886 = vmul.f32 %v4366, %v4366
        %v4887 = vmul.f32 %v4367, %v4367
        %v4888 = vmul.f32 %v4368, %v4368
        %v4889 = vmul.f32 %v4369, %v4369
        %v4890 = vsel %vm4691, %v4826, 0.0
        %v4891 = vsel %vm4691, %v4827, 0.0
        %v4892 = vadd.f32 %v4890, %v4891
        %v4893 = vsel %vm4691, %v4828, 0.0
        %v4894 = vadd.f32 %v4892, %v4893
        %v4895 = vsel %vm4691, %v4829, 0.0
        %v4896 = vadd.f32 %v4894, %v4895
        %v4897 = vsel %vm4691, %v4830, 0.0
        %v4898 = vadd.f32 %v4896, %v4897
        %v4899 = vsel %vm4691, %v4831, 0.0
        %v4900 = vadd.f32 %v4898, %v4899
        %v4901 = vsel %vm4691, %v4832, 0.0
        %v4902 = vadd.f32 %v4900, %v4901
        %v4903 = vsel %vm4691, %v4833, 0.0
        %v4904 = vadd.f32 %v4902, %v4903
        %v4905 = vsel %vm4691, %v4834, 0.0
        %v4906 = vadd.f32 %v4904, %v4905
        %v4907 = vsel %vm4691, %v4835, 0.0
        %v4908 = vadd.f32 %v4906, %v4907
        %v4909 = vsel %vm4691, %v4836, 0.0
        %v4910 = vadd.f32 %v4908, %v4909
        %v4911 = vsel %vm4691, %v4837, 0.0
        %v4912 = vadd.f32 %v4910, %v4911
        %v4913 = vsel %vm4691, %v4838, 0.0
        %v4914 = vadd.f32 %v4912, %v4913
        %v4915 = vsel %vm4691, %v4839, 0.0
        %v4916 = vadd.f32 %v4914, %v4915
        %v4917 = vsel %vm4691, %v4840, 0.0
        %v4918 = vadd.f32 %v4916, %v4917
        %v4919 = vsel %vm4691, %v4841, 0.0
        %v4920 = vadd.f32 %v4918, %v4919
        %v4921 = vsel %vm4691, %v4842, 0.0
        %v4922 = vadd.f32 %v4920, %v4921
        %v4923 = vsel %vm4691, %v4843, 0.0
        %v4924 = vadd.f32 %v4922, %v4923
        %v4925 = vsel %vm4691, %v4844, 0.0
        %v4926 = vadd.f32 %v4924, %v4925
        %v4927 = vsel %vm4691, %v4845, 0.0
        %v4928 = vadd.f32 %v4926, %v4927
        %v4929 = vsel %vm4691, %v4846, 0.0
        %v4930 = vadd.f32 %v4928, %v4929
        %v4931 = vsel %vm4691, %v4847, 0.0
        %v4932 = vadd.f32 %v4930, %v4931
        %v4933 = vsel %vm4691, %v4848, 0.0
        %v4934 = vadd.f32 %v4932, %v4933
        %v4935 = vsel %vm4691, %v4849, 0.0
        %v4936 = vadd.f32 %v4934, %v4935
        %v4937 = vsel %vm4691, %v4850, 0.0
        %v4938 = vadd.f32 %v4936, %v4937
        %v4939 = vsel %vm4691, %v4851, 0.0
        %v4940 = vadd.f32 %v4938, %v4939
        %v4941 = vsel %vm4691, %v4852, 0.0
        %v4942 = vadd.f32 %v4940, %v4941
        %v4943 = vsel %vm4691, %v4853, 0.0
        %v4944 = vadd.f32 %v4942, %v4943
        %v4945 = vsel %vm4691, %v4854, 0.0
        %v4946 = vadd.f32 %v4944, %v4945
        %v4947 = vsel %vm4691, %v4855, 0.0
        %v4948 = vadd.f32 %v4946, %v4947
        %v4949 = vsel %vm4691, %v4856, 0.0
        %v4950 = vadd.f32 %v4948, %v4949
        %v4951 = vsel %vm4691, %v4857, 0.0
        %v4952 = vadd.f32 %v4950, %v4951
        %v4953 = vsel %vm4691, %v4858, 0.0
        %v4954 = vadd.f32 %v4952, %v4953
        %v4955 = vsel %vm4691, %v4859, 0.0
        %v4956 = vadd.f32 %v4954, %v4955
        %v4957 = vsel %vm4691, %v4860, 0.0
        %v4958 = vadd.f32 %v4956, %v4957
        %v4959 = vsel %vm4691, %v4861, 0.0
        %v4960 = vadd.f32 %v4958, %v4959
        %v4961 = vsel %vm4691, %v4862, 0.0
        %v4962 = vadd.f32 %v4960, %v4961
        %v4963 = vsel %vm4691, %v4863, 0.0
        %v4964 = vadd.f32 %v4962, %v4963
        %v4965 = vsel %vm4691, %v4864, 0.0
        %v4966 = vadd.f32 %v4964, %v4965
        %v4967 = vsel %vm4691, %v4865, 0.0
        %v4968 = vadd.f32 %v4966, %v4967
        %v4969 = vsel %vm4691, %v4866, 0.0
        %v4970 = vadd.f32 %v4968, %v4969
        %v4971 = vsel %vm4691, %v4867, 0.0
        %v4972 = vadd.f32 %v4970, %v4971
        %v4973 = vsel %vm4691, %v4868, 0.0
        %v4974 = vadd.f32 %v4972, %v4973
        %v4975 = vsel %vm4691, %v4869, 0.0
        %v4976 = vadd.f32 %v4974, %v4975
        %v4977 = vsel %vm4691, %v4870, 0.0
        %v4978 = vadd.f32 %v4976, %v4977
        %v4979 = vsel %vm4691, %v4871, 0.0
        %v4980 = vadd.f32 %v4978, %v4979
        %v4981 = vsel %vm4691, %v4872, 0.0
        %v4982 = vadd.f32 %v4980, %v4981
        %v4983 = vsel %vm4691, %v4873, 0.0
        %v4984 = vadd.f32 %v4982, %v4983
        %v4985 = vsel %vm4691, %v4874, 0.0
        %v4986 = vadd.f32 %v4984, %v4985
        %v4987 = vsel %vm4691, %v4875, 0.0
        %v4988 = vadd.f32 %v4986, %v4987
        %v4989 = vsel %vm4691, %v4876, 0.0
        %v4990 = vadd.f32 %v4988, %v4989
        %v4991 = vsel %vm4691, %v4877, 0.0
        %v4992 = vadd.f32 %v4990, %v4991
        %v4993 = vsel %vm4691, %v4878, 0.0
        %v4994 = vadd.f32 %v4992, %v4993
        %v4995 = vsel %vm4691, %v4879, 0.0
        %v4996 = vadd.f32 %v4994, %v4995
        %v4997 = vsel %vm4691, %v4880, 0.0
        %v4998 = vadd.f32 %v4996, %v4997
        %v4999 = vsel %vm4691, %v4881, 0.0
        %v5000 = vadd.f32 %v4998, %v4999
        %v5001 = vsel %vm4691, %v4882, 0.0
        %v5002 = vadd.f32 %v5000, %v5001
        %v5003 = vsel %vm4691, %v4883, 0.0
        %v5004 = vadd.f32 %v5002, %v5003
        %v5005 = vsel %vm4691, %v4884, 0.0
        %v5006 = vadd.f32 %v5004, %v5005
        %v5007 = vsel %vm4691, %v4885, 0.0
        %v5008 = vadd.f32 %v5006, %v5007
        %v5009 = vsel %vm4691, %v4886, 0.0
        %v5010 = vadd.f32 %v5008, %v5009
        %v5011 = vsel %vm4691, %v4887, 0.0
        %v5012 = vadd.f32 %v5010, %v5011
        %v5013 = vsel %vm4691, %v4888, 0.0
        %v5014 = vadd.f32 %v5012, %v5013
        %v5015 = vsel %vm4691, %v4889, 0.0
        %v5016 = vadd.f32 %v5014, %v5015
        %v5017 = vrot.slane %v5016, 4
        %v5018 = vadd.f32 %v5016, %v5017
        %v5019 = vrot.slane %v5018, 2
        %v5020 = vadd.f32 %v5018, %v5019
        %v5021 = vrot.slane %v5020, 1
        %v5022 = vadd.f32 %v5020, %v5021
        %v5023 = vadd.f32 %v5022, 0.0
        %s5024 = scalar_lea.vmem %s280, 320
        %v5025 = vld [vmem:[%s5024] sm:$0xf]
        %v5026 = vld [vmem:[%s5024 + $0x4] sm:$0xf]
        %v5027 = vld [vmem:[%s5024 + $0x8] sm:$0xf]
        %v5028 = vld [vmem:[%s5024 + $0xc] sm:$0xf]
        %v5029 = vld [vmem:[%s5024 + $0x10] sm:$0x1]
        %v5030 = vld [vmem:[%s5024 + $0x14] sm:$0xf]
        %v5031 = vld [vmem:[%s5024 + $0x18] sm:$0xf]
        %v5032 = vld [vmem:[%s5024 + $0x1c] sm:$0xf]
        %v5033 = vld [vmem:[%s5024 + $0x20] sm:$0xf]
        %v5034 = vld [vmem:[%s5024 + $0x24] sm:$0x1]
        %v5035 = vld [vmem:[%s5024 + $0x28] sm:$0xf]
        %v5036 = vld [vmem:[%s5024 + $0x2c] sm:$0xf]
        %v5037 = vld [vmem:[%s5024 + $0x30] sm:$0xf]
        %v5038 = vld [vmem:[%s5024 + $0x34] sm:$0xf]
        %v5039 = vld [vmem:[%s5024 + $0x38] sm:$0x1]
        %v5040 = vld [vmem:[%s5024 + $0x3c] sm:$0xf]
        %v5041 = vld [vmem:[%s5024 + $0x40] sm:$0xf]
        %v5042 = vld [vmem:[%s5024 + $0x44] sm:$0xf]
        %v5043 = vld [vmem:[%s5024 + $0x48] sm:$0xf]
        %v5044 = vld [vmem:[%s5024 + $0x4c] sm:$0x1]
        %v5045 = vld [vmem:[%s5024 + $0x50] sm:$0xf]
        %v5046 = vld [vmem:[%s5024 + $0x54] sm:$0xf]
        %v5047 = vld [vmem:[%s5024 + $0x58] sm:$0xf]
        %v5048 = vld [vmem:[%s5024 + $0x5c] sm:$0xf]
        %v5049 = vld [vmem:[%s5024 + $0x60] sm:$0x1]
        %v5050 = vld [vmem:[%s5024 + $0x64] sm:$0xf]
        %v5051 = vld [vmem:[%s5024 + $0x68] sm:$0xf]
        %v5052 = vld [vmem:[%s5024 + $0x6c] sm:$0xf]
        %v5053 = vld [vmem:[%s5024 + $0x70] sm:$0xf]
        %v5054 = vld [vmem:[%s5024 + $0x74] sm:$0x1]
        %v5055 = vld [vmem:[%s5024 + $0x78] sm:$0xf]
        %v5056 = vld [vmem:[%s5024 + $0x7c] sm:$0xf]
        %v5057 = vld [vmem:[%s5024 + $0x80] sm:$0xf]
        %v5058 = vld [vmem:[%s5024 + $0x84] sm:$0xf]
        %v5059 = vld [vmem:[%s5024 + $0x88] sm:$0x1]
        %v5060 = vld [vmem:[%s5024 + $0x8c] sm:$0xf]
        %v5061 = vld [vmem:[%s5024 + $0x90] sm:$0xf]
        %v5062 = vld [vmem:[%s5024 + $0x94] sm:$0xf]
        %v5063 = vld [vmem:[%s5024 + $0x98] sm:$0xf]
        %v5064 = vld [vmem:[%s5024 + $0x9c] sm:$0x1]
        %v5065 = vld [vmem:[%s5024 + $0xa0] sm:$0xf]
        %v5066 = vld [vmem:[%s5024 + $0xa4] sm:$0xf]
        %v5067 = vld [vmem:[%s5024 + $0xa8] sm:$0xf]
        %v5068 = vld [vmem:[%s5024 + $0xac] sm:$0xf]
        %v5069 = vld [vmem:[%s5024 + $0xb0] sm:$0x1]
        %v5070 = vld [vmem:[%s5024 + $0xb4] sm:$0xf]
        %v5071 = vld [vmem:[%s5024 + $0xb8] sm:$0xf]
        %v5072 = vld [vmem:[%s5024 + $0xbc] sm:$0xf]
        %v5073 = vld [vmem:[%s5024 + $0xc0] sm:$0xf]
        %v5074 = vld [vmem:[%s5024 + $0xc4] sm:$0x1]
        %v5075 = vld [vmem:[%s5024 + $0xc8] sm:$0xf]
        %v5076 = vld [vmem:[%s5024 + $0xcc] sm:$0xf]
        %v5077 = vld [vmem:[%s5024 + $0xd0] sm:$0xf]
        %v5078 = vld [vmem:[%s5024 + $0xd4] sm:$0xf]
        %v5079 = vld [vmem:[%s5024 + $0xd8] sm:$0x1]
        %v5080 = vld [vmem:[%s5024 + $0xdc] sm:$0xf]
        %v5081 = vld [vmem:[%s5024 + $0xe0] sm:$0xf]
        %v5082 = vld [vmem:[%s5024 + $0xe4] sm:$0xf]
        %v5083 = vld [vmem:[%s5024 + $0xe8] sm:$0xf]
        %v5084 = vld [vmem:[%s5024 + $0xec] sm:$0x1]
        %v5085 = vld [vmem:[%s5024 + $0xf0] sm:$0xf]
        %v5086 = vld [vmem:[%s5024 + $0xf4] sm:$0xf]
        %v5087 = vld [vmem:[%s5024 + $0xf8] sm:$0xf]
        %v5088 = vld [vmem:[%s5024 + $0xfc] sm:$0xf]
        %v5089 = vld [vmem:[%s5024 + $0x100] sm:$0x1]
        %v5090 = vld [vmem:[%s5024 + $0x104] sm:$0xf]
        %v5091 = vld [vmem:[%s5024 + $0x108] sm:$0xf]
        %v5092 = vld [vmem:[%s5024 + $0x10c] sm:$0xf]
        %v5093 = vld [vmem:[%s5024 + $0x110] sm:$0xf]
        %v5094 = vld [vmem:[%s5024 + $0x114] sm:$0x1]
        %v5095 = vld [vmem:[%s5024 + $0x118] sm:$0xf]
        %v5096 = vld [vmem:[%s5024 + $0x11c] sm:$0xf]
        %v5097 = vld [vmem:[%s5024 + $0x120] sm:$0xf]
        %v5098 = vld [vmem:[%s5024 + $0x124] sm:$0xf]
        %v5099 = vld [vmem:[%s5024 + $0x128] sm:$0x1]
        %v5100 = vld [vmem:[%s5024 + $0x12c] sm:$0xf]
        %v5101 = vld [vmem:[%s5024 + $0x130] sm:$0xf]
        %v5102 = vld [vmem:[%s5024 + $0x134] sm:$0xf]
        %v5103 = vld [vmem:[%s5024 + $0x138] sm:$0xf]
        %v5104 = vld [vmem:[%s5024 + $0x13c] sm:$0x1]
        %v5169 = vunpack.c.l.b16 %v5025
        %v5170 = vunpack.c.l.b16 %v5026
        %v5171 = vunpack.c.l.b16 %v5027
        %v5172 = vunpack.c.l.b16 %v5028
        %v5173 = vunpack.c.l.b16 %v5030
        %v5174 = vunpack.c.l.b16 %v5031
        %v5175 = vunpack.c.l.b16 %v5032
        %v5176 = vunpack.c.l.b16 %v5033
        %v5177 = vunpack.c.l.b16 %v5035
        %v5178 = vunpack.c.l.b16 %v5036
        %v5179 = vunpack.c.l.b16 %v5037
        %v5180 = vunpack.c.l.b16 %v5038
        %v5181 = vunpack.c.l.b16 %v5040
        %v5182 = vunpack.c.l.b16 %v5041
        %v5183 = vunpack.c.l.b16 %v5042
        %v5184 = vunpack.c.l.b16 %v5043
        %v5185 = vunpack.c.l.b16 %v5045
        %v5186 = vunpack.c.l.b16 %v5046
        %v5187 = vunpack.c.l.b16 %v5047
        %v5188 = vunpack.c.l.b16 %v5048
        %v5189 = vunpack.c.l.b16 %v5050
        %v5190 = vunpack.c.l.b16 %v5051
        %v5191 = vunpack.c.l.b16 %v5052
        %v5192 = vunpack.c.l.b16 %v5053
        %v5193 = vunpack.c.l.b16 %v5055
        %v5194 = vunpack.c.l.b16 %v5056
        %v5195 = vunpack.c.l.b16 %v5057
        %v5196 = vunpack.c.l.b16 %v5058
        %v5197 = vunpack.c.l.b16 %v5060
        %v5198 = vunpack.c.l.b16 %v5061
        %v5199 = vunpack.c.l.b16 %v5062
        %v5200 = vunpack.c.l.b16 %v5063
        %v5201 = vunpack.c.l.b16 %v5065
        %v5202 = vunpack.c.l.b16 %v5066
        %v5203 = vunpack.c.l.b16 %v5067
        %v5204 = vunpack.c.l.b16 %v5068
        %v5205 = vunpack.c.l.b16 %v5070
        %v5206 = vunpack.c.l.b16 %v5071
        %v5207 = vunpack.c.l.b16 %v5072
        %v5208 = vunpack.c.l.b16 %v5073
        %v5209 = vunpack.c.l.b16 %v5075
        %v5210 = vunpack.c.l.b16 %v5076
        %v5211 = vunpack.c.l.b16 %v5077
        %v5212 = vunpack.c.l.b16 %v5078
        %v5213 = vunpack.c.l.b16 %v5080
        %v5214 = vunpack.c.l.b16 %v5081
        %v5215 = vunpack.c.l.b16 %v5082
        %v5216 = vunpack.c.l.b16 %v5083
        %v5217 = vunpack.c.l.b16 %v5085
        %v5218 = vunpack.c.l.b16 %v5086
        %v5219 = vunpack.c.l.b16 %v5087
        %v5220 = vunpack.c.l.b16 %v5088
        %v5221 = vunpack.c.l.b16 %v5090
        %v5222 = vunpack.c.l.b16 %v5091
        %v5223 = vunpack.c.l.b16 %v5092
        %v5224 = vunpack.c.l.b16 %v5093
        %v5225 = vunpack.c.l.b16 %v5095
        %v5226 = vunpack.c.l.b16 %v5096
        %v5227 = vunpack.c.l.b16 %v5097
        %v5228 = vunpack.c.l.b16 %v5098
        %v5229 = vunpack.c.l.b16 %v5100
        %v5230 = vunpack.c.l.b16 %v5101
        %v5231 = vunpack.c.l.b16 %v5102
        %v5232 = vunpack.c.l.b16 %v5103
        %v5233 = vpack.c.b16 %v5170, %v5169
        %v5234 = vpack.c.b16 %v5172, %v5171
        %v5235 = vpack.c.b16 %v5174, %v5173
        %v5236 = vpack.c.b16 %v5176, %v5175
        %v5237 = vpack.c.b16 %v5178, %v5177
        %v5238 = vpack.c.b16 %v5180, %v5179
        %v5239 = vpack.c.b16 %v5182, %v5181
        %v5240 = vpack.c.b16 %v5184, %v5183
        %v5241 = vpack.c.b16 %v5186, %v5185
        %v5242 = vpack.c.b16 %v5188, %v5187
        %v5243 = vpack.c.b16 %v5190, %v5189
        %v5244 = vpack.c.b16 %v5192, %v5191
        %v5245 = vpack.c.b16 %v5194, %v5193
        %v5246 = vpack.c.b16 %v5196, %v5195
        %v5247 = vpack.c.b16 %v5198, %v5197
        %v5248 = vpack.c.b16 %v5200, %v5199
        %v5249 = vpack.c.b16 %v5202, %v5201
        %v5250 = vpack.c.b16 %v5204, %v5203
        %v5251 = vpack.c.b16 %v5206, %v5205
        %v5252 = vpack.c.b16 %v5208, %v5207
        %v5253 = vpack.c.b16 %v5210, %v5209
        %v5254 = vpack.c.b16 %v5212, %v5211
        %v5255 = vpack.c.b16 %v5214, %v5213
        %v5256 = vpack.c.b16 %v5216, %v5215
        %v5257 = vpack.c.b16 %v5218, %v5217
        %v5258 = vpack.c.b16 %v5220, %v5219
        %v5259 = vpack.c.b16 %v5222, %v5221
        %v5260 = vpack.c.b16 %v5224, %v5223
        %v5261 = vpack.c.b16 %v5226, %v5225
        %v5262 = vpack.c.b16 %v5228, %v5227
        %v5263 = vpack.c.b16 %v5230, %v5229
        %v5264 = vpack.c.b16 %v5232, %v5231
        %v5281 = vunpack.c.l.b16 %v5029
        %v5282 = vunpack.c.l.b16 %v5034
        %v5283 = vunpack.c.l.b16 %v5039
        %v5284 = vunpack.c.l.b16 %v5044
        %v5285 = vunpack.c.l.b16 %v5049
        %v5286 = vunpack.c.l.b16 %v5054
        %v5287 = vunpack.c.l.b16 %v5059
        %v5288 = vunpack.c.l.b16 %v5064
        %v5289 = vunpack.c.l.b16 %v5069
        %v5290 = vunpack.c.l.b16 %v5074
        %v5291 = vunpack.c.l.b16 %v5079
        %v5292 = vunpack.c.l.b16 %v5084
        %v5293 = vunpack.c.l.b16 %v5089
        %v5294 = vunpack.c.l.b16 %v5094
        %v5295 = vunpack.c.l.b16 %v5099
        %v5296 = vunpack.c.l.b16 %v5104
        %v5297 = vpack.c.b16 %v5281, %v5281
        %v5298 = vpack.c.b16 %v5282, %v5282
        %v5299 = vpack.c.b16 %v5283, %v5283
        %v5300 = vpack.c.b16 %v5284, %v5284
        %v5301 = vpack.c.b16 %v5285, %v5285
        %v5302 = vpack.c.b16 %v5286, %v5286
        %v5303 = vpack.c.b16 %v5287, %v5287
        %v5304 = vpack.c.b16 %v5288, %v5288
        %v5305 = vpack.c.b16 %v5289, %v5289
        %v5306 = vpack.c.b16 %v5290, %v5290
        %v5307 = vpack.c.b16 %v5291, %v5291
        %v5308 = vpack.c.b16 %v5292, %v5292
        %v5309 = vpack.c.b16 %v5293, %v5293
        %v5310 = vpack.c.b16 %v5294, %v5294
        %v5311 = vpack.c.b16 %v5295, %v5295
        %v5312 = vpack.c.b16 %v5296, %v5296
        %v5314 = vshrl.u32 %v5233, 16
        %v5316 = vshll.u32 %v5233, 16
        %v5318 = vrot.slane %v5316, 1
        %v5319 = vor.u32 %v5314, %v5318
        %v5321 = vshll.u32 %v5234, 16
        %v5323 = vrot.slane %v5321, 1
        %v5324 = vsel %vm578, %v5319, %v5323
        %v5325 = vshrl.u32 %v5234, 16
        %v5327 = vor.u32 %v5325, %v5323
        %v5329 = vshll.u32 %v5297, 16
        %v5331 = vrot.slane %v5329, 1
        %v5332 = vsel %vm578, %v5327, %v5331
        %v5334 = vshrl.u32 %v5235, 16
        %v5336 = vshll.u32 %v5235, 16
        %v5338 = vrot.slane %v5336, 1
        %v5339 = vor.u32 %v5334, %v5338
        %v5341 = vshll.u32 %v5236, 16
        %v5343 = vrot.slane %v5341, 1
        %v5344 = vsel %vm578, %v5339, %v5343
        %v5345 = vshrl.u32 %v5236, 16
        %v5347 = vor.u32 %v5345, %v5343
        %v5349 = vshll.u32 %v5298, 16
        %v5351 = vrot.slane %v5349, 1
        %v5352 = vsel %vm578, %v5347, %v5351
        %v5354 = vshrl.u32 %v5237, 16
        %v5356 = vshll.u32 %v5237, 16
        %v5358 = vrot.slane %v5356, 1
        %v5359 = vor.u32 %v5354, %v5358
        %v5361 = vshll.u32 %v5238, 16
        %v5363 = vrot.slane %v5361, 1
        %v5364 = vsel %vm578, %v5359, %v5363
        %v5365 = vshrl.u32 %v5238, 16
        %v5367 = vor.u32 %v5365, %v5363
        %v5369 = vshll.u32 %v5299, 16
        %v5371 = vrot.slane %v5369, 1
        %v5372 = vsel %vm578, %v5367, %v5371
        %v5374 = vshrl.u32 %v5239, 16
        %v5376 = vshll.u32 %v5239, 16
        %v5378 = vrot.slane %v5376, 1
        %v5379 = vor.u32 %v5374, %v5378
        %v5381 = vshll.u32 %v5240, 16
        %v5383 = vrot.slane %v5381, 1
        %v5384 = vsel %vm578, %v5379, %v5383
        %v5385 = vshrl.u32 %v5240, 16
        %v5387 = vor.u32 %v5385, %v5383
        %v5389 = vshll.u32 %v5300, 16
        %v5391 = vrot.slane %v5389, 1
        %v5392 = vsel %vm578, %v5387, %v5391
        %v5394 = vshrl.u32 %v5241, 16
        %v5396 = vshll.u32 %v5241, 16
        %v5398 = vrot.slane %v5396, 1
        %v5399 = vor.u32 %v5394, %v5398
        %v5401 = vshll.u32 %v5242, 16
        %v5403 = vrot.slane %v5401, 1
        %v5404 = vsel %vm578, %v5399, %v5403
        %v5405 = vshrl.u32 %v5242, 16
        %v5407 = vor.u32 %v5405, %v5403
        %v5409 = vshll.u32 %v5301, 16
        %v5411 = vrot.slane %v5409, 1
        %v5412 = vsel %vm578, %v5407, %v5411
        %v5414 = vshrl.u32 %v5243, 16
        %v5416 = vshll.u32 %v5243, 16
        %v5418 = vrot.slane %v5416, 1
        %v5419 = vor.u32 %v5414, %v5418
        %v5421 = vshll.u32 %v5244, 16
        %v5423 = vrot.slane %v5421, 1
        %v5424 = vsel %vm578, %v5419, %v5423
        %v5425 = vshrl.u32 %v5244, 16
        %v5427 = vor.u32 %v5425, %v5423
        %v5429 = vshll.u32 %v5302, 16
        %v5431 = vrot.slane %v5429, 1
        %v5432 = vsel %vm578, %v5427, %v5431
        %v5434 = vshrl.u32 %v5245, 16
        %v5436 = vshll.u32 %v5245, 16
        %v5438 = vrot.slane %v5436, 1
        %v5439 = vor.u32 %v5434, %v5438
        %v5441 = vshll.u32 %v5246, 16
        %v5443 = vrot.slane %v5441, 1
        %v5444 = vsel %vm578, %v5439, %v5443
        %v5445 = vshrl.u32 %v5246, 16
        %v5447 = vor.u32 %v5445, %v5443
        %v5449 = vshll.u32 %v5303, 16
        %v5451 = vrot.slane %v5449, 1
        %v5452 = vsel %vm578, %v5447, %v5451
        %v5454 = vshrl.u32 %v5247, 16
        %v5456 = vshll.u32 %v5247, 16
        %v5458 = vrot.slane %v5456, 1
        %v5459 = vor.u32 %v5454, %v5458
        %v5461 = vshll.u32 %v5248, 16
        %v5463 = vrot.slane %v5461, 1
        %v5464 = vsel %vm578, %v5459, %v5463
        %v5465 = vshrl.u32 %v5248, 16
        %v5467 = vor.u32 %v5465, %v5463
        %v5469 = vshll.u32 %v5304, 16
        %v5471 = vrot.slane %v5469, 1
        %v5472 = vsel %vm578, %v5467, %v5471
        %v5474 = vshrl.u32 %v5249, 16
        %v5476 = vshll.u32 %v5249, 16
        %v5478 = vrot.slane %v5476, 1
        %v5479 = vor.u32 %v5474, %v5478
        %v5481 = vshll.u32 %v5250, 16
        %v5483 = vrot.slane %v5481, 1
        %v5484 = vsel %vm578, %v5479, %v5483
        %v5485 = vshrl.u32 %v5250, 16
        %v5487 = vor.u32 %v5485, %v5483
        %v5489 = vshll.u32 %v5305, 16
        %v5491 = vrot.slane %v5489, 1
        %v5492 = vsel %vm578, %v5487, %v5491
        %v5494 = vshrl.u32 %v5251, 16
        %v5496 = vshll.u32 %v5251, 16
        %v5498 = vrot.slane %v5496, 1
        %v5499 = vor.u32 %v5494, %v5498
        %v5501 = vshll.u32 %v5252, 16
        %v5503 = vrot.slane %v5501, 1
        %v5504 = vsel %vm578, %v5499, %v5503
        %v5505 = vshrl.u32 %v5252, 16
        %v5507 = vor.u32 %v5505, %v5503
        %v5509 = vshll.u32 %v5306, 16
        %v5511 = vrot.slane %v5509, 1
        %v5512 = vsel %vm578, %v5507, %v5511
        %v5514 = vshrl.u32 %v5253, 16
        %v5516 = vshll.u32 %v5253, 16
        %v5518 = vrot.slane %v5516, 1
        %v5519 = vor.u32 %v5514, %v5518
        %v5521 = vshll.u32 %v5254, 16
        %v5523 = vrot.slane %v5521, 1
        %v5524 = vsel %vm578, %v5519, %v5523
        %v5525 = vshrl.u32 %v5254, 16
        %v5527 = vor.u32 %v5525, %v5523
        %v5529 = vshll.u32 %v5307, 16
        %v5531 = vrot.slane %v5529, 1
        %v5532 = vsel %vm578, %v5527, %v5531
        %v5534 = vshrl.u32 %v5255, 16
        %v5536 = vshll.u32 %v5255, 16
        %v5538 = vrot.slane %v5536, 1
        %v5539 = vor.u32 %v5534, %v5538
        %v5541 = vshll.u32 %v5256, 16
        %v5543 = vrot.slane %v5541, 1
        %v5544 = vsel %vm578, %v5539, %v5543
        %v5545 = vshrl.u32 %v5256, 16
        %v5547 = vor.u32 %v5545, %v5543
        %v5549 = vshll.u32 %v5308, 16
        %v5551 = vrot.slane %v5549, 1
        %v5552 = vsel %vm578, %v5547, %v5551
        %v5554 = vshrl.u32 %v5257, 16
        %v5556 = vshll.u32 %v5257, 16
        %v5558 = vrot.slane %v5556, 1
        %v5559 = vor.u32 %v5554, %v5558
        %v5561 = vshll.u32 %v5258, 16
        %v5563 = vrot.slane %v5561, 1
        %v5564 = vsel %vm578, %v5559, %v5563
        %v5565 = vshrl.u32 %v5258, 16
        %v5567 = vor.u32 %v5565, %v5563
        %v5569 = vshll.u32 %v5309, 16
        %v5571 = vrot.slane %v5569, 1
        %v5572 = vsel %vm578, %v5567, %v5571
        %v5574 = vshrl.u32 %v5259, 16
        %v5576 = vshll.u32 %v5259, 16
        %v5578 = vrot.slane %v5576, 1
        %v5579 = vor.u32 %v5574, %v5578
        %v5581 = vshll.u32 %v5260, 16
        %v5583 = vrot.slane %v5581, 1
        %v5584 = vsel %vm578, %v5579, %v5583
        %v5585 = vshrl.u32 %v5260, 16
        %v5587 = vor.u32 %v5585, %v5583
        %v5589 = vshll.u32 %v5310, 16
        %v5591 = vrot.slane %v5589, 1
        %v5592 = vsel %vm578, %v5587, %v5591
        %v5594 = vshrl.u32 %v5261, 16
        %v5596 = vshll.u32 %v5261, 16
        %v5598 = vrot.slane %v5596, 1
        %v5599 = vor.u32 %v5594, %v5598
        %v5601 = vshll.u32 %v5262, 16
        %v5603 = vrot.slane %v5601, 1
        %v5604 = vsel %vm578, %v5599, %v5603
        %v5605 = vshrl.u32 %v5262, 16
        %v5607 = vor.u32 %v5605, %v5603
        %v5609 = vshll.u32 %v5311, 16
        %v5611 = vrot.slane %v5609, 1
        %v5612 = vsel %vm578, %v5607, %v5611
        %v5614 = vshrl.u32 %v5263, 16
        %v5616 = vshll.u32 %v5263, 16
        %v5618 = vrot.slane %v5616, 1
        %v5619 = vor.u32 %v5614, %v5618
        %v5621 = vshll.u32 %v5264, 16
        %v5623 = vrot.slane %v5621, 1
        %v5624 = vsel %vm578, %v5619, %v5623
        %v5625 = vshrl.u32 %v5264, 16
        %v5627 = vor.u32 %v5625, %v5623
        %v5629 = vshll.u32 %v5312, 16
        %v5631 = vrot.slane %v5629, 1
        %v5632 = vsel %vm578, %v5627, %v5631
        %5633 = vrot.lane.b32.xlu0 %v5324, 8
        %v5634 = vpop.permute.xlu0 %5633
        %5635 = vrot.lane.b32.xlu0 %v5332, 8
        %v5636 = vpop.permute.xlu0 %5635
        %5637 = vrot.lane.b32.xlu0 %v5344, 8
        %v5638 = vpop.permute.xlu0 %5637
        %5639 = vrot.lane.b32.xlu0 %v5352, 8
        %v5640 = vpop.permute.xlu0 %5639
        %5641 = vrot.lane.b32.xlu0 %v5364, 8
        %v5642 = vpop.permute.xlu0 %5641
        %5643 = vrot.lane.b32.xlu0 %v5372, 8
        %v5644 = vpop.permute.xlu0 %5643
        %5645 = vrot.lane.b32.xlu0 %v5384, 8
        %v5646 = vpop.permute.xlu0 %5645
        %5647 = vrot.lane.b32.xlu0 %v5392, 8
        %v5648 = vpop.permute.xlu0 %5647
        %5649 = vrot.lane.b32.xlu0 %v5404, 8
        %v5650 = vpop.permute.xlu0 %5649
        %5651 = vrot.lane.b32.xlu0 %v5412, 8
        %v5652 = vpop.permute.xlu0 %5651
        %5653 = vrot.lane.b32.xlu0 %v5424, 8
        %v5654 = vpop.permute.xlu0 %5653
        %5655 = vrot.lane.b32.xlu0 %v5432, 8
        %v5656 = vpop.permute.xlu0 %5655
        %5657 = vrot.lane.b32.xlu0 %v5444, 8
        %v5658 = vpop.permute.xlu0 %5657
        %5659 = vrot.lane.b32.xlu0 %v5452, 8
        %v5660 = vpop.permute.xlu0 %5659
        %5661 = vrot.lane.b32.xlu0 %v5464, 8
        %v5662 = vpop.permute.xlu0 %5661
        %5663 = vrot.lane.b32.xlu0 %v5472, 8
        %v5664 = vpop.permute.xlu0 %5663
        %5665 = vrot.lane.b32.xlu0 %v5484, 8
        %v5666 = vpop.permute.xlu0 %5665
        %5667 = vrot.lane.b32.xlu0 %v5492, 8
        %v5668 = vpop.permute.xlu0 %5667
        %5669 = vrot.lane.b32.xlu0 %v5504, 8
        %v5670 = vpop.permute.xlu0 %5669
        %5671 = vrot.lane.b32.xlu0 %v5512, 8
        %v5672 = vpop.permute.xlu0 %5671
        %5673 = vrot.lane.b32.xlu0 %v5524, 8
        %v5674 = vpop.permute.xlu0 %5673
        %5675 = vrot.lane.b32.xlu0 %v5532, 8
        %v5676 = vpop.permute.xlu0 %5675
        %5677 = vrot.lane.b32.xlu0 %v5544, 8
        %v5678 = vpop.permute.xlu0 %5677
        %5679 = vrot.lane.b32.xlu0 %v5552, 8
        %v5680 = vpop.permute.xlu0 %5679
        %5681 = vrot.lane.b32.xlu0 %v5564, 8
        %v5682 = vpop.permute.xlu0 %5681
        %5683 = vrot.lane.b32.xlu0 %v5572, 8
        %v5684 = vpop.permute.xlu0 %5683
        %5685 = vrot.lane.b32.xlu0 %v5584, 8
        %v5686 = vpop.permute.xlu0 %5685
        %5687 = vrot.lane.b32.xlu0 %v5592, 8
        %v5688 = vpop.permute.xlu0 %5687
        %5689 = vrot.lane.b32.xlu0 %v5604, 8
        %v5690 = vpop.permute.xlu0 %5689
        %5691 = vrot.lane.b32.xlu0 %v5612, 8
        %v5692 = vpop.permute.xlu0 %5691
        %5693 = vrot.lane.b32.xlu0 %v5624, 8
        %v5694 = vpop.permute.xlu0 %5693
        %5695 = vrot.lane.b32.xlu0 %v5632, 8
        %v5696 = vpop.permute.xlu0 %5695
        %v5697 = vrot.slane %v5233, 1
        %v5698 = vrot.slane %v5234, 1
        %v5699 = vsel %vm963, %v5697, %v5698
        %v5700 = vrot.slane %v5297, 1
        %v5701 = vsel %vm963, %v5698, %v5700
        %v5702 = vrot.slane %v5235, 1
        %v5703 = vrot.slane %v5236, 1
        %v5704 = vsel %vm963, %v5702, %v5703
        %v5705 = vrot.slane %v5298, 1
        %v5706 = vsel %vm963, %v5703, %v5705
        %v5707 = vrot.slane %v5237, 1
        %v5708 = vrot.slane %v5238, 1
        %v5709 = vsel %vm963, %v5707, %v5708
        %v5710 = vrot.slane %v5299, 1
        %v5711 = vsel %vm963, %v5708, %v5710
        %v5712 = vrot.slane %v5239, 1
        %v5713 = vrot.slane %v5240, 1
        %v5714 = vsel %vm963, %v5712, %v5713
        %v5715 = vrot.slane %v5300, 1
        %v5716 = vsel %vm963, %v5713, %v5715
        %v5717 = vrot.slane %v5241, 1
        %v5718 = vrot.slane %v5242, 1
        %v5719 = vsel %vm963, %v5717, %v5718
        %v5720 = vrot.slane %v5301, 1
        %v5721 = vsel %vm963, %v5718, %v5720
        %v5722 = vrot.slane %v5243, 1
        %v5723 = vrot.slane %v5244, 1
        %v5724 = vsel %vm963, %v5722, %v5723
        %v5725 = vrot.slane %v5302, 1
        %v5726 = vsel %vm963, %v5723, %v5725
        %v5727 = vrot.slane %v5245, 1
        %v5728 = vrot.slane %v5246, 1
        %v5729 = vsel %vm963, %v5727, %v5728
        %v5730 = vrot.slane %v5303, 1
        %v5731 = vsel %vm963, %v5728, %v5730
        %v5732 = vrot.slane %v5247, 1
        %v5733 = vrot.slane %v5248, 1
        %v5734 = vsel %vm963, %v5732, %v5733
        %v5735 = vrot.slane %v5304, 1
        %v5736 = vsel %vm963, %v5733, %v5735
        %v5737 = vrot.slane %v5249, 1
        %v5738 = vrot.slane %v5250, 1
        %v5739 = vsel %vm963, %v5737, %v5738
        %v5740 = vrot.slane %v5305, 1
        %v5741 = vsel %vm963, %v5738, %v5740
        %v5742 = vrot.slane %v5251, 1
        %v5743 = vrot.slane %v5252, 1
        %v5744 = vsel %vm963, %v5742, %v5743
        %v5745 = vrot.slane %v5306, 1
        %v5746 = vsel %vm963, %v5743, %v5745
        %v5747 = vrot.slane %v5253, 1
        %v5748 = vrot.slane %v5254, 1
        %v5749 = vsel %vm963, %v5747, %v5748
        %v5750 = vrot.slane %v5307, 1
        %v5751 = vsel %vm963, %v5748, %v5750
        %v5752 = vrot.slane %v5255, 1
        %v5753 = vrot.slane %v5256, 1
        %v5754 = vsel %vm963, %v5752, %v5753
        %v5755 = vrot.slane %v5308, 1
        %v5756 = vsel %vm963, %v5753, %v5755
        %v5757 = vrot.slane %v5257, 1
        %v5758 = vrot.slane %v5258, 1
        %v5759 = vsel %vm963, %v5757, %v5758
        %v5760 = vrot.slane %v5309, 1
        %v5761 = vsel %vm963, %v5758, %v5760
        %v5762 = vrot.slane %v5259, 1
        %v5763 = vrot.slane %v5260, 1
        %v5764 = vsel %vm963, %v5762, %v5763
        %v5765 = vrot.slane %v5310, 1
        %v5766 = vsel %vm963, %v5763, %v5765
        %v5767 = vrot.slane %v5261, 1
        %v5768 = vrot.slane %v5262, 1
        %v5769 = vsel %vm963, %v5767, %v5768
        %v5770 = vrot.slane %v5311, 1
        %v5771 = vsel %vm963, %v5768, %v5770
        %v5772 = vrot.slane %v5263, 1
        %v5773 = vrot.slane %v5264, 1
        %v5774 = vsel %vm963, %v5772, %v5773
        %v5775 = vrot.slane %v5312, 1
        %v5776 = vsel %vm963, %v5773, %v5775
        %5777 = vrot.lane.b32.xlu0 %v5699, 16
        %v5778 = vpop.permute.xlu0 %5777
        %5779 = vrot.lane.b32.xlu0 %v5701, 16
        %v5780 = vpop.permute.xlu0 %5779
        %5781 = vrot.lane.b32.xlu0 %v5704, 16
        %v5782 = vpop.permute.xlu0 %5781
        %5783 = vrot.lane.b32.xlu0 %v5706, 16
        %v5784 = vpop.permute.xlu0 %5783
        %5785 = vrot.lane.b32.xlu0 %v5709, 16
        %v5786 = vpop.permute.xlu0 %5785
        %5787 = vrot.lane.b32.xlu0 %v5711, 16
        %v5788 = vpop.permute.xlu0 %5787
        %5789 = vrot.lane.b32.xlu0 %v5714, 16
        %v5790 = vpop.permute.xlu0 %5789
        %5791 = vrot.lane.b32.xlu0 %v5716, 16
        %v5792 = vpop.permute.xlu0 %5791
        %5793 = vrot.lane.b32.xlu0 %v5719, 16
        %v5794 = vpop.permute.xlu0 %5793
        %5795 = vrot.lane.b32.xlu0 %v5721, 16
        %v5796 = vpop.permute.xlu0 %5795
        %5797 = vrot.lane.b32.xlu0 %v5724, 16
        %v5798 = vpop.permute.xlu0 %5797
        %5799 = vrot.lane.b32.xlu0 %v5726, 16
        %v5800 = vpop.permute.xlu0 %5799
        %5801 = vrot.lane.b32.xlu0 %v5729, 16
        %v5802 = vpop.permute.xlu0 %5801
        %5803 = vrot.lane.b32.xlu0 %v5731, 16
        %v5804 = vpop.permute.xlu0 %5803
        %5805 = vrot.lane.b32.xlu0 %v5734, 16
        %v5806 = vpop.permute.xlu0 %5805
        %5807 = vrot.lane.b32.xlu0 %v5736, 16
        %v5808 = vpop.permute.xlu0 %5807
        %5809 = vrot.lane.b32.xlu0 %v5739, 16
        %v5810 = vpop.permute.xlu0 %5809
        %5811 = vrot.lane.b32.xlu0 %v5741, 16
        %v5812 = vpop.permute.xlu0 %5811
        %5813 = vrot.lane.b32.xlu0 %v5744, 16
        %v5814 = vpop.permute.xlu0 %5813
        %5815 = vrot.lane.b32.xlu0 %v5746, 16
        %v5816 = vpop.permute.xlu0 %5815
        %5817 = vrot.lane.b32.xlu0 %v5749, 16
        %v5818 = vpop.permute.xlu0 %5817
        %5819 = vrot.lane.b32.xlu0 %v5751, 16
        %v5820 = vpop.permute.xlu0 %5819
        %5821 = vrot.lane.b32.xlu0 %v5754, 16
        %v5822 = vpop.permute.xlu0 %5821
        %5823 = vrot.lane.b32.xlu0 %v5756, 16
        %v5824 = vpop.permute.xlu0 %5823
        %5825 = vrot.lane.b32.xlu0 %v5759, 16
        %v5826 = vpop.permute.xlu0 %5825
        %5827 = vrot.lane.b32.xlu0 %v5761, 16
        %v5828 = vpop.permute.xlu0 %5827
        %5829 = vrot.lane.b32.xlu0 %v5764, 16
        %v5830 = vpop.permute.xlu0 %5829
        %5831 = vrot.lane.b32.xlu0 %v5766, 16
        %v5832 = vpop.permute.xlu0 %5831
        %5833 = vrot.lane.b32.xlu0 %v5769, 16
        %v5834 = vpop.permute.xlu0 %5833
        %5835 = vrot.lane.b32.xlu0 %v5771, 16
        %v5836 = vpop.permute.xlu0 %5835
        %5837 = vrot.lane.b32.xlu0 %v5774, 16
        %v5838 = vpop.permute.xlu0 %5837
        %5839 = vrot.lane.b32.xlu0 %v5776, 16
        %v5840 = vpop.permute.xlu0 %5839
        %v5842 = vsel %vm1108, %v5233, %v5634
        %v5844 = vsel %vm1108, %v5234, %v5636
        %v5846 = vsel %vm1108, %v5235, %v5638
        %v5848 = vsel %vm1108, %v5236, %v5640
        %v5850 = vsel %vm1108, %v5237, %v5642
        %v5852 = vsel %vm1108, %v5238, %v5644
        %v5854 = vsel %vm1108, %v5239, %v5646
        %v5856 = vsel %vm1108, %v5240, %v5648
        %v5858 = vsel %vm1108, %v5241, %v5650
        %v5860 = vsel %vm1108, %v5242, %v5652
        %v5862 = vsel %vm1108, %v5243, %v5654
        %v5864 = vsel %vm1108, %v5244, %v5656
        %v5866 = vsel %vm1108, %v5245, %v5658
        %v5868 = vsel %vm1108, %v5246, %v5660
        %v5870 = vsel %vm1108, %v5247, %v5662
        %v5872 = vsel %vm1108, %v5248, %v5664
        %v5874 = vsel %vm1108, %v5249, %v5666
        %v5876 = vsel %vm1108, %v5250, %v5668
        %v5878 = vsel %vm1108, %v5251, %v5670
        %v5880 = vsel %vm1108, %v5252, %v5672
        %v5882 = vsel %vm1108, %v5253, %v5674
        %v5884 = vsel %vm1108, %v5254, %v5676
        %v5886 = vsel %vm1108, %v5255, %v5678
        %v5888 = vsel %vm1108, %v5256, %v5680
        %v5890 = vsel %vm1108, %v5257, %v5682
        %v5892 = vsel %vm1108, %v5258, %v5684
        %v5894 = vsel %vm1108, %v5259, %v5686
        %v5896 = vsel %vm1108, %v5260, %v5688
        %v5898 = vsel %vm1108, %v5261, %v5690
        %v5900 = vsel %vm1108, %v5262, %v5692
        %v5902 = vsel %vm1108, %v5263, %v5694
        %v5904 = vsel %vm1108, %v5264, %v5696
        %v5906 = vsel %vm1173, %v5842, %v5778
        %v5908 = vsel %vm1173, %v5844, %v5780
        %v5910 = vsel %vm1173, %v5846, %v5782
        %v5912 = vsel %vm1173, %v5848, %v5784
        %v5914 = vsel %vm1173, %v5850, %v5786
        %v5916 = vsel %vm1173, %v5852, %v5788
        %v5918 = vsel %vm1173, %v5854, %v5790
        %v5920 = vsel %vm1173, %v5856, %v5792
        %v5922 = vsel %vm1173, %v5858, %v5794
        %v5924 = vsel %vm1173, %v5860, %v5796
        %v5926 = vsel %vm1173, %v5862, %v5798
        %v5928 = vsel %vm1173, %v5864, %v5800
        %v5930 = vsel %vm1173, %v5866, %v5802
        %v5932 = vsel %vm1173, %v5868, %v5804
        %v5934 = vsel %vm1173, %v5870, %v5806
        %v5936 = vsel %vm1173, %v5872, %v5808
        %v5938 = vsel %vm1173, %v5874, %v5810
        %v5940 = vsel %vm1173, %v5876, %v5812
        %v5942 = vsel %vm1173, %v5878, %v5814
        %v5944 = vsel %vm1173, %v5880, %v5816
        %v5946 = vsel %vm1173, %v5882, %v5818
        %v5948 = vsel %vm1173, %v5884, %v5820
        %v5950 = vsel %vm1173, %v5886, %v5822
        %v5952 = vsel %vm1173, %v5888, %v5824
        %v5954 = vsel %vm1173, %v5890, %v5826
        %v5956 = vsel %vm1173, %v5892, %v5828
        %v5958 = vsel %vm1173, %v5894, %v5830
        %v5960 = vsel %vm1173, %v5896, %v5832
        %v5962 = vsel %vm1173, %v5898, %v5834
        %v5964 = vsel %vm1173, %v5900, %v5836
        %v5966 = vsel %vm1173, %v5902, %v5838
        %v5968 = vsel %vm1173, %v5904, %v5840
        %v5969 = vld [vmem:[%s284] sm:$0xf]
        %v5970 = vld [vmem:[%s284 + $0x4] sm:$0xf]
        %v5971 = vld [vmem:[%s284 + $0x8] sm:$0xf]
        %s5972 = scalar_lea.vmem %s280, 340
        %v5973 = vld [vmem:[%s5972] sm:$0xf]
        %v5974 = vld [vmem:[%s5972 + $0x4] sm:$0xf]
        %v5975 = vld [vmem:[%s5972 + $0x8] sm:$0xf]
        %v5976 = vld [vmem:[%s5972 + $0xc] sm:$0xf]
        %v5977 = vld [vmem:[%s5972 + $0x10] sm:$0x1]
        %v5978 = vld [vmem:[%s5972 + $0x14] sm:$0xf]
        %v5979 = vld [vmem:[%s5972 + $0x18] sm:$0xf]
        %v5980 = vld [vmem:[%s5972 + $0x1c] sm:$0xf]
        %v5981 = vld [vmem:[%s5972 + $0x20] sm:$0xf]
        %v5982 = vld [vmem:[%s5972 + $0x24] sm:$0x1]
        %v5983 = vld [vmem:[%s5972 + $0x28] sm:$0xf]
        %v5984 = vld [vmem:[%s5972 + $0x2c] sm:$0xf]
        %v5985 = vld [vmem:[%s5972 + $0x30] sm:$0xf]
        %v5986 = vld [vmem:[%s5972 + $0x34] sm:$0xf]
        %v5987 = vld [vmem:[%s5972 + $0x38] sm:$0x1]
        %v5988 = vld [vmem:[%s5972 + $0x3c] sm:$0xf]
        %v5989 = vld [vmem:[%s5972 + $0x40] sm:$0xf]
        %v5990 = vld [vmem:[%s5972 + $0x44] sm:$0xf]
        %v5991 = vld [vmem:[%s5972 + $0x48] sm:$0xf]
        %v5992 = vld [vmem:[%s5972 + $0x4c] sm:$0x1]
        %v5993 = vld [vmem:[%s5972 + $0x50] sm:$0xf]
        %v5994 = vld [vmem:[%s5972 + $0x54] sm:$0xf]
        %v5995 = vld [vmem:[%s5972 + $0x58] sm:$0xf]
        %v5996 = vld [vmem:[%s5972 + $0x5c] sm:$0xf]
        %v5997 = vld [vmem:[%s5972 + $0x60] sm:$0x1]
        %v5998 = vld [vmem:[%s5972 + $0x64] sm:$0xf]
        %v5999 = vld [vmem:[%s5972 + $0x68] sm:$0xf]
        %v6000 = vld [vmem:[%s5972 + $0x6c] sm:$0xf]
        %v6001 = vld [vmem:[%s5972 + $0x70] sm:$0xf]
        %v6002 = vld [vmem:[%s5972 + $0x74] sm:$0x1]
        %v6003 = vld [vmem:[%s5972 + $0x78] sm:$0xf]
        %v6004 = vld [vmem:[%s5972 + $0x7c] sm:$0xf]
        %v6005 = vld [vmem:[%s5972 + $0x80] sm:$0xf]
        %v6006 = vld [vmem:[%s5972 + $0x84] sm:$0xf]
        %v6007 = vld [vmem:[%s5972 + $0x88] sm:$0x1]
        %v6008 = vld [vmem:[%s5972 + $0x8c] sm:$0xf]
        %v6009 = vld [vmem:[%s5972 + $0x90] sm:$0xf]
        %v6010 = vld [vmem:[%s5972 + $0x94] sm:$0xf]
        %v6011 = vld [vmem:[%s5972 + $0x98] sm:$0xf]
        %v6012 = vld [vmem:[%s5972 + $0x9c] sm:$0x1]
        %v6013 = vld [vmem:[%s5972 + $0xa0] sm:$0xf]
        %v6014 = vld [vmem:[%s5972 + $0xa4] sm:$0xf]
        %v6015 = vld [vmem:[%s5972 + $0xa8] sm:$0xf]
        %v6016 = vld [vmem:[%s5972 + $0xac] sm:$0xf]
        %v6017 = vld [vmem:[%s5972 + $0xb0] sm:$0x1]
        %v6018 = vld [vmem:[%s5972 + $0xb4] sm:$0xf]
        %v6019 = vld [vmem:[%s5972 + $0xb8] sm:$0xf]
        %v6020 = vld [vmem:[%s5972 + $0xbc] sm:$0xf]
        %v6021 = vld [vmem:[%s5972 + $0xc0] sm:$0xf]
        %v6022 = vld [vmem:[%s5972 + $0xc4] sm:$0x1]
        %v6023 = vld [vmem:[%s5972 + $0xc8] sm:$0xf]
        %v6024 = vld [vmem:[%s5972 + $0xcc] sm:$0xf]
        %v6025 = vld [vmem:[%s5972 + $0xd0] sm:$0xf]
        %v6026 = vld [vmem:[%s5972 + $0xd4] sm:$0xf]
        %v6027 = vld [vmem:[%s5972 + $0xd8] sm:$0x1]
        %v6028 = vld [vmem:[%s5972 + $0xdc] sm:$0xf]
        %v6029 = vld [vmem:[%s5972 + $0xe0] sm:$0xf]
        %v6030 = vld [vmem:[%s5972 + $0xe4] sm:$0xf]
        %v6031 = vld [vmem:[%s5972 + $0xe8] sm:$0xf]
        %v6032 = vld [vmem:[%s5972 + $0xec] sm:$0x1]
        %v6033 = vld [vmem:[%s5972 + $0xf0] sm:$0xf]
        %v6034 = vld [vmem:[%s5972 + $0xf4] sm:$0xf]
        %v6035 = vld [vmem:[%s5972 + $0xf8] sm:$0xf]
        %v6036 = vld [vmem:[%s5972 + $0xfc] sm:$0xf]
        %v6037 = vld [vmem:[%s5972 + $0x100] sm:$0x1]
        %v6038 = vld [vmem:[%s5972 + $0x104] sm:$0xf]
        %v6039 = vld [vmem:[%s5972 + $0x108] sm:$0xf]
        %v6040 = vld [vmem:[%s5972 + $0x10c] sm:$0xf]
        %v6041 = vld [vmem:[%s5972 + $0x110] sm:$0xf]
        %v6042 = vld [vmem:[%s5972 + $0x114] sm:$0x1]
        %v6043 = vld [vmem:[%s5972 + $0x118] sm:$0xf]
        %v6044 = vld [vmem:[%s5972 + $0x11c] sm:$0xf]
        %v6045 = vld [vmem:[%s5972 + $0x120] sm:$0xf]
        %v6046 = vld [vmem:[%s5972 + $0x124] sm:$0xf]
        %v6047 = vld [vmem:[%s5972 + $0x128] sm:$0x1]
        %v6048 = vld [vmem:[%s5972 + $0x12c] sm:$0xf]
        %v6049 = vld [vmem:[%s5972 + $0x130] sm:$0xf]
        %v6050 = vld [vmem:[%s5972 + $0x134] sm:$0xf]
        %v6051 = vld [vmem:[%s5972 + $0x138] sm:$0xf]
        %v6052 = vld [vmem:[%s5972 + $0x13c] sm:$0x1]
        %v6117 = vunpack.c.l.b16 %v5973
        %v6118 = vunpack.c.l.b16 %v5974
        %v6119 = vunpack.c.l.b16 %v5975
        %v6120 = vunpack.c.l.b16 %v5976
        %v6121 = vunpack.c.l.b16 %v5978
        %v6122 = vunpack.c.l.b16 %v5979
        %v6123 = vunpack.c.l.b16 %v5980
        %v6124 = vunpack.c.l.b16 %v5981
        %v6125 = vunpack.c.l.b16 %v5983
        %v6126 = vunpack.c.l.b16 %v5984
        %v6127 = vunpack.c.l.b16 %v5985
        %v6128 = vunpack.c.l.b16 %v5986
        %v6129 = vunpack.c.l.b16 %v5988
        %v6130 = vunpack.c.l.b16 %v5989
        %v6131 = vunpack.c.l.b16 %v5990
        %v6132 = vunpack.c.l.b16 %v5991
        %v6133 = vunpack.c.l.b16 %v5993
        %v6134 = vunpack.c.l.b16 %v5994
        %v6135 = vunpack.c.l.b16 %v5995
        %v6136 = vunpack.c.l.b16 %v5996
        %v6137 = vunpack.c.l.b16 %v5998
        %v6138 = vunpack.c.l.b16 %v5999
        %v6139 = vunpack.c.l.b16 %v6000
        %v6140 = vunpack.c.l.b16 %v6001
        %v6141 = vunpack.c.l.b16 %v6003
        %v6142 = vunpack.c.l.b16 %v6004
        %v6143 = vunpack.c.l.b16 %v6005
        %v6144 = vunpack.c.l.b16 %v6006
        %v6145 = vunpack.c.l.b16 %v6008
        %v6146 = vunpack.c.l.b16 %v6009
        %v6147 = vunpack.c.l.b16 %v6010
        %v6148 = vunpack.c.l.b16 %v6011
        %v6149 = vunpack.c.l.b16 %v6013
        %v6150 = vunpack.c.l.b16 %v6014
        %v6151 = vunpack.c.l.b16 %v6015
        %v6152 = vunpack.c.l.b16 %v6016
        %v6153 = vunpack.c.l.b16 %v6018
        %v6154 = vunpack.c.l.b16 %v6019
        %v6155 = vunpack.c.l.b16 %v6020
        %v6156 = vunpack.c.l.b16 %v6021
        %v6157 = vunpack.c.l.b16 %v6023
        %v6158 = vunpack.c.l.b16 %v6024
        %v6159 = vunpack.c.l.b16 %v6025
        %v6160 = vunpack.c.l.b16 %v6026
        %v6161 = vunpack.c.l.b16 %v6028
        %v6162 = vunpack.c.l.b16 %v6029
        %v6163 = vunpack.c.l.b16 %v6030
        %v6164 = vunpack.c.l.b16 %v6031
        %v6165 = vunpack.c.l.b16 %v6033
        %v6166 = vunpack.c.l.b16 %v6034
        %v6167 = vunpack.c.l.b16 %v6035
        %v6168 = vunpack.c.l.b16 %v6036
        %v6169 = vunpack.c.l.b16 %v6038
        %v6170 = vunpack.c.l.b16 %v6039
        %v6171 = vunpack.c.l.b16 %v6040
        %v6172 = vunpack.c.l.b16 %v6041
        %v6173 = vunpack.c.l.b16 %v6043
        %v6174 = vunpack.c.l.b16 %v6044
        %v6175 = vunpack.c.l.b16 %v6045
        %v6176 = vunpack.c.l.b16 %v6046
        %v6177 = vunpack.c.l.b16 %v6048
        %v6178 = vunpack.c.l.b16 %v6049
        %v6179 = vunpack.c.l.b16 %v6050
        %v6180 = vunpack.c.l.b16 %v6051
        %v6181 = vpack.c.b16 %v6118, %v6117
        %v6182 = vpack.c.b16 %v6120, %v6119
        %v6183 = vpack.c.b16 %v6122, %v6121
        %v6184 = vpack.c.b16 %v6124, %v6123
        %v6185 = vpack.c.b16 %v6126, %v6125
        %v6186 = vpack.c.b16 %v6128, %v6127
        %v6187 = vpack.c.b16 %v6130, %v6129
        %v6188 = vpack.c.b16 %v6132, %v6131
        %v6189 = vpack.c.b16 %v6134, %v6133
        %v6190 = vpack.c.b16 %v6136, %v6135
        %v6191 = vpack.c.b16 %v6138, %v6137
        %v6192 = vpack.c.b16 %v6140, %v6139
        %v6193 = vpack.c.b16 %v6142, %v6141
        %v6194 = vpack.c.b16 %v6144, %v6143
        %v6195 = vpack.c.b16 %v6146, %v6145
        %v6196 = vpack.c.b16 %v6148, %v6147
        %v6197 = vpack.c.b16 %v6150, %v6149
        %v6198 = vpack.c.b16 %v6152, %v6151
        %v6199 = vpack.c.b16 %v6154, %v6153
        %v6200 = vpack.c.b16 %v6156, %v6155
        %v6201 = vpack.c.b16 %v6158, %v6157
        %v6202 = vpack.c.b16 %v6160, %v6159
        %v6203 = vpack.c.b16 %v6162, %v6161
        %v6204 = vpack.c.b16 %v6164, %v6163
        %v6205 = vpack.c.b16 %v6166, %v6165
        %v6206 = vpack.c.b16 %v6168, %v6167
        %v6207 = vpack.c.b16 %v6170, %v6169
        %v6208 = vpack.c.b16 %v6172, %v6171
        %v6209 = vpack.c.b16 %v6174, %v6173
        %v6210 = vpack.c.b16 %v6176, %v6175
        %v6211 = vpack.c.b16 %v6178, %v6177
        %v6212 = vpack.c.b16 %v6180, %v6179
        %v6229 = vunpack.c.l.b16 %v5977
        %v6230 = vunpack.c.l.b16 %v5982
        %v6231 = vunpack.c.l.b16 %v5987
        %v6232 = vunpack.c.l.b16 %v5992
        %v6233 = vunpack.c.l.b16 %v5997
        %v6234 = vunpack.c.l.b16 %v6002
        %v6235 = vunpack.c.l.b16 %v6007
        %v6236 = vunpack.c.l.b16 %v6012
        %v6237 = vunpack.c.l.b16 %v6017
        %v6238 = vunpack.c.l.b16 %v6022
        %v6239 = vunpack.c.l.b16 %v6027
        %v6240 = vunpack.c.l.b16 %v6032
        %v6241 = vunpack.c.l.b16 %v6037
        %v6242 = vunpack.c.l.b16 %v6042
        %v6243 = vunpack.c.l.b16 %v6047
        %v6244 = vunpack.c.l.b16 %v6052
        %v6245 = vpack.c.b16 %v6229, %v6229
        %v6246 = vpack.c.b16 %v6230, %v6230
        %v6247 = vpack.c.b16 %v6231, %v6231
        %v6248 = vpack.c.b16 %v6232, %v6232
        %v6249 = vpack.c.b16 %v6233, %v6233
        %v6250 = vpack.c.b16 %v6234, %v6234
        %v6251 = vpack.c.b16 %v6235, %v6235
        %v6252 = vpack.c.b16 %v6236, %v6236
        %v6253 = vpack.c.b16 %v6237, %v6237
        %v6254 = vpack.c.b16 %v6238, %v6238
        %v6255 = vpack.c.b16 %v6239, %v6239
        %v6256 = vpack.c.b16 %v6240, %v6240
        %v6257 = vpack.c.b16 %v6241, %v6241
        %v6258 = vpack.c.b16 %v6242, %v6242
        %v6259 = vpack.c.b16 %v6243, %v6243
        %v6260 = vpack.c.b16 %v6244, %v6244
        %v6262 = vshrl.u32 %v6181, 16
        %v6264 = vshll.u32 %v6181, 16
        %v6266 = vrot.slane %v6264, 1
        %v6267 = vor.u32 %v6262, %v6266
        %v6269 = vshll.u32 %v6182, 16
        %v6271 = vrot.slane %v6269, 1
        %v6272 = vsel %vm578, %v6267, %v6271
        %v6273 = vshrl.u32 %v6182, 16
        %v6275 = vor.u32 %v6273, %v6271
        %v6277 = vshll.u32 %v6245, 16
        %v6279 = vrot.slane %v6277, 1
        %v6280 = vsel %vm578, %v6275, %v6279
        %v6282 = vshrl.u32 %v6183, 16
        %v6284 = vshll.u32 %v6183, 16
        %v6286 = vrot.slane %v6284, 1
        %v6287 = vor.u32 %v6282, %v6286
        %v6289 = vshll.u32 %v6184, 16
        %v6291 = vrot.slane %v6289, 1
        %v6292 = vsel %vm578, %v6287, %v6291
        %v6293 = vshrl.u32 %v6184, 16
        %v6295 = vor.u32 %v6293, %v6291
        %v6297 = vshll.u32 %v6246, 16
        %v6299 = vrot.slane %v6297, 1
        %v6300 = vsel %vm578, %v6295, %v6299
        %v6302 = vshrl.u32 %v6185, 16
        %v6304 = vshll.u32 %v6185, 16
        %v6306 = vrot.slane %v6304, 1
        %v6307 = vor.u32 %v6302, %v6306
        %v6309 = vshll.u32 %v6186, 16
        %v6311 = vrot.slane %v6309, 1
        %v6312 = vsel %vm578, %v6307, %v6311
        %v6313 = vshrl.u32 %v6186, 16
        %v6315 = vor.u32 %v6313, %v6311
        %v6317 = vshll.u32 %v6247, 16
        %v6319 = vrot.slane %v6317, 1
        %v6320 = vsel %vm578, %v6315, %v6319
        %v6322 = vshrl.u32 %v6187, 16
        %v6324 = vshll.u32 %v6187, 16
        %v6326 = vrot.slane %v6324, 1
        %v6327 = vor.u32 %v6322, %v6326
        %v6329 = vshll.u32 %v6188, 16
        %v6331 = vrot.slane %v6329, 1
        %v6332 = vsel %vm578, %v6327, %v6331
        %v6333 = vshrl.u32 %v6188, 16
        %v6335 = vor.u32 %v6333, %v6331
        %v6337 = vshll.u32 %v6248, 16
        %v6339 = vrot.slane %v6337, 1
        %v6340 = vsel %vm578, %v6335, %v6339
        %v6342 = vshrl.u32 %v6189, 16
        %v6344 = vshll.u32 %v6189, 16
        %v6346 = vrot.slane %v6344, 1
        %v6347 = vor.u32 %v6342, %v6346
        %v6349 = vshll.u32 %v6190, 16
        %v6351 = vrot.slane %v6349, 1
        %v6352 = vsel %vm578, %v6347, %v6351
        %v6353 = vshrl.u32 %v6190, 16
        %v6355 = vor.u32 %v6353, %v6351
        %v6357 = vshll.u32 %v6249, 16
        %v6359 = vrot.slane %v6357, 1
        %v6360 = vsel %vm578, %v6355, %v6359
        %v6362 = vshrl.u32 %v6191, 16
        %v6364 = vshll.u32 %v6191, 16
        %v6366 = vrot.slane %v6364, 1
        %v6367 = vor.u32 %v6362, %v6366
        %v6369 = vshll.u32 %v6192, 16
        %v6371 = vrot.slane %v6369, 1
        %v6372 = vsel %vm578, %v6367, %v6371
        %v6373 = vshrl.u32 %v6192, 16
        %v6375 = vor.u32 %v6373, %v6371
        %v6377 = vshll.u32 %v6250, 16
        %v6379 = vrot.slane %v6377, 1
        %v6380 = vsel %vm578, %v6375, %v6379
        %v6382 = vshrl.u32 %v6193, 16
        %v6384 = vshll.u32 %v6193, 16
        %v6386 = vrot.slane %v6384, 1
        %v6387 = vor.u32 %v6382, %v6386
        %v6389 = vshll.u32 %v6194, 16
        %v6391 = vrot.slane %v6389, 1
        %v6392 = vsel %vm578, %v6387, %v6391
        %v6393 = vshrl.u32 %v6194, 16
        %v6395 = vor.u32 %v6393, %v6391
        %v6397 = vshll.u32 %v6251, 16
        %v6399 = vrot.slane %v6397, 1
        %v6400 = vsel %vm578, %v6395, %v6399
        %v6402 = vshrl.u32 %v6195, 16
        %v6404 = vshll.u32 %v6195, 16
        %v6406 = vrot.slane %v6404, 1
        %v6407 = vor.u32 %v6402, %v6406
        %v6409 = vshll.u32 %v6196, 16
        %v6411 = vrot.slane %v6409, 1
        %v6412 = vsel %vm578, %v6407, %v6411
        %v6413 = vshrl.u32 %v6196, 16
        %v6415 = vor.u32 %v6413, %v6411
        %v6417 = vshll.u32 %v6252, 16
        %v6419 = vrot.slane %v6417, 1
        %v6420 = vsel %vm578, %v6415, %v6419
        %v6422 = vshrl.u32 %v6197, 16
        %v6424 = vshll.u32 %v6197, 16
        %v6426 = vrot.slane %v6424, 1
        %v6427 = vor.u32 %v6422, %v6426
        %v6429 = vshll.u32 %v6198, 16
        %v6431 = vrot.slane %v6429, 1
        %v6432 = vsel %vm578, %v6427, %v6431
        %v6433 = vshrl.u32 %v6198, 16
        %v6435 = vor.u32 %v6433, %v6431
        %v6437 = vshll.u32 %v6253, 16
        %v6439 = vrot.slane %v6437, 1
        %v6440 = vsel %vm578, %v6435, %v6439
        %v6442 = vshrl.u32 %v6199, 16
        %v6444 = vshll.u32 %v6199, 16
        %v6446 = vrot.slane %v6444, 1
        %v6447 = vor.u32 %v6442, %v6446
        %v6449 = vshll.u32 %v6200, 16
        %v6451 = vrot.slane %v6449, 1
        %v6452 = vsel %vm578, %v6447, %v6451
        %v6453 = vshrl.u32 %v6200, 16
        %v6455 = vor.u32 %v6453, %v6451
        %v6457 = vshll.u32 %v6254, 16
        %v6459 = vrot.slane %v6457, 1
        %v6460 = vsel %vm578, %v6455, %v6459
        %v6462 = vshrl.u32 %v6201, 16
        %v6464 = vshll.u32 %v6201, 16
        %v6466 = vrot.slane %v6464, 1
        %v6467 = vor.u32 %v6462, %v6466
        %v6469 = vshll.u32 %v6202, 16
        %v6471 = vrot.slane %v6469, 1
        %v6472 = vsel %vm578, %v6467, %v6471
        %v6473 = vshrl.u32 %v6202, 16
        %v6475 = vor.u32 %v6473, %v6471
        %v6477 = vshll.u32 %v6255, 16
        %v6479 = vrot.slane %v6477, 1
        %v6480 = vsel %vm578, %v6475, %v6479
        %v6482 = vshrl.u32 %v6203, 16
        %v6484 = vshll.u32 %v6203, 16
        %v6486 = vrot.slane %v6484, 1
        %v6487 = vor.u32 %v6482, %v6486
        %v6489 = vshll.u32 %v6204, 16
        %v6491 = vrot.slane %v6489, 1
        %v6492 = vsel %vm578, %v6487, %v6491
        %v6493 = vshrl.u32 %v6204, 16
        %v6495 = vor.u32 %v6493, %v6491
        %v6497 = vshll.u32 %v6256, 16
        %v6499 = vrot.slane %v6497, 1
        %v6500 = vsel %vm578, %v6495, %v6499
        %v6502 = vshrl.u32 %v6205, 16
        %v6504 = vshll.u32 %v6205, 16
        %v6506 = vrot.slane %v6504, 1
        %v6507 = vor.u32 %v6502, %v6506
        %v6509 = vshll.u32 %v6206, 16
        %v6511 = vrot.slane %v6509, 1
        %v6512 = vsel %vm578, %v6507, %v6511
        %v6513 = vshrl.u32 %v6206, 16
        %v6515 = vor.u32 %v6513, %v6511
        %v6517 = vshll.u32 %v6257, 16
        %v6519 = vrot.slane %v6517, 1
        %v6520 = vsel %vm578, %v6515, %v6519
        %v6522 = vshrl.u32 %v6207, 16
        %v6524 = vshll.u32 %v6207, 16
        %v6526 = vrot.slane %v6524, 1
        %v6527 = vor.u32 %v6522, %v6526
        %v6529 = vshll.u32 %v6208, 16
        %v6531 = vrot.slane %v6529, 1
        %v6532 = vsel %vm578, %v6527, %v6531
        %v6533 = vshrl.u32 %v6208, 16
        %v6535 = vor.u32 %v6533, %v6531
        %v6537 = vshll.u32 %v6258, 16
        %v6539 = vrot.slane %v6537, 1
        %v6540 = vsel %vm578, %v6535, %v6539
        %v6542 = vshrl.u32 %v6209, 16
        %v6544 = vshll.u32 %v6209, 16
        %v6546 = vrot.slane %v6544, 1
        %v6547 = vor.u32 %v6542, %v6546
        %v6549 = vshll.u32 %v6210, 16
        %v6551 = vrot.slane %v6549, 1
        %v6552 = vsel %vm578, %v6547, %v6551
        %v6553 = vshrl.u32 %v6210, 16
        %v6555 = vor.u32 %v6553, %v6551
        %v6557 = vshll.u32 %v6259, 16
        %v6559 = vrot.slane %v6557, 1
        %v6560 = vsel %vm578, %v6555, %v6559
        %v6562 = vshrl.u32 %v6211, 16
        %v6564 = vshll.u32 %v6211, 16
        %v6566 = vrot.slane %v6564, 1
        %v6567 = vor.u32 %v6562, %v6566
        %v6569 = vshll.u32 %v6212, 16
        %v6571 = vrot.slane %v6569, 1
        %v6572 = vsel %vm578, %v6567, %v6571
        %v6573 = vshrl.u32 %v6212, 16
        %v6575 = vor.u32 %v6573, %v6571
        %v6577 = vshll.u32 %v6260, 16
        %v6579 = vrot.slane %v6577, 1
        %v6580 = vsel %vm578, %v6575, %v6579
        %6581 = vrot.lane.b32.xlu0 %v6272, 8
        %v6582 = vpop.permute.xlu0 %6581
        %6583 = vrot.lane.b32.xlu0 %v6280, 8
        %v6584 = vpop.permute.xlu0 %6583
        %6585 = vrot.lane.b32.xlu0 %v6292, 8
        %v6586 = vpop.permute.xlu0 %6585
        %6587 = vrot.lane.b32.xlu0 %v6300, 8
        %v6588 = vpop.permute.xlu0 %6587
        %6589 = vrot.lane.b32.xlu0 %v6312, 8
        %v6590 = vpop.permute.xlu0 %6589
        %6591 = vrot.lane.b32.xlu0 %v6320, 8
        %v6592 = vpop.permute.xlu0 %6591
        %6593 = vrot.lane.b32.xlu0 %v6332, 8
        %v6594 = vpop.permute.xlu0 %6593
        %6595 = vrot.lane.b32.xlu0 %v6340, 8
        %v6596 = vpop.permute.xlu0 %6595
        %6597 = vrot.lane.b32.xlu0 %v6352, 8
        %v6598 = vpop.permute.xlu0 %6597
        %6599 = vrot.lane.b32.xlu0 %v6360, 8
        %v6600 = vpop.permute.xlu0 %6599
        %6601 = vrot.lane.b32.xlu0 %v6372, 8
        %v6602 = vpop.permute.xlu0 %6601
        %6603 = vrot.lane.b32.xlu0 %v6380, 8
        %v6604 = vpop.permute.xlu0 %6603
        %6605 = vrot.lane.b32.xlu0 %v6392, 8
        %v6606 = vpop.permute.xlu0 %6605
        %6607 = vrot.lane.b32.xlu0 %v6400, 8
        %v6608 = vpop.permute.xlu0 %6607
        %6609 = vrot.lane.b32.xlu0 %v6412, 8
        %v6610 = vpop.permute.xlu0 %6609
        %6611 = vrot.lane.b32.xlu0 %v6420, 8
        %v6612 = vpop.permute.xlu0 %6611
        %6613 = vrot.lane.b32.xlu0 %v6432, 8
        %v6614 = vpop.permute.xlu0 %6613
        %6615 = vrot.lane.b32.xlu0 %v6440, 8
        %v6616 = vpop.permute.xlu0 %6615
        %6617 = vrot.lane.b32.xlu0 %v6452, 8
        %v6618 = vpop.permute.xlu0 %6617
        %6619 = vrot.lane.b32.xlu0 %v6460, 8
        %v6620 = vpop.permute.xlu0 %6619
        %6621 = vrot.lane.b32.xlu0 %v6472, 8
        %v6622 = vpop.permute.xlu0 %6621
        %6623 = vrot.lane.b32.xlu0 %v6480, 8
        %v6624 = vpop.permute.xlu0 %6623
        %6625 = vrot.lane.b32.xlu0 %v6492, 8
        %v6626 = vpop.permute.xlu0 %6625
        %6627 = vrot.lane.b32.xlu0 %v6500, 8
        %v6628 = vpop.permute.xlu0 %6627
        %6629 = vrot.lane.b32.xlu0 %v6512, 8
        %v6630 = vpop.permute.xlu0 %6629
        %6631 = vrot.lane.b32.xlu0 %v6520, 8
        %v6632 = vpop.permute.xlu0 %6631
        %6633 = vrot.lane.b32.xlu0 %v6532, 8
        %v6634 = vpop.permute.xlu0 %6633
        %6635 = vrot.lane.b32.xlu0 %v6540, 8
        %v6636 = vpop.permute.xlu0 %6635
        %6637 = vrot.lane.b32.xlu0 %v6552, 8
        %v6638 = vpop.permute.xlu0 %6637
        %6639 = vrot.lane.b32.xlu0 %v6560, 8
        %v6640 = vpop.permute.xlu0 %6639
        %6641 = vrot.lane.b32.xlu0 %v6572, 8
        %v6642 = vpop.permute.xlu0 %6641
        %6643 = vrot.lane.b32.xlu0 %v6580, 8
        %v6644 = vpop.permute.xlu0 %6643
        %v6645 = vrot.slane %v6181, 1
        %v6646 = vrot.slane %v6182, 1
        %v6647 = vsel %vm963, %v6645, %v6646
        %v6648 = vrot.slane %v6245, 1
        %v6649 = vsel %vm963, %v6646, %v6648
        %v6650 = vrot.slane %v6183, 1
        %v6651 = vrot.slane %v6184, 1
        %v6652 = vsel %vm963, %v6650, %v6651
        %v6653 = vrot.slane %v6246, 1
        %v6654 = vsel %vm963, %v6651, %v6653
        %v6655 = vrot.slane %v6185, 1
        %v6656 = vrot.slane %v6186, 1
        %v6657 = vsel %vm963, %v6655, %v6656
        %v6658 = vrot.slane %v6247, 1
        %v6659 = vsel %vm963, %v6656, %v6658
        %v6660 = vrot.slane %v6187, 1
        %v6661 = vrot.slane %v6188, 1
        %v6662 = vsel %vm963, %v6660, %v6661
        %v6663 = vrot.slane %v6248, 1
        %v6664 = vsel %vm963, %v6661, %v6663
        %v6665 = vrot.slane %v6189, 1
        %v6666 = vrot.slane %v6190, 1
        %v6667 = vsel %vm963, %v6665, %v6666
        %v6668 = vrot.slane %v6249, 1
        %v6669 = vsel %vm963, %v6666, %v6668
        %v6670 = vrot.slane %v6191, 1
        %v6671 = vrot.slane %v6192, 1
        %v6672 = vsel %vm963, %v6670, %v6671
        %v6673 = vrot.slane %v6250, 1
        %v6674 = vsel %vm963, %v6671, %v6673
        %v6675 = vrot.slane %v6193, 1
        %v6676 = vrot.slane %v6194, 1
        %v6677 = vsel %vm963, %v6675, %v6676
        %v6678 = vrot.slane %v6251, 1
        %v6679 = vsel %vm963, %v6676, %v6678
        %v6680 = vrot.slane %v6195, 1
        %v6681 = vrot.slane %v6196, 1
        %v6682 = vsel %vm963, %v6680, %v6681
        %v6683 = vrot.slane %v6252, 1
        %v6684 = vsel %vm963, %v6681, %v6683
        %v6685 = vrot.slane %v6197, 1
        %v6686 = vrot.slane %v6198, 1
        %v6687 = vsel %vm963, %v6685, %v6686
        %v6688 = vrot.slane %v6253, 1
        %v6689 = vsel %vm963, %v6686, %v6688
        %v6690 = vrot.slane %v6199, 1
        %v6691 = vrot.slane %v6200, 1
        %v6692 = vsel %vm963, %v6690, %v6691
        %v6693 = vrot.slane %v6254, 1
        %v6694 = vsel %vm963, %v6691, %v6693
        %v6695 = vrot.slane %v6201, 1
        %v6696 = vrot.slane %v6202, 1
        %v6697 = vsel %vm963, %v6695, %v6696
        %v6698 = vrot.slane %v6255, 1
        %v6699 = vsel %vm963, %v6696, %v6698
        %v6700 = vrot.slane %v6203, 1
        %v6701 = vrot.slane %v6204, 1
        %v6702 = vsel %vm963, %v6700, %v6701
        %v6703 = vrot.slane %v6256, 1
        %v6704 = vsel %vm963, %v6701, %v6703
        %v6705 = vrot.slane %v6205, 1
        %v6706 = vrot.slane %v6206, 1
        %v6707 = vsel %vm963, %v6705, %v6706
        %v6708 = vrot.slane %v6257, 1
        %v6709 = vsel %vm963, %v6706, %v6708
        %v6710 = vrot.slane %v6207, 1
        %v6711 = vrot.slane %v6208, 1
        %v6712 = vsel %vm963, %v6710, %v6711
        %v6713 = vrot.slane %v6258, 1
        %v6714 = vsel %vm963, %v6711, %v6713
        %v6715 = vrot.slane %v6209, 1
        %v6716 = vrot.slane %v6210, 1
        %v6717 = vsel %vm963, %v6715, %v6716
        %v6718 = vrot.slane %v6259, 1
        %v6719 = vsel %vm963, %v6716, %v6718
        %v6720 = vrot.slane %v6211, 1
        %v6721 = vrot.slane %v6212, 1
        %v6722 = vsel %vm963, %v6720, %v6721
        %v6723 = vrot.slane %v6260, 1
        %v6724 = vsel %vm963, %v6721, %v6723
        %6725 = vrot.lane.b32.xlu0 %v6647, 16
        %v6726 = vpop.permute.xlu0 %6725
        %6727 = vrot.lane.b32.xlu0 %v6649, 16
        %v6728 = vpop.permute.xlu0 %6727
        %6729 = vrot.lane.b32.xlu0 %v6652, 16
        %v6730 = vpop.permute.xlu0 %6729
        %6731 = vrot.lane.b32.xlu0 %v6654, 16
        %v6732 = vpop.permute.xlu0 %6731
        %6733 = vrot.lane.b32.xlu0 %v6657, 16
        %v6734 = vpop.permute.xlu0 %6733
        %6735 = vrot.lane.b32.xlu0 %v6659, 16
        %v6736 = vpop.permute.xlu0 %6735
        %6737 = vrot.lane.b32.xlu0 %v6662, 16
        %v6738 = vpop.permute.xlu0 %6737
        %6739 = vrot.lane.b32.xlu0 %v6664, 16
        %v6740 = vpop.permute.xlu0 %6739
        %6741 = vrot.lane.b32.xlu0 %v6667, 16
        %v6742 = vpop.permute.xlu0 %6741
        %6743 = vrot.lane.b32.xlu0 %v6669, 16
        %v6744 = vpop.permute.xlu0 %6743
        %6745 = vrot.lane.b32.xlu0 %v6672, 16
        %v6746 = vpop.permute.xlu0 %6745
        %6747 = vrot.lane.b32.xlu0 %v6674, 16
        %v6748 = vpop.permute.xlu0 %6747
        %6749 = vrot.lane.b32.xlu0 %v6677, 16
        %v6750 = vpop.permute.xlu0 %6749
        %6751 = vrot.lane.b32.xlu0 %v6679, 16
        %v6752 = vpop.permute.xlu0 %6751
        %6753 = vrot.lane.b32.xlu0 %v6682, 16
        %v6754 = vpop.permute.xlu0 %6753
        %6755 = vrot.lane.b32.xlu0 %v6684, 16
        %v6756 = vpop.permute.xlu0 %6755
        %6757 = vrot.lane.b32.xlu0 %v6687, 16
        %v6758 = vpop.permute.xlu0 %6757
        %6759 = vrot.lane.b32.xlu0 %v6689, 16
        %v6760 = vpop.permute.xlu0 %6759
        %6761 = vrot.lane.b32.xlu0 %v6692, 16
        %v6762 = vpop.permute.xlu0 %6761
        %6763 = vrot.lane.b32.xlu0 %v6694, 16
        %v6764 = vpop.permute.xlu0 %6763
        %6765 = vrot.lane.b32.xlu0 %v6697, 16
        %v6766 = vpop.permute.xlu0 %6765
        %6767 = vrot.lane.b32.xlu0 %v6699, 16
        %v6768 = vpop.permute.xlu0 %6767
        %6769 = vrot.lane.b32.xlu0 %v6702, 16
        %v6770 = vpop.permute.xlu0 %6769
        %6771 = vrot.lane.b32.xlu0 %v6704, 16
        %v6772 = vpop.permute.xlu0 %6771
        %6773 = vrot.lane.b32.xlu0 %v6707, 16
        %v6774 = vpop.permute.xlu0 %6773
        %6775 = vrot.lane.b32.xlu0 %v6709, 16
        %v6776 = vpop.permute.xlu0 %6775
        %6777 = vrot.lane.b32.xlu0 %v6712, 16
        %v6778 = vpop.permute.xlu0 %6777
        %6779 = vrot.lane.b32.xlu0 %v6714, 16
        %v6780 = vpop.permute.xlu0 %6779
        %6781 = vrot.lane.b32.xlu0 %v6717, 16
        %v6782 = vpop.permute.xlu0 %6781
        %6783 = vrot.lane.b32.xlu0 %v6719, 16
        %v6784 = vpop.permute.xlu0 %6783
        %6785 = vrot.lane.b32.xlu0 %v6722, 16
        %v6786 = vpop.permute.xlu0 %6785
        %6787 = vrot.lane.b32.xlu0 %v6724, 16
        %v6788 = vpop.permute.xlu0 %6787
        %v6790 = vsel %vm1108, %v6181, %v6582
        %v6792 = vsel %vm1108, %v6182, %v6584
        %v6794 = vsel %vm1108, %v6183, %v6586
        %v6796 = vsel %vm1108, %v6184, %v6588
        %v6798 = vsel %vm1108, %v6185, %v6590
        %v6800 = vsel %vm1108, %v6186, %v6592
        %v6802 = vsel %vm1108, %v6187, %v6594
        %v6804 = vsel %vm1108, %v6188, %v6596
        %v6806 = vsel %vm1108, %v6189, %v6598
        %v6808 = vsel %vm1108, %v6190, %v6600
        %v6810 = vsel %vm1108, %v6191, %v6602
        %v6812 = vsel %vm1108, %v6192, %v6604
        %v6814 = vsel %vm1108, %v6193, %v6606
        %v6816 = vsel %vm1108, %v6194, %v6608
        %v6818 = vsel %vm1108, %v6195, %v6610
        %v6820 = vsel %vm1108, %v6196, %v6612
        %v6822 = vsel %vm1108, %v6197, %v6614
        %v6824 = vsel %vm1108, %v6198, %v6616
        %v6826 = vsel %vm1108, %v6199, %v6618
        %v6828 = vsel %vm1108, %v6200, %v6620
        %v6830 = vsel %vm1108, %v6201, %v6622
        %v6832 = vsel %vm1108, %v6202, %v6624
        %v6834 = vsel %vm1108, %v6203, %v6626
        %v6836 = vsel %vm1108, %v6204, %v6628
        %v6838 = vsel %vm1108, %v6205, %v6630
        %v6840 = vsel %vm1108, %v6206, %v6632
        %v6842 = vsel %vm1108, %v6207, %v6634
        %v6844 = vsel %vm1108, %v6208, %v6636
        %v6846 = vsel %vm1108, %v6209, %v6638
        %v6848 = vsel %vm1108, %v6210, %v6640
        %v6850 = vsel %vm1108, %v6211, %v6642
        %v6852 = vsel %vm1108, %v6212, %v6644
        %v6854 = vsel %vm1173, %v6790, %v6726
        %v6856 = vsel %vm1173, %v6792, %v6728
        %v6858 = vsel %vm1173, %v6794, %v6730
        %v6860 = vsel %vm1173, %v6796, %v6732
        %v6862 = vsel %vm1173, %v6798, %v6734
        %v6864 = vsel %vm1173, %v6800, %v6736
        %v6866 = vsel %vm1173, %v6802, %v6738
        %v6868 = vsel %vm1173, %v6804, %v6740
        %v6870 = vsel %vm1173, %v6806, %v6742
        %v6872 = vsel %vm1173, %v6808, %v6744
        %v6874 = vsel %vm1173, %v6810, %v6746
        %v6876 = vsel %vm1173, %v6812, %v6748
        %v6878 = vsel %vm1173, %v6814, %v6750
        %v6880 = vsel %vm1173, %v6816, %v6752
        %v6882 = vsel %vm1173, %v6818, %v6754
        %v6884 = vsel %vm1173, %v6820, %v6756
        %v6886 = vsel %vm1173, %v6822, %v6758
        %v6888 = vsel %vm1173, %v6824, %v6760
        %v6890 = vsel %vm1173, %v6826, %v6762
        %v6892 = vsel %vm1173, %v6828, %v6764
        %v6894 = vsel %vm1173, %v6830, %v6766
        %v6896 = vsel %vm1173, %v6832, %v6768
        %v6898 = vsel %vm1173, %v6834, %v6770
        %v6900 = vsel %vm1173, %v6836, %v6772
        %v6902 = vsel %vm1173, %v6838, %v6774
        %v6904 = vsel %vm1173, %v6840, %v6776
        %v6906 = vsel %vm1173, %v6842, %v6778
        %v6908 = vsel %vm1173, %v6844, %v6780
        %v6910 = vsel %vm1173, %v6846, %v6782
        %v6912 = vsel %vm1173, %v6848, %v6784
        %v6914 = vsel %vm1173, %v6850, %v6786
        %v6916 = vsel %vm1173, %v6852, %v6788
        %v6917 = vld [vmem:[%s2186] sm:$0xf]
        %v6918 = vld [vmem:[%s2186 + $0x4] sm:$0xf]
        %v6919 = vld [vmem:[%s2186 + $0x8] sm:$0xf]
        %v6923 = vunpack.c.l.b16 %v6917
        %v6924 = vunpack.c.l.b16 %v6918
        %v6925 = vunpack.c.l.b16 %v6919
        %v6926 = vpack.c.b16 %v6924, %v6923
        %v6927 = vpack.c.b16 %v6925, %v6925
        %v6929 = vsel %vm2199, %v6854, 0
        %v6931 = vsel %vm2199, %v6856, 0
        %v6933 = vsel %vm2199, %v6858, 0
        %v6935 = vsel %vm2199, %v6860, 0
        %v6937 = vsel %vm2199, %v6862, 0
        %v6939 = vsel %vm2199, %v6864, 0
        %v6941 = vsel %vm2199, %v6866, 0
        %v6943 = vsel %vm2199, %v6868, 0
        %v6945 = vsel %vm2199, %v6870, 0
        %v6947 = vsel %vm2199, %v6872, 0
        %v6949 = vsel %vm2199, %v6874, 0
        %v6951 = vsel %vm2199, %v6876, 0
        %v6953 = vsel %vm2199, %v6878, 0
        %v6955 = vsel %vm2199, %v6880, 0
        %v6957 = vsel %vm2199, %v6882, 0
        %v6959 = vsel %vm2199, %v6884, 0
        %v6961 = vsel %vm2199, %v6886, 0
        %v6963 = vsel %vm2199, %v6888, 0
        %v6965 = vsel %vm2199, %v6890, 0
        %v6967 = vsel %vm2199, %v6892, 0
        %v6969 = vsel %vm2199, %v6894, 0
        %v6971 = vsel %vm2199, %v6896, 0
        %v6973 = vsel %vm2199, %v6898, 0
        %v6975 = vsel %vm2199, %v6900, 0
        %v6977 = vsel %vm2199, %v6902, 0
        %v6979 = vsel %vm2199, %v6904, 0
        %v6981 = vsel %vm2199, %v6906, 0
        %v6983 = vsel %vm2199, %v6908, 0
        %v6985 = vsel %vm2199, %v6910, 0
        %v6987 = vsel %vm2199, %v6912, 0
        %v6989 = vsel %vm2199, %v6914, 0
        %v6991 = vsel %vm2199, %v6916, 0
        %v6994 = vsel %vm2264, %v6927, 0
        %6996 = vmatprep.subr.bf16.mxu0 0
        %6997 = vmatpush1.bf16.msra.mxu0 %v6926
        %6998 = vmatprep.subr.bf16.mxu0 0
        %6999 = vmatpush1.bf16.msra.mxu0 %v6994
        %7000 = vmatprep.subr.bf16.mxu0 0
        %7001 = vmatpush1.bf16.msra.mxu0 0
        %7002 = vmatprep.subr.bf16.mxu0 0
        %7003 = vmatpush1.bf16.msra.mxu0 0
        %7004 = vmatprep.subr.bf16.mxu0 0
        %7005 = vmatpush1.bf16.msra.mxu0 0
        %7006 = vmatprep.subr.bf16.mxu0 0
        %7007 = vmatpush1.bf16.msra.mxu0 0
        %7008 = vmatprep.subr.bf16.mxu0 0
        %7009 = vmatpush1.bf16.msra.mxu0 0
        %7010 = vmatprep.subr.bf16.mxu0 0
        %7011 = vmatpush1.bf16.msra.mxu0 0
        %7012 = vmatprep.subr.bf16.mxu0 0
        %7013 = vmatpush1.bf16.msra.mxu0 0
        %7014 = vmatprep.subr.bf16.mxu0 0
        %7015 = vmatpush1.bf16.msra.mxu0 0
        %7016 = vmatprep.subr.bf16.mxu0 0
        %7017 = vmatpush1.bf16.msra.mxu0 0
        %7018 = vmatprep.subr.bf16.mxu0 0
        %7019 = vmatpush1.bf16.msra.mxu0 0
        %7020 = vmatprep.subr.bf16.mxu0 0
        %7021 = vmatpush1.bf16.msra.mxu0 0
        %7022 = vmatprep.subr.bf16.mxu0 0
        %7023 = vmatpush1.bf16.msra.mxu0 0
        %7024 = vmatprep.subr.bf16.mxu0 0
        %7025 = vmatpush1.bf16.msra.mxu0 0
        %7026 = vmatprep.subr.bf16.mxu0 0
        %7027 = vmatpush1.bf16.msra.mxu0 0
        %7028 = vmatprep.mubr.bf16.mxu0 0
        %7029 = vmatmul.mubr.bf16.gmra.mrb[0].mxu0 %v6929
        %v7030 = vpop.f32.mrb[0].mxu0
        %v7031 = vadd.f32 0.0, %v7030
        %v7032 = vpop.f32.mrb[0].mxu0
        %v7033 = vpop.f32.mrb[0].mxu0
        %v7034 = vadd.f32 0.0, %v7033
        %v7035 = vpop.f32.mrb[0].mxu0
        %7036 = vmatprep.mubr.bf16.mxu0 0
        %7037 = vmatmul.mubr.bf16.gmra.mrb[0].mxu0 %v6931
        %v7038 = vpop.f32.mrb[0].mxu0
        %v7039 = vadd.f32 0.0, %v7038
        %v7040 = vpop.f32.mrb[0].mxu0
        %v7041 = vpop.f32.mrb[0].mxu0
        %v7042 = vadd.f32 0.0, %v7041
        %v7043 = vpop.f32.mrb[0].mxu0
        %7044 = vmatprep.mubr.bf16.mxu0 0
        %7045 = vmatmul.mubr.bf16.gmra.mrb[0].mxu0 %v6933
        %v7046 = vpop.f32.mrb[0].mxu0
        %v7047 = vadd.f32 0.0, %v7046
        %v7048 = vpop.f32.mrb[0].mxu0
        %v7049 = vpop.f32.mrb[0].mxu0
        %v7050 = vadd.f32 0.0, %v7049
        %v7051 = vpop.f32.mrb[0].mxu0
        %7052 = vmatprep.mubr.bf16.mxu0 0
        %7053 = vmatmul.mubr.bf16.gmra.mrb[0].mxu0 %v6935
        %v7054 = vpop.f32.mrb[0].mxu0
        %v7055 = vadd.f32 0.0, %v7054
        %v7056 = vpop.f32.mrb[0].mxu0
        %v7057 = vpop.f32.mrb[0].mxu0
        %v7058 = vadd.f32 0.0, %v7057
        %v7059 = vpop.f32.mrb[0].mxu0
        %7060 = vmatprep.mubr.bf16.mxu0 0
        %7061 = vmatmul.mubr.bf16.gmra.mrb[0].mxu0 %v6937
        %v7062 = vpop.f32.mrb[0].mxu0
        %v7063 = vadd.f32 0.0, %v7062
        %v7064 = vpop.f32.mrb[0].mxu0
        %v7065 = vpop.f32.mrb[0].mxu0
        %v7066 = vadd.f32 0.0, %v7065
        %v7067 = vpop.f32.mrb[0].mxu0
        %7068 = vmatprep.mubr.bf16.mxu0 0
        %7069 = vmatmul.mubr.bf16.gmra.mrb[0].mxu0 %v6939
        %v7070 = vpop.f32.mrb[0].mxu0
        %v7071 = vadd.f32 0.0, %v7070
        %v7072 = vpop.f32.mrb[0].mxu0
        %v7073 = vpop.f32.mrb[0].mxu0
        %v7074 = vadd.f32 0.0, %v7073
        %v7075 = vpop.f32.mrb[0].mxu0
        %7076 = vmatprep.mubr.bf16.mxu0 0
        %7077 = vmatmul.mubr.bf16.gmra.mrb[0].mxu0 %v6941
        %v7078 = vpop.f32.mrb[0].mxu0
        %v7079 = vadd.f32 0.0, %v7078
        %v7080 = vpop.f32.mrb[0].mxu0
        %v7081 = vpop.f32.mrb[0].mxu0
        %v7082 = vadd.f32 0.0, %v7081
        %v7083 = vpop.f32.mrb[0].mxu0
        %7084 = vmatprep.mubr.bf16.mxu0 0
        %7085 = vmatmul.mubr.bf16.gmra.mrb[0].mxu0 %v6943
        %v7086 = vpop.f32.mrb[0].mxu0
        %v7087 = vadd.f32 0.0, %v7086
        %v7088 = vpop.f32.mrb[0].mxu0
        %v7089 = vpop.f32.mrb[0].mxu0
        %v7090 = vadd.f32 0.0, %v7089
        %v7091 = vpop.f32.mrb[0].mxu0
        %7092 = vmatprep.mubr.bf16.mxu0 0
        %7093 = vmatmul.mubr.bf16.gmra.mrb[0].mxu0 %v6945
        %v7094 = vpop.f32.mrb[0].mxu0
        %v7095 = vadd.f32 0.0, %v7094
        %v7096 = vpop.f32.mrb[0].mxu0
        %v7097 = vpop.f32.mrb[0].mxu0
        %v7098 = vadd.f32 0.0, %v7097
        %v7099 = vpop.f32.mrb[0].mxu0
        %7100 = vmatprep.mubr.bf16.mxu0 0
        %7101 = vmatmul.mubr.bf16.gmra.mrb[0].mxu0 %v6947
        %v7102 = vpop.f32.mrb[0].mxu0
        %v7103 = vadd.f32 0.0, %v7102
        %v7104 = vpop.f32.mrb[0].mxu0
        %v7105 = vpop.f32.mrb[0].mxu0
        %v7106 = vadd.f32 0.0, %v7105
        %v7107 = vpop.f32.mrb[0].mxu0
        %7108 = vmatprep.mubr.bf16.mxu0 0
        %7109 = vmatmul.mubr.bf16.gmra.mrb[0].mxu0 %v6949
        %v7110 = vpop.f32.mrb[0].mxu0
        %v7111 = vadd.f32 0.0, %v7110
        %v7112 = vpop.f32.mrb[0].mxu0
        %v7113 = vpop.f32.mrb[0].mxu0
        %v7114 = vadd.f32 0.0, %v7113
        %v7115 = vpop.f32.mrb[0].mxu0
        %7116 = vmatprep.mubr.bf16.mxu0 0
        %7117 = vmatmul.mubr.bf16.gmra.mrb[0].mxu0 %v6951
        %v7118 = vpop.f32.mrb[0].mxu0
        %v7119 = vadd.f32 0.0, %v7118
        %v7120 = vpop.f32.mrb[0].mxu0
        %v7121 = vpop.f32.mrb[0].mxu0
        %v7122 = vadd.f32 0.0, %v7121
        %v7123 = vpop.f32.mrb[0].mxu0
        %7124 = vmatprep.mubr.bf16.mxu0 0
        %7125 = vmatmul.mubr.bf16.gmra.mrb[0].mxu0 %v6953
        %v7126 = vpop.f32.mrb[0].mxu0
        %v7127 = vadd.f32 0.0, %v7126
        %v7128 = vpop.f32.mrb[0].mxu0
        %v7129 = vpop.f32.mrb[0].mxu0
        %v7130 = vadd.f32 0.0, %v7129
        %v7131 = vpop.f32.mrb[0].mxu0
        %7132 = vmatprep.mubr.bf16.mxu0 0
        %7133 = vmatmul.mubr.bf16.gmra.mrb[0].mxu0 %v6955
        %v7134 = vpop.f32.mrb[0].mxu0
        %v7135 = vadd.f32 0.0, %v7134
        %v7136 = vpop.f32.mrb[0].mxu0
        %v7137 = vpop.f32.mrb[0].mxu0
        %v7138 = vadd.f32 0.0, %v7137
        %v7139 = vpop.f32.mrb[0].mxu0
        %7140 = vmatprep.mubr.bf16.mxu0 0
        %7141 = vmatmul.mubr.bf16.gmra.mrb[0].mxu0 %v6957
        %v7142 = vpop.f32.mrb[0].mxu0
        %v7143 = vadd.f32 0.0, %v7142
        %v7144 = vpop.f32.mrb[0].mxu0
        %v7145 = vpop.f32.mrb[0].mxu0
        %v7146 = vadd.f32 0.0, %v7145
        %v7147 = vpop.f32.mrb[0].mxu0
        %7148 = vmatprep.mubr.bf16.mxu0 0
        %7149 = vmatmul.mubr.bf16.gmra.mrb[0].mxu0 %v6959
        %v7150 = vpop.f32.mrb[0].mxu0
        %v7151 = vadd.f32 0.0, %v7150
        %v7152 = vpop.f32.mrb[0].mxu0
        %v7153 = vpop.f32.mrb[0].mxu0
        %v7154 = vadd.f32 0.0, %v7153
        %v7155 = vpop.f32.mrb[0].mxu0
        %7156 = vmatprep.mubr.bf16.mxu0 0
        %7157 = vmatmul.mubr.bf16.gmra.mrb[0].mxu0 %v6961
        %v7158 = vpop.f32.mrb[0].mxu0
        %v7159 = vadd.f32 0.0, %v7158
        %v7160 = vpop.f32.mrb[0].mxu0
        %v7161 = vpop.f32.mrb[0].mxu0
        %v7162 = vadd.f32 0.0, %v7161
        %v7163 = vpop.f32.mrb[0].mxu0
        %7164 = vmatprep.mubr.bf16.mxu0 0
        %7165 = vmatmul.mubr.bf16.gmra.mrb[0].mxu0 %v6963
        %v7166 = vpop.f32.mrb[0].mxu0
        %v7167 = vadd.f32 0.0, %v7166
        %v7168 = vpop.f32.mrb[0].mxu0
        %v7169 = vpop.f32.mrb[0].mxu0
        %v7170 = vadd.f32 0.0, %v7169
        %v7171 = vpop.f32.mrb[0].mxu0
        %7172 = vmatprep.mubr.bf16.mxu0 0
        %7173 = vmatmul.mubr.bf16.gmra.mrb[0].mxu0 %v6965
        %v7174 = vpop.f32.mrb[0].mxu0
        %v7175 = vadd.f32 0.0, %v7174
        %v7176 = vpop.f32.mrb[0].mxu0
        %v7177 = vpop.f32.mrb[0].mxu0
        %v7178 = vadd.f32 0.0, %v7177
        %v7179 = vpop.f32.mrb[0].mxu0
        %7180 = vmatprep.mubr.bf16.mxu0 0
        %7181 = vmatmul.mubr.bf16.gmra.mrb[0].mxu0 %v6967
        %v7182 = vpop.f32.mrb[0].mxu0
        %v7183 = vadd.f32 0.0, %v7182
        %v7184 = vpop.f32.mrb[0].mxu0
        %v7185 = vpop.f32.mrb[0].mxu0
        %v7186 = vadd.f32 0.0, %v7185
        %v7187 = vpop.f32.mrb[0].mxu0
        %7188 = vmatprep.mubr.bf16.mxu0 0
        %7189 = vmatmul.mubr.bf16.gmra.mrb[0].mxu0 %v6969
        %v7190 = vpop.f32.mrb[0].mxu0
        %v7191 = vadd.f32 0.0, %v7190
        %v7192 = vpop.f32.mrb[0].mxu0
        %v7193 = vpop.f32.mrb[0].mxu0
        %v7194 = vadd.f32 0.0, %v7193
        %v7195 = vpop.f32.mrb[0].mxu0
        %7196 = vmatprep.mubr.bf16.mxu0 0
        %7197 = vmatmul.mubr.bf16.gmra.mrb[0].mxu0 %v6971
        %v7198 = vpop.f32.mrb[0].mxu0
        %v7199 = vadd.f32 0.0, %v7198
        %v7200 = vpop.f32.mrb[0].mxu0
        %v7201 = vpop.f32.mrb[0].mxu0
        %v7202 = vadd.f32 0.0, %v7201
        %v7203 = vpop.f32.mrb[0].mxu0
        %7204 = vmatprep.mubr.bf16.mxu0 0
        %7205 = vmatmul.mubr.bf16.gmra.mrb[0].mxu0 %v6973
        %v7206 = vpop.f32.mrb[0].mxu0
        %v7207 = vadd.f32 0.0, %v7206
        %v7208 = vpop.f32.mrb[0].mxu0
        %v7209 = vpop.f32.mrb[0].mxu0
        %v7210 = vadd.f32 0.0, %v7209
        %v7211 = vpop.f32.mrb[0].mxu0
        %7212 = vmatprep.mubr.bf16.mxu0 0
        %7213 = vmatmul.mubr.bf16.gmra.mrb[0].mxu0 %v6975
        %v7214 = vpop.f32.mrb[0].mxu0
        %v7215 = vadd.f32 0.0, %v7214
        %v7216 = vpop.f32.mrb[0].mxu0
        %v7217 = vpop.f32.mrb[0].mxu0
        %v7218 = vadd.f32 0.0, %v7217
        %v7219 = vpop.f32.mrb[0].mxu0
        %7220 = vmatprep.mubr.bf16.mxu0 0
        %7221 = vmatmul.mubr.bf16.gmra.mrb[0].mxu0 %v6977
        %v7222 = vpop.f32.mrb[0].mxu0
        %v7223 = vadd.f32 0.0, %v7222
        %v7224 = vpop.f32.mrb[0].mxu0
        %v7225 = vpop.f32.mrb[0].mxu0
        %v7226 = vadd.f32 0.0, %v7225
        %v7227 = vpop.f32.mrb[0].mxu0
        %7228 = vmatprep.mubr.bf16.mxu0 0
        %7229 = vmatmul.mubr.bf16.gmra.mrb[0].mxu0 %v6979
        %v7230 = vpop.f32.mrb[0].mxu0
        %v7231 = vadd.f32 0.0, %v7230
        %v7232 = vpop.f32.mrb[0].mxu0
        %v7233 = vpop.f32.mrb[0].mxu0
        %v7234 = vadd.f32 0.0, %v7233
        %v7235 = vpop.f32.mrb[0].mxu0
        %7236 = vmatprep.mubr.bf16.mxu0 0
        %7237 = vmatmul.mubr.bf16.gmra.mrb[0].mxu0 %v6981
        %v7238 = vpop.f32.mrb[0].mxu0
        %v7239 = vadd.f32 0.0, %v7238
        %v7240 = vpop.f32.mrb[0].mxu0
        %v7241 = vpop.f32.mrb[0].mxu0
        %v7242 = vadd.f32 0.0, %v7241
        %v7243 = vpop.f32.mrb[0].mxu0
        %7244 = vmatprep.mubr.bf16.mxu0 0
        %7245 = vmatmul.mubr.bf16.gmra.mrb[0].mxu0 %v6983
        %v7246 = vpop.f32.mrb[0].mxu0
        %v7247 = vadd.f32 0.0, %v7246
        %v7248 = vpop.f32.mrb[0].mxu0
        %v7249 = vpop.f32.mrb[0].mxu0
        %v7250 = vadd.f32 0.0, %v7249
        %v7251 = vpop.f32.mrb[0].mxu0
        %7252 = vmatprep.mubr.bf16.mxu0 0
        %7253 = vmatmul.mubr.bf16.gmra.mrb[0].mxu0 %v6985
        %v7254 = vpop.f32.mrb[0].mxu0
        %v7255 = vadd.f32 0.0, %v7254
        %v7256 = vpop.f32.mrb[0].mxu0
        %v7257 = vpop.f32.mrb[0].mxu0
        %v7258 = vadd.f32 0.0, %v7257
        %v7259 = vpop.f32.mrb[0].mxu0
        %7260 = vmatprep.mubr.bf16.mxu0 0
        %7261 = vmatmul.mubr.bf16.gmra.mrb[0].mxu0 %v6987
        %v7262 = vpop.f32.mrb[0].mxu0
        %v7263 = vadd.f32 0.0, %v7262
        %v7264 = vpop.f32.mrb[0].mxu0
        %v7265 = vpop.f32.mrb[0].mxu0
        %v7266 = vadd.f32 0.0, %v7265
        %v7267 = vpop.f32.mrb[0].mxu0
        %7268 = vmatprep.mubr.bf16.mxu0 0
        %7269 = vmatmul.mubr.bf16.gmra.mrb[0].mxu0 %v6989
        %v7270 = vpop.f32.mrb[0].mxu0
        %v7271 = vadd.f32 0.0, %v7270
        %v7272 = vpop.f32.mrb[0].mxu0
        %v7273 = vpop.f32.mrb[0].mxu0
        %v7274 = vadd.f32 0.0, %v7273
        %v7275 = vpop.f32.mrb[0].mxu0
        %7276 = vmatprep.mubr.bf16.mxu0 0
        %7277 = vmatmul.mubr.bf16.gmra.mrb[0].mxu0 %v6991
        %v7278 = vpop.f32.mrb[0].mxu0
        %v7279 = vadd.f32 0.0, %v7278
        %v7280 = vpop.f32.mrb[0].mxu0
        %v7281 = vpop.f32.mrb[0].mxu0
        %v7282 = vadd.f32 0.0, %v7281
        %v7283 = vpop.f32.mrb[0].mxu0
        %7284 = vdwg.mxu0
        %v7288 = vunpack.c.l.b16 %v5969
        %v7289 = vunpack.c.l.b16 %v5970
        %v7290 = vunpack.c.l.b16 %v5971
        %v7291 = vpack.c.b16 %v7289, %v7288
        %v7292 = vpack.c.b16 %v7290, %v7290
        %v7294 = vsel %vm2199, %v5906, 0
        %v7296 = vsel %vm2199, %v5908, 0
        %v7298 = vsel %vm2199, %v5910, 0
        %v7300 = vsel %vm2199, %v5912, 0
        %v7302 = vsel %vm2199, %v5914, 0
        %v7304 = vsel %vm2199, %v5916, 0
        %v7306 = vsel %vm2199, %v5918, 0
        %v7308 = vsel %vm2199, %v5920, 0
        %v7310 = vsel %vm2199, %v5922, 0
        %v7312 = vsel %vm2199, %v5924, 0
        %v7314 = vsel %vm2199, %v5926, 0
        %v7316 = vsel %vm2199, %v5928, 0
        %v7318 = vsel %vm2199, %v5930, 0
        %v7320 = vsel %vm2199, %v5932, 0
        %v7322 = vsel %vm2199, %v5934, 0
        %v7324 = vsel %vm2199, %v5936, 0
        %v7326 = vsel %vm2199, %v5938, 0
        %v7328 = vsel %vm2199, %v5940, 0
        %v7330 = vsel %vm2199, %v5942, 0
        %v7332 = vsel %vm2199, %v5944, 0
        %v7334 = vsel %vm2199, %v5946, 0
        %v7336 = vsel %vm2199, %v5948, 0
        %v7338 = vsel %vm2199, %v5950, 0
        %v7340 = vsel %vm2199, %v5952, 0
        %v7342 = vsel %vm2199, %v5954, 0
        %v7344 = vsel %vm2199, %v5956, 0
        %v7346 = vsel %vm2199, %v5958, 0
        %v7348 = vsel %vm2199, %v5960, 0
        %v7350 = vsel %vm2199, %v5962, 0
        %v7352 = vsel %vm2199, %v5964, 0
        %v7354 = vsel %vm2199, %v5966, 0
        %v7356 = vsel %vm2199, %v5968, 0
        %v7359 = vsel %vm2264, %v7292, 0
        %7361 = vmatprep.subr.bf16.mxu0 0
        %7362 = vmatpush1.bf16.msra.mxu0 %v7291
        %7363 = vmatprep.subr.bf16.mxu0 0
        %7364 = vmatpush1.bf16.msra.mxu0 %v7359
        %7365 = vmatprep.subr.bf16.mxu0 0
        %7366 = vmatpush1.bf16.msra.mxu0 0
        %7367 = vmatprep.subr.bf16.mxu0 0
        %7368 = vmatpush1.bf16.msra.mxu0 0
        %7369 = vmatprep.subr.bf16.mxu0 0
        %7370 = vmatpush1.bf16.msra.mxu0 0
        %7371 = vmatprep.subr.bf16.mxu0 0
        %7372 = vmatpush1.bf16.msra.mxu0 0
        %7373 = vmatprep.subr.bf16.mxu0 0
        %7374 = vmatpush1.bf16.msra.mxu0 0
        %7375 = vmatprep.subr.bf16.mxu0 0
        %7376 = vmatpush1.bf16.msra.mxu0 0
        %7377 = vmatprep.subr.bf16.mxu0 0
        %7378 = vmatpush1.bf16.msra.mxu0 0
        %7379 = vmatprep.subr.bf16.mxu0 0
        %7380 = vmatpush1.bf16.msra.mxu0 0
        %7381 = vmatprep.subr.bf16.mxu0 0
        %7382 = vmatpush1.bf16.msra.mxu0 0
        %7383 = vmatprep.subr.bf16.mxu0 0
        %7384 = vmatpush1.bf16.msra.mxu0 0
        %7385 = vmatprep.subr.bf16.mxu0 0
        %7386 = vmatpush1.bf16.msra.mxu0 0
        %7387 = vmatprep.subr.bf16.mxu0 0
        %7388 = vmatpush1.bf16.msra.mxu0 0
        %7389 = vmatprep.subr.bf16.mxu0 0
        %7390 = vmatpush1.bf16.msra.mxu0 0
        %7391 = vmatprep.subr.bf16.mxu0 0
        %7392 = vmatpush1.bf16.msra.mxu0 0
        %7393 = vmatprep.mubr.bf16.mxu0 0
        %7394 = vmatmul.mubr.bf16.gmra.mrb[0].mxu0 %v7294
        %v7395 = vpop.f32.mrb[0].mxu0
        %v7396 = vadd.f32 %v7031, %v7395
        %v7397 = vpop.f32.mrb[0].mxu0
        %v7398 = vpop.f32.mrb[0].mxu0
        %v7399 = vadd.f32 %v7034, %v7398
        %v7400 = vpop.f32.mrb[0].mxu0
        %7401 = vmatprep.mubr.bf16.mxu0 0
        %7402 = vmatmul.mubr.bf16.gmra.mrb[0].mxu0 %v7296
        %v7403 = vpop.f32.mrb[0].mxu0
        %v7404 = vadd.f32 %v7039, %v7403
        %v7405 = vpop.f32.mrb[0].mxu0
        %v7406 = vpop.f32.mrb[0].mxu0
        %v7407 = vadd.f32 %v7042, %v7406
        %v7408 = vpop.f32.mrb[0].mxu0
        %7409 = vmatprep.mubr.bf16.mxu0 0
        %7410 = vmatmul.mubr.bf16.gmra.mrb[0].mxu0 %v7298
        %v7411 = vpop.f32.mrb[0].mxu0
        %v7412 = vadd.f32 %v7047, %v7411
        %v7413 = vpop.f32.mrb[0].mxu0
        %v7414 = vpop.f32.mrb[0].mxu0
        %v7415 = vadd.f32 %v7050, %v7414
        %v7416 = vpop.f32.mrb[0].mxu0
        %7417 = vmatprep.mubr.bf16.mxu0 0
        %7418 = vmatmul.mubr.bf16.gmra.mrb[0].mxu0 %v7300
        %v7419 = vpop.f32.mrb[0].mxu0
        %v7420 = vadd.f32 %v7055, %v7419
        %v7421 = vpop.f32.mrb[0].mxu0
        %v7422 = vpop.f32.mrb[0].mxu0
        %v7423 = vadd.f32 %v7058, %v7422
        %v7424 = vpop.f32.mrb[0].mxu0
        %7425 = vmatprep.mubr.bf16.mxu0 0
        %7426 = vmatmul.mubr.bf16.gmra.mrb[0].mxu0 %v7302
        %v7427 = vpop.f32.mrb[0].mxu0
        %v7428 = vadd.f32 %v7063, %v7427
        %v7429 = vpop.f32.mrb[0].mxu0
        %v7430 = vpop.f32.mrb[0].mxu0
        %v7431 = vadd.f32 %v7066, %v7430
        %v7432 = vpop.f32.mrb[0].mxu0
        %7433 = vmatprep.mubr.bf16.mxu0 0
        %7434 = vmatmul.mubr.bf16.gmra.mrb[0].mxu0 %v7304
        %v7435 = vpop.f32.mrb[0].mxu0
        %v7436 = vadd.f32 %v7071, %v7435
        %v7437 = vpop.f32.mrb[0].mxu0
        %v7438 = vpop.f32.mrb[0].mxu0
        %v7439 = vadd.f32 %v7074, %v7438
        %v7440 = vpop.f32.mrb[0].mxu0
        %7441 = vmatprep.mubr.bf16.mxu0 0
        %7442 = vmatmul.mubr.bf16.gmra.mrb[0].mxu0 %v7306
        %v7443 = vpop.f32.mrb[0].mxu0
        %v7444 = vadd.f32 %v7079, %v7443
        %v7445 = vpop.f32.mrb[0].mxu0
        %v7446 = vpop.f32.mrb[0].mxu0
        %v7447 = vadd.f32 %v7082, %v7446
        %v7448 = vpop.f32.mrb[0].mxu0
        %7449 = vmatprep.mubr.bf16.mxu0 0
        %7450 = vmatmul.mubr.bf16.gmra.mrb[0].mxu0 %v7308
        %v7451 = vpop.f32.mrb[0].mxu0
        %v7452 = vadd.f32 %v7087, %v7451
        %v7453 = vpop.f32.mrb[0].mxu0
        %v7454 = vpop.f32.mrb[0].mxu0
        %v7455 = vadd.f32 %v7090, %v7454
        %v7456 = vpop.f32.mrb[0].mxu0
        %7457 = vmatprep.mubr.bf16.mxu0 0
        %7458 = vmatmul.mubr.bf16.gmra.mrb[0].mxu0 %v7310
        %v7459 = vpop.f32.mrb[0].mxu0
        %v7460 = vadd.f32 %v7095, %v7459
        %v7461 = vpop.f32.mrb[0].mxu0
        %v7462 = vpop.f32.mrb[0].mxu0
        %v7463 = vadd.f32 %v7098, %v7462
        %v7464 = vpop.f32.mrb[0].mxu0
        %7465 = vmatprep.mubr.bf16.mxu0 0
        %7466 = vmatmul.mubr.bf16.gmra.mrb[0].mxu0 %v7312
        %v7467 = vpop.f32.mrb[0].mxu0
        %v7468 = vadd.f32 %v7103, %v7467
        %v7469 = vpop.f32.mrb[0].mxu0
        %v7470 = vpop.f32.mrb[0].mxu0
        %v7471 = vadd.f32 %v7106, %v7470
        %v7472 = vpop.f32.mrb[0].mxu0
        %7473 = vmatprep.mubr.bf16.mxu0 0
        %7474 = vmatmul.mubr.bf16.gmra.mrb[0].mxu0 %v7314
        %v7475 = vpop.f32.mrb[0].mxu0
        %v7476 = vadd.f32 %v7111, %v7475
        %v7477 = vpop.f32.mrb[0].mxu0
        %v7478 = vpop.f32.mrb[0].mxu0
        %v7479 = vadd.f32 %v7114, %v7478
        %v7480 = vpop.f32.mrb[0].mxu0
        %7481 = vmatprep.mubr.bf16.mxu0 0
        %7482 = vmatmul.mubr.bf16.gmra.mrb[0].mxu0 %v7316
        %v7483 = vpop.f32.mrb[0].mxu0
        %v7484 = vadd.f32 %v7119, %v7483
        %v7485 = vpop.f32.mrb[0].mxu0
        %v7486 = vpop.f32.mrb[0].mxu0
        %v7487 = vadd.f32 %v7122, %v7486
        %v7488 = vpop.f32.mrb[0].mxu0
        %7489 = vmatprep.mubr.bf16.mxu0 0
        %7490 = vmatmul.mubr.bf16.gmra.mrb[0].mxu0 %v7318
        %v7491 = vpop.f32.mrb[0].mxu0
        %v7492 = vadd.f32 %v7127, %v7491
        %v7493 = vpop.f32.mrb[0].mxu0
        %v7494 = vpop.f32.mrb[0].mxu0
        %v7495 = vadd.f32 %v7130, %v7494
        %v7496 = vpop.f32.mrb[0].mxu0
        %7497 = vmatprep.mubr.bf16.mxu0 0
        %7498 = vmatmul.mubr.bf16.gmra.mrb[0].mxu0 %v7320
        %v7499 = vpop.f32.mrb[0].mxu0
        %v7500 = vadd.f32 %v7135, %v7499
        %v7501 = vpop.f32.mrb[0].mxu0
        %v7502 = vpop.f32.mrb[0].mxu0
        %v7503 = vadd.f32 %v7138, %v7502
        %v7504 = vpop.f32.mrb[0].mxu0
        %7505 = vmatprep.mubr.bf16.mxu0 0
        %7506 = vmatmul.mubr.bf16.gmra.mrb[0].mxu0 %v7322
        %v7507 = vpop.f32.mrb[0].mxu0
        %v7508 = vadd.f32 %v7143, %v7507
        %v7509 = vpop.f32.mrb[0].mxu0
        %v7510 = vpop.f32.mrb[0].mxu0
        %v7511 = vadd.f32 %v7146, %v7510
        %v7512 = vpop.f32.mrb[0].mxu0
        %7513 = vmatprep.mubr.bf16.mxu0 0
        %7514 = vmatmul.mubr.bf16.gmra.mrb[0].mxu0 %v7324
        %v7515 = vpop.f32.mrb[0].mxu0
        %v7516 = vadd.f32 %v7151, %v7515
        %v7517 = vpop.f32.mrb[0].mxu0
        %v7518 = vpop.f32.mrb[0].mxu0
        %v7519 = vadd.f32 %v7154, %v7518
        %v7520 = vpop.f32.mrb[0].mxu0
        %7521 = vmatprep.mubr.bf16.mxu0 0
        %7522 = vmatmul.mubr.bf16.gmra.mrb[0].mxu0 %v7326
        %v7523 = vpop.f32.mrb[0].mxu0
        %v7524 = vadd.f32 %v7159, %v7523
        %v7525 = vpop.f32.mrb[0].mxu0
        %v7526 = vpop.f32.mrb[0].mxu0
        %v7527 = vadd.f32 %v7162, %v7526
        %v7528 = vpop.f32.mrb[0].mxu0
        %7529 = vmatprep.mubr.bf16.mxu0 0
        %7530 = vmatmul.mubr.bf16.gmra.mrb[0].mxu0 %v7328
        %v7531 = vpop.f32.mrb[0].mxu0
        %v7532 = vadd.f32 %v7167, %v7531
        %v7533 = vpop.f32.mrb[0].mxu0
        %v7534 = vpop.f32.mrb[0].mxu0
        %v7535 = vadd.f32 %v7170, %v7534
        %v7536 = vpop.f32.mrb[0].mxu0
        %7537 = vmatprep.mubr.bf16.mxu0 0
        %7538 = vmatmul.mubr.bf16.gmra.mrb[0].mxu0 %v7330
        %v7539 = vpop.f32.mrb[0].mxu0
        %v7540 = vadd.f32 %v7175, %v7539
        %v7541 = vpop.f32.mrb[0].mxu0
        %v7542 = vpop.f32.mrb[0].mxu0
        %v7543 = vadd.f32 %v7178, %v7542
        %v7544 = vpop.f32.mrb[0].mxu0
        %7545 = vmatprep.mubr.bf16.mxu0 0
        %7546 = vmatmul.mubr.bf16.gmra.mrb[0].mxu0 %v7332
        %v7547 = vpop.f32.mrb[0].mxu0
        %v7548 = vadd.f32 %v7183, %v7547
        %v7549 = vpop.f32.mrb[0].mxu0
        %v7550 = vpop.f32.mrb[0].mxu0
        %v7551 = vadd.f32 %v7186, %v7550
        %v7552 = vpop.f32.mrb[0].mxu0
        %7553 = vmatprep.mubr.bf16.mxu0 0
        %7554 = vmatmul.mubr.bf16.gmra.mrb[0].mxu0 %v7334
        %v7555 = vpop.f32.mrb[0].mxu0
        %v7556 = vadd.f32 %v7191, %v7555
        %v7557 = vpop.f32.mrb[0].mxu0
        %v7558 = vpop.f32.mrb[0].mxu0
        %v7559 = vadd.f32 %v7194, %v7558
        %v7560 = vpop.f32.mrb[0].mxu0
        %7561 = vmatprep.mubr.bf16.mxu0 0
        %7562 = vmatmul.mubr.bf16.gmra.mrb[0].mxu0 %v7336
        %v7563 = vpop.f32.mrb[0].mxu0
        %v7564 = vadd.f32 %v7199, %v7563
        %v7565 = vpop.f32.mrb[0].mxu0
        %v7566 = vpop.f32.mrb[0].mxu0
        %v7567 = vadd.f32 %v7202, %v7566
        %v7568 = vpop.f32.mrb[0].mxu0
        %7569 = vmatprep.mubr.bf16.mxu0 0
        %7570 = vmatmul.mubr.bf16.gmra.mrb[0].mxu0 %v7338
        %v7571 = vpop.f32.mrb[0].mxu0
        %v7572 = vadd.f32 %v7207, %v7571
        %v7573 = vpop.f32.mrb[0].mxu0
        %v7574 = vpop.f32.mrb[0].mxu0
        %v7575 = vadd.f32 %v7210, %v7574
        %v7576 = vpop.f32.mrb[0].mxu0
        %7577 = vmatprep.mubr.bf16.mxu0 0
        %7578 = vmatmul.mubr.bf16.gmra.mrb[0].mxu0 %v7340
        %v7579 = vpop.f32.mrb[0].mxu0
        %v7580 = vadd.f32 %v7215, %v7579
        %v7581 = vpop.f32.mrb[0].mxu0
        %v7582 = vpop.f32.mrb[0].mxu0
        %v7583 = vadd.f32 %v7218, %v7582
        %v7584 = vpop.f32.mrb[0].mxu0
        %7585 = vmatprep.mubr.bf16.mxu0 0
        %7586 = vmatmul.mubr.bf16.gmra.mrb[0].mxu0 %v7342
        %v7587 = vpop.f32.mrb[0].mxu0
        %v7588 = vadd.f32 %v7223, %v7587
        %v7589 = vpop.f32.mrb[0].mxu0
        %v7590 = vpop.f32.mrb[0].mxu0
        %v7591 = vadd.f32 %v7226, %v7590
        %v7592 = vpop.f32.mrb[0].mxu0
        %7593 = vmatprep.mubr.bf16.mxu0 0
        %7594 = vmatmul.mubr.bf16.gmra.mrb[0].mxu0 %v7344
        %v7595 = vpop.f32.mrb[0].mxu0
        %v7596 = vadd.f32 %v7231, %v7595
        %v7597 = vpop.f32.mrb[0].mxu0
        %v7598 = vpop.f32.mrb[0].mxu0
        %v7599 = vadd.f32 %v7234, %v7598
        %v7600 = vpop.f32.mrb[0].mxu0
        %7601 = vmatprep.mubr.bf16.mxu0 0
        %7602 = vmatmul.mubr.bf16.gmra.mrb[0].mxu0 %v7346
        %v7603 = vpop.f32.mrb[0].mxu0
        %v7604 = vadd.f32 %v7239, %v7603
        %v7605 = vpop.f32.mrb[0].mxu0
        %v7606 = vpop.f32.mrb[0].mxu0
        %v7607 = vadd.f32 %v7242, %v7606
        %v7608 = vpop.f32.mrb[0].mxu0
        %7609 = vmatprep.mubr.bf16.mxu0 0
        %7610 = vmatmul.mubr.bf16.gmra.mrb[0].mxu0 %v7348
        %v7611 = vpop.f32.mrb[0].mxu0
        %v7612 = vadd.f32 %v7247, %v7611
        %v7613 = vpop.f32.mrb[0].mxu0
        %v7614 = vpop.f32.mrb[0].mxu0
        %v7615 = vadd.f32 %v7250, %v7614
        %v7616 = vpop.f32.mrb[0].mxu0
        %7617 = vmatprep.mubr.bf16.mxu0 0
        %7618 = vmatmul.mubr.bf16.gmra.mrb[0].mxu0 %v7350
        %v7619 = vpop.f32.mrb[0].mxu0
        %v7620 = vadd.f32 %v7255, %v7619
        %v7621 = vpop.f32.mrb[0].mxu0
        %v7622 = vpop.f32.mrb[0].mxu0
        %v7623 = vadd.f32 %v7258, %v7622
        %v7624 = vpop.f32.mrb[0].mxu0
        %7625 = vmatprep.mubr.bf16.mxu0 0
        %7626 = vmatmul.mubr.bf16.gmra.mrb[0].mxu0 %v7352
        %v7627 = vpop.f32.mrb[0].mxu0
        %v7628 = vadd.f32 %v7263, %v7627
        %v7629 = vpop.f32.mrb[0].mxu0
        %v7630 = vpop.f32.mrb[0].mxu0
        %v7631 = vadd.f32 %v7266, %v7630
        %v7632 = vpop.f32.mrb[0].mxu0
        %7633 = vmatprep.mubr.bf16.mxu0 0
        %7634 = vmatmul.mubr.bf16.gmra.mrb[0].mxu0 %v7354
        %v7635 = vpop.f32.mrb[0].mxu0
        %v7636 = vadd.f32 %v7271, %v7635
        %v7637 = vpop.f32.mrb[0].mxu0
        %v7638 = vpop.f32.mrb[0].mxu0
        %v7639 = vadd.f32 %v7274, %v7638
        %v7640 = vpop.f32.mrb[0].mxu0
        %7641 = vmatprep.mubr.bf16.mxu0 0
        %7642 = vmatmul.mubr.bf16.gmra.mrb[0].mxu0 %v7356
        %v7643 = vpop.f32.mrb[0].mxu0
        %v7644 = vadd.f32 %v7279, %v7643
        %v7645 = vpop.f32.mrb[0].mxu0
        %v7646 = vpop.f32.mrb[0].mxu0
        %v7647 = vadd.f32 %v7282, %v7646
        %v7648 = vpop.f32.mrb[0].mxu0
        %7649 = vdwg.mxu0
        %s7650 = scalar_lea.vmem %s280, 360
        %v7651 = vld [vmem:[%s7650] sm:$0xf]
        %v7652 = vld [vmem:[%s7650 + $0x4] sm:$0xf]
        %v7653 = vld [vmem:[%s7650 + $0x8] sm:$0xf]
        %v7654 = vld [vmem:[%s7650 + $0xc] sm:$0xf]
        %v7655 = vld [vmem:[%s7650 + $0x10] sm:$0x1]
        %v7656 = vld [vmem:[%s7650 + $0x14] sm:$0xf]
        %v7657 = vld [vmem:[%s7650 + $0x18] sm:$0xf]
        %v7658 = vld [vmem:[%s7650 + $0x1c] sm:$0xf]
        %v7659 = vld [vmem:[%s7650 + $0x20] sm:$0xf]
        %v7660 = vld [vmem:[%s7650 + $0x24] sm:$0x1]
        %v7661 = vld [vmem:[%s7650 + $0x28] sm:$0xf]
        %v7662 = vld [vmem:[%s7650 + $0x2c] sm:$0xf]
        %v7663 = vld [vmem:[%s7650 + $0x30] sm:$0xf]
        %v7664 = vld [vmem:[%s7650 + $0x34] sm:$0xf]
        %v7665 = vld [vmem:[%s7650 + $0x38] sm:$0x1]
        %v7666 = vld [vmem:[%s7650 + $0x3c] sm:$0xf]
        %v7667 = vld [vmem:[%s7650 + $0x40] sm:$0xf]
        %v7668 = vld [vmem:[%s7650 + $0x44] sm:$0xf]
        %v7669 = vld [vmem:[%s7650 + $0x48] sm:$0xf]
        %v7670 = vld [vmem:[%s7650 + $0x4c] sm:$0x1]
        %v7671 = vld [vmem:[%s7650 + $0x50] sm:$0xf]
        %v7672 = vld [vmem:[%s7650 + $0x54] sm:$0xf]
        %v7673 = vld [vmem:[%s7650 + $0x58] sm:$0xf]
        %v7674 = vld [vmem:[%s7650 + $0x5c] sm:$0xf]
        %v7675 = vld [vmem:[%s7650 + $0x60] sm:$0x1]
        %v7676 = vld [vmem:[%s7650 + $0x64] sm:$0xf]
        %v7677 = vld [vmem:[%s7650 + $0x68] sm:$0xf]
        %v7678 = vld [vmem:[%s7650 + $0x6c] sm:$0xf]
        %v7679 = vld [vmem:[%s7650 + $0x70] sm:$0xf]
        %v7680 = vld [vmem:[%s7650 + $0x74] sm:$0x1]
        %v7681 = vld [vmem:[%s7650 + $0x78] sm:$0xf]
        %v7682 = vld [vmem:[%s7650 + $0x7c] sm:$0xf]
        %v7683 = vld [vmem:[%s7650 + $0x80] sm:$0xf]
        %v7684 = vld [vmem:[%s7650 + $0x84] sm:$0xf]
        %v7685 = vld [vmem:[%s7650 + $0x88] sm:$0x1]
        %v7686 = vld [vmem:[%s7650 + $0x8c] sm:$0xf]
        %v7687 = vld [vmem:[%s7650 + $0x90] sm:$0xf]
        %v7688 = vld [vmem:[%s7650 + $0x94] sm:$0xf]
        %v7689 = vld [vmem:[%s7650 + $0x98] sm:$0xf]
        %v7690 = vld [vmem:[%s7650 + $0x9c] sm:$0x1]
        %v7691 = vld [vmem:[%s7650 + $0xa0] sm:$0xf]
        %v7692 = vld [vmem:[%s7650 + $0xa4] sm:$0xf]
        %v7693 = vld [vmem:[%s7650 + $0xa8] sm:$0xf]
        %v7694 = vld [vmem:[%s7650 + $0xac] sm:$0xf]
        %v7695 = vld [vmem:[%s7650 + $0xb0] sm:$0x1]
        %v7696 = vld [vmem:[%s7650 + $0xb4] sm:$0xf]
        %v7697 = vld [vmem:[%s7650 + $0xb8] sm:$0xf]
        %v7698 = vld [vmem:[%s7650 + $0xbc] sm:$0xf]
        %v7699 = vld [vmem:[%s7650 + $0xc0] sm:$0xf]
        %v7700 = vld [vmem:[%s7650 + $0xc4] sm:$0x1]
        %v7701 = vld [vmem:[%s7650 + $0xc8] sm:$0xf]
        %v7702 = vld [vmem:[%s7650 + $0xcc] sm:$0xf]
        %v7703 = vld [vmem:[%s7650 + $0xd0] sm:$0xf]
        %v7704 = vld [vmem:[%s7650 + $0xd4] sm:$0xf]
        %v7705 = vld [vmem:[%s7650 + $0xd8] sm:$0x1]
        %v7706 = vld [vmem:[%s7650 + $0xdc] sm:$0xf]
        %v7707 = vld [vmem:[%s7650 + $0xe0] sm:$0xf]
        %v7708 = vld [vmem:[%s7650 + $0xe4] sm:$0xf]
        %v7709 = vld [vmem:[%s7650 + $0xe8] sm:$0xf]
        %v7710 = vld [vmem:[%s7650 + $0xec] sm:$0x1]
        %v7711 = vld [vmem:[%s7650 + $0xf0] sm:$0xf]
        %v7712 = vld [vmem:[%s7650 + $0xf4] sm:$0xf]
        %v7713 = vld [vmem:[%s7650 + $0xf8] sm:$0xf]
        %v7714 = vld [vmem:[%s7650 + $0xfc] sm:$0xf]
        %v7715 = vld [vmem:[%s7650 + $0x100] sm:$0x1]
        %v7716 = vld [vmem:[%s7650 + $0x104] sm:$0xf]
        %v7717 = vld [vmem:[%s7650 + $0x108] sm:$0xf]
        %v7718 = vld [vmem:[%s7650 + $0x10c] sm:$0xf]
        %v7719 = vld [vmem:[%s7650 + $0x110] sm:$0xf]
        %v7720 = vld [vmem:[%s7650 + $0x114] sm:$0x1]
        %v7721 = vld [vmem:[%s7650 + $0x118] sm:$0xf]
        %v7722 = vld [vmem:[%s7650 + $0x11c] sm:$0xf]
        %v7723 = vld [vmem:[%s7650 + $0x120] sm:$0xf]
        %v7724 = vld [vmem:[%s7650 + $0x124] sm:$0xf]
        %v7725 = vld [vmem:[%s7650 + $0x128] sm:$0x1]
        %v7726 = vld [vmem:[%s7650 + $0x12c] sm:$0xf]
        %v7727 = vld [vmem:[%s7650 + $0x130] sm:$0xf]
        %v7728 = vld [vmem:[%s7650 + $0x134] sm:$0xf]
        %v7729 = vld [vmem:[%s7650 + $0x138] sm:$0xf]
        %v7730 = vld [vmem:[%s7650 + $0x13c] sm:$0x1]
        %v7795 = vunpack.c.l.b16 %v7651
        %v7796 = vunpack.c.l.b16 %v7652
        %v7797 = vunpack.c.l.b16 %v7653
        %v7798 = vunpack.c.l.b16 %v7654
        %v7799 = vunpack.c.l.b16 %v7656
        %v7800 = vunpack.c.l.b16 %v7657
        %v7801 = vunpack.c.l.b16 %v7658
        %v7802 = vunpack.c.l.b16 %v7659
        %v7803 = vunpack.c.l.b16 %v7661
        %v7804 = vunpack.c.l.b16 %v7662
        %v7805 = vunpack.c.l.b16 %v7663
        %v7806 = vunpack.c.l.b16 %v7664
        %v7807 = vunpack.c.l.b16 %v7666
        %v7808 = vunpack.c.l.b16 %v7667
        %v7809 = vunpack.c.l.b16 %v7668
        %v7810 = vunpack.c.l.b16 %v7669
        %v7811 = vunpack.c.l.b16 %v7671
        %v7812 = vunpack.c.l.b16 %v7672
        %v7813 = vunpack.c.l.b16 %v7673
        %v7814 = vunpack.c.l.b16 %v7674
        %v7815 = vunpack.c.l.b16 %v7676
        %v7816 = vunpack.c.l.b16 %v7677
        %v7817 = vunpack.c.l.b16 %v7678
        %v7818 = vunpack.c.l.b16 %v7679
        %v7819 = vunpack.c.l.b16 %v7681
        %v7820 = vunpack.c.l.b16 %v7682
        %v7821 = vunpack.c.l.b16 %v7683
        %v7822 = vunpack.c.l.b16 %v7684
        %v7823 = vunpack.c.l.b16 %v7686
        %v7824 = vunpack.c.l.b16 %v7687
        %v7825 = vunpack.c.l.b16 %v7688
        %v7826 = vunpack.c.l.b16 %v7689
        %v7827 = vunpack.c.l.b16 %v7691
        %v7828 = vunpack.c.l.b16 %v7692
        %v7829 = vunpack.c.l.b16 %v7693
        %v7830 = vunpack.c.l.b16 %v7694
        %v7831 = vunpack.c.l.b16 %v7696
        %v7832 = vunpack.c.l.b16 %v7697
        %v7833 = vunpack.c.l.b16 %v7698
        %v7834 = vunpack.c.l.b16 %v7699
        %v7835 = vunpack.c.l.b16 %v7701
        %v7836 = vunpack.c.l.b16 %v7702
        %v7837 = vunpack.c.l.b16 %v7703
        %v7838 = vunpack.c.l.b16 %v7704
        %v7839 = vunpack.c.l.b16 %v7706
        %v7840 = vunpack.c.l.b16 %v7707
        %v7841 = vunpack.c.l.b16 %v7708
        %v7842 = vunpack.c.l.b16 %v7709
        %v7843 = vunpack.c.l.b16 %v7711
        %v7844 = vunpack.c.l.b16 %v7712
        %v7845 = vunpack.c.l.b16 %v7713
        %v7846 = vunpack.c.l.b16 %v7714
        %v7847 = vunpack.c.l.b16 %v7716
        %v7848 = vunpack.c.l.b16 %v7717
        %v7849 = vunpack.c.l.b16 %v7718
        %v7850 = vunpack.c.l.b16 %v7719
        %v7851 = vunpack.c.l.b16 %v7721
        %v7852 = vunpack.c.l.b16 %v7722
        %v7853 = vunpack.c.l.b16 %v7723
        %v7854 = vunpack.c.l.b16 %v7724
        %v7855 = vunpack.c.l.b16 %v7726
        %v7856 = vunpack.c.l.b16 %v7727
        %v7857 = vunpack.c.l.b16 %v7728
        %v7858 = vunpack.c.l.b16 %v7729
        %v7859 = vpack.c.b16 %v7796, %v7795
        %v7860 = vpack.c.b16 %v7798, %v7797
        %v7861 = vpack.c.b16 %v7800, %v7799
        %v7862 = vpack.c.b16 %v7802, %v7801
        %v7863 = vpack.c.b16 %v7804, %v7803
        %v7864 = vpack.c.b16 %v7806, %v7805
        %v7865 = vpack.c.b16 %v7808, %v7807
        %v7866 = vpack.c.b16 %v7810, %v7809
        %v7867 = vpack.c.b16 %v7812, %v7811
        %v7868 = vpack.c.b16 %v7814, %v7813
        %v7869 = vpack.c.b16 %v7816, %v7815
        %v7870 = vpack.c.b16 %v7818, %v7817
        %v7871 = vpack.c.b16 %v7820, %v7819
        %v7872 = vpack.c.b16 %v7822, %v7821
        %v7873 = vpack.c.b16 %v7824, %v7823
        %v7874 = vpack.c.b16 %v7826, %v7825
        %v7875 = vpack.c.b16 %v7828, %v7827
        %v7876 = vpack.c.b16 %v7830, %v7829
        %v7877 = vpack.c.b16 %v7832, %v7831
        %v7878 = vpack.c.b16 %v7834, %v7833
        %v7879 = vpack.c.b16 %v7836, %v7835
        %v7880 = vpack.c.b16 %v7838, %v7837
        %v7881 = vpack.c.b16 %v7840, %v7839
        %v7882 = vpack.c.b16 %v7842, %v7841
        %v7883 = vpack.c.b16 %v7844, %v7843
        %v7884 = vpack.c.b16 %v7846, %v7845
        %v7885 = vpack.c.b16 %v7848, %v7847
        %v7886 = vpack.c.b16 %v7850, %v7849
        %v7887 = vpack.c.b16 %v7852, %v7851
        %v7888 = vpack.c.b16 %v7854, %v7853
        %v7889 = vpack.c.b16 %v7856, %v7855
        %v7890 = vpack.c.b16 %v7858, %v7857
        %v7907 = vunpack.c.l.b16 %v7655
        %v7908 = vunpack.c.l.b16 %v7660
        %v7909 = vunpack.c.l.b16 %v7665
        %v7910 = vunpack.c.l.b16 %v7670
        %v7911 = vunpack.c.l.b16 %v7675
        %v7912 = vunpack.c.l.b16 %v7680
        %v7913 = vunpack.c.l.b16 %v7685
        %v7914 = vunpack.c.l.b16 %v7690
        %v7915 = vunpack.c.l.b16 %v7695
        %v7916 = vunpack.c.l.b16 %v7700
        %v7917 = vunpack.c.l.b16 %v7705
        %v7918 = vunpack.c.l.b16 %v7710
        %v7919 = vunpack.c.l.b16 %v7715
        %v7920 = vunpack.c.l.b16 %v7720
        %v7921 = vunpack.c.l.b16 %v7725
        %v7922 = vunpack.c.l.b16 %v7730
        %v7923 = vpack.c.b16 %v7907, %v7907
        %v7924 = vpack.c.b16 %v7908, %v7908
        %v7925 = vpack.c.b16 %v7909, %v7909
        %v7926 = vpack.c.b16 %v7910, %v7910
        %v7927 = vpack.c.b16 %v7911, %v7911
        %v7928 = vpack.c.b16 %v7912, %v7912
        %v7929 = vpack.c.b16 %v7913, %v7913
        %v7930 = vpack.c.b16 %v7914, %v7914
        %v7931 = vpack.c.b16 %v7915, %v7915
        %v7932 = vpack.c.b16 %v7916, %v7916
        %v7933 = vpack.c.b16 %v7917, %v7917
        %v7934 = vpack.c.b16 %v7918, %v7918
        %v7935 = vpack.c.b16 %v7919, %v7919
        %v7936 = vpack.c.b16 %v7920, %v7920
        %v7937 = vpack.c.b16 %v7921, %v7921
        %v7938 = vpack.c.b16 %v7922, %v7922
        %v7940 = vshrl.u32 %v7859, 16
        %v7942 = vshll.u32 %v7859, 16
        %v7944 = vrot.slane %v7942, 1
        %v7945 = vor.u32 %v7940, %v7944
        %v7947 = vshll.u32 %v7860, 16
        %v7949 = vrot.slane %v7947, 1
        %v7950 = vsel %vm578, %v7945, %v7949
        %v7951 = vshrl.u32 %v7860, 16
        %v7953 = vor.u32 %v7951, %v7949
        %v7955 = vshll.u32 %v7923, 16
        %v7957 = vrot.slane %v7955, 1
        %v7958 = vsel %vm578, %v7953, %v7957
        %v7960 = vshrl.u32 %v7861, 16
        %v7962 = vshll.u32 %v7861, 16
        %v7964 = vrot.slane %v7962, 1
        %v7965 = vor.u32 %v7960, %v7964
        %v7967 = vshll.u32 %v7862, 16
        %v7969 = vrot.slane %v7967, 1
        %v7970 = vsel %vm578, %v7965, %v7969
        %v7971 = vshrl.u32 %v7862, 16
        %v7973 = vor.u32 %v7971, %v7969
        %v7975 = vshll.u32 %v7924, 16
        %v7977 = vrot.slane %v7975, 1
        %v7978 = vsel %vm578, %v7973, %v7977
        %v7980 = vshrl.u32 %v7863, 16
        %v7982 = vshll.u32 %v7863, 16
        %v7984 = vrot.slane %v7982, 1
        %v7985 = vor.u32 %v7980, %v7984
        %v7987 = vshll.u32 %v7864, 16
        %v7989 = vrot.slane %v7987, 1
        %v7990 = vsel %vm578, %v7985, %v7989
        %v7991 = vshrl.u32 %v7864, 16
        %v7993 = vor.u32 %v7991, %v7989
        %v7995 = vshll.u32 %v7925, 16
        %v7997 = vrot.slane %v7995, 1
        %v7998 = vsel %vm578, %v7993, %v7997
        %v8000 = vshrl.u32 %v7865, 16
        %v8002 = vshll.u32 %v7865, 16
        %v8004 = vrot.slane %v8002, 1
        %v8005 = vor.u32 %v8000, %v8004
        %v8007 = vshll.u32 %v7866, 16
        %v8009 = vrot.slane %v8007, 1
        %v8010 = vsel %vm578, %v8005, %v8009
        %v8011 = vshrl.u32 %v7866, 16
        %v8013 = vor.u32 %v8011, %v8009
        %v8015 = vshll.u32 %v7926, 16
        %v8017 = vrot.slane %v8015, 1
        %v8018 = vsel %vm578, %v8013, %v8017
        %v8020 = vshrl.u32 %v7867, 16
        %v8022 = vshll.u32 %v7867, 16
        %v8024 = vrot.slane %v8022, 1
        %v8025 = vor.u32 %v8020, %v8024
        %v8027 = vshll.u32 %v7868, 16
        %v8029 = vrot.slane %v8027, 1
        %v8030 = vsel %vm578, %v8025, %v8029
        %v8031 = vshrl.u32 %v7868, 16
        %v8033 = vor.u32 %v8031, %v8029
        %v8035 = vshll.u32 %v7927, 16
        %v8037 = vrot.slane %v8035, 1
        %v8038 = vsel %vm578, %v8033, %v8037
        %v8040 = vshrl.u32 %v7869, 16
        %v8042 = vshll.u32 %v7869, 16
        %v8044 = vrot.slane %v8042, 1
        %v8045 = vor.u32 %v8040, %v8044
        %v8047 = vshll.u32 %v7870, 16
        %v8049 = vrot.slane %v8047, 1
        %v8050 = vsel %vm578, %v8045, %v8049
        %v8051 = vshrl.u32 %v7870, 16
        %v8053 = vor.u32 %v8051, %v8049
        %v8055 = vshll.u32 %v7928, 16
        %v8057 = vrot.slane %v8055, 1
        %v8058 = vsel %vm578, %v8053, %v8057
        %v8060 = vshrl.u32 %v7871, 16
        %v8062 = vshll.u32 %v7871, 16
        %v8064 = vrot.slane %v8062, 1
        %v8065 = vor.u32 %v8060, %v8064
        %v8067 = vshll.u32 %v7872, 16
        %v8069 = vrot.slane %v8067, 1
        %v8070 = vsel %vm578, %v8065, %v8069
        %v8071 = vshrl.u32 %v7872, 16
        %v8073 = vor.u32 %v8071, %v8069
        %v8075 = vshll.u32 %v7929, 16
        %v8077 = vrot.slane %v8075, 1
        %v8078 = vsel %vm578, %v8073, %v8077
        %v8080 = vshrl.u32 %v7873, 16
        %v8082 = vshll.u32 %v7873, 16
        %v8084 = vrot.slane %v8082, 1
        %v8085 = vor.u32 %v8080, %v8084
        %v8087 = vshll.u32 %v7874, 16
        %v8089 = vrot.slane %v8087, 1
        %v8090 = vsel %vm578, %v8085, %v8089
        %v8091 = vshrl.u32 %v7874, 16
        %v8093 = vor.u32 %v8091, %v8089
        %v8095 = vshll.u32 %v7930, 16
        %v8097 = vrot.slane %v8095, 1
        %v8098 = vsel %vm578, %v8093, %v8097
        %v8100 = vshrl.u32 %v7875, 16
        %v8102 = vshll.u32 %v7875, 16
        %v8104 = vrot.slane %v8102, 1
        %v8105 = vor.u32 %v8100, %v8104
        %v8107 = vshll.u32 %v7876, 16
        %v8109 = vrot.slane %v8107, 1
        %v8110 = vsel %vm578, %v8105, %v8109
        %v8111 = vshrl.u32 %v7876, 16
        %v8113 = vor.u32 %v8111, %v8109
        %v8115 = vshll.u32 %v7931, 16
        %v8117 = vrot.slane %v8115, 1
        %v8118 = vsel %vm578, %v8113, %v8117
        %v8120 = vshrl.u32 %v7877, 16
        %v8122 = vshll.u32 %v7877, 16
        %v8124 = vrot.slane %v8122, 1
        %v8125 = vor.u32 %v8120, %v8124
        %v8127 = vshll.u32 %v7878, 16
        %v8129 = vrot.slane %v8127, 1
        %v8130 = vsel %vm578, %v8125, %v8129
        %v8131 = vshrl.u32 %v7878, 16
        %v8133 = vor.u32 %v8131, %v8129
        %v8135 = vshll.u32 %v7932, 16
        %v8137 = vrot.slane %v8135, 1
        %v8138 = vsel %vm578, %v8133, %v8137
        %v8140 = vshrl.u32 %v7879, 16
        %v8142 = vshll.u32 %v7879, 16
        %v8144 = vrot.slane %v8142, 1
        %v8145 = vor.u32 %v8140, %v8144
        %v8147 = vshll.u32 %v7880, 16
        %v8149 = vrot.slane %v8147, 1
        %v8150 = vsel %vm578, %v8145, %v8149
        %v8151 = vshrl.u32 %v7880, 16
        %v8153 = vor.u32 %v8151, %v8149
        %v8155 = vshll.u32 %v7933, 16
        %v8157 = vrot.slane %v8155, 1
        %v8158 = vsel %vm578, %v8153, %v8157
        %v8160 = vshrl.u32 %v7881, 16
        %v8162 = vshll.u32 %v7881, 16
        %v8164 = vrot.slane %v8162, 1
        %v8165 = vor.u32 %v8160, %v8164
        %v8167 = vshll.u32 %v7882, 16
        %v8169 = vrot.slane %v8167, 1
        %v8170 = vsel %vm578, %v8165, %v8169
        %v8171 = vshrl.u32 %v7882, 16
        %v8173 = vor.u32 %v8171, %v8169
        %v8175 = vshll.u32 %v7934, 16
        %v8177 = vrot.slane %v8175, 1
        %v8178 = vsel %vm578, %v8173, %v8177
        %v8180 = vshrl.u32 %v7883, 16
        %v8182 = vshll.u32 %v7883, 16
        %v8184 = vrot.slane %v8182, 1
        %v8185 = vor.u32 %v8180, %v8184
        %v8187 = vshll.u32 %v7884, 16
        %v8189 = vrot.slane %v8187, 1
        %v8190 = vsel %vm578, %v8185, %v8189
        %v8191 = vshrl.u32 %v7884, 16
        %v8193 = vor.u32 %v8191, %v8189
        %v8195 = vshll.u32 %v7935, 16
        %v8197 = vrot.slane %v8195, 1
        %v8198 = vsel %vm578, %v8193, %v8197
        %v8200 = vshrl.u32 %v7885, 16
        %v8202 = vshll.u32 %v7885, 16
        %v8204 = vrot.slane %v8202, 1
        %v8205 = vor.u32 %v8200, %v8204
        %v8207 = vshll.u32 %v7886, 16
        %v8209 = vrot.slane %v8207, 1
        %v8210 = vsel %vm578, %v8205, %v8209
        %v8211 = vshrl.u32 %v7886, 16
        %v8213 = vor.u32 %v8211, %v8209
        %v8215 = vshll.u32 %v7936, 16
        %v8217 = vrot.slane %v8215, 1
        %v8218 = vsel %vm578, %v8213, %v8217
        %v8220 = vshrl.u32 %v7887, 16
        %v8222 = vshll.u32 %v7887, 16
        %v8224 = vrot.slane %v8222, 1
        %v8225 = vor.u32 %v8220, %v8224
        %v8227 = vshll.u32 %v7888, 16
        %v8229 = vrot.slane %v8227, 1
        %v8230 = vsel %vm578, %v8225, %v8229
        %v8231 = vshrl.u32 %v7888, 16
        %v8233 = vor.u32 %v8231, %v8229
        %v8235 = vshll.u32 %v7937, 16
        %v8237 = vrot.slane %v8235, 1
        %v8238 = vsel %vm578, %v8233, %v8237
        %v8240 = vshrl.u32 %v7889, 16
        %v8242 = vshll.u32 %v7889, 16
        %v8244 = vrot.slane %v8242, 1
        %v8245 = vor.u32 %v8240, %v8244
        %v8247 = vshll.u32 %v7890, 16
        %v8249 = vrot.slane %v8247, 1
        %v8250 = vsel %vm578, %v8245, %v8249
        %v8251 = vshrl.u32 %v7890, 16
        %v8253 = vor.u32 %v8251, %v8249
        %v8255 = vshll.u32 %v7938, 16
        %v8257 = vrot.slane %v8255, 1
        %v8258 = vsel %vm578, %v8253, %v8257
        %8259 = vrot.lane.b32.xlu0 %v7950, 8
        %v8260 = vpop.permute.xlu0 %8259
        %8261 = vrot.lane.b32.xlu0 %v7958, 8
        %v8262 = vpop.permute.xlu0 %8261
        %8263 = vrot.lane.b32.xlu0 %v7970, 8
        %v8264 = vpop.permute.xlu0 %8263
        %8265 = vrot.lane.b32.xlu0 %v7978, 8
        %v8266 = vpop.permute.xlu0 %8265
        %8267 = vrot.lane.b32.xlu0 %v7990, 8
        %v8268 = vpop.permute.xlu0 %8267
        %8269 = vrot.lane.b32.xlu0 %v7998, 8
        %v8270 = vpop.permute.xlu0 %8269
        %8271 = vrot.lane.b32.xlu0 %v8010, 8
        %v8272 = vpop.permute.xlu0 %8271
        %8273 = vrot.lane.b32.xlu0 %v8018, 8
        %v8274 = vpop.permute.xlu0 %8273
        %8275 = vrot.lane.b32.xlu0 %v8030, 8
        %v8276 = vpop.permute.xlu0 %8275
        %8277 = vrot.lane.b32.xlu0 %v8038, 8
        %v8278 = vpop.permute.xlu0 %8277
        %8279 = vrot.lane.b32.xlu0 %v8050, 8
        %v8280 = vpop.permute.xlu0 %8279
        %8281 = vrot.lane.b32.xlu0 %v8058, 8
        %v8282 = vpop.permute.xlu0 %8281
        %8283 = vrot.lane.b32.xlu0 %v8070, 8
        %v8284 = vpop.permute.xlu0 %8283
        %8285 = vrot.lane.b32.xlu0 %v8078, 8
        %v8286 = vpop.permute.xlu0 %8285
        %8287 = vrot.lane.b32.xlu0 %v8090, 8
        %v8288 = vpop.permute.xlu0 %8287
        %8289 = vrot.lane.b32.xlu0 %v8098, 8
        %v8290 = vpop.permute.xlu0 %8289
        %8291 = vrot.lane.b32.xlu0 %v8110, 8
        %v8292 = vpop.permute.xlu0 %8291
        %8293 = vrot.lane.b32.xlu0 %v8118, 8
        %v8294 = vpop.permute.xlu0 %8293
        %8295 = vrot.lane.b32.xlu0 %v8130, 8
        %v8296 = vpop.permute.xlu0 %8295
        %8297 = vrot.lane.b32.xlu0 %v8138, 8
        %v8298 = vpop.permute.xlu0 %8297
        %8299 = vrot.lane.b32.xlu0 %v8150, 8
        %v8300 = vpop.permute.xlu0 %8299
        %8301 = vrot.lane.b32.xlu0 %v8158, 8
        %v8302 = vpop.permute.xlu0 %8301
        %8303 = vrot.lane.b32.xlu0 %v8170, 8
        %v8304 = vpop.permute.xlu0 %8303
        %8305 = vrot.lane.b32.xlu0 %v8178, 8
        %v8306 = vpop.permute.xlu0 %8305
        %8307 = vrot.lane.b32.xlu0 %v8190, 8
        %v8308 = vpop.permute.xlu0 %8307
        %8309 = vrot.lane.b32.xlu0 %v8198, 8
        %v8310 = vpop.permute.xlu0 %8309
        %8311 = vrot.lane.b32.xlu0 %v8210, 8
        %v8312 = vpop.permute.xlu0 %8311
        %8313 = vrot.lane.b32.xlu0 %v8218, 8
        %v8314 = vpop.permute.xlu0 %8313
        %8315 = vrot.lane.b32.xlu0 %v8230, 8
        %v8316 = vpop.permute.xlu0 %8315
        %8317 = vrot.lane.b32.xlu0 %v8238, 8
        %v8318 = vpop.permute.xlu0 %8317
        %8319 = vrot.lane.b32.xlu0 %v8250, 8
        %v8320 = vpop.permute.xlu0 %8319
        %8321 = vrot.lane.b32.xlu0 %v8258, 8
        %v8322 = vpop.permute.xlu0 %8321
        %v8323 = vrot.slane %v7859, 1
        %v8324 = vrot.slane %v7860, 1
        %v8325 = vsel %vm963, %v8323, %v8324
        %v8326 = vrot.slane %v7923, 1
        %v8327 = vsel %vm963, %v8324, %v8326
        %v8328 = vrot.slane %v7861, 1
        %v8329 = vrot.slane %v7862, 1
        %v8330 = vsel %vm963, %v8328, %v8329
        %v8331 = vrot.slane %v7924, 1
        %v8332 = vsel %vm963, %v8329, %v8331
        %v8333 = vrot.slane %v7863, 1
        %v8334 = vrot.slane %v7864, 1
        %v8335 = vsel %vm963, %v8333, %v8334
        %v8336 = vrot.slane %v7925, 1
        %v8337 = vsel %vm963, %v8334, %v8336
        %v8338 = vrot.slane %v7865, 1
        %v8339 = vrot.slane %v7866, 1
        %v8340 = vsel %vm963, %v8338, %v8339
        %v8341 = vrot.slane %v7926, 1
        %v8342 = vsel %vm963, %v8339, %v8341
        %v8343 = vrot.slane %v7867, 1
        %v8344 = vrot.slane %v7868, 1
        %v8345 = vsel %vm963, %v8343, %v8344
        %v8346 = vrot.slane %v7927, 1
        %v8347 = vsel %vm963, %v8344, %v8346
        %v8348 = vrot.slane %v7869, 1
        %v8349 = vrot.slane %v7870, 1
        %v8350 = vsel %vm963, %v8348, %v8349
        %v8351 = vrot.slane %v7928, 1
        %v8352 = vsel %vm963, %v8349, %v8351
        %v8353 = vrot.slane %v7871, 1
        %v8354 = vrot.slane %v7872, 1
        %v8355 = vsel %vm963, %v8353, %v8354
        %v8356 = vrot.slane %v7929, 1
        %v8357 = vsel %vm963, %v8354, %v8356
        %v8358 = vrot.slane %v7873, 1
        %v8359 = vrot.slane %v7874, 1
        %v8360 = vsel %vm963, %v8358, %v8359
        %v8361 = vrot.slane %v7930, 1
        %v8362 = vsel %vm963, %v8359, %v8361
        %v8363 = vrot.slane %v7875, 1
        %v8364 = vrot.slane %v7876, 1
        %v8365 = vsel %vm963, %v8363, %v8364
        %v8366 = vrot.slane %v7931, 1
        %v8367 = vsel %vm963, %v8364, %v8366
        %v8368 = vrot.slane %v7877, 1
        %v8369 = vrot.slane %v7878, 1
        %v8370 = vsel %vm963, %v8368, %v8369
        %v8371 = vrot.slane %v7932, 1
        %v8372 = vsel %vm963, %v8369, %v8371
        %v8373 = vrot.slane %v7879, 1
        %v8374 = vrot.slane %v7880, 1
        %v8375 = vsel %vm963, %v8373, %v8374
        %v8376 = vrot.slane %v7933, 1
        %v8377 = vsel %vm963, %v8374, %v8376
        %v8378 = vrot.slane %v7881, 1
        %v8379 = vrot.slane %v7882, 1
        %v8380 = vsel %vm963, %v8378, %v8379
        %v8381 = vrot.slane %v7934, 1
        %v8382 = vsel %vm963, %v8379, %v8381
        %v8383 = vrot.slane %v7883, 1
        %v8384 = vrot.slane %v7884, 1
        %v8385 = vsel %vm963, %v8383, %v8384
        %v8386 = vrot.slane %v7935, 1
        %v8387 = vsel %vm963, %v8384, %v8386
        %v8388 = vrot.slane %v7885, 1
        %v8389 = vrot.slane %v7886, 1
        %v8390 = vsel %vm963, %v8388, %v8389
        %v8391 = vrot.slane %v7936, 1
        %v8392 = vsel %vm963, %v8389, %v8391
        %v8393 = vrot.slane %v7887, 1
        %v8394 = vrot.slane %v7888, 1
        %v8395 = vsel %vm963, %v8393, %v8394
        %v8396 = vrot.slane %v7937, 1
        %v8397 = vsel %vm963, %v8394, %v8396
        %v8398 = vrot.slane %v7889, 1
        %v8399 = vrot.slane %v7890, 1
        %v8400 = vsel %vm963, %v8398, %v8399
        %v8401 = vrot.slane %v7938, 1
        %v8402 = vsel %vm963, %v8399, %v8401
        %8403 = vrot.lane.b32.xlu0 %v8325, 16
        %v8404 = vpop.permute.xlu0 %8403
        %8405 = vrot.lane.b32.xlu0 %v8327, 16
        %v8406 = vpop.permute.xlu0 %8405
        %8407 = vrot.lane.b32.xlu0 %v8330, 16
        %v8408 = vpop.permute.xlu0 %8407
        %8409 = vrot.lane.b32.xlu0 %v8332, 16
        %v8410 = vpop.permute.xlu0 %8409
        %8411 = vrot.lane.b32.xlu0 %v8335, 16
        %v8412 = vpop.permute.xlu0 %8411
        %8413 = vrot.lane.b32.xlu0 %v8337, 16
        %v8414 = vpop.permute.xlu0 %8413
        %8415 = vrot.lane.b32.xlu0 %v8340, 16
        %v8416 = vpop.permute.xlu0 %8415
        %8417 = vrot.lane.b32.xlu0 %v8342, 16
        %v8418 = vpop.permute.xlu0 %8417
        %8419 = vrot.lane.b32.xlu0 %v8345, 16
        %v8420 = vpop.permute.xlu0 %8419
        %8421 = vrot.lane.b32.xlu0 %v8347, 16
        %v8422 = vpop.permute.xlu0 %8421
        %8423 = vrot.lane.b32.xlu0 %v8350, 16
        %v8424 = vpop.permute.xlu0 %8423
        %8425 = vrot.lane.b32.xlu0 %v8352, 16
        %v8426 = vpop.permute.xlu0 %8425
        %8427 = vrot.lane.b32.xlu0 %v8355, 16
        %v8428 = vpop.permute.xlu0 %8427
        %8429 = vrot.lane.b32.xlu0 %v8357, 16
        %v8430 = vpop.permute.xlu0 %8429
        %8431 = vrot.lane.b32.xlu0 %v8360, 16
        %v8432 = vpop.permute.xlu0 %8431
        %8433 = vrot.lane.b32.xlu0 %v8362, 16
        %v8434 = vpop.permute.xlu0 %8433
        %8435 = vrot.lane.b32.xlu0 %v8365, 16
        %v8436 = vpop.permute.xlu0 %8435
        %8437 = vrot.lane.b32.xlu0 %v8367, 16
        %v8438 = vpop.permute.xlu0 %8437
        %8439 = vrot.lane.b32.xlu0 %v8370, 16
        %v8440 = vpop.permute.xlu0 %8439
        %8441 = vrot.lane.b32.xlu0 %v8372, 16
        %v8442 = vpop.permute.xlu0 %8441
        %8443 = vrot.lane.b32.xlu0 %v8375, 16
        %v8444 = vpop.permute.xlu0 %8443
        %8445 = vrot.lane.b32.xlu0 %v8377, 16
        %v8446 = vpop.permute.xlu0 %8445
        %8447 = vrot.lane.b32.xlu0 %v8380, 16
        %v8448 = vpop.permute.xlu0 %8447
        %8449 = vrot.lane.b32.xlu0 %v8382, 16
        %v8450 = vpop.permute.xlu0 %8449
        %8451 = vrot.lane.b32.xlu0 %v8385, 16
        %v8452 = vpop.permute.xlu0 %8451
        %8453 = vrot.lane.b32.xlu0 %v8387, 16
        %v8454 = vpop.permute.xlu0 %8453
        %8455 = vrot.lane.b32.xlu0 %v8390, 16
        %v8456 = vpop.permute.xlu0 %8455
        %8457 = vrot.lane.b32.xlu0 %v8392, 16
        %v8458 = vpop.permute.xlu0 %8457
        %8459 = vrot.lane.b32.xlu0 %v8395, 16
        %v8460 = vpop.permute.xlu0 %8459
        %8461 = vrot.lane.b32.xlu0 %v8397, 16
        %v8462 = vpop.permute.xlu0 %8461
        %8463 = vrot.lane.b32.xlu0 %v8400, 16
        %v8464 = vpop.permute.xlu0 %8463
        %8465 = vrot.lane.b32.xlu0 %v8402, 16
        %v8466 = vpop.permute.xlu0 %8465
        %v8468 = vsel %vm1108, %v7859, %v8260
        %v8470 = vsel %vm1108, %v7860, %v8262
        %v8472 = vsel %vm1108, %v7861, %v8264
        %v8474 = vsel %vm1108, %v7862, %v8266
        %v8476 = vsel %vm1108, %v7863, %v8268
        %v8478 = vsel %vm1108, %v7864, %v8270
        %v8480 = vsel %vm1108, %v7865, %v8272
        %v8482 = vsel %vm1108, %v7866, %v8274
        %v8484 = vsel %vm1108, %v7867, %v8276
        %v8486 = vsel %vm1108, %v7868, %v8278
        %v8488 = vsel %vm1108, %v7869, %v8280
        %v8490 = vsel %vm1108, %v7870, %v8282
        %v8492 = vsel %vm1108, %v7871, %v8284
        %v8494 = vsel %vm1108, %v7872, %v8286
        %v8496 = vsel %vm1108, %v7873, %v8288
        %v8498 = vsel %vm1108, %v7874, %v8290
        %v8500 = vsel %vm1108, %v7875, %v8292
        %v8502 = vsel %vm1108, %v7876, %v8294
        %v8504 = vsel %vm1108, %v7877, %v8296
        %v8506 = vsel %vm1108, %v7878, %v8298
        %v8508 = vsel %vm1108, %v7879, %v8300
        %v8510 = vsel %vm1108, %v7880, %v8302
        %v8512 = vsel %vm1108, %v7881, %v8304
        %v8514 = vsel %vm1108, %v7882, %v8306
        %v8516 = vsel %vm1108, %v7883, %v8308
        %v8518 = vsel %vm1108, %v7884, %v8310
        %v8520 = vsel %vm1108, %v7885, %v8312
        %v8522 = vsel %vm1108, %v7886, %v8314
        %v8524 = vsel %vm1108, %v7887, %v8316
        %v8526 = vsel %vm1108, %v7888, %v8318
        %v8528 = vsel %vm1108, %v7889, %v8320
        %v8530 = vsel %vm1108, %v7890, %v8322
        %v8532 = vsel %vm1173, %v8468, %v8404
        %v8534 = vsel %vm1173, %v8470, %v8406
        %v8536 = vsel %vm1173, %v8472, %v8408
        %v8538 = vsel %vm1173, %v8474, %v8410
        %v8540 = vsel %vm1173, %v8476, %v8412
        %v8542 = vsel %vm1173, %v8478, %v8414
        %v8544 = vsel %vm1173, %v8480, %v8416
        %v8546 = vsel %vm1173, %v8482, %v8418
        %v8548 = vsel %vm1173, %v8484, %v8420
        %v8550 = vsel %vm1173, %v8486, %v8422
        %v8552 = vsel %vm1173, %v8488, %v8424
        %v8554 = vsel %vm1173, %v8490, %v8426
        %v8556 = vsel %vm1173, %v8492, %v8428
        %v8558 = vsel %vm1173, %v8494, %v8430
        %v8560 = vsel %vm1173, %v8496, %v8432
        %v8562 = vsel %vm1173, %v8498, %v8434
        %v8564 = vsel %vm1173, %v8500, %v8436
        %v8566 = vsel %vm1173, %v8502, %v8438
        %v8568 = vsel %vm1173, %v8504, %v8440
        %v8570 = vsel %vm1173, %v8506, %v8442
        %v8572 = vsel %vm1173, %v8508, %v8444
        %v8574 = vsel %vm1173, %v8510, %v8446
        %v8576 = vsel %vm1173, %v8512, %v8448
        %v8578 = vsel %vm1173, %v8514, %v8450
        %v8580 = vsel %vm1173, %v8516, %v8452
        %v8582 = vsel %vm1173, %v8518, %v8454
        %v8584 = vsel %vm1173, %v8520, %v8456
        %v8586 = vsel %vm1173, %v8522, %v8458
        %v8588 = vsel %vm1173, %v8524, %v8460
        %v8590 = vsel %vm1173, %v8526, %v8462
        %v8592 = vsel %vm1173, %v8528, %v8464
        %v8594 = vsel %vm1173, %v8530, %v8466
        %v8595 = vld [vmem:[%s3867] sm:$0xf]
        %v8596 = vld [vmem:[%s3867 + $0x4] sm:$0xf]
        %v8597 = vld [vmem:[%s3867 + $0x8] sm:$0xf]
        %v8601 = vunpack.c.l.b16 %v8595
        %v8602 = vunpack.c.l.b16 %v8596
        %v8603 = vunpack.c.l.b16 %v8597
        %v8604 = vpack.c.b16 %v8602, %v8601
        %v8605 = vpack.c.b16 %v8603, %v8603
        %v8607 = vsel %vm2199, %v8532, 0
        %v8609 = vsel %vm2199, %v8534, 0
        %v8611 = vsel %vm2199, %v8536, 0
        %v8613 = vsel %vm2199, %v8538, 0
        %v8615 = vsel %vm2199, %v8540, 0
        %v8617 = vsel %vm2199, %v8542, 0
        %v8619 = vsel %vm2199, %v8544, 0
        %v8621 = vsel %vm2199, %v8546, 0
        %v8623 = vsel %vm2199, %v8548, 0
        %v8625 = vsel %vm2199, %v8550, 0
        %v8627 = vsel %vm2199, %v8552, 0
        %v8629 = vsel %vm2199, %v8554, 0
        %v8631 = vsel %vm2199, %v8556, 0
        %v8633 = vsel %vm2199, %v8558, 0
        %v8635 = vsel %vm2199, %v8560, 0
        %v8637 = vsel %vm2199, %v8562, 0
        %v8639 = vsel %vm2199, %v8564, 0
        %v8641 = vsel %vm2199, %v8566, 0
        %v8643 = vsel %vm2199, %v8568, 0
        %v8645 = vsel %vm2199, %v8570, 0
        %v8647 = vsel %vm2199, %v8572, 0
        %v8649 = vsel %vm2199, %v8574, 0
        %v8651 = vsel %vm2199, %v8576, 0
        %v8653 = vsel %vm2199, %v8578, 0
        %v8655 = vsel %vm2199, %v8580, 0
        %v8657 = vsel %vm2199, %v8582, 0
        %v8659 = vsel %vm2199, %v8584, 0
        %v8661 = vsel %vm2199, %v8586, 0
        %v8663 = vsel %vm2199, %v8588, 0
        %v8665 = vsel %vm2199, %v8590, 0
        %v8667 = vsel %vm2199, %v8592, 0
        %v8669 = vsel %vm2199, %v8594, 0
        %v8672 = vsel %vm2264, %v8605, 0
        %8674 = vmatprep.subr.bf16.mxu0 0
        %8675 = vmatpush1.bf16.msra.mxu0 %v8604
        %8676 = vmatprep.subr.bf16.mxu0 0
        %8677 = vmatpush1.bf16.msra.mxu0 %v8672
        %8678 = vmatprep.subr.bf16.mxu0 0
        %8679 = vmatpush1.bf16.msra.mxu0 0
        %8680 = vmatprep.subr.bf16.mxu0 0
        %8681 = vmatpush1.bf16.msra.mxu0 0
        %8682 = vmatprep.subr.bf16.mxu0 0
        %8683 = vmatpush1.bf16.msra.mxu0 0
        %8684 = vmatprep.subr.bf16.mxu0 0
        %8685 = vmatpush1.bf16.msra.mxu0 0
        %8686 = vmatprep.subr.bf16.mxu0 0
        %8687 = vmatpush1.bf16.msra.mxu0 0
        %8688 = vmatprep.subr.bf16.mxu0 0
        %8689 = vmatpush1.bf16.msra.mxu0 0
        %8690 = vmatprep.subr.bf16.mxu0 0
        %8691 = vmatpush1.bf16.msra.mxu0 0
        %8692 = vmatprep.subr.bf16.mxu0 0
        %8693 = vmatpush1.bf16.msra.mxu0 0
        %8694 = vmatprep.subr.bf16.mxu0 0
        %8695 = vmatpush1.bf16.msra.mxu0 0
        %8696 = vmatprep.subr.bf16.mxu0 0
        %8697 = vmatpush1.bf16.msra.mxu0 0
        %8698 = vmatprep.subr.bf16.mxu0 0
        %8699 = vmatpush1.bf16.msra.mxu0 0
        %8700 = vmatprep.subr.bf16.mxu0 0
        %8701 = vmatpush1.bf16.msra.mxu0 0
        %8702 = vmatprep.subr.bf16.mxu0 0
        %8703 = vmatpush1.bf16.msra.mxu0 0
        %8704 = vmatprep.subr.bf16.mxu0 0
        %8705 = vmatpush1.bf16.msra.mxu0 0
        %8706 = vmatprep.mubr.bf16.mxu0 0
        %8707 = vmatmul.mubr.bf16.gmra.mrb[0].mxu0 %v8607
        %v8708 = vpop.f32.mrb[0].mxu0
        %v8709 = vadd.f32 0.0, %v8708
        %v8710 = vpop.f32.mrb[0].mxu0
        %v8711 = vpop.f32.mrb[0].mxu0
        %v8712 = vadd.f32 0.0, %v8711
        %v8713 = vpop.f32.mrb[0].mxu0
        %8714 = vmatprep.mubr.bf16.mxu0 0
        %8715 = vmatmul.mubr.bf16.gmra.mrb[0].mxu0 %v8609
        %v8716 = vpop.f32.mrb[0].mxu0
        %v8717 = vadd.f32 0.0, %v8716
        %v8718 = vpop.f32.mrb[0].mxu0
        %v8719 = vpop.f32.mrb[0].mxu0
        %v8720 = vadd.f32 0.0, %v8719
        %v8721 = vpop.f32.mrb[0].mxu0
        %8722 = vmatprep.mubr.bf16.mxu0 0
        %8723 = vmatmul.mubr.bf16.gmra.mrb[0].mxu0 %v8611
        %v8724 = vpop.f32.mrb[0].mxu0
        %v8725 = vadd.f32 0.0, %v8724
        %v8726 = vpop.f32.mrb[0].mxu0
        %v8727 = vpop.f32.mrb[0].mxu0
        %v8728 = vadd.f32 0.0, %v8727
        %v8729 = vpop.f32.mrb[0].mxu0
        %8730 = vmatprep.mubr.bf16.mxu0 0
        %8731 = vmatmul.mubr.bf16.gmra.mrb[0].mxu0 %v8613
        %v8732 = vpop.f32.mrb[0].mxu0
        %v8733 = vadd.f32 0.0, %v8732
        %v8734 = vpop.f32.mrb[0].mxu0
        %v8735 = vpop.f32.mrb[0].mxu0
        %v8736 = vadd.f32 0.0, %v8735
        %v8737 = vpop.f32.mrb[0].mxu0
        %8738 = vmatprep.mubr.bf16.mxu0 0
        %8739 = vmatmul.mubr.bf16.gmra.mrb[0].mxu0 %v8615
        %v8740 = vpop.f32.mrb[0].mxu0
        %v8741 = vadd.f32 0.0, %v8740
        %v8742 = vpop.f32.mrb[0].mxu0
        %v8743 = vpop.f32.mrb[0].mxu0
        %v8744 = vadd.f32 0.0, %v8743
        %v8745 = vpop.f32.mrb[0].mxu0
        %8746 = vmatprep.mubr.bf16.mxu0 0
        %8747 = vmatmul.mubr.bf16.gmra.mrb[0].mxu0 %v8617
        %v8748 = vpop.f32.mrb[0].mxu0
        %v8749 = vadd.f32 0.0, %v8748
        %v8750 = vpop.f32.mrb[0].mxu0
        %v8751 = vpop.f32.mrb[0].mxu0
        %v8752 = vadd.f32 0.0, %v8751
        %v8753 = vpop.f32.mrb[0].mxu0
        %8754 = vmatprep.mubr.bf16.mxu0 0
        %8755 = vmatmul.mubr.bf16.gmra.mrb[0].mxu0 %v8619
        %v8756 = vpop.f32.mrb[0].mxu0
        %v8757 = vadd.f32 0.0, %v8756
        %v8758 = vpop.f32.mrb[0].mxu0
        %v8759 = vpop.f32.mrb[0].mxu0
        %v8760 = vadd.f32 0.0, %v8759
        %v8761 = vpop.f32.mrb[0].mxu0
        %8762 = vmatprep.mubr.bf16.mxu0 0
        %8763 = vmatmul.mubr.bf16.gmra.mrb[0].mxu0 %v8621
        %v8764 = vpop.f32.mrb[0].mxu0
        %v8765 = vadd.f32 0.0, %v8764
        %v8766 = vpop.f32.mrb[0].mxu0
        %v8767 = vpop.f32.mrb[0].mxu0
        %v8768 = vadd.f32 0.0, %v8767
        %v8769 = vpop.f32.mrb[0].mxu0
        %8770 = vmatprep.mubr.bf16.mxu0 0
        %8771 = vmatmul.mubr.bf16.gmra.mrb[0].mxu0 %v8623
        %v8772 = vpop.f32.mrb[0].mxu0
        %v8773 = vadd.f32 0.0, %v8772
        %v8774 = vpop.f32.mrb[0].mxu0
        %v8775 = vpop.f32.mrb[0].mxu0
        %v8776 = vadd.f32 0.0, %v8775
        %v8777 = vpop.f32.mrb[0].mxu0
        %8778 = vmatprep.mubr.bf16.mxu0 0
        %8779 = vmatmul.mubr.bf16.gmra.mrb[0].mxu0 %v8625
        %v8780 = vpop.f32.mrb[0].mxu0
        %v8781 = vadd.f32 0.0, %v8780
        %v8782 = vpop.f32.mrb[0].mxu0
        %v8783 = vpop.f32.mrb[0].mxu0
        %v8784 = vadd.f32 0.0, %v8783
        %v8785 = vpop.f32.mrb[0].mxu0
        %8786 = vmatprep.mubr.bf16.mxu0 0
        %8787 = vmatmul.mubr.bf16.gmra.mrb[0].mxu0 %v8627
        %v8788 = vpop.f32.mrb[0].mxu0
        %v8789 = vadd.f32 0.0, %v8788
        %v8790 = vpop.f32.mrb[0].mxu0
        %v8791 = vpop.f32.mrb[0].mxu0
        %v8792 = vadd.f32 0.0, %v8791
        %v8793 = vpop.f32.mrb[0].mxu0
        %8794 = vmatprep.mubr.bf16.mxu0 0
        %8795 = vmatmul.mubr.bf16.gmra.mrb[0].mxu0 %v8629
        %v8796 = vpop.f32.mrb[0].mxu0
        %v8797 = vadd.f32 0.0, %v8796
        %v8798 = vpop.f32.mrb[0].mxu0
        %v8799 = vpop.f32.mrb[0].mxu0
        %v8800 = vadd.f32 0.0, %v8799
        %v8801 = vpop.f32.mrb[0].mxu0
        %8802 = vmatprep.mubr.bf16.mxu0 0
        %8803 = vmatmul.mubr.bf16.gmra.mrb[0].mxu0 %v8631
        %v8804 = vpop.f32.mrb[0].mxu0
        %v8805 = vadd.f32 0.0, %v8804
        %v8806 = vpop.f32.mrb[0].mxu0
        %v8807 = vpop.f32.mrb[0].mxu0
        %v8808 = vadd.f32 0.0, %v8807
        %v8809 = vpop.f32.mrb[0].mxu0
        %8810 = vmatprep.mubr.bf16.mxu0 0
        %8811 = vmatmul.mubr.bf16.gmra.mrb[0].mxu0 %v8633
        %v8812 = vpop.f32.mrb[0].mxu0
        %v8813 = vadd.f32 0.0, %v8812
        %v8814 = vpop.f32.mrb[0].mxu0
        %v8815 = vpop.f32.mrb[0].mxu0
        %v8816 = vadd.f32 0.0, %v8815
        %v8817 = vpop.f32.mrb[0].mxu0
        %8818 = vmatprep.mubr.bf16.mxu0 0
        %8819 = vmatmul.mubr.bf16.gmra.mrb[0].mxu0 %v8635
        %v8820 = vpop.f32.mrb[0].mxu0
        %v8821 = vadd.f32 0.0, %v8820
        %v8822 = vpop.f32.mrb[0].mxu0
        %v8823 = vpop.f32.mrb[0].mxu0
        %v8824 = vadd.f32 0.0, %v8823
        %v8825 = vpop.f32.mrb[0].mxu0
        %8826 = vmatprep.mubr.bf16.mxu0 0
        %8827 = vmatmul.mubr.bf16.gmra.mrb[0].mxu0 %v8637
        %v8828 = vpop.f32.mrb[0].mxu0
        %v8829 = vadd.f32 0.0, %v8828
        %v8830 = vpop.f32.mrb[0].mxu0
        %v8831 = vpop.f32.mrb[0].mxu0
        %v8832 = vadd.f32 0.0, %v8831
        %v8833 = vpop.f32.mrb[0].mxu0
        %8834 = vmatprep.mubr.bf16.mxu0 0
        %8835 = vmatmul.mubr.bf16.gmra.mrb[0].mxu0 %v8639
        %v8836 = vpop.f32.mrb[0].mxu0
        %v8837 = vadd.f32 0.0, %v8836
        %v8838 = vpop.f32.mrb[0].mxu0
        %v8839 = vpop.f32.mrb[0].mxu0
        %v8840 = vadd.f32 0.0, %v8839
        %v8841 = vpop.f32.mrb[0].mxu0
        %8842 = vmatprep.mubr.bf16.mxu0 0
        %8843 = vmatmul.mubr.bf16.gmra.mrb[0].mxu0 %v8641
        %v8844 = vpop.f32.mrb[0].mxu0
        %v8845 = vadd.f32 0.0, %v8844
        %v8846 = vpop.f32.mrb[0].mxu0
        %v8847 = vpop.f32.mrb[0].mxu0
        %v8848 = vadd.f32 0.0, %v8847
        %v8849 = vpop.f32.mrb[0].mxu0
        %8850 = vmatprep.mubr.bf16.mxu0 0
        %8851 = vmatmul.mubr.bf16.gmra.mrb[0].mxu0 %v8643
        %v8852 = vpop.f32.mrb[0].mxu0
        %v8853 = vadd.f32 0.0, %v8852
        %v8854 = vpop.f32.mrb[0].mxu0
        %v8855 = vpop.f32.mrb[0].mxu0
        %v8856 = vadd.f32 0.0, %v8855
        %v8857 = vpop.f32.mrb[0].mxu0
        %8858 = vmatprep.mubr.bf16.mxu0 0
        %8859 = vmatmul.mubr.bf16.gmra.mrb[0].mxu0 %v8645
        %v8860 = vpop.f32.mrb[0].mxu0
        %v8861 = vadd.f32 0.0, %v8860
        %v8862 = vpop.f32.mrb[0].mxu0
        %v8863 = vpop.f32.mrb[0].mxu0
        %v8864 = vadd.f32 0.0, %v8863
        %v8865 = vpop.f32.mrb[0].mxu0
        %8866 = vmatprep.mubr.bf16.mxu0 0
        %8867 = vmatmul.mubr.bf16.gmra.mrb[0].mxu0 %v8647
        %v8868 = vpop.f32.mrb[0].mxu0
        %v8869 = vadd.f32 0.0, %v8868
        %v8870 = vpop.f32.mrb[0].mxu0
        %v8871 = vpop.f32.mrb[0].mxu0
        %v8872 = vadd.f32 0.0, %v8871
        %v8873 = vpop.f32.mrb[0].mxu0
        %8874 = vmatprep.mubr.bf16.mxu0 0
        %8875 = vmatmul.mubr.bf16.gmra.mrb[0].mxu0 %v8649
        %v8876 = vpop.f32.mrb[0].mxu0
        %v8877 = vadd.f32 0.0, %v8876
        %v8878 = vpop.f32.mrb[0].mxu0
        %v8879 = vpop.f32.mrb[0].mxu0
        %v8880 = vadd.f32 0.0, %v8879
        %v8881 = vpop.f32.mrb[0].mxu0
        %8882 = vmatprep.mubr.bf16.mxu0 0
        %8883 = vmatmul.mubr.bf16.gmra.mrb[0].mxu0 %v8651
        %v8884 = vpop.f32.mrb[0].mxu0
        %v8885 = vadd.f32 0.0, %v8884
        %v8886 = vpop.f32.mrb[0].mxu0
        %v8887 = vpop.f32.mrb[0].mxu0
        %v8888 = vadd.f32 0.0, %v8887
        %v8889 = vpop.f32.mrb[0].mxu0
        %8890 = vmatprep.mubr.bf16.mxu0 0
        %8891 = vmatmul.mubr.bf16.gmra.mrb[0].mxu0 %v8653
        %v8892 = vpop.f32.mrb[0].mxu0
        %v8893 = vadd.f32 0.0, %v8892
        %v8894 = vpop.f32.mrb[0].mxu0
        %v8895 = vpop.f32.mrb[0].mxu0
        %v8896 = vadd.f32 0.0, %v8895
        %v8897 = vpop.f32.mrb[0].mxu0
        %8898 = vmatprep.mubr.bf16.mxu0 0
        %8899 = vmatmul.mubr.bf16.gmra.mrb[0].mxu0 %v8655
        %v8900 = vpop.f32.mrb[0].mxu0
        %v8901 = vadd.f32 0.0, %v8900
        %v8902 = vpop.f32.mrb[0].mxu0
        %v8903 = vpop.f32.mrb[0].mxu0
        %v8904 = vadd.f32 0.0, %v8903
        %v8905 = vpop.f32.mrb[0].mxu0
        %8906 = vmatprep.mubr.bf16.mxu0 0
        %8907 = vmatmul.mubr.bf16.gmra.mrb[0].mxu0 %v8657
        %v8908 = vpop.f32.mrb[0].mxu0
        %v8909 = vadd.f32 0.0, %v8908
        %v8910 = vpop.f32.mrb[0].mxu0
        %v8911 = vpop.f32.mrb[0].mxu0
        %v8912 = vadd.f32 0.0, %v8911
        %v8913 = vpop.f32.mrb[0].mxu0
        %8914 = vmatprep.mubr.bf16.mxu0 0
        %8915 = vmatmul.mubr.bf16.gmra.mrb[0].mxu0 %v8659
        %v8916 = vpop.f32.mrb[0].mxu0
        %v8917 = vadd.f32 0.0, %v8916
        %v8918 = vpop.f32.mrb[0].mxu0
        %v8919 = vpop.f32.mrb[0].mxu0
        %v8920 = vadd.f32 0.0, %v8919
        %v8921 = vpop.f32.mrb[0].mxu0
        %8922 = vmatprep.mubr.bf16.mxu0 0
        %8923 = vmatmul.mubr.bf16.gmra.mrb[0].mxu0 %v8661
        %v8924 = vpop.f32.mrb[0].mxu0
        %v8925 = vadd.f32 0.0, %v8924
        %v8926 = vpop.f32.mrb[0].mxu0
        %v8927 = vpop.f32.mrb[0].mxu0
        %v8928 = vadd.f32 0.0, %v8927
        %v8929 = vpop.f32.mrb[0].mxu0
        %8930 = vmatprep.mubr.bf16.mxu0 0
        %8931 = vmatmul.mubr.bf16.gmra.mrb[0].mxu0 %v8663
        %v8932 = vpop.f32.mrb[0].mxu0
        %v8933 = vadd.f32 0.0, %v8932
        %v8934 = vpop.f32.mrb[0].mxu0
        %v8935 = vpop.f32.mrb[0].mxu0
        %v8936 = vadd.f32 0.0, %v8935
        %v8937 = vpop.f32.mrb[0].mxu0
        %8938 = vmatprep.mubr.bf16.mxu0 0
        %8939 = vmatmul.mubr.bf16.gmra.mrb[0].mxu0 %v8665
        %v8940 = vpop.f32.mrb[0].mxu0
        %v8941 = vadd.f32 0.0, %v8940
        %v8942 = vpop.f32.mrb[0].mxu0
        %v8943 = vpop.f32.mrb[0].mxu0
        %v8944 = vadd.f32 0.0, %v8943
        %v8945 = vpop.f32.mrb[0].mxu0
        %8946 = vmatprep.mubr.bf16.mxu0 0
        %8947 = vmatmul.mubr.bf16.gmra.mrb[0].mxu0 %v8667
        %v8948 = vpop.f32.mrb[0].mxu0
        %v8949 = vadd.f32 0.0, %v8948
        %v8950 = vpop.f32.mrb[0].mxu0
        %v8951 = vpop.f32.mrb[0].mxu0
        %v8952 = vadd.f32 0.0, %v8951
        %v8953 = vpop.f32.mrb[0].mxu0
        %8954 = vmatprep.mubr.bf16.mxu0 0
        %8955 = vmatmul.mubr.bf16.gmra.mrb[0].mxu0 %v8669
        %v8956 = vpop.f32.mrb[0].mxu0
        %v8957 = vadd.f32 0.0, %v8956
        %v8958 = vpop.f32.mrb[0].mxu0
        %v8959 = vpop.f32.mrb[0].mxu0
        %v8960 = vadd.f32 0.0, %v8959
        %v8961 = vpop.f32.mrb[0].mxu0
        %8962 = vdwg.mxu0
        %v8963 = vadd.f32 %v7396, %v8709
        %v8964 = vadd.f32 %v7399, %v8712
        %v8965 = vadd.f32 %v7404, %v8717
        %v8966 = vadd.f32 %v7407, %v8720
        %v8967 = vadd.f32 %v7412, %v8725
        %v8968 = vadd.f32 %v7415, %v8728
        %v8969 = vadd.f32 %v7420, %v8733
        %v8970 = vadd.f32 %v7423, %v8736
        %v8971 = vadd.f32 %v7428, %v8741
        %v8972 = vadd.f32 %v7431, %v8744
        %v8973 = vadd.f32 %v7436, %v8749
        %v8974 = vadd.f32 %v7439, %v8752
        %v8975 = vadd.f32 %v7444, %v8757
        %v8976 = vadd.f32 %v7447, %v8760
        %v8977 = vadd.f32 %v7452, %v8765
        %v8978 = vadd.f32 %v7455, %v8768
        %v8979 = vadd.f32 %v7460, %v8773
        %v8980 = vadd.f32 %v7463, %v8776
        %v8981 = vadd.f32 %v7468, %v8781
        %v8982 = vadd.f32 %v7471, %v8784
        %v8983 = vadd.f32 %v7476, %v8789
        %v8984 = vadd.f32 %v7479, %v8792
        %v8985 = vadd.f32 %v7484, %v8797
        %v8986 = vadd.f32 %v7487, %v8800
        %v8987 = vadd.f32 %v7492, %v8805
        %v8988 = vadd.f32 %v7495, %v8808
        %v8989 = vadd.f32 %v7500, %v8813
        %v8990 = vadd.f32 %v7503, %v8816
        %v8991 = vadd.f32 %v7508, %v8821
        %v8992 = vadd.f32 %v7511, %v8824
        %v8993 = vadd.f32 %v7516, %v8829
        %v8994 = vadd.f32 %v7519, %v8832
        %v8995 = vadd.f32 %v7524, %v8837
        %v8996 = vadd.f32 %v7527, %v8840
        %v8997 = vadd.f32 %v7532, %v8845
        %v8998 = vadd.f32 %v7535, %v8848
        %v8999 = vadd.f32 %v7540, %v8853
        %v9000 = vadd.f32 %v7543, %v8856
        %v9001 = vadd.f32 %v7548, %v8861
        %v9002 = vadd.f32 %v7551, %v8864
        %v9003 = vadd.f32 %v7556, %v8869
        %v9004 = vadd.f32 %v7559, %v8872
        %v9005 = vadd.f32 %v7564, %v8877
        %v9006 = vadd.f32 %v7567, %v8880
        %v9007 = vadd.f32 %v7572, %v8885
        %v9008 = vadd.f32 %v7575, %v8888
        %v9009 = vadd.f32 %v7580, %v8893
        %v9010 = vadd.f32 %v7583, %v8896
        %v9011 = vadd.f32 %v7588, %v8901
        %v9012 = vadd.f32 %v7591, %v8904
        %v9013 = vadd.f32 %v7596, %v8909
        %v9014 = vadd.f32 %v7599, %v8912
        %v9015 = vadd.f32 %v7604, %v8917
        %v9016 = vadd.f32 %v7607, %v8920
        %v9017 = vadd.f32 %v7612, %v8925
        %v9018 = vadd.f32 %v7615, %v8928
        %v9019 = vadd.f32 %v7620, %v8933
        %v9020 = vadd.f32 %v7623, %v8936
        %v9021 = vadd.f32 %v7628, %v8941
        %v9022 = vadd.f32 %v7631, %v8944
        %v9023 = vadd.f32 %v7636, %v8949
        %v9024 = vadd.f32 %v7639, %v8952
        %v9025 = vadd.f32 %v7644, %v8957
        %v9026 = vadd.f32 %v7647, %v8960
        %v9027 = vadd.f32 %v8963, %v4304
        %v9028 = vadd.f32 %v8964, %v4304
        %v9029 = vadd.f32 %v8965, %v4304
        %v9030 = vadd.f32 %v8966, %v4304
        %v9031 = vadd.f32 %v8967, %v4304
        %v9032 = vadd.f32 %v8968, %v4304
        %v9033 = vadd.f32 %v8969, %v4304
        %v9034 = vadd.f32 %v8970, %v4304
        %v9035 = vadd.f32 %v8971, %v4304
        %v9036 = vadd.f32 %v8972, %v4304
        %v9037 = vadd.f32 %v8973, %v4304
        %v9038 = vadd.f32 %v8974, %v4304
        %v9039 = vadd.f32 %v8975, %v4304
        %v9040 = vadd.f32 %v8976, %v4304
        %v9041 = vadd.f32 %v8977, %v4304
        %v9042 = vadd.f32 %v8978, %v4304
        %v9043 = vadd.f32 %v8979, %v4304
        %v9044 = vadd.f32 %v8980, %v4304
        %v9045 = vadd.f32 %v8981, %v4304
        %v9046 = vadd.f32 %v8982, %v4304
        %v9047 = vadd.f32 %v8983, %v4304
        %v9048 = vadd.f32 %v8984, %v4304
        %v9049 = vadd.f32 %v8985, %v4304
        %v9050 = vadd.f32 %v8986, %v4304
        %v9051 = vadd.f32 %v8987, %v4304
        %v9052 = vadd.f32 %v8988, %v4304
        %v9053 = vadd.f32 %v8989, %v4304
        %v9054 = vadd.f32 %v8990, %v4304
        %v9055 = vadd.f32 %v8991, %v4304
        %v9056 = vadd.f32 %v8992, %v4304
        %v9057 = vadd.f32 %v8993, %v4304
        %v9058 = vadd.f32 %v8994, %v4304
        %v9059 = vadd.f32 %v8995, %v4304
        %v9060 = vadd.f32 %v8996, %v4304
        %v9061 = vadd.f32 %v8997, %v4304
        %v9062 = vadd.f32 %v8998, %v4304
        %v9063 = vadd.f32 %v8999, %v4304
        %v9064 = vadd.f32 %v9000, %v4304
        %v9065 = vadd.f32 %v9001, %v4304
        %v9066 = vadd.f32 %v9002, %v4304
        %v9067 = vadd.f32 %v9003, %v4304
        %v9068 = vadd.f32 %v9004, %v4304
        %v9069 = vadd.f32 %v9005, %v4304
        %v9070 = vadd.f32 %v9006, %v4304
        %v9071 = vadd.f32 %v9007, %v4304
        %v9072 = vadd.f32 %v9008, %v4304
        %v9073 = vadd.f32 %v9009, %v4304
        %v9074 = vadd.f32 %v9010, %v4304
        %v9075 = vadd.f32 %v9011, %v4304
        %v9076 = vadd.f32 %v9012, %v4304
        %v9077 = vadd.f32 %v9013, %v4304
        %v9078 = vadd.f32 %v9014, %v4304
        %v9079 = vadd.f32 %v9015, %v4304
        %v9080 = vadd.f32 %v9016, %v4304
        %v9081 = vadd.f32 %v9017, %v4304
        %v9082 = vadd.f32 %v9018, %v4304
        %v9083 = vadd.f32 %v9019, %v4304
        %v9084 = vadd.f32 %v9020, %v4304
        %v9085 = vadd.f32 %v9021, %v4304
        %v9086 = vadd.f32 %v9022, %v4304
        %v9087 = vadd.f32 %v9023, %v4304
        %v9088 = vadd.f32 %v9024, %v4304
        %v9089 = vadd.f32 %v9025, %v4304
        %v9090 = vadd.f32 %v9026, %v4304
        %v9091 = vpack.c.bf16 %v9028, %v9027
        %v9092 = vpack.c.bf16 %v9030, %v9029
        %v9093 = vpack.c.bf16 %v9032, %v9031
        %v9094 = vpack.c.bf16 %v9034, %v9033
        %v9095 = vpack.c.bf16 %v9036, %v9035
        %v9096 = vpack.c.bf16 %v9038, %v9037
        %v9097 = vpack.c.bf16 %v9040, %v9039
        %v9098 = vpack.c.bf16 %v9042, %v9041
        %v9099 = vpack.c.bf16 %v9044, %v9043
        %v9100 = vpack.c.bf16 %v9046, %v9045
        %v9101 = vpack.c.bf16 %v9048, %v9047
        %v9102 = vpack.c.bf16 %v9050, %v9049
        %v9103 = vpack.c.bf16 %v9052, %v9051
        %v9104 = vpack.c.bf16 %v9054, %v9053
        %v9105 = vpack.c.bf16 %v9056, %v9055
        %v9106 = vpack.c.bf16 %v9058, %v9057
        %v9107 = vpack.c.bf16 %v9060, %v9059
        %v9108 = vpack.c.bf16 %v9062, %v9061
        %v9109 = vpack.c.bf16 %v9064, %v9063
        %v9110 = vpack.c.bf16 %v9066, %v9065
        %v9111 = vpack.c.bf16 %v9068, %v9067
        %v9112 = vpack.c.bf16 %v9070, %v9069
        %v9113 = vpack.c.bf16 %v9072, %v9071
        %v9114 = vpack.c.bf16 %v9074, %v9073
        %v9115 = vpack.c.bf16 %v9076, %v9075
        %v9116 = vpack.c.bf16 %v9078, %v9077
        %v9117 = vpack.c.bf16 %v9080, %v9079
        %v9118 = vpack.c.bf16 %v9082, %v9081
        %v9119 = vpack.c.bf16 %v9084, %v9083
        %v9120 = vpack.c.bf16 %v9086, %v9085
        %v9121 = vpack.c.bf16 %v9088, %v9087
        %v9122 = vpack.c.bf16 %v9090, %v9089
        %v9155 = vunpack.c.l.b16 %v9091
        %v9156 = vunpack.c.h.b16 %v9091
        %v9157 = vunpack.c.l.b16 %v9092
        %v9158 = vunpack.c.h.b16 %v9092
        %v9159 = vunpack.c.l.b16 %v9093
        %v9160 = vunpack.c.h.b16 %v9093
        %v9161 = vunpack.c.l.b16 %v9094
        %v9162 = vunpack.c.h.b16 %v9094
        %v9163 = vunpack.c.l.b16 %v9095
        %v9164 = vunpack.c.h.b16 %v9095
        %v9165 = vunpack.c.l.b16 %v9096
        %v9166 = vunpack.c.h.b16 %v9096
        %v9167 = vunpack.c.l.b16 %v9097
        %v9168 = vunpack.c.h.b16 %v9097
        %v9169 = vunpack.c.l.b16 %v9098
        %v9170 = vunpack.c.h.b16 %v9098
        %v9171 = vunpack.c.l.b16 %v9099
        %v9172 = vunpack.c.h.b16 %v9099
        %v9173 = vunpack.c.l.b16 %v9100
        %v9174 = vunpack.c.h.b16 %v9100
        %v9175 = vunpack.c.l.b16 %v9101
        %v9176 = vunpack.c.h.b16 %v9101
        %v9177 = vunpack.c.l.b16 %v9102
        %v9178 = vunpack.c.h.b16 %v9102
        %v9179 = vunpack.c.l.b16 %v9103
        %v9180 = vunpack.c.h.b16 %v9103
        %v9181 = vunpack.c.l.b16 %v9104
        %v9182 = vunpack.c.h.b16 %v9104
        %v9183 = vunpack.c.l.b16 %v9105
        %v9184 = vunpack.c.h.b16 %v9105
        %v9185 = vunpack.c.l.b16 %v9106
        %v9186 = vunpack.c.h.b16 %v9106
        %v9187 = vunpack.c.l.b16 %v9107
        %v9188 = vunpack.c.h.b16 %v9107
        %v9189 = vunpack.c.l.b16 %v9108
        %v9190 = vunpack.c.h.b16 %v9108
        %v9191 = vunpack.c.l.b16 %v9109
        %v9192 = vunpack.c.h.b16 %v9109
        %v9193 = vunpack.c.l.b16 %v9110
        %v9194 = vunpack.c.h.b16 %v9110
        %v9195 = vunpack.c.l.b16 %v9111
        %v9196 = vunpack.c.h.b16 %v9111
        %v9197 = vunpack.c.l.b16 %v9112
        %v9198 = vunpack.c.h.b16 %v9112
        %v9199 = vunpack.c.l.b16 %v9113
        %v9200 = vunpack.c.h.b16 %v9113
        %v9201 = vunpack.c.l.b16 %v9114
        %v9202 = vunpack.c.h.b16 %v9114
        %v9203 = vunpack.c.l.b16 %v9115
        %v9204 = vunpack.c.h.b16 %v9115
        %v9205 = vunpack.c.l.b16 %v9116
        %v9206 = vunpack.c.h.b16 %v9116
        %v9207 = vunpack.c.l.b16 %v9117
        %v9208 = vunpack.c.h.b16 %v9117
        %v9209 = vunpack.c.l.b16 %v9118
        %v9210 = vunpack.c.h.b16 %v9118
        %v9211 = vunpack.c.l.b16 %v9119
        %v9212 = vunpack.c.h.b16 %v9119
        %v9213 = vunpack.c.l.b16 %v9120
        %v9214 = vunpack.c.h.b16 %v9120
        %v9215 = vunpack.c.l.b16 %v9121
        %v9216 = vunpack.c.h.b16 %v9121
        %v9217 = vunpack.c.l.b16 %v9122
        %v9218 = vunpack.c.h.b16 %v9122
        %v9219 = vpack.c.b16 %v9155, %v9155
        %v9220 = vpack.c.b16 %v9156, %v9156
        %v9221 = vpack.c.b16 %v9157, %v9157
        %v9222 = vpack.c.b16 %v9158, %v9158
        %v9223 = vpack.c.b16 %v9159, %v9159
        %v9224 = vpack.c.b16 %v9160, %v9160
        %v9225 = vpack.c.b16 %v9161, %v9161
        %v9226 = vpack.c.b16 %v9162, %v9162
        %v9227 = vpack.c.b16 %v9163, %v9163
        %v9228 = vpack.c.b16 %v9164, %v9164
        %v9229 = vpack.c.b16 %v9165, %v9165
        %v9230 = vpack.c.b16 %v9166, %v9166
        %v9231 = vpack.c.b16 %v9167, %v9167
        %v9232 = vpack.c.b16 %v9168, %v9168
        %v9233 = vpack.c.b16 %v9169, %v9169
        %v9234 = vpack.c.b16 %v9170, %v9170
        %v9235 = vpack.c.b16 %v9171, %v9171
        %v9236 = vpack.c.b16 %v9172, %v9172
        %v9237 = vpack.c.b16 %v9173, %v9173
        %v9238 = vpack.c.b16 %v9174, %v9174
        %v9239 = vpack.c.b16 %v9175, %v9175
        %v9240 = vpack.c.b16 %v9176, %v9176
        %v9241 = vpack.c.b16 %v9177, %v9177
        %v9242 = vpack.c.b16 %v9178, %v9178
        %v9243 = vpack.c.b16 %v9179, %v9179
        %v9244 = vpack.c.b16 %v9180, %v9180
        %v9245 = vpack.c.b16 %v9181, %v9181
        %v9246 = vpack.c.b16 %v9182, %v9182
        %v9247 = vpack.c.b16 %v9183, %v9183
        %v9248 = vpack.c.b16 %v9184, %v9184
        %v9249 = vpack.c.b16 %v9185, %v9185
        %v9250 = vpack.c.b16 %v9186, %v9186
        %v9251 = vpack.c.b16 %v9187, %v9187
        %v9252 = vpack.c.b16 %v9188, %v9188
        %v9253 = vpack.c.b16 %v9189, %v9189
        %v9254 = vpack.c.b16 %v9190, %v9190
        %v9255 = vpack.c.b16 %v9191, %v9191
        %v9256 = vpack.c.b16 %v9192, %v9192
        %v9257 = vpack.c.b16 %v9193, %v9193
        %v9258 = vpack.c.b16 %v9194, %v9194
        %v9259 = vpack.c.b16 %v9195, %v9195
        %v9260 = vpack.c.b16 %v9196, %v9196
        %v9261 = vpack.c.b16 %v9197, %v9197
        %v9262 = vpack.c.b16 %v9198, %v9198
        %v9263 = vpack.c.b16 %v9199, %v9199
        %v9264 = vpack.c.b16 %v9200, %v9200
        %v9265 = vpack.c.b16 %v9201, %v9201
        %v9266 = vpack.c.b16 %v9202, %v9202
        %v9267 = vpack.c.b16 %v9203, %v9203
        %v9268 = vpack.c.b16 %v9204, %v9204
        %v9269 = vpack.c.b16 %v9205, %v9205
        %v9270 = vpack.c.b16 %v9206, %v9206
        %v9271 = vpack.c.b16 %v9207, %v9207
        %v9272 = vpack.c.b16 %v9208, %v9208
        %v9273 = vpack.c.b16 %v9209, %v9209
        %v9274 = vpack.c.b16 %v9210, %v9210
        %v9275 = vpack.c.b16 %v9211, %v9211
        %v9276 = vpack.c.b16 %v9212, %v9212
        %v9277 = vpack.c.b16 %v9213, %v9213
        %v9278 = vpack.c.b16 %v9214, %v9214
        %v9279 = vpack.c.b16 %v9215, %v9215
        %v9280 = vpack.c.b16 %v9216, %v9216
        %v9281 = vpack.c.b16 %v9217, %v9217
        %v9282 = vpack.c.b16 %v9218, %v9218
        %s9347 = scalar_lea.vmem %s263, 256 [#allocation2]
        %9348 = vst.msk [vmem:[%s9347] sm:$0xf] %vm4626, %v9219
        %9349 = vst.msk [vmem:[%s9347 + $0x4] sm:$0xf] %vm4626, %v9220
        %9350 = vst.msk [vmem:[%s9347 + $0x8] sm:$0xf] %vm4626, %v9221
        %9351 = vst.msk [vmem:[%s9347 + $0xc] sm:$0xf] %vm4626, %v9222
        %9352 = vst.msk [vmem:[%s9347 + $0x10] sm:$0xf] %vm4626, %v9223
        %9353 = vst.msk [vmem:[%s9347 + $0x14] sm:$0xf] %vm4626, %v9224
        %9354 = vst.msk [vmem:[%s9347 + $0x18] sm:$0xf] %vm4626, %v9225
        %9355 = vst.msk [vmem:[%s9347 + $0x1c] sm:$0xf] %vm4626, %v9226
        %9356 = vst.msk [vmem:[%s9347 + $0x20] sm:$0xf] %vm4626, %v9227
        %9357 = vst.msk [vmem:[%s9347 + $0x24] sm:$0xf] %vm4626, %v9228
        %9358 = vst.msk [vmem:[%s9347 + $0x28] sm:$0xf] %vm4626, %v9229
        %9359 = vst.msk [vmem:[%s9347 + $0x2c] sm:$0xf] %vm4626, %v9230
        %9360 = vst.msk [vmem:[%s9347 + $0x30] sm:$0xf] %vm4626, %v9231
        %9361 = vst.msk [vmem:[%s9347 + $0x34] sm:$0xf] %vm4626, %v9232
        %9362 = vst.msk [vmem:[%s9347 + $0x38] sm:$0xf] %vm4626, %v9233
        %9363 = vst.msk [vmem:[%s9347 + $0x3c] sm:$0xf] %vm4626, %v9234
        %9364 = vst.msk [vmem:[%s9347 + $0x40] sm:$0xf] %vm4626, %v9235
        %9365 = vst.msk [vmem:[%s9347 + $0x44] sm:$0xf] %vm4626, %v9236
        %9366 = vst.msk [vmem:[%s9347 + $0x48] sm:$0xf] %vm4626, %v9237
        %9367 = vst.msk [vmem:[%s9347 + $0x4c] sm:$0xf] %vm4626, %v9238
        %9368 = vst.msk [vmem:[%s9347 + $0x50] sm:$0xf] %vm4626, %v9239
        %9369 = vst.msk [vmem:[%s9347 + $0x54] sm:$0xf] %vm4626, %v9240
        %9370 = vst.msk [vmem:[%s9347 + $0x58] sm:$0xf] %vm4626, %v9241
        %9371 = vst.msk [vmem:[%s9347 + $0x5c] sm:$0xf] %vm4626, %v9242
        %9372 = vst.msk [vmem:[%s9347 + $0x60] sm:$0xf] %vm4626, %v9243
        %9373 = vst.msk [vmem:[%s9347 + $0x64] sm:$0xf] %vm4626, %v9244
        %9374 = vst.msk [vmem:[%s9347 + $0x68] sm:$0xf] %vm4626, %v9245
        %9375 = vst.msk [vmem:[%s9347 + $0x6c] sm:$0xf] %vm4626, %v9246
        %9376 = vst.msk [vmem:[%s9347 + $0x70] sm:$0xf] %vm4626, %v9247
        %9377 = vst.msk [vmem:[%s9347 + $0x74] sm:$0xf] %vm4626, %v9248
        %9378 = vst.msk [vmem:[%s9347 + $0x78] sm:$0xf] %vm4626, %v9249
        %9379 = vst.msk [vmem:[%s9347 + $0x7c] sm:$0xf] %vm4626, %v9250
        %9380 = vst.msk [vmem:[%s9347 + $0x80] sm:$0xf] %vm4626, %v9251
        %9381 = vst.msk [vmem:[%s9347 + $0x84] sm:$0xf] %vm4626, %v9252
        %9382 = vst.msk [vmem:[%s9347 + $0x88] sm:$0xf] %vm4626, %v9253
        %9383 = vst.msk [vmem:[%s9347 + $0x8c] sm:$0xf] %vm4626, %v9254
        %9384 = vst.msk [vmem:[%s9347 + $0x90] sm:$0xf] %vm4626, %v9255
        %9385 = vst.msk [vmem:[%s9347 + $0x94] sm:$0xf] %vm4626, %v9256
        %9386 = vst.msk [vmem:[%s9347 + $0x98] sm:$0xf] %vm4626, %v9257
        %9387 = vst.msk [vmem:[%s9347 + $0x9c] sm:$0xf] %vm4626, %v9258
        %9388 = vst.msk [vmem:[%s9347 + $0xa0] sm:$0xf] %vm4626, %v9259
        %9389 = vst.msk [vmem:[%s9347 + $0xa4] sm:$0xf] %vm4626, %v9260
        %9390 = vst.msk [vmem:[%s9347 + $0xa8] sm:$0xf] %vm4626, %v9261
        %9391 = vst.msk [vmem:[%s9347 + $0xac] sm:$0xf] %vm4626, %v9262
        %9392 = vst.msk [vmem:[%s9347 + $0xb0] sm:$0xf] %vm4626, %v9263
        %9393 = vst.msk [vmem:[%s9347 + $0xb4] sm:$0xf] %vm4626, %v9264
        %9394 = vst.msk [vmem:[%s9347 + $0xb8] sm:$0xf] %vm4626, %v9265
        %9395 = vst.msk [vmem:[%s9347 + $0xbc] sm:$0xf] %vm4626, %v9266
        %9396 = vst.msk [vmem:[%s9347 + $0xc0] sm:$0xf] %vm4626, %v9267
        %9397 = vst.msk [vmem:[%s9347 + $0xc4] sm:$0xf] %vm4626, %v9268
        %9398 = vst.msk [vmem:[%s9347 + $0xc8] sm:$0xf] %vm4626, %v9269
        %9399 = vst.msk [vmem:[%s9347 + $0xcc] sm:$0xf] %vm4626, %v9270
        %9400 = vst.msk [vmem:[%s9347 + $0xd0] sm:$0xf] %vm4626, %v9271
        %9401 = vst.msk [vmem:[%s9347 + $0xd4] sm:$0xf] %vm4626, %v9272
        %9402 = vst.msk [vmem:[%s9347 + $0xd8] sm:$0xf] %vm4626, %v9273
        %9403 = vst.msk [vmem:[%s9347 + $0xdc] sm:$0xf] %vm4626, %v9274
        %9404 = vst.msk [vmem:[%s9347 + $0xe0] sm:$0xf] %vm4626, %v9275
        %9405 = vst.msk [vmem:[%s9347 + $0xe4] sm:$0xf] %vm4626, %v9276
        %9406 = vst.msk [vmem:[%s9347 + $0xe8] sm:$0xf] %vm4626, %v9277
        %9407 = vst.msk [vmem:[%s9347 + $0xec] sm:$0xf] %vm4626, %v9278
        %9408 = vst.msk [vmem:[%s9347 + $0xf0] sm:$0xf] %vm4626, %v9279
        %9409 = vst.msk [vmem:[%s9347 + $0xf4] sm:$0xf] %vm4626, %v9280
        %9410 = vst.msk [vmem:[%s9347 + $0xf8] sm:$0xf] %vm4626, %v9281
        %9411 = vst.msk [vmem:[%s9347 + $0xfc] sm:$0xf] %vm4626, %v9282
        %v9412 = vsel %vm4691, %v9027, 0.0
        %v9413 = vsel %vm4691, %v9028, 0.0
        %v9414 = vadd.f32 %v9412, %v9413
        %v9415 = vsel %vm4691, %v9029, 0.0
        %v9416 = vadd.f32 %v9414, %v9415
        %v9417 = vsel %vm4691, %v9030, 0.0
        %v9418 = vadd.f32 %v9416, %v9417
        %v9419 = vsel %vm4691, %v9031, 0.0
        %v9420 = vadd.f32 %v9418, %v9419
        %v9421 = vsel %vm4691, %v9032, 0.0
        %v9422 = vadd.f32 %v9420, %v9421
        %v9423 = vsel %vm4691, %v9033, 0.0
        %v9424 = vadd.f32 %v9422, %v9423
        %v9425 = vsel %vm4691, %v9034, 0.0
        %v9426 = vadd.f32 %v9424, %v9425
        %v9427 = vsel %vm4691, %v9035, 0.0
        %v9428 = vadd.f32 %v9426, %v9427
        %v9429 = vsel %vm4691, %v9036, 0.0
        %v9430 = vadd.f32 %v9428, %v9429
        %v9431 = vsel %vm4691, %v9037, 0.0
        %v9432 = vadd.f32 %v9430, %v9431
        %v9433 = vsel %vm4691, %v9038, 0.0
        %v9434 = vadd.f32 %v9432, %v9433
        %v9435 = vsel %vm4691, %v9039, 0.0
        %v9436 = vadd.f32 %v9434, %v9435
        %v9437 = vsel %vm4691, %v9040, 0.0
        %v9438 = vadd.f32 %v9436, %v9437
        %v9439 = vsel %vm4691, %v9041, 0.0
        %v9440 = vadd.f32 %v9438, %v9439
        %v9441 = vsel %vm4691, %v9042, 0.0
        %v9442 = vadd.f32 %v9440, %v9441
        %v9443 = vsel %vm4691, %v9043, 0.0
        %v9444 = vadd.f32 %v9442, %v9443
        %v9445 = vsel %vm4691, %v9044, 0.0
        %v9446 = vadd.f32 %v9444, %v9445
        %v9447 = vsel %vm4691, %v9045, 0.0
        %v9448 = vadd.f32 %v9446, %v9447
        %v9449 = vsel %vm4691, %v9046, 0.0
        %v9450 = vadd.f32 %v9448, %v9449
        %v9451 = vsel %vm4691, %v9047, 0.0
        %v9452 = vadd.f32 %v9450, %v9451
        %v9453 = vsel %vm4691, %v9048, 0.0
        %v9454 = vadd.f32 %v9452, %v9453
        %v9455 = vsel %vm4691, %v9049, 0.0
        %v9456 = vadd.f32 %v9454, %v9455
        %v9457 = vsel %vm4691, %v9050, 0.0
        %v9458 = vadd.f32 %v9456, %v9457
        %v9459 = vsel %vm4691, %v9051, 0.0
        %v9460 = vadd.f32 %v9458, %v9459
        %v9461 = vsel %vm4691, %v9052, 0.0
        %v9462 = vadd.f32 %v9460, %v9461
        %v9463 = vsel %vm4691, %v9053, 0.0
        %v9464 = vadd.f32 %v9462, %v9463
        %v9465 = vsel %vm4691, %v9054, 0.0
        %v9466 = vadd.f32 %v9464, %v9465
        %v9467 = vsel %vm4691, %v9055, 0.0
        %v9468 = vadd.f32 %v9466, %v9467
        %v9469 = vsel %vm4691, %v9056, 0.0
        %v9470 = vadd.f32 %v9468, %v9469
        %v9471 = vsel %vm4691, %v9057, 0.0
        %v9472 = vadd.f32 %v9470, %v9471
        %v9473 = vsel %vm4691, %v9058, 0.0
        %v9474 = vadd.f32 %v9472, %v9473
        %v9475 = vsel %vm4691, %v9059, 0.0
        %v9476 = vadd.f32 %v9474, %v9475
        %v9477 = vsel %vm4691, %v9060, 0.0
        %v9478 = vadd.f32 %v9476, %v9477
        %v9479 = vsel %vm4691, %v9061, 0.0
        %v9480 = vadd.f32 %v9478, %v9479
        %v9481 = vsel %vm4691, %v9062, 0.0
        %v9482 = vadd.f32 %v9480, %v9481
        %v9483 = vsel %vm4691, %v9063, 0.0
        %v9484 = vadd.f32 %v9482, %v9483
        %v9485 = vsel %vm4691, %v9064, 0.0
        %v9486 = vadd.f32 %v9484, %v9485
        %v9487 = vsel %vm4691, %v9065, 0.0
        %v9488 = vadd.f32 %v9486, %v9487
        %v9489 = vsel %vm4691, %v9066, 0.0
        %v9490 = vadd.f32 %v9488, %v9489
        %v9491 = vsel %vm4691, %v9067, 0.0
        %v9492 = vadd.f32 %v9490, %v9491
        %v9493 = vsel %vm4691, %v9068, 0.0
        %v9494 = vadd.f32 %v9492, %v9493
        %v9495 = vsel %vm4691, %v9069, 0.0
        %v9496 = vadd.f32 %v9494, %v9495
        %v9497 = vsel %vm4691, %v9070, 0.0
        %v9498 = vadd.f32 %v9496, %v9497
        %v9499 = vsel %vm4691, %v9071, 0.0
        %v9500 = vadd.f32 %v9498, %v9499
        %v9501 = vsel %vm4691, %v9072, 0.0
        %v9502 = vadd.f32 %v9500, %v9501
        %v9503 = vsel %vm4691, %v9073, 0.0
        %v9504 = vadd.f32 %v9502, %v9503
        %v9505 = vsel %vm4691, %v9074, 0.0
        %v9506 = vadd.f32 %v9504, %v9505
        %v9507 = vsel %vm4691, %v9075, 0.0
        %v9508 = vadd.f32 %v9506, %v9507
        %v9509 = vsel %vm4691, %v9076, 0.0
        %v9510 = vadd.f32 %v9508, %v9509
        %v9511 = vsel %vm4691, %v9077, 0.0
        %v9512 = vadd.f32 %v9510, %v9511
        %v9513 = vsel %vm4691, %v9078, 0.0
        %v9514 = vadd.f32 %v9512, %v9513
        %v9515 = vsel %vm4691, %v9079, 0.0
        %v9516 = vadd.f32 %v9514, %v9515
        %v9517 = vsel %vm4691, %v9080, 0.0
        %v9518 = vadd.f32 %v9516, %v9517
        %v9519 = vsel %vm4691, %v9081, 0.0
        %v9520 = vadd.f32 %v9518, %v9519
        %v9521 = vsel %vm4691, %v9082, 0.0
        %v9522 = vadd.f32 %v9520, %v9521
        %v9523 = vsel %vm4691, %v9083, 0.0
        %v9524 = vadd.f32 %v9522, %v9523
        %v9525 = vsel %vm4691, %v9084, 0.0
        %v9526 = vadd.f32 %v9524, %v9525
        %v9527 = vsel %vm4691, %v9085, 0.0
        %v9528 = vadd.f32 %v9526, %v9527
        %v9529 = vsel %vm4691, %v9086, 0.0
        %v9530 = vadd.f32 %v9528, %v9529
        %v9531 = vsel %vm4691, %v9087, 0.0
        %v9532 = vadd.f32 %v9530, %v9531
        %v9533 = vsel %vm4691, %v9088, 0.0
        %v9534 = vadd.f32 %v9532, %v9533
        %v9535 = vsel %vm4691, %v9089, 0.0
        %v9536 = vadd.f32 %v9534, %v9535
        %v9537 = vsel %vm4691, %v9090, 0.0
        %v9538 = vadd.f32 %v9536, %v9537
        %v9539 = vrot.slane %v9538, 4
        %v9540 = vadd.f32 %v9538, %v9539
        %v9541 = vrot.slane %v9540, 2
        %v9542 = vadd.f32 %v9540, %v9541
        %v9543 = vrot.slane %v9542, 1
        %v9544 = vadd.f32 %v9542, %v9543
        %v9545 = vadd.f32 %v4825, %v9544
        %v9546 = vmul.f32 %v9027, %v9027
        %v9547 = vmul.f32 %v9028, %v9028
        %v9548 = vmul.f32 %v9029, %v9029
        %v9549 = vmul.f32 %v9030, %v9030
        %v9550 = vmul.f32 %v9031, %v9031
        %v9551 = vmul.f32 %v9032, %v9032
        %v9552 = vmul.f32 %v9033, %v9033
        %v9553 = vmul.f32 %v9034, %v9034
        %v9554 = vmul.f32 %v9035, %v9035
        %v9555 = vmul.f32 %v9036, %v9036
        %v9556 = vmul.f32 %v9037, %v9037
        %v9557 = vmul.f32 %v9038, %v9038
        %v9558 = vmul.f32 %v9039, %v9039
        %v9559 = vmul.f32 %v9040, %v9040
        %v9560 = vmul.f32 %v9041, %v9041
        %v9561 = vmul.f32 %v9042, %v9042
        %v9562 = vmul.f32 %v9043, %v9043
        %v9563 = vmul.f32 %v9044, %v9044
        %v9564 = vmul.f32 %v9045, %v9045
        %v9565 = vmul.f32 %v9046, %v9046
        %v9566 = vmul.f32 %v9047, %v9047
        %v9567 = vmul.f32 %v9048, %v9048
        %v9568 = vmul.f32 %v9049, %v9049
        %v9569 = vmul.f32 %v9050, %v9050
        %v9570 = vmul.f32 %v9051, %v9051
        %v9571 = vmul.f32 %v9052, %v9052
        %v9572 = vmul.f32 %v9053, %v9053
        %v9573 = vmul.f32 %v9054, %v9054
        %v9574 = vmul.f32 %v9055, %v9055
        %v9575 = vmul.f32 %v9056, %v9056
        %v9576 = vmul.f32 %v9057, %v9057
        %v9577 = vmul.f32 %v9058, %v9058
        %v9578 = vmul.f32 %v9059, %v9059
        %v9579 = vmul.f32 %v9060, %v9060
        %v9580 = vmul.f32 %v9061, %v9061
        %v9581 = vmul.f32 %v9062, %v9062
        %v9582 = vmul.f32 %v9063, %v9063
        %v9583 = vmul.f32 %v9064, %v9064
        %v9584 = vmul.f32 %v9065, %v9065
        %v9585 = vmul.f32 %v9066, %v9066
        %v9586 = vmul.f32 %v9067, %v9067
        %v9587 = vmul.f32 %v9068, %v9068
        %v9588 = vmul.f32 %v9069, %v9069
        %v9589 = vmul.f32 %v9070, %v9070
        %v9590 = vmul.f32 %v9071, %v9071
        %v9591 = vmul.f32 %v9072, %v9072
        %v9592 = vmul.f32 %v9073, %v9073
        %v9593 = vmul.f32 %v9074, %v9074
        %v9594 = vmul.f32 %v9075, %v9075
        %v9595 = vmul.f32 %v9076, %v9076
        %v9596 = vmul.f32 %v9077, %v9077
        %v9597 = vmul.f32 %v9078, %v9078
        %v9598 = vmul.f32 %v9079, %v9079
        %v9599 = vmul.f32 %v9080, %v9080
        %v9600 = vmul.f32 %v9081, %v9081
        %v9601 = vmul.f32 %v9082, %v9082
        %v9602 = vmul.f32 %v9083, %v9083
        %v9603 = vmul.f32 %v9084, %v9084
        %v9604 = vmul.f32 %v9085, %v9085
        %v9605 = vmul.f32 %v9086, %v9086
        %v9606 = vmul.f32 %v9087, %v9087
        %v9607 = vmul.f32 %v9088, %v9088
        %v9608 = vmul.f32 %v9089, %v9089
        %v9609 = vmul.f32 %v9090, %v9090
        %v9610 = vsel %vm4691, %v9546, 0.0
        %v9611 = vsel %vm4691, %v9547, 0.0
        %v9612 = vadd.f32 %v9610, %v9611
        %v9613 = vsel %vm4691, %v9548, 0.0
        %v9614 = vadd.f32 %v9612, %v9613
        %v9615 = vsel %vm4691, %v9549, 0.0
        %v9616 = vadd.f32 %v9614, %v9615
        %v9617 = vsel %vm4691, %v9550, 0.0
        %v9618 = vadd.f32 %v9616, %v9617
        %v9619 = vsel %vm4691, %v9551, 0.0
        %v9620 = vadd.f32 %v9618, %v9619
        %v9621 = vsel %vm4691, %v9552, 0.0
        %v9622 = vadd.f32 %v9620, %v9621
        %v9623 = vsel %vm4691, %v9553, 0.0
        %v9624 = vadd.f32 %v9622, %v9623
        %v9625 = vsel %vm4691, %v9554, 0.0
        %v9626 = vadd.f32 %v9624, %v9625
        %v9627 = vsel %vm4691, %v9555, 0.0
        %v9628 = vadd.f32 %v9626, %v9627
        %v9629 = vsel %vm4691, %v9556, 0.0
        %v9630 = vadd.f32 %v9628, %v9629
        %v9631 = vsel %vm4691, %v9557, 0.0
        %v9632 = vadd.f32 %v9630, %v9631
        %v9633 = vsel %vm4691, %v9558, 0.0
        %v9634 = vadd.f32 %v9632, %v9633
        %v9635 = vsel %vm4691, %v9559, 0.0
        %v9636 = vadd.f32 %v9634, %v9635
        %v9637 = vsel %vm4691, %v9560, 0.0
        %v9638 = vadd.f32 %v9636, %v9637
        %v9639 = vsel %vm4691, %v9561, 0.0
        %v9640 = vadd.f32 %v9638, %v9639
        %v9641 = vsel %vm4691, %v9562, 0.0
        %v9642 = vadd.f32 %v9640, %v9641
        %v9643 = vsel %vm4691, %v9563, 0.0
        %v9644 = vadd.f32 %v9642, %v9643
        %v9645 = vsel %vm4691, %v9564, 0.0
        %v9646 = vadd.f32 %v9644, %v9645
        %v9647 = vsel %vm4691, %v9565, 0.0
        %v9648 = vadd.f32 %v9646, %v9647
        %v9649 = vsel %vm4691, %v9566, 0.0
        %v9650 = vadd.f32 %v9648, %v9649
        %v9651 = vsel %vm4691, %v9567, 0.0
        %v9652 = vadd.f32 %v9650, %v9651
        %v9653 = vsel %vm4691, %v9568, 0.0
        %v9654 = vadd.f32 %v9652, %v9653
        %v9655 = vsel %vm4691, %v9569, 0.0
        %v9656 = vadd.f32 %v9654, %v9655
        %v9657 = vsel %vm4691, %v9570, 0.0
        %v9658 = vadd.f32 %v9656, %v9657
        %v9659 = vsel %vm4691, %v9571, 0.0
        %v9660 = vadd.f32 %v9658, %v9659
        %v9661 = vsel %vm4691, %v9572, 0.0
        %v9662 = vadd.f32 %v9660, %v9661
        %v9663 = vsel %vm4691, %v9573, 0.0
        %v9664 = vadd.f32 %v9662, %v9663
        %v9665 = vsel %vm4691, %v9574, 0.0
        %v9666 = vadd.f32 %v9664, %v9665
        %v9667 = vsel %vm4691, %v9575, 0.0
        %v9668 = vadd.f32 %v9666, %v9667
        %v9669 = vsel %vm4691, %v9576, 0.0
        %v9670 = vadd.f32 %v9668, %v9669
        %v9671 = vsel %vm4691, %v9577, 0.0
        %v9672 = vadd.f32 %v9670, %v9671
        %v9673 = vsel %vm4691, %v9578, 0.0
        %v9674 = vadd.f32 %v9672, %v9673
        %v9675 = vsel %vm4691, %v9579, 0.0
        %v9676 = vadd.f32 %v9674, %v9675
        %v9677 = vsel %vm4691, %v9580, 0.0
        %v9678 = vadd.f32 %v9676, %v9677
        %v9679 = vsel %vm4691, %v9581, 0.0
        %v9680 = vadd.f32 %v9678, %v9679
        %v9681 = vsel %vm4691, %v9582, 0.0
        %v9682 = vadd.f32 %v9680, %v9681
        %v9683 = vsel %vm4691, %v9583, 0.0
        %v9684 = vadd.f32 %v9682, %v9683
        %v9685 = vsel %vm4691, %v9584, 0.0
        %v9686 = vadd.f32 %v9684, %v9685
        %v9687 = vsel %vm4691, %v9585, 0.0
        %v9688 = vadd.f32 %v9686, %v9687
        %v9689 = vsel %vm4691, %v9586, 0.0
        %v9690 = vadd.f32 %v9688, %v9689
        %v9691 = vsel %vm4691, %v9587, 0.0
        %v9692 = vadd.f32 %v9690, %v9691
        %v9693 = vsel %vm4691, %v9588, 0.0
        %v9694 = vadd.f32 %v9692, %v9693
        %v9695 = vsel %vm4691, %v9589, 0.0
        %v9696 = vadd.f32 %v9694, %v9695
        %v9697 = vsel %vm4691, %v9590, 0.0
        %v9698 = vadd.f32 %v9696, %v9697
        %v9699 = vsel %vm4691, %v9591, 0.0
        %v9700 = vadd.f32 %v9698, %v9699
        %v9701 = vsel %vm4691, %v9592, 0.0
        %v9702 = vadd.f32 %v9700, %v9701
        %v9703 = vsel %vm4691, %v9593, 0.0
        %v9704 = vadd.f32 %v9702, %v9703
        %v9705 = vsel %vm4691, %v9594, 0.0
        %v9706 = vadd.f32 %v9704, %v9705
        %v9707 = vsel %vm4691, %v9595, 0.0
        %v9708 = vadd.f32 %v9706, %v9707
        %v9709 = vsel %vm4691, %v9596, 0.0
        %v9710 = vadd.f32 %v9708, %v9709
        %v9711 = vsel %vm4691, %v9597, 0.0
        %v9712 = vadd.f32 %v9710, %v9711
        %v9713 = vsel %vm4691, %v9598, 0.0
        %v9714 = vadd.f32 %v9712, %v9713
        %v9715 = vsel %vm4691, %v9599, 0.0
        %v9716 = vadd.f32 %v9714, %v9715
        %v9717 = vsel %vm4691, %v9600, 0.0
        %v9718 = vadd.f32 %v9716, %v9717
        %v9719 = vsel %vm4691, %v9601, 0.0
        %v9720 = vadd.f32 %v9718, %v9719
        %v9721 = vsel %vm4691, %v9602, 0.0
        %v9722 = vadd.f32 %v9720, %v9721
        %v9723 = vsel %vm4691, %v9603, 0.0
        %v9724 = vadd.f32 %v9722, %v9723
        %v9725 = vsel %vm4691, %v9604, 0.0
        %v9726 = vadd.f32 %v9724, %v9725
        %v9727 = vsel %vm4691, %v9605, 0.0
        %v9728 = vadd.f32 %v9726, %v9727
        %v9729 = vsel %vm4691, %v9606, 0.0
        %v9730 = vadd.f32 %v9728, %v9729
        %v9731 = vsel %vm4691, %v9607, 0.0
        %v9732 = vadd.f32 %v9730, %v9731
        %v9733 = vsel %vm4691, %v9608, 0.0
        %v9734 = vadd.f32 %v9732, %v9733
        %v9735 = vsel %vm4691, %v9609, 0.0
        %v9736 = vadd.f32 %v9734, %v9735
        %v9737 = vrot.slane %v9736, 4
        %v9738 = vadd.f32 %v9736, %v9737
        %v9739 = vrot.slane %v9738, 2
        %v9740 = vadd.f32 %v9738, %v9739
        %v9741 = vrot.slane %v9740, 1
        %v9742 = vadd.f32 %v9740, %v9741
        %v9743 = vadd.f32 %v5023, %v9742
        %vm9744 = vcmask 516096
        %9745 = vst.msk [vmem:[%s269] sm:$0x1] %vm9744, %v9545
        %9746 = vst.msk [vmem:[%s275] sm:$0x1] %vm9744, %v9743
        %s9747 = sand.u32 %s123, 1
        %s9748 = scalar_lea.sflag [#allocation3], %s9747
        %s9749 = sand.u32 %s123, 1
        %s9750 = smul.addr %s9749, 512
        %s9751 = scalar_lea.vmem [#allocation2], %s9750
        %s9752 = sand.u32 %s23, 1
        %s9753 = scalar_lea.sflag [#allocation5], %s9752
        %s9754 = sand.u32 %s151, 1
        %s9755 = scalar_lea.vmem [#allocation4], %s9754
        %s9756 = sand.u32 %s23, 1
        %s9757 = scalar_lea.sflag [#allocation5], %s9756
        %s9758 = sand.u32 %s179, 1
        %s9759 = scalar_lea.vmem [#allocation6], %s9758
        // Predicated region
        $region33: #{tpu_custom_call.1} parent=31 // pred_check
          %p9760 = pneg %p133
        $region34: #{tpu_custom_call.1} parent=31 // pred_check_branch
          %9762 = sbr.rel (%p9760) target = $region36
        $region35: #{tpu_custom_call.1} parent=31 // pred_region
          %s9764 = ssub.s32 8192, 8192
          %9765 = vsyncadd %s9748, %s9764
          %s9766 = smul.addr %s27, 128
          %s9767 = sadd.s32 %s28, %s9766
          %s9768 = smul.addr %s9767, 64
          %s9769 = scalar_lea.hbm %s3, %s9768
          %s9770 = sshll.u32 %s9751, 4
          %s9771 = int_to_ptr.vmem [resolvable:$true] %s9770
          %9776 = dma.vmem_to_hbm [thread:$0]  %s9771, 8192, %s9769, %s9748, 64, 64, 4
        $region36: #{tpu_custom_call.1} parent=31 // pred_fallthru
          _
        // Predicated region
        $region37: #{tpu_custom_call.1} parent=31 // pred_check
          %p9777 = pneg %p161
        $region38: #{tpu_custom_call.1} parent=31 // pred_check_branch
          %9779 = sbr.rel (%p9777) target = $region40
        $region39: #{tpu_custom_call.1} parent=31 // pred_region
          %s9781 = ssub.s32 16, 16
          %9782 = vsyncadd %s9753, %s9781
          %s9783 = sadd.s32 %s28, %s27
          %s9784 = smul.addr %s9783, 16
          %s9785 = scalar_lea.hbm %s4, %s9784
          %s9787 = sshll.u32 %s9755, 4
          %s9788 = int_to_ptr.vmem [resolvable:$true] %s9787
          %9790 = dma.vmem_to_hbm [thread:$0]  %s9788, 16, %s9785, %s9753
        $region40: #{tpu_custom_call.1} parent=31 // pred_fallthru
          _
        // Predicated region
        $region41: #{tpu_custom_call.1} parent=31 // pred_check
          %p9791 = pneg %p189
        $region42: #{tpu_custom_call.1} parent=31 // pred_check_branch
          %9793 = sbr.rel (%p9791) target = $region44
        $region43: #{tpu_custom_call.1} parent=31 // pred_region
          %s9795 = ssub.s32 16, 16
          %9796 = vsyncadd %s9757, %s9795
          %s9797 = sadd.s32 %s28, %s27
          %s9798 = smul.addr %s9797, 16
          %s9799 = scalar_lea.hbm %s5, %s9798
          %s9801 = sshll.u32 %s9759, 4
          %s9802 = int_to_ptr.vmem [resolvable:$true] %s9801
          %9804 = dma.vmem_to_hbm [thread:$0]  %s9802, 16, %s9799, %s9757
        $region44: #{tpu_custom_call.1} parent=31 // pred_fallthru
          _
      $region32: #{tpu_custom_call.1} parent=5 // pred_fallthru
        _
      %p9805 = scmp.le.s32.totalorder 2, %s18
      // Predicated region
      $region45: #{tpu_custom_call.1} parent=5 // pred_check
        %p9806 = pneg %p9805
      $region46: #{tpu_custom_call.1} parent=5 // pred_check_branch
        %9808 = sbr.rel (%p9806) target = $region48
      $region47: #{tpu_custom_call.1} parent=5 // pred_region
        %s9809 = ssub.s32 %s18, 2
        // Predicated region
        $region49: #{tpu_custom_call.1} parent=47 // pred_check
          %p9810 = pneg %p139
        $region50: #{tpu_custom_call.1} parent=47 // pred_check_branch
          %9812 = sbr.rel (%p9810) target = $region52
        $region51: #{tpu_custom_call.1} parent=47 // pred_region
          %s9813 = sand.u32 %s124, 1
          %s9814 = scalar_lea.sflag [#allocation3], %s9813
          %s9815 = sand.u32 %s124, 1
          %s9816 = smul.addr %s9815, 512
          %s9817 = scalar_lea.vmem [#allocation2], %s9816
          %9818 = dma.done %s9814, 8192
        $region52: #{tpu_custom_call.1} parent=47 // pred_fallthru
          _
        // Predicated region
        $region53: #{tpu_custom_call.1} parent=47 // pred_check
          %p9819 = pneg %p167
        $region54: #{tpu_custom_call.1} parent=47 // pred_check_branch
          %9821 = sbr.rel (%p9819) target = $region56
        $region55: #{tpu_custom_call.1} parent=47 // pred_region
          %s9822 = sand.u32 %s24, 1
          %s9823 = scalar_lea.sflag [#allocation5], %s9822
          %s9824 = sand.u32 %s152, 1
          %s9825 = scalar_lea.vmem [#allocation4], %s9824
          %9826 = dma.done %s9823, 16
        $region56: #{tpu_custom_call.1} parent=47 // pred_fallthru
          _
        // Predicated region
        $region57: #{tpu_custom_call.1} parent=47 // pred_check
          %p9827 = pneg %p195
        $region58: #{tpu_custom_call.1} parent=47 // pred_check_branch
          %9829 = sbr.rel (%p9827) target = $region60
        $region59: #{tpu_custom_call.1} parent=47 // pred_region
          %s9830 = sand.u32 %s24, 1
          %s9831 = scalar_lea.sflag [#allocation5], %s9830
          %s9832 = sand.u32 %s180, 1
          %s9833 = scalar_lea.vmem [#allocation6], %s9832
          %9834 = dma.done %s9831, 16
        $region60: #{tpu_custom_call.1} parent=47 // pred_fallthru
          _
      $region48: #{tpu_custom_call.1} parent=5 // pred_fallthru
        _
    $region6: #{tpu_custom_call.1} parent=1 // loop_footer
      %s22 = sadd.s32 1, %s18
    $region7: #{tpu_custom_call.1} parent=1 // loop_footer_branch
      %17 = sbr.rel target = $region3
    $region8: #{tpu_custom_call.1} parent=1 // loop_exit
      _
    %9835 = vsyncpa [#allocation3], 1
    %s9836 = scalar_lea.sflag [#allocation3], 1
    %9837 = vsyncpa %s9836, 1
    %9838 = vsyncpa [#allocation5], 1
    %s9839 = scalar_lea.sflag [#allocation5], 1
    %9840 = vsyncpa %s9839, 1

</llo_original>
